<compile_context>
chip_gen: v7x
topology: tpu7x:2x2x1
jax: 0.10.0
libtpu: 0.0.40
codegen_flags: <defaults>
</compile_context>

<pallas_src>
import jax
import jax.numpy as jnp
from jax.experimental import pallas as pl
from jax.experimental.pallas import tpu as pltpu

EPS = 1e-5  # nn.InstanceNorm2d default eps


# ------------------------------ kernel body ------------------------------

def _conv3x3_reflect_instancenorm(x, w):
    """x: (H, W, C) f32 — one image. w: (3, 3, C, C) f32 (ky, kx, cin, cout).
    Returns InstanceNorm2d(conv3x3(reflect_pad1(x))), shape (H, W, C), f32."""
    H, W, C = x.shape
    # Reflection pad of the row (H) axis: major-axis concat (cheap, no relayout).
    xr = jnp.concatenate([x[1:2], x, x[H - 2:H - 1]], axis=0)      # (H+2, W, C)
    col = jax.lax.broadcasted_iota(jnp.int32, (H, W, C), 1)
    acc = jnp.zeros((H * W, C), jnp.float32)
    for dy in range(3):
        r = xr[dy:dy + H]                                          # (H, W, C)
        # Column taps of the reflect-padded row band via sublane rolls (XLU)
        # + boundary select, instead of sublane-crossing slice copies.
        left = jnp.where(col == 0, r[:, 1:2, :],
                         pltpu.roll(r, 1, axis=1))                 # dx = 0
        right = jnp.where(col == W - 1, r[:, W - 2:W - 1, :],
                          pltpu.roll(r, W - 1, axis=1))            # dx = 2
        taps = (left, r, right)
        for dx in range(3):
            acc = acc + jnp.dot(taps[dx].reshape(H * W, C), w[dy, dx],
                                preferred_element_type=jnp.float32)
    y = acc.reshape(H, W, C)
    # InstanceNorm2d(affine=False): per-(n, c) stats over (H, W), biased var.
    mean = jnp.mean(y, axis=(0, 1), keepdims=True)
    yc = y - mean
    var = jnp.mean(yc * yc, axis=(0, 1), keepdims=True)
    return yc * jax.lax.rsqrt(var + EPS)


def resnet_block_kernel(x_ref, w1_ref, w2_ref, o_ref):
    """Whole ResnetBlock for one batch image, entirely in VMEM."""
    x = x_ref[0].astype(jnp.float32)                 # (H, W, C)
    w1 = w1_ref[...].astype(jnp.float32)             # (3, 3, C, C)
    w2 = w2_ref[...].astype(jnp.float32)
    # conv biases omitted: cancelled exactly by InstanceNorm(affine=False).
    h = jnp.maximum(_conv3x3_reflect_instancenorm(x, w1), 0.0)   # conv1+IN+ReLU
    y = _conv3x3_reflect_instancenorm(h, w2)                     # conv2+IN
    o_ref[0] = (x + y).astype(o_ref.dtype)                       # residual add


# ------------------------------ wrapper glue ------------------------------

@jax.jit
def resnet_block_forward(x_nhwc, w1, w2):
    """x_nhwc: (N, H, W, C); w1, w2: (3, 3, C, C) HWIO."""
    N, H, W, C = x_nhwc.shape
    grid_spec = pltpu.PrefetchScalarGridSpec(
        num_scalar_prefetch=0,
        grid=(N,),                                   # per-image IN stats are exact
        in_specs=[
            pl.BlockSpec((1, H, W, C), lambda n: (n, 0, 0, 0)),
            pl.BlockSpec((3, 3, C, C), lambda n: (0, 0, 0, 0)),  # weights resident
            pl.BlockSpec((3, 3, C, C), lambda n: (0, 0, 0, 0)),
        ],
        out_specs=pl.BlockSpec((1, H, W, C), lambda n: (n, 0, 0, 0)),
    )
    # TODO(synk): for production sizes (64x64x256 on v7x's 64 MiB VMEM) add an
    # H-row grid axis with IN stats carried in scratch, and feed the MXU bf16.
    return pl.pallas_call(
        resnet_block_kernel,
        out_shape=jax.ShapeDtypeStruct((N, H, W, C), x_nhwc.dtype),
        grid_spec=grid_spec,
        compiler_params=pltpu.CompilerParams(
            dimension_semantics=("parallel",)),       # megacore sharding on v7x
    )(x_nhwc, w1, w2)


# ------------------------- pure-JAX reference check ------------------------

def _reference(x_nhwc, w1, b1, w2, b2):
    def conv_in(x, w, b, relu):
        xp = jnp.pad(x, ((0, 0), (1, 1), (1, 1), (0, 0)), mode="reflect")
        y = jax.lax.conv_general_dilated(
            xp, w, window_strides=(1, 1), padding="VALID",
            dimension_numbers=("NHWC", "HWIO", "NHWC")) + b
        mean = jnp.mean(y, axis=(1, 2), keepdims=True)
        var = jnp.mean(jnp.square(y - mean), axis=(1, 2), keepdims=True)
        y = (y - mean) * jax.lax.rsqrt(var + EPS)
        return jnp.maximum(y, 0.0) if relu else y

    h = conv_in(x_nhwc, w1, b1, True)
    h = conv_in(h, w2, b2, False)
    return x_nhwc + h


# ----------------------------------- main ----------------------------------

if __name__ == "__main__":
    key = jax.random.PRNGKey(0)
    N, C, H, W = 2, 4, 16, 16  # PyTorch NCHW view of the input

    k1, k2, k3, k4, k5 = jax.random.split(key, 5)
    x_nchw = jax.random.normal(k1, (N, C, H, W), jnp.float32)
    # Synthetic Conv2d(dim, dim, 3, bias=True) params, generated in HWIO layout.
    w1 = jax.random.normal(k2, (3, 3, C, C), jnp.float32) * 0.1
    b1 = jax.random.normal(k3, (C,), jnp.float32) * 0.1
    w2 = jax.random.normal(k4, (3, 3, C, C), jnp.float32) * 0.1
    b2 = jax.random.normal(k5, (C,), jnp.float32) * 0.1

    # NCHW -> NHWC for the kernel layout.
    x_nhwc = jnp.transpose(x_nchw, (0, 2, 3, 1))

    out = resnet_block_forward(x_nhwc, w1, w2)
    out = jax.block_until_ready(out)

    # Reference includes the conv biases; the kernel omits them because
    # InstanceNorm(affine=False) cancels them exactly — outputs must match.
    ref = _reference(x_nhwc, w1, b1.reshape(1, 1, 1, C), w2, b2.reshape(1, 1, 1, C))
    assert out.shape == (N, H, W, C) and out.dtype == x_nhwc.dtype
    assert jnp.allclose(out, ref, atol=1e-4, rtol=1e-4), "kernel/reference mismatch"

    _ = jnp.transpose(out, (0, 3, 1, 2))  # back to PyTorch NCHW if needed
    print("KERNEL_OK")
</pallas_src>

<mosaic_0001>
module attributes {stable_mosaic.version = 11 : i64} {
  func.func @resnet_block_kernel(%arg0: i32, %arg1: memref<1x16x16x4xf32, #tpu.memory_space<vmem>>, %arg2: memref<3x3x4x4xf32, #tpu.memory_space<vmem>>, %arg3: memref<3x3x4x4xf32, #tpu.memory_space<vmem>>, %arg4: memref<1x16x16x4xf32, #tpu.memory_space<vmem>>) attributes {dimension_semantics = [#tpu.dimension_semantics<parallel>], iteration_bounds = array<i64: 2>, scalar_prefetch = 0 : i64, scratch_operands = 0 : i64, tpu.core_type = #tpu.core_type<tc>, window_params = [{transform_indices = @transform_0, window_bounds = array<i64: 1, 16, 16, 4>}, {pipeline_mode = #tpu.pipeline_mode<synchronous>, transform_indices = @transform_1, window_bounds = array<i64: 3, 3, 4, 4>}, {pipeline_mode = #tpu.pipeline_mode<synchronous>, transform_indices = @transform_2, window_bounds = array<i64: 3, 3, 4, 4>}, {transform_indices = @transform_3, window_bounds = array<i64: 1, 16, 16, 4>}]} {
    %c0 = arith.constant 0 : index
    %c0_0 = arith.constant 0 : index
    %c0_1 = arith.constant 0 : index
    %c0_2 = arith.constant 0 : index
    %0 = vector.load %arg1[%c0, %c0_0, %c0_1, %c0_2] : memref<1x16x16x4xf32, #tpu.memory_space<vmem>>, vector<1x16x16x4xf32>
    %1 = vector.shape_cast %0 : vector<1x16x16x4xf32> to vector<16x16x4xf32>
    %c0_3 = arith.constant 0 : index
    %c0_4 = arith.constant 0 : index
    %c0_5 = arith.constant 0 : index
    %c0_6 = arith.constant 0 : index
    %2 = vector.load %arg2[%c0_3, %c0_4, %c0_5, %c0_6] : memref<3x3x4x4xf32, #tpu.memory_space<vmem>>, vector<3x3x4x4xf32>
    %c0_7 = arith.constant 0 : index
    %c0_8 = arith.constant 0 : index
    %c0_9 = arith.constant 0 : index
    %c0_10 = arith.constant 0 : index
    %3 = vector.load %arg3[%c0_7, %c0_8, %c0_9, %c0_10] : memref<3x3x4x4xf32, #tpu.memory_space<vmem>>, vector<3x3x4x4xf32>
    %4 = vector.extract_strided_slice %1 {offsets = [1, 0, 0], sizes = [1, 16, 4], strides = [1, 1, 1]} : vector<16x16x4xf32> to vector<1x16x4xf32>
    %5 = vector.extract_strided_slice %1 {offsets = [14, 0, 0], sizes = [1, 16, 4], strides = [1, 1, 1]} : vector<16x16x4xf32> to vector<1x16x4xf32>
    %6 = tpu.concatenate %4, %1, %5 in 0 : vector<1x16x4xf32>, vector<16x16x4xf32>, vector<1x16x4xf32> -> vector<18x16x4xf32>
    %7 = tpu.iota {dimensions = array<i32: 1>} : vector<16x16x4xi32>
    %cst = arith.constant 0.000000e+00 : f32
    %8 = vector.broadcast %cst : f32 to vector<256x4xf32>
    %9 = vector.extract_strided_slice %6 {offsets = [0, 0, 0], sizes = [16, 16, 4], strides = [1, 1, 1]} : vector<18x16x4xf32> to vector<16x16x4xf32>
    %c0_i32 = arith.constant 0 : i32
    %10 = vector.broadcast %c0_i32 : i32 to vector<16x16x4xi32>
    %11 = arith.cmpi eq, %7, %10 : vector<16x16x4xi32>
    %12 = vector.extract_strided_slice %9 {offsets = [0, 1, 0], sizes = [16, 1, 4], strides = [1, 1, 1]} : vector<16x16x4xf32> to vector<16x1x4xf32>
    %c1_i32 = arith.constant 1 : i32
    %13 = tpu.dynamic_rotate %9 by %c1_i32 dim 1 : vector<16x16x4xf32>, i32 -> vector<16x16x4xf32>
    %14 = vector.shape_cast %12 : vector<16x1x4xf32> to vector<16x1x4xf32>
    %15 = vector.broadcast %14 : vector<16x1x4xf32> to vector<16x16x4xf32>
    %16 = arith.select %11, %15, %13 : vector<16x16x4xi1>, vector<16x16x4xf32>
    %c15_i32 = arith.constant 15 : i32
    %17 = vector.broadcast %c15_i32 : i32 to vector<16x16x4xi32>
    %18 = arith.cmpi eq, %7, %17 : vector<16x16x4xi32>
    %19 = vector.extract_strided_slice %9 {offsets = [0, 14, 0], sizes = [16, 1, 4], strides = [1, 1, 1]} : vector<16x16x4xf32> to vector<16x1x4xf32>
    %c15_i32_11 = arith.constant 15 : i32
    %20 = tpu.dynamic_rotate %9 by %c15_i32_11 dim 1 : vector<16x16x4xf32>, i32 -> vector<16x16x4xf32>
    %21 = vector.shape_cast %19 : vector<16x1x4xf32> to vector<16x1x4xf32>
    %22 = vector.broadcast %21 : vector<16x1x4xf32> to vector<16x16x4xf32>
    %23 = arith.select %18, %22, %20 : vector<16x16x4xi1>, vector<16x16x4xf32>
    %24 = vector.shape_cast %16 : vector<16x16x4xf32> to vector<256x4xf32>
    %25 = vector.extract_strided_slice %2 {offsets = [0, 0, 0, 0], sizes = [1, 1, 4, 4], strides = [1, 1, 1, 1]} : vector<3x3x4x4xf32> to vector<1x1x4x4xf32>
    %26 = vector.shape_cast %25 : vector<1x1x4x4xf32> to vector<4x4xf32>
    %cst_12 = arith.constant dense<0.000000e+00> : vector<256x4xf32>
    %27 = tpu.matmul %24, %26, %cst_12 {dimension_numbers = #tpu.dot_dimension_numbers<[1], [0], [0], [1], [0, 0, 1, 1], [], []>} : vector<256x4xf32>, vector<4x4xf32>, vector<256x4xf32> -> vector<256x4xf32>
    %28 = arith.addf %8, %27 : vector<256x4xf32>
    %29 = vector.shape_cast %9 : vector<16x16x4xf32> to vector<256x4xf32>
    %30 = vector.extract_strided_slice %2 {offsets = [0, 1, 0, 0], sizes = [1, 1, 4, 4], strides = [1, 1, 1, 1]} : vector<3x3x4x4xf32> to vector<1x1x4x4xf32>
    %31 = vector.shape_cast %30 : vector<1x1x4x4xf32> to vector<4x4xf32>
    %cst_13 = arith.constant dense<0.000000e+00> : vector<256x4xf32>
    %32 = tpu.matmul %29, %31, %cst_13 {dimension_numbers = #tpu.dot_dimension_numbers<[1], [0], [0], [1], [0, 0, 1, 1], [], []>} : vector<256x4xf32>, vector<4x4xf32>, vector<256x4xf32> -> vector<256x4xf32>
    %33 = arith.addf %28, %32 : vector<256x4xf32>
    %34 = vector.shape_cast %23 : vector<16x16x4xf32> to vector<256x4xf32>
    %35 = vector.extract_strided_slice %2 {offsets = [0, 2, 0, 0], sizes = [1, 1, 4, 4], strides = [1, 1, 1, 1]} : vector<3x3x4x4xf32> to vector<1x1x4x4xf32>
    %36 = vector.shape_cast %35 : vector<1x1x4x4xf32> to vector<4x4xf32>
    %cst_14 = arith.constant dense<0.000000e+00> : vector<256x4xf32>
    %37 = tpu.matmul %34, %36, %cst_14 {dimension_numbers = #tpu.dot_dimension_numbers<[1], [0], [0], [1], [0, 0, 1, 1], [], []>} : vector<256x4xf32>, vector<4x4xf32>, vector<256x4xf32> -> vector<256x4xf32>
    %38 = arith.addf %33, %37 : vector<256x4xf32>
    %39 = vector.extract_strided_slice %6 {offsets = [1, 0, 0], sizes = [16, 16, 4], strides = [1, 1, 1]} : vector<18x16x4xf32> to vector<16x16x4xf32>
    %c0_i32_15 = arith.constant 0 : i32
    %40 = vector.broadcast %c0_i32_15 : i32 to vector<16x16x4xi32>
    %41 = arith.cmpi eq, %7, %40 : vector<16x16x4xi32>
    %42 = vector.extract_strided_slice %39 {offsets = [0, 1, 0], sizes = [16, 1, 4], strides = [1, 1, 1]} : vector<16x16x4xf32> to vector<16x1x4xf32>
    %c1_i32_16 = arith.constant 1 : i32
    %43 = tpu.dynamic_rotate %39 by %c1_i32_16 dim 1 : vector<16x16x4xf32>, i32 -> vector<16x16x4xf32>
    %44 = vector.shape_cast %42 : vector<16x1x4xf32> to vector<16x1x4xf32>
    %45 = vector.broadcast %44 : vector<16x1x4xf32> to vector<16x16x4xf32>
    %46 = arith.select %41, %45, %43 : vector<16x16x4xi1>, vector<16x16x4xf32>
    %c15_i32_17 = arith.constant 15 : i32
    %47 = vector.broadcast %c15_i32_17 : i32 to vector<16x16x4xi32>
    %48 = arith.cmpi eq, %7, %47 : vector<16x16x4xi32>
    %49 = vector.extract_strided_slice %39 {offsets = [0, 14, 0], sizes = [16, 1, 4], strides = [1, 1, 1]} : vector<16x16x4xf32> to vector<16x1x4xf32>
    %c15_i32_18 = arith.constant 15 : i32
    %50 = tpu.dynamic_rotate %39 by %c15_i32_18 dim 1 : vector<16x16x4xf32>, i32 -> vector<16x16x4xf32>
    %51 = vector.shape_cast %49 : vector<16x1x4xf32> to vector<16x1x4xf32>
    %52 = vector.broadcast %51 : vector<16x1x4xf32> to vector<16x16x4xf32>
    %53 = arith.select %48, %52, %50 : vector<16x16x4xi1>, vector<16x16x4xf32>
    %54 = vector.shape_cast %46 : vector<16x16x4xf32> to vector<256x4xf32>
    %55 = vector.extract_strided_slice %2 {offsets = [1, 0, 0, 0], sizes = [1, 1, 4, 4], strides = [1, 1, 1, 1]} : vector<3x3x4x4xf32> to vector<1x1x4x4xf32>
    %56 = vector.shape_cast %55 : vector<1x1x4x4xf32> to vector<4x4xf32>
    %cst_19 = arith.constant dense<0.000000e+00> : vector<256x4xf32>
    %57 = tpu.matmul %54, %56, %cst_19 {dimension_numbers = #tpu.dot_dimension_numbers<[1], [0], [0], [1], [0, 0, 1, 1], [], []>} : vector<256x4xf32>, vector<4x4xf32>, vector<256x4xf32> -> vector<256x4xf32>
    %58 = arith.addf %38, %57 : vector<256x4xf32>
    %59 = vector.shape_cast %39 : vector<16x16x4xf32> to vector<256x4xf32>
    %60 = vector.extract_strided_slice %2 {offsets = [1, 1, 0, 0], sizes = [1, 1, 4, 4], strides = [1, 1, 1, 1]} : vector<3x3x4x4xf32> to vector<1x1x4x4xf32>
    %61 = vector.shape_cast %60 : vector<1x1x4x4xf32> to vector<4x4xf32>
    %cst_20 = arith.constant dense<0.000000e+00> : vector<256x4xf32>
    %62 = tpu.matmul %59, %61, %cst_20 {dimension_numbers = #tpu.dot_dimension_numbers<[1], [0], [0], [1], [0, 0, 1, 1], [], []>} : vector<256x4xf32>, vector<4x4xf32>, vector<256x4xf32> -> vector<256x4xf32>
    %63 = arith.addf %58, %62 : vector<256x4xf32>
    %64 = vector.shape_cast %53 : vector<16x16x4xf32> to vector<256x4xf32>
    %65 = vector.extract_strided_slice %2 {offsets = [1, 2, 0, 0], sizes = [1, 1, 4, 4], strides = [1, 1, 1, 1]} : vector<3x3x4x4xf32> to vector<1x1x4x4xf32>
    %66 = vector.shape_cast %65 : vector<1x1x4x4xf32> to vector<4x4xf32>
    %cst_21 = arith.constant dense<0.000000e+00> : vector<256x4xf32>
    %67 = tpu.matmul %64, %66, %cst_21 {dimension_numbers = #tpu.dot_dimension_numbers<[1], [0], [0], [1], [0, 0, 1, 1], [], []>} : vector<256x4xf32>, vector<4x4xf32>, vector<256x4xf32> -> vector<256x4xf32>
    %68 = arith.addf %63, %67 : vector<256x4xf32>
    %69 = vector.extract_strided_slice %6 {offsets = [2, 0, 0], sizes = [16, 16, 4], strides = [1, 1, 1]} : vector<18x16x4xf32> to vector<16x16x4xf32>
    %c0_i32_22 = arith.constant 0 : i32
    %70 = vector.broadcast %c0_i32_22 : i32 to vector<16x16x4xi32>
    %71 = arith.cmpi eq, %7, %70 : vector<16x16x4xi32>
    %72 = vector.extract_strided_slice %69 {offsets = [0, 1, 0], sizes = [16, 1, 4], strides = [1, 1, 1]} : vector<16x16x4xf32> to vector<16x1x4xf32>
    %c1_i32_23 = arith.constant 1 : i32
    %73 = tpu.dynamic_rotate %69 by %c1_i32_23 dim 1 : vector<16x16x4xf32>, i32 -> vector<16x16x4xf32>
    %74 = vector.shape_cast %72 : vector<16x1x4xf32> to vector<16x1x4xf32>
    %75 = vector.broadcast %74 : vector<16x1x4xf32> to vector<16x16x4xf32>
    %76 = arith.select %71, %75, %73 : vector<16x16x4xi1>, vector<16x16x4xf32>
    %c15_i32_24 = arith.constant 15 : i32
    %77 = vector.broadcast %c15_i32_24 : i32 to vector<16x16x4xi32>
    %78 = arith.cmpi eq, %7, %77 : vector<16x16x4xi32>
    %79 = vector.extract_strided_slice %69 {offsets = [0, 14, 0], sizes = [16, 1, 4], strides = [1, 1, 1]} : vector<16x16x4xf32> to vector<16x1x4xf32>
    %c15_i32_25 = arith.constant 15 : i32
    %80 = tpu.dynamic_rotate %69 by %c15_i32_25 dim 1 : vector<16x16x4xf32>, i32 -> vector<16x16x4xf32>
    %81 = vector.shape_cast %79 : vector<16x1x4xf32> to vector<16x1x4xf32>
    %82 = vector.broadcast %81 : vector<16x1x4xf32> to vector<16x16x4xf32>
    %83 = arith.select %78, %82, %80 : vector<16x16x4xi1>, vector<16x16x4xf32>
    %84 = vector.shape_cast %76 : vector<16x16x4xf32> to vector<256x4xf32>
    %85 = vector.extract_strided_slice %2 {offsets = [2, 0, 0, 0], sizes = [1, 1, 4, 4], strides = [1, 1, 1, 1]} : vector<3x3x4x4xf32> to vector<1x1x4x4xf32>
    %86 = vector.shape_cast %85 : vector<1x1x4x4xf32> to vector<4x4xf32>
    %cst_26 = arith.constant dense<0.000000e+00> : vector<256x4xf32>
    %87 = tpu.matmul %84, %86, %cst_26 {dimension_numbers = #tpu.dot_dimension_numbers<[1], [0], [0], [1], [0, 0, 1, 1], [], []>} : vector<256x4xf32>, vector<4x4xf32>, vector<256x4xf32> -> vector<256x4xf32>
    %88 = arith.addf %68, %87 : vector<256x4xf32>
    %89 = vector.shape_cast %69 : vector<16x16x4xf32> to vector<256x4xf32>
    %90 = vector.extract_strided_slice %2 {offsets = [2, 1, 0, 0], sizes = [1, 1, 4, 4], strides = [1, 1, 1, 1]} : vector<3x3x4x4xf32> to vector<1x1x4x4xf32>
    %91 = vector.shape_cast %90 : vector<1x1x4x4xf32> to vector<4x4xf32>
    %cst_27 = arith.constant dense<0.000000e+00> : vector<256x4xf32>
    %92 = tpu.matmul %89, %91, %cst_27 {dimension_numbers = #tpu.dot_dimension_numbers<[1], [0], [0], [1], [0, 0, 1, 1], [], []>} : vector<256x4xf32>, vector<4x4xf32>, vector<256x4xf32> -> vector<256x4xf32>
    %93 = arith.addf %88, %92 : vector<256x4xf32>
    %94 = vector.shape_cast %83 : vector<16x16x4xf32> to vector<256x4xf32>
    %95 = vector.extract_strided_slice %2 {offsets = [2, 2, 0, 0], sizes = [1, 1, 4, 4], strides = [1, 1, 1, 1]} : vector<3x3x4x4xf32> to vector<1x1x4x4xf32>
    %96 = vector.shape_cast %95 : vector<1x1x4x4xf32> to vector<4x4xf32>
    %cst_28 = arith.constant dense<0.000000e+00> : vector<256x4xf32>
    %97 = tpu.matmul %94, %96, %cst_28 {dimension_numbers = #tpu.dot_dimension_numbers<[1], [0], [0], [1], [0, 0, 1, 1], [], []>} : vector<256x4xf32>, vector<4x4xf32>, vector<256x4xf32> -> vector<256x4xf32>
    %98 = arith.addf %93, %97 : vector<256x4xf32>
    %99 = vector.shape_cast %98 : vector<256x4xf32> to vector<16x16x4xf32>
    %cst_29 = arith.constant dense<0.000000e+00> : vector<4xf32>
    %100 = vector.multi_reduction <add>, %99, %cst_29 [0, 1] : vector<16x16x4xf32> to vector<4xf32>
    %101 = vector.shape_cast %100 : vector<4xf32> to vector<1x1x4xf32>
    %cst_30 = arith.constant 2.560000e+02 : f32
    %102 = vector.broadcast %cst_30 : f32 to vector<1x1x4xf32>
    %103 = arith.divf %101, %102 : vector<1x1x4xf32>
    %104 = vector.broadcast %103 : vector<1x1x4xf32> to vector<16x16x4xf32>
    %105 = arith.subf %99, %104 : vector<16x16x4xf32>
    %106 = arith.mulf %105, %105 : vector<16x16x4xf32>
    %cst_31 = arith.constant dense<0.000000e+00> : vector<4xf32>
    %107 = vector.multi_reduction <add>, %106, %cst_31 [0, 1] : vector<16x16x4xf32> to vector<4xf32>
    %108 = vector.shape_cast %107 : vector<4xf32> to vector<1x1x4xf32>
    %cst_32 = arith.constant 2.560000e+02 : f32
    %109 = vector.broadcast %cst_32 : f32 to vector<1x1x4xf32>
    %110 = arith.divf %108, %109 : vector<1x1x4xf32>
    %cst_33 = arith.constant 9.99999974E-6 : f32
    %111 = vector.broadcast %cst_33 : f32 to vector<1x1x4xf32>
    %112 = arith.addf %110, %111 : vector<1x1x4xf32>
    %113 = math.rsqrt %112 : vector<1x1x4xf32>
    %114 = vector.broadcast %113 : vector<1x1x4xf32> to vector<16x16x4xf32>
    %115 = arith.mulf %105, %114 : vector<16x16x4xf32>
    %cst_34 = arith.constant 0.000000e+00 : f32
    %116 = vector.broadcast %cst_34 : f32 to vector<16x16x4xf32>
    %117 = arith.maximumf %115, %116 : vector<16x16x4xf32>
    %118 = vector.extract_strided_slice %117 {offsets = [1, 0, 0], sizes = [1, 16, 4], strides = [1, 1, 1]} : vector<16x16x4xf32> to vector<1x16x4xf32>
    %119 = vector.extract_strided_slice %117 {offsets = [14, 0, 0], sizes = [1, 16, 4], strides = [1, 1, 1]} : vector<16x16x4xf32> to vector<1x16x4xf32>
    %120 = tpu.concatenate %118, %117, %119 in 0 : vector<1x16x4xf32>, vector<16x16x4xf32>, vector<1x16x4xf32> -> vector<18x16x4xf32>
    %121 = tpu.iota {dimensions = array<i32: 1>} : vector<16x16x4xi32>
    %cst_35 = arith.constant 0.000000e+00 : f32
    %122 = vector.broadcast %cst_35 : f32 to vector<256x4xf32>
    %123 = vector.extract_strided_slice %120 {offsets = [0, 0, 0], sizes = [16, 16, 4], strides = [1, 1, 1]} : vector<18x16x4xf32> to vector<16x16x4xf32>
    %c0_i32_36 = arith.constant 0 : i32
    %124 = vector.broadcast %c0_i32_36 : i32 to vector<16x16x4xi32>
    %125 = arith.cmpi eq, %121, %124 : vector<16x16x4xi32>
    %126 = vector.extract_strided_slice %123 {offsets = [0, 1, 0], sizes = [16, 1, 4], strides = [1, 1, 1]} : vector<16x16x4xf32> to vector<16x1x4xf32>
    %c1_i32_37 = arith.constant 1 : i32
    %127 = tpu.dynamic_rotate %123 by %c1_i32_37 dim 1 : vector<16x16x4xf32>, i32 -> vector<16x16x4xf32>
    %128 = vector.shape_cast %126 : vector<16x1x4xf32> to vector<16x1x4xf32>
    %129 = vector.broadcast %128 : vector<16x1x4xf32> to vector<16x16x4xf32>
    %130 = arith.select %125, %129, %127 : vector<16x16x4xi1>, vector<16x16x4xf32>
    %c15_i32_38 = arith.constant 15 : i32
    %131 = vector.broadcast %c15_i32_38 : i32 to vector<16x16x4xi32>
    %132 = arith.cmpi eq, %121, %131 : vector<16x16x4xi32>
    %133 = vector.extract_strided_slice %123 {offsets = [0, 14, 0], sizes = [16, 1, 4], strides = [1, 1, 1]} : vector<16x16x4xf32> to vector<16x1x4xf32>
    %c15_i32_39 = arith.constant 15 : i32
    %134 = tpu.dynamic_rotate %123 by %c15_i32_39 dim 1 : vector<16x16x4xf32>, i32 -> vector<16x16x4xf32>
    %135 = vector.shape_cast %133 : vector<16x1x4xf32> to vector<16x1x4xf32>
    %136 = vector.broadcast %135 : vector<16x1x4xf32> to vector<16x16x4xf32>
    %137 = arith.select %132, %136, %134 : vector<16x16x4xi1>, vector<16x16x4xf32>
    %138 = vector.shape_cast %130 : vector<16x16x4xf32> to vector<256x4xf32>
    %139 = vector.extract_strided_slice %3 {offsets = [0, 0, 0, 0], sizes = [1, 1, 4, 4], strides = [1, 1, 1, 1]} : vector<3x3x4x4xf32> to vector<1x1x4x4xf32>
    %140 = vector.shape_cast %139 : vector<1x1x4x4xf32> to vector<4x4xf32>
    %cst_40 = arith.constant dense<0.000000e+00> : vector<256x4xf32>
    %141 = tpu.matmul %138, %140, %cst_40 {dimension_numbers = #tpu.dot_dimension_numbers<[1], [0], [0], [1], [0, 0, 1, 1], [], []>} : vector<256x4xf32>, vector<4x4xf32>, vector<256x4xf32> -> vector<256x4xf32>
    %142 = arith.addf %122, %141 : vector<256x4xf32>
    %143 = vector.shape_cast %123 : vector<16x16x4xf32> to vector<256x4xf32>
    %144 = vector.extract_strided_slice %3 {offsets = [0, 1, 0, 0], sizes = [1, 1, 4, 4], strides = [1, 1, 1, 1]} : vector<3x3x4x4xf32> to vector<1x1x4x4xf32>
    %145 = vector.shape_cast %144 : vector<1x1x4x4xf32> to vector<4x4xf32>
    %cst_41 = arith.constant dense<0.000000e+00> : vector<256x4xf32>
    %146 = tpu.matmul %143, %145, %cst_41 {dimension_numbers = #tpu.dot_dimension_numbers<[1], [0], [0], [1], [0, 0, 1, 1], [], []>} : vector<256x4xf32>, vector<4x4xf32>, vector<256x4xf32> -> vector<256x4xf32>
    %147 = arith.addf %142, %146 : vector<256x4xf32>
    %148 = vector.shape_cast %137 : vector<16x16x4xf32> to vector<256x4xf32>
    %149 = vector.extract_strided_slice %3 {offsets = [0, 2, 0, 0], sizes = [1, 1, 4, 4], strides = [1, 1, 1, 1]} : vector<3x3x4x4xf32> to vector<1x1x4x4xf32>
    %150 = vector.shape_cast %149 : vector<1x1x4x4xf32> to vector<4x4xf32>
    %cst_42 = arith.constant dense<0.000000e+00> : vector<256x4xf32>
    %151 = tpu.matmul %148, %150, %cst_42 {dimension_numbers = #tpu.dot_dimension_numbers<[1], [0], [0], [1], [0, 0, 1, 1], [], []>} : vector<256x4xf32>, vector<4x4xf32>, vector<256x4xf32> -> vector<256x4xf32>
    %152 = arith.addf %147, %151 : vector<256x4xf32>
    %153 = vector.extract_strided_slice %120 {offsets = [1, 0, 0], sizes = [16, 16, 4], strides = [1, 1, 1]} : vector<18x16x4xf32> to vector<16x16x4xf32>
    %c0_i32_43 = arith.constant 0 : i32
    %154 = vector.broadcast %c0_i32_43 : i32 to vector<16x16x4xi32>
    %155 = arith.cmpi eq, %121, %154 : vector<16x16x4xi32>
    %156 = vector.extract_strided_slice %153 {offsets = [0, 1, 0], sizes = [16, 1, 4], strides = [1, 1, 1]} : vector<16x16x4xf32> to vector<16x1x4xf32>
    %c1_i32_44 = arith.constant 1 : i32
    %157 = tpu.dynamic_rotate %153 by %c1_i32_44 dim 1 : vector<16x16x4xf32>, i32 -> vector<16x16x4xf32>
    %158 = vector.shape_cast %156 : vector<16x1x4xf32> to vector<16x1x4xf32>
    %159 = vector.broadcast %158 : vector<16x1x4xf32> to vector<16x16x4xf32>
    %160 = arith.select %155, %159, %157 : vector<16x16x4xi1>, vector<16x16x4xf32>
    %c15_i32_45 = arith.constant 15 : i32
    %161 = vector.broadcast %c15_i32_45 : i32 to vector<16x16x4xi32>
    %162 = arith.cmpi eq, %121, %161 : vector<16x16x4xi32>
    %163 = vector.extract_strided_slice %153 {offsets = [0, 14, 0], sizes = [16, 1, 4], strides = [1, 1, 1]} : vector<16x16x4xf32> to vector<16x1x4xf32>
    %c15_i32_46 = arith.constant 15 : i32
    %164 = tpu.dynamic_rotate %153 by %c15_i32_46 dim 1 : vector<16x16x4xf32>, i32 -> vector<16x16x4xf32>
    %165 = vector.shape_cast %163 : vector<16x1x4xf32> to vector<16x1x4xf32>
    %166 = vector.broadcast %165 : vector<16x1x4xf32> to vector<16x16x4xf32>
    %167 = arith.select %162, %166, %164 : vector<16x16x4xi1>, vector<16x16x4xf32>
    %168 = vector.shape_cast %160 : vector<16x16x4xf32> to vector<256x4xf32>
    %169 = vector.extract_strided_slice %3 {offsets = [1, 0, 0, 0], sizes = [1, 1, 4, 4], strides = [1, 1, 1, 1]} : vector<3x3x4x4xf32> to vector<1x1x4x4xf32>
    %170 = vector.shape_cast %169 : vector<1x1x4x4xf32> to vector<4x4xf32>
    %cst_47 = arith.constant dense<0.000000e+00> : vector<256x4xf32>
    %171 = tpu.matmul %168, %170, %cst_47 {dimension_numbers = #tpu.dot_dimension_numbers<[1], [0], [0], [1], [0, 0, 1, 1], [], []>} : vector<256x4xf32>, vector<4x4xf32>, vector<256x4xf32> -> vector<256x4xf32>
    %172 = arith.addf %152, %171 : vector<256x4xf32>
    %173 = vector.shape_cast %153 : vector<16x16x4xf32> to vector<256x4xf32>
    %174 = vector.extract_strided_slice %3 {offsets = [1, 1, 0, 0], sizes = [1, 1, 4, 4], strides = [1, 1, 1, 1]} : vector<3x3x4x4xf32> to vector<1x1x4x4xf32>
    %175 = vector.shape_cast %174 : vector<1x1x4x4xf32> to vector<4x4xf32>
    %cst_48 = arith.constant dense<0.000000e+00> : vector<256x4xf32>
    %176 = tpu.matmul %173, %175, %cst_48 {dimension_numbers = #tpu.dot_dimension_numbers<[1], [0], [0], [1], [0, 0, 1, 1], [], []>} : vector<256x4xf32>, vector<4x4xf32>, vector<256x4xf32> -> vector<256x4xf32>
    %177 = arith.addf %172, %176 : vector<256x4xf32>
    %178 = vector.shape_cast %167 : vector<16x16x4xf32> to vector<256x4xf32>
    %179 = vector.extract_strided_slice %3 {offsets = [1, 2, 0, 0], sizes = [1, 1, 4, 4], strides = [1, 1, 1, 1]} : vector<3x3x4x4xf32> to vector<1x1x4x4xf32>
    %180 = vector.shape_cast %179 : vector<1x1x4x4xf32> to vector<4x4xf32>
    %cst_49 = arith.constant dense<0.000000e+00> : vector<256x4xf32>
    %181 = tpu.matmul %178, %180, %cst_49 {dimension_numbers = #tpu.dot_dimension_numbers<[1], [0], [0], [1], [0, 0, 1, 1], [], []>} : vector<256x4xf32>, vector<4x4xf32>, vector<256x4xf32> -> vector<256x4xf32>
    %182 = arith.addf %177, %181 : vector<256x4xf32>
    %183 = vector.extract_strided_slice %120 {offsets = [2, 0, 0], sizes = [16, 16, 4], strides = [1, 1, 1]} : vector<18x16x4xf32> to vector<16x16x4xf32>
    %c0_i32_50 = arith.constant 0 : i32
    %184 = vector.broadcast %c0_i32_50 : i32 to vector<16x16x4xi32>
    %185 = arith.cmpi eq, %121, %184 : vector<16x16x4xi32>
    %186 = vector.extract_strided_slice %183 {offsets = [0, 1, 0], sizes = [16, 1, 4], strides = [1, 1, 1]} : vector<16x16x4xf32> to vector<16x1x4xf32>
    %c1_i32_51 = arith.constant 1 : i32
    %187 = tpu.dynamic_rotate %183 by %c1_i32_51 dim 1 : vector<16x16x4xf32>, i32 -> vector<16x16x4xf32>
    %188 = vector.shape_cast %186 : vector<16x1x4xf32> to vector<16x1x4xf32>
    %189 = vector.broadcast %188 : vector<16x1x4xf32> to vector<16x16x4xf32>
    %190 = arith.select %185, %189, %187 : vector<16x16x4xi1>, vector<16x16x4xf32>
    %c15_i32_52 = arith.constant 15 : i32
    %191 = vector.broadcast %c15_i32_52 : i32 to vector<16x16x4xi32>
    %192 = arith.cmpi eq, %121, %191 : vector<16x16x4xi32>
    %193 = vector.extract_strided_slice %183 {offsets = [0, 14, 0], sizes = [16, 1, 4], strides = [1, 1, 1]} : vector<16x16x4xf32> to vector<16x1x4xf32>
    %c15_i32_53 = arith.constant 15 : i32
    %194 = tpu.dynamic_rotate %183 by %c15_i32_53 dim 1 : vector<16x16x4xf32>, i32 -> vector<16x16x4xf32>
    %195 = vector.shape_cast %193 : vector<16x1x4xf32> to vector<16x1x4xf32>
    %196 = vector.broadcast %195 : vector<16x1x4xf32> to vector<16x16x4xf32>
    %197 = arith.select %192, %196, %194 : vector<16x16x4xi1>, vector<16x16x4xf32>
    %198 = vector.shape_cast %190 : vector<16x16x4xf32> to vector<256x4xf32>
    %199 = vector.extract_strided_slice %3 {offsets = [2, 0, 0, 0], sizes = [1, 1, 4, 4], strides = [1, 1, 1, 1]} : vector<3x3x4x4xf32> to vector<1x1x4x4xf32>
    %200 = vector.shape_cast %199 : vector<1x1x4x4xf32> to vector<4x4xf32>
    %cst_54 = arith.constant dense<0.000000e+00> : vector<256x4xf32>
    %201 = tpu.matmul %198, %200, %cst_54 {dimension_numbers = #tpu.dot_dimension_numbers<[1], [0], [0], [1], [0, 0, 1, 1], [], []>} : vector<256x4xf32>, vector<4x4xf32>, vector<256x4xf32> -> vector<256x4xf32>
    %202 = arith.addf %182, %201 : vector<256x4xf32>
    %203 = vector.shape_cast %183 : vector<16x16x4xf32> to vector<256x4xf32>
    %204 = vector.extract_strided_slice %3 {offsets = [2, 1, 0, 0], sizes = [1, 1, 4, 4], strides = [1, 1, 1, 1]} : vector<3x3x4x4xf32> to vector<1x1x4x4xf32>
    %205 = vector.shape_cast %204 : vector<1x1x4x4xf32> to vector<4x4xf32>
    %cst_55 = arith.constant dense<0.000000e+00> : vector<256x4xf32>
    %206 = tpu.matmul %203, %205, %cst_55 {dimension_numbers = #tpu.dot_dimension_numbers<[1], [0], [0], [1], [0, 0, 1, 1], [], []>} : vector<256x4xf32>, vector<4x4xf32>, vector<256x4xf32> -> vector<256x4xf32>
    %207 = arith.addf %202, %206 : vector<256x4xf32>
    %208 = vector.shape_cast %197 : vector<16x16x4xf32> to vector<256x4xf32>
    %209 = vector.extract_strided_slice %3 {offsets = [2, 2, 0, 0], sizes = [1, 1, 4, 4], strides = [1, 1, 1, 1]} : vector<3x3x4x4xf32> to vector<1x1x4x4xf32>
    %210 = vector.shape_cast %209 : vector<1x1x4x4xf32> to vector<4x4xf32>
    %cst_56 = arith.constant dense<0.000000e+00> : vector<256x4xf32>
    %211 = tpu.matmul %208, %210, %cst_56 {dimension_numbers = #tpu.dot_dimension_numbers<[1], [0], [0], [1], [0, 0, 1, 1], [], []>} : vector<256x4xf32>, vector<4x4xf32>, vector<256x4xf32> -> vector<256x4xf32>
    %212 = arith.addf %207, %211 : vector<256x4xf32>
    %213 = vector.shape_cast %212 : vector<256x4xf32> to vector<16x16x4xf32>
    %cst_57 = arith.constant dense<0.000000e+00> : vector<4xf32>
    %214 = vector.multi_reduction <add>, %213, %cst_57 [0, 1] : vector<16x16x4xf32> to vector<4xf32>
    %215 = vector.shape_cast %214 : vector<4xf32> to vector<1x1x4xf32>
    %cst_58 = arith.constant 2.560000e+02 : f32
    %216 = vector.broadcast %cst_58 : f32 to vector<1x1x4xf32>
    %217 = arith.divf %215, %216 : vector<1x1x4xf32>
    %218 = vector.broadcast %217 : vector<1x1x4xf32> to vector<16x16x4xf32>
    %219 = arith.subf %213, %218 : vector<16x16x4xf32>
    %220 = arith.mulf %219, %219 : vector<16x16x4xf32>
    %cst_59 = arith.constant dense<0.000000e+00> : vector<4xf32>
    %221 = vector.multi_reduction <add>, %220, %cst_59 [0, 1] : vector<16x16x4xf32> to vector<4xf32>
    %222 = vector.shape_cast %221 : vector<4xf32> to vector<1x1x4xf32>
    %cst_60 = arith.constant 2.560000e+02 : f32
    %223 = vector.broadcast %cst_60 : f32 to vector<1x1x4xf32>
    %224 = arith.divf %222, %223 : vector<1x1x4xf32>
    %cst_61 = arith.constant 9.99999974E-6 : f32
    %225 = vector.broadcast %cst_61 : f32 to vector<1x1x4xf32>
    %226 = arith.addf %224, %225 : vector<1x1x4xf32>
    %227 = math.rsqrt %226 : vector<1x1x4xf32>
    %228 = vector.broadcast %227 : vector<1x1x4xf32> to vector<16x16x4xf32>
    %229 = arith.mulf %219, %228 : vector<16x16x4xf32>
    %230 = arith.addf %1, %229 : vector<16x16x4xf32>
    %c0_62 = arith.constant 0 : index
    %c0_63 = arith.constant 0 : index
    %c0_64 = arith.constant 0 : index
    %c0_65 = arith.constant 0 : index
    %231 = vector.load %arg4[%c0_62, %c0_63, %c0_64, %c0_65] : memref<1x16x16x4xf32, #tpu.memory_space<vmem>>, vector<1x16x16x4xf32>
    %232 = vector.shape_cast %231 : vector<1x16x16x4xf32> to vector<16x16x4xf32>
    %233 = vector.shape_cast %230 : vector<16x16x4xf32> to vector<1x16x16x4xf32>
    tpu.vector_store %arg4[%c0_62, %c0_63, %c0_64, %c0_65], %233 {strides = array<i32>} : memref<1x16x16x4xf32, #tpu.memory_space<vmem>>, vector<1x16x16x4xf32>,
    return
  }
  func.func @transform_0(%arg0: i32) -> (i32, i32, i32, i32) {
    %c0_i32 = arith.constant 0 : i32
    %c0_i32_0 = arith.constant 0 : i32
    %c0_i32_1 = arith.constant 0 : i32
    %c0_i32_2 = arith.constant 0 : i32
    return %arg0, %c0_i32, %c0_i32_0, %c0_i32_1 : i32, i32, i32, i32
  }
  func.func @transform_1(%arg0: i32) -> (i32, i32, i32, i32) {
    %c0_i32 = arith.constant 0 : i32
    %c0_i32_0 = arith.constant 0 : i32
    %c0_i32_1 = arith.constant 0 : i32
    %c0_i32_2 = arith.constant 0 : i32
    %c0_i32_3 = arith.constant 0 : i32
    return %c0_i32, %c0_i32_0, %c0_i32_1, %c0_i32_2 : i32, i32, i32, i32
  }
  func.func @transform_2(%arg0: i32) -> (i32, i32, i32, i32) {
    %c0_i32 = arith.constant 0 : i32
    %c0_i32_0 = arith.constant 0 : i32
    %c0_i32_1 = arith.constant 0 : i32
    %c0_i32_2 = arith.constant 0 : i32
    %c0_i32_3 = arith.constant 0 : i32
    return %c0_i32, %c0_i32_0, %c0_i32_1, %c0_i32_2 : i32, i32, i32, i32
  }
  func.func @transform_3(%arg0: i32) -> (i32, i32, i32, i32) {
    %c0_i32 = arith.constant 0 : i32
    %c0_i32_0 = arith.constant 0 : i32
    %c0_i32_1 = arith.constant 0 : i32
    %c0_i32_2 = arith.constant 0 : i32
    return %arg0, %c0_i32, %c0_i32_0, %c0_i32_1 : i32, i32, i32, i32
  }
}

</mosaic_0001>

<llo_original>
// kernel: resnet_block_forward.1
$region0: #{resnet_block_forward.1}
  #allocation0 [shape = 'u32[]', space=smem, size = 0x4, offset = 0x4, fixed_abs, tag = 'smem constant byte address 0x4 - core index']
  #allocation1 [shape = 'u32[144,128]{1,0:T(1,128)}', space=vmem, size = 0x12000, scoped, tag = 'internal scratch']
  %s0 = inlined_call_operand.vmem [shape: f32[2,16,16,4], index: 0, kind: input, shape index: {}]
  %s1 = inlined_call_operand.vmem [shape: f32[3,3,4,4], index: 1, kind: input, shape index: {}]
  %s2 = inlined_call_operand.vmem [shape: f32[3,3,4,4], index: 2, kind: input, shape index: {}]
  %s3 = inlined_call_operand.vmem [shape: f32[2,16,16,4], index: 3, kind: output, shape index: {}]
  %s4 = sld [smem:[#allocation0]]
  $region45: #{resnet_block_forward.1} parent=0
    _
  %s6 = ssub.s32 1, %s4
  %s7 = scalar_select 0, %s6, %s4
  loop: start=0, step=1, limit=4
  $region2: #{resnet_block_forward.1} parent=0 // loop_pre_header
    _
  $region3: #{resnet_block_forward.1} parent=0 // loop_header
    %s9 = sphi 0, %s13
    %p10 = scmp.ge.s32.totalorder %s9, 4
    %s19 = sphi 0, %s21
    %s22 = sphi 0, %s19
    %s23 = sphi 0, %s22
    %s39 = sphi 0, %s23
    %s43 = sphi 0, %s43
    %s45 = sphi 0, %s43
    %s46 = sphi 0, %s45
    %s60 = sphi 0, %s46
    %s64 = sphi 0, %s64
    %s66 = sphi 0, %s64
    %s67 = sphi 0, %s66
    %s81 = sphi 0, %s67
    %s87 = sphi 0, %s89
    %s90 = sphi 0, %s87
    %s91 = sphi 0, %s90
    %s107 = sphi 0, %s91
  $region4: #{resnet_block_forward.1} parent=0 // loop_header_branch
    %12 = sbr.rel (%p10) target = $region8
  $region5: #{resnet_block_forward.1} parent=0 // loop_body
    %s14 = ssub.s32 %s9, 1
    %s15 = ssub.s32 %s9, 2
    %s16 = sadd.s32 %s9, 1
    %s17 = ssub.s32 %s9, %s16
    %p18 = scmp.eq.s32.totalorder %s17, 0
    %s20 = sadd.s32 %s19, 1
    %s21 = scalar_select %p18, %s19, %s20
    %p24 = pneg %p18
    %p25 = scmp.eq.s32.totalorder %s9, 1
    %p26 = por %p24, %p25
    %p27 = scmp.ne.s32.totalorder %s19, %s22
    %p28 = scmp.eq.s32.totalorder %s9, 0
    %p29 = por %p27, %p28
    %p30 = scmp.ne.s32.totalorder %s19, %s22
    %p31 = scmp.eq.s32.totalorder %s14, 1
    %p32 = por %p30, %p31
    %p33 = scmp.ne.s32.totalorder %s22, %s23
    %p34 = scmp.eq.s32.totalorder %s14, 0
    %p35 = por %p33, %p34
    %p36 = scmp.ne.s32.totalorder %s22, %s23
    %p37 = scmp.eq.s32.totalorder %s15, 1
    %p38 = por %p36, %p37
    %p40 = scmp.ne.s32.totalorder %s23, %s39
    %p41 = scmp.eq.s32.totalorder %s15, 0
    %p42 = por %p40, %p41
    %s44 = sadd.s32 %s43, 1
    %p47 = scmp.eq.s32.totalorder %s9, 1
    %p48 = scmp.ne.s32.totalorder %s43, %s45
    %p49 = scmp.eq.s32.totalorder %s9, 0
    %p50 = por %p48, %p49
    %p51 = scmp.ne.s32.totalorder %s43, %s45
    %p52 = scmp.eq.s32.totalorder %s14, 1
    %p53 = por %p51, %p52
    %p54 = scmp.ne.s32.totalorder %s45, %s46
    %p55 = scmp.eq.s32.totalorder %s14, 0
    %p56 = por %p54, %p55
    %p57 = scmp.ne.s32.totalorder %s45, %s46
    %p58 = scmp.eq.s32.totalorder %s15, 1
    %p59 = por %p57, %p58
    %p61 = scmp.ne.s32.totalorder %s46, %s60
    %p62 = scmp.eq.s32.totalorder %s15, 0
    %p63 = por %p61, %p62
    %s65 = sadd.s32 %s64, 1
    %p68 = scmp.eq.s32.totalorder %s9, 1
    %p69 = scmp.ne.s32.totalorder %s64, %s66
    %p70 = scmp.eq.s32.totalorder %s9, 0
    %p71 = por %p69, %p70
    %p72 = scmp.ne.s32.totalorder %s64, %s66
    %p73 = scmp.eq.s32.totalorder %s14, 1
    %p74 = por %p72, %p73
    %p75 = scmp.ne.s32.totalorder %s66, %s67
    %p76 = scmp.eq.s32.totalorder %s14, 0
    %p77 = por %p75, %p76
    %p78 = scmp.ne.s32.totalorder %s66, %s67
    %p79 = scmp.eq.s32.totalorder %s15, 1
    %p80 = por %p78, %p79
    %p82 = scmp.ne.s32.totalorder %s67, %s81
    %p83 = scmp.eq.s32.totalorder %s15, 0
    %p84 = por %p82, %p83
    %s85 = ssub.s32 %s9, %s16
    %p86 = scmp.eq.s32.totalorder %s85, 0
    %s88 = sadd.s32 %s87, 1
    %s89 = scalar_select %p86, %s87, %s88
    %p92 = pneg %p86
    %p93 = scmp.eq.s32.totalorder %s9, 1
    %p94 = por %p92, %p93
    %p95 = scmp.ne.s32.totalorder %s87, %s90
    %p96 = scmp.eq.s32.totalorder %s9, 0
    %p97 = por %p95, %p96
    %p98 = scmp.ne.s32.totalorder %s87, %s90
    %p99 = scmp.eq.s32.totalorder %s14, 1
    %p100 = por %p98, %p99
    %p101 = scmp.ne.s32.totalorder %s90, %s91
    %p102 = scmp.eq.s32.totalorder %s14, 0
    %p103 = por %p101, %p102
    %p104 = scmp.ne.s32.totalorder %s90, %s91
    %p105 = scmp.eq.s32.totalorder %s15, 1
    %p106 = por %p104, %p105
    %p108 = scmp.ne.s32.totalorder %s91, %s107
    %p109 = scmp.eq.s32.totalorder %s15, 0
    %p110 = por %p108, %p109
    %p111 = scmp.le.s32.totalorder 1, %s9
    %p112 = scmp.lt.s32.totalorder %s9, 3
    %p113 = pnand %p111, %p112
    %p114 = pneg %p113
    // Predicated region
    $region9: #{resnet_block_forward.1} parent=5 // pred_check
      _
    $region10: #{resnet_block_forward.1} parent=5 // pred_check_branch
      %116 = sbr.rel (%p113) target = $region12
    $region11: #{resnet_block_forward.1} parent=5 // pred_region
      %s117 = ssub.s32 %s9, 1
      // Predicated region
      $region13: #{resnet_block_forward.1} parent=11 // pred_check
        %p118 = pneg %p56
      $region14: #{resnet_block_forward.1} parent=11 // pred_check_branch
        %120 = sbr.rel (%p118) target = $region16
      $region15: #{resnet_block_forward.1} parent=11 // pred_region
        _
      $region16: #{resnet_block_forward.1} parent=11 // pred_fallthru
        _
      // Predicated region
      $region17: #{resnet_block_forward.1} parent=11 // pred_check
        %p121 = pneg %p77
      $region18: #{resnet_block_forward.1} parent=11 // pred_check_branch
        %123 = sbr.rel (%p121) target = $region20
      $region19: #{resnet_block_forward.1} parent=11 // pred_region
        _
      $region20: #{resnet_block_forward.1} parent=11 // pred_fallthru
        _
    $region12: #{resnet_block_forward.1} parent=5 // pred_fallthru
      _
    %p124 = scmp.lt.s32.totalorder %s9, 2
    // Predicated region
    $region21: #{resnet_block_forward.1} parent=5 // pred_check
      %p125 = pneg %p124
    $region22: #{resnet_block_forward.1} parent=5 // pred_check_branch
      %127 = sbr.rel (%p125) target = $region24
    $region23: #{resnet_block_forward.1} parent=5 // pred_region
      // Predicated region
      $region25: #{resnet_block_forward.1} parent=23 // pred_check
        %p128 = pneg %p29
      $region26: #{resnet_block_forward.1} parent=23 // pred_check_branch
        %130 = sbr.rel (%p128) target = $region28
      $region27: #{resnet_block_forward.1} parent=23 // pred_region
        %p131 = scmp.lt.s32.totalorder %s9, 1
        %s132 = scalar_select %p131, %s9, 1
        %s133 = smul.addr %s132, 32
        %s134 = smul.addr %s133, 8
        %s135 = scalar_lea.vmem %s0, %s134
      $region28: #{resnet_block_forward.1} parent=23 // pred_fallthru
        _
    $region24: #{resnet_block_forward.1} parent=5 // pred_fallthru
      _
    %p136 = scmp.le.s32.totalorder 1, %s9
    %p137 = scmp.lt.s32.totalorder %s9, 3
    %p138 = pnand %p136, %p137
    %p139 = pneg %p138
    // Predicated region
    $region29: #{resnet_block_forward.1} parent=5 // pred_check
      _
    $region30: #{resnet_block_forward.1} parent=5 // pred_check_branch
      %141 = sbr.rel (%p138) target = $region32
    $region31: #{resnet_block_forward.1} parent=5 // pred_region
      %s142 = ssub.s32 %s9, 1
      %p143 = scmp.lt.s32.totalorder %s14, 1
      %s144 = scalar_select %p143, %s14, 1
      %s145 = smul.addr %s144, 32
      %s146 = smul.addr %s145, 8
      %s147 = scalar_lea.vmem %s0, %s146
      %p148 = pneg %p35
      %p149 = pneg %p32
      %p150 = pneg %p56
      %p151 = pneg %p53
      %p152 = pneg %p77
      %p153 = pneg %p74
      %p154 = pneg %p103
      %p155 = pneg %p100
      %p156 = scmp.lt.s32.totalorder %s14, 1
      %s157 = scalar_select %p156, %s14, 1
      %s158 = smul.addr %s157, 32
      %s159 = smul.addr %s158, 8
      %s160 = scalar_lea.vmem %s3, %s159
      %p161 = scmp.lt.s32.totalorder %s14, 1
      %s162 = scalar_select %p161, %s14, 1
      %s163 = smul.addr %s162, 32
      %s164 = smul.addr %s163, 8
      %s165 = scalar_lea.vmem %s0, %s164
      %p166 = scmp.lt.s32.totalorder %s14, 1
      %s167 = scalar_select %p166, %s14, 1
      %s168 = smul.addr %s167, 32
      %s169 = smul.addr %s168, 8
      %s170 = scalar_lea.vmem %s3, %s169
      %v171 = vld [vmem:[%s165] sm:$0xff]
      %v172 = vld [vmem:[%s165 + $0x8] sm:$0xff]
      %v173 = vld [vmem:[%s165 + $0x10] sm:$0xff]
      %v174 = vld [vmem:[%s165 + $0x18] sm:$0xff]
      %v175 = vld [vmem:[%s165 + $0x20] sm:$0xff]
      %v176 = vld [vmem:[%s165 + $0x28] sm:$0xff]
      %v177 = vld [vmem:[%s165 + $0x30] sm:$0xff]
      %v178 = vld [vmem:[%s165 + $0x38] sm:$0xff]
      %v179 = vld [vmem:[%s165 + $0x40] sm:$0xff]
      %v180 = vld [vmem:[%s165 + $0x48] sm:$0xff]
      %v181 = vld [vmem:[%s165 + $0x50] sm:$0xff]
      %v182 = vld [vmem:[%s165 + $0x58] sm:$0xff]
      %v183 = vld [vmem:[%s165 + $0x60] sm:$0xff]
      %v184 = vld [vmem:[%s165 + $0x68] sm:$0xff]
      %v185 = vld [vmem:[%s165 + $0x70] sm:$0xff]
      %v186 = vld [vmem:[%s165 + $0x78] sm:$0xff]
      %v187 = vld [vmem:[%s165 + $0x80] sm:$0xff]
      %v188 = vld [vmem:[%s165 + $0x88] sm:$0xff]
      %v189 = vld [vmem:[%s165 + $0x90] sm:$0xff]
      %v190 = vld [vmem:[%s165 + $0x98] sm:$0xff]
      %v191 = vld [vmem:[%s165 + $0xa0] sm:$0xff]
      %v192 = vld [vmem:[%s165 + $0xa8] sm:$0xff]
      %v193 = vld [vmem:[%s165 + $0xb0] sm:$0xff]
      %v194 = vld [vmem:[%s165 + $0xb8] sm:$0xff]
      %v195 = vld [vmem:[%s165 + $0xc0] sm:$0xff]
      %v196 = vld [vmem:[%s165 + $0xc8] sm:$0xff]
      %v197 = vld [vmem:[%s165 + $0xd0] sm:$0xff]
      %v198 = vld [vmem:[%s165 + $0xd8] sm:$0xff]
      %v199 = vld [vmem:[%s165 + $0xe0] sm:$0xff]
      %v200 = vld [vmem:[%s165 + $0xe8] sm:$0xff]
      %v201 = vld [vmem:[%s165 + $0xf0] sm:$0xff]
      %v202 = vld [vmem:[%s165 + $0xf8] sm:$0xff]
      %v203 = vld [vmem:[%s1] sm:$0xf]
      %v204 = vld [vmem:[%s1 + $0x4] sm:$0xf]
      %v205 = vld [vmem:[%s1 + $0x8] sm:$0xf]
      %v206 = vld [vmem:[%s1 + $0xc] sm:$0xf]
      %v207 = vld [vmem:[%s1 + $0x10] sm:$0xf]
      %v208 = vld [vmem:[%s1 + $0x14] sm:$0xf]
      %v209 = vld [vmem:[%s1 + $0x18] sm:$0xf]
      %v210 = vld [vmem:[%s1 + $0x1c] sm:$0xf]
      %v211 = vld [vmem:[%s1 + $0x20] sm:$0xf]
      %v212 = vld [vmem:[%s2] sm:$0xf]
      %v213 = vld [vmem:[%s2 + $0x4] sm:$0xf]
      %v214 = vld [vmem:[%s2 + $0x8] sm:$0xf]
      %v215 = vld [vmem:[%s2 + $0xc] sm:$0xf]
      %v216 = vld [vmem:[%s2 + $0x10] sm:$0xf]
      %v217 = vld [vmem:[%s2 + $0x14] sm:$0xf]
      %v218 = vld [vmem:[%s2 + $0x18] sm:$0xf]
      %v219 = vld [vmem:[%s2 + $0x1c] sm:$0xf]
      %v220 = vld [vmem:[%s2 + $0x20] sm:$0xf]
      %v221 = vlaneseq
      %v222 = vshrl.u32 %v221, 7
      %v223 = vadd.s32 %v222, 8
      %vm224 = vcmp.eq.s32.totalorder %v222, 0
      %vm225 = vcmp.eq.s32.totalorder %v223, 0
      %v226 = vrot.slane %v173, 7
      %v227 = vrot.slane %v171, 7
      %v228 = vrot.slane %v175, 7
      %v229 = vrot.slane %v177, 7
      %v230 = vrot.slane %v179, 7
      %v231 = vrot.slane %v181, 7
      %v232 = vrot.slane %v183, 7
      %v233 = vrot.slane %v185, 7
      %v234 = vrot.slane %v187, 7
      %v235 = vrot.slane %v189, 7
      %v236 = vrot.slane %v191, 7
      %v237 = vrot.slane %v193, 7
      %v238 = vrot.slane %v195, 7
      %v239 = vrot.slane %v197, 7
      %v240 = vrot.slane %v199, 7
      %v241 = vrot.slane %v174, 7
      %v242 = vrot.slane %v172, 7
      %v243 = vrot.slane %v176, 7
      %v244 = vrot.slane %v178, 7
      %v245 = vrot.slane %v180, 7
      %v246 = vrot.slane %v182, 7
      %v247 = vrot.slane %v184, 7
      %v248 = vrot.slane %v186, 7
      %v249 = vrot.slane %v188, 7
      %v250 = vrot.slane %v190, 7
      %v251 = vrot.slane %v192, 7
      %v252 = vrot.slane %v194, 7
      %v253 = vrot.slane %v196, 7
      %v254 = vrot.slane %v198, 7
      %v255 = vrot.slane %v200, 7
      %vm256 = vcmp.lt.s32.totalorder %v222, 1
      %v257 = vsel %vm256, %v226, %v241
      %v258 = vsel %vm256, %v227, %v242
      %v259 = vsel %vm256, %v228, %v243
      %v260 = vsel %vm256, %v229, %v244
      %v261 = vsel %vm256, %v230, %v245
      %v262 = vsel %vm256, %v231, %v246
      %v263 = vsel %vm256, %v232, %v247
      %v264 = vsel %vm256, %v233, %v248
      %v265 = vsel %vm256, %v234, %v249
      %v266 = vsel %vm256, %v235, %v250
      %v267 = vsel %vm256, %v236, %v251
      %v268 = vsel %vm256, %v237, %v252
      %v269 = vsel %vm256, %v238, %v253
      %v270 = vsel %vm256, %v239, %v254
      %v271 = vsel %vm256, %v240, %v255
      %v272 = vsel %vm256, %v241, %v226
      %v273 = vsel %vm256, %v242, %v227
      %v274 = vsel %vm256, %v243, %v228
      %v275 = vsel %vm256, %v244, %v229
      %v276 = vsel %vm256, %v245, %v230
      %v277 = vsel %vm256, %v246, %v231
      %v278 = vsel %vm256, %v247, %v232
      %v279 = vsel %vm256, %v248, %v233
      %v280 = vsel %vm256, %v249, %v234
      %v281 = vsel %vm256, %v250, %v235
      %v282 = vsel %vm256, %v251, %v236
      %v283 = vsel %vm256, %v252, %v237
      %v284 = vsel %vm256, %v253, %v238
      %v285 = vsel %vm256, %v254, %v239
      %v286 = vsel %vm256, %v255, %v240
      %v287 = vlaneseq
      %v288 = vshrl.u32 %v287, 7
      %v289 = vsub.s32 1, %v288
      %v290 = vrot.slane %v173, %v289
      %v291 = vlaneseq
      %v292 = vshrl.u32 %v291, 7
      %v293 = vsub.s32 1, %v292
      %v294 = vrot.slane %v171, %v293
      %v295 = vlaneseq
      %v296 = vshrl.u32 %v295, 7
      %v297 = vsub.s32 1, %v296
      %v298 = vrot.slane %v175, %v297
      %v299 = vlaneseq
      %v300 = vshrl.u32 %v299, 7
      %v301 = vsub.s32 1, %v300
      %v302 = vrot.slane %v177, %v301
      %v303 = vlaneseq
      %v304 = vshrl.u32 %v303, 7
      %v305 = vsub.s32 1, %v304
      %v306 = vrot.slane %v179, %v305
      %v307 = vlaneseq
      %v308 = vshrl.u32 %v307, 7
      %v309 = vsub.s32 1, %v308
      %v310 = vrot.slane %v181, %v309
      %v311 = vlaneseq
      %v312 = vshrl.u32 %v311, 7
      %v313 = vsub.s32 1, %v312
      %v314 = vrot.slane %v183, %v313
      %v315 = vlaneseq
      %v316 = vshrl.u32 %v315, 7
      %v317 = vsub.s32 1, %v316
      %v318 = vrot.slane %v185, %v317
      %v319 = vlaneseq
      %v320 = vshrl.u32 %v319, 7
      %v321 = vsub.s32 1, %v320
      %v322 = vrot.slane %v187, %v321
      %v323 = vlaneseq
      %v324 = vshrl.u32 %v323, 7
      %v325 = vsub.s32 1, %v324
      %v326 = vrot.slane %v189, %v325
      %v327 = vlaneseq
      %v328 = vshrl.u32 %v327, 7
      %v329 = vsub.s32 1, %v328
      %v330 = vrot.slane %v191, %v329
      %v331 = vlaneseq
      %v332 = vshrl.u32 %v331, 7
      %v333 = vsub.s32 1, %v332
      %v334 = vrot.slane %v193, %v333
      %v335 = vlaneseq
      %v336 = vshrl.u32 %v335, 7
      %v337 = vsub.s32 1, %v336
      %v338 = vrot.slane %v195, %v337
      %v339 = vlaneseq
      %v340 = vshrl.u32 %v339, 7
      %v341 = vsub.s32 1, %v340
      %v342 = vrot.slane %v197, %v341
      %v343 = vlaneseq
      %v344 = vshrl.u32 %v343, 7
      %v345 = vsub.s32 1, %v344
      %v346 = vrot.slane %v199, %v345
      %v347 = vsel %vm224, %v290, %v272
      %v348 = vsel %vm225, %v290, %v257
      %v349 = vsel %vm224, %v294, %v273
      %v350 = vsel %vm225, %v294, %v258
      %v351 = vsel %vm224, %v298, %v274
      %v352 = vsel %vm225, %v298, %v259
      %v353 = vsel %vm224, %v302, %v275
      %v354 = vsel %vm225, %v302, %v260
      %v355 = vsel %vm224, %v306, %v276
      %v356 = vsel %vm225, %v306, %v261
      %v357 = vsel %vm224, %v310, %v277
      %v358 = vsel %vm225, %v310, %v262
      %v359 = vsel %vm224, %v314, %v278
      %v360 = vsel %vm225, %v314, %v263
      %v361 = vsel %vm224, %v318, %v279
      %v362 = vsel %vm225, %v318, %v264
      %v363 = vsel %vm224, %v322, %v280
      %v364 = vsel %vm225, %v322, %v265
      %v365 = vsel %vm224, %v326, %v281
      %v366 = vsel %vm225, %v326, %v266
      %v367 = vsel %vm224, %v330, %v282
      %v368 = vsel %vm225, %v330, %v267
      %v369 = vsel %vm224, %v334, %v283
      %v370 = vsel %vm225, %v334, %v268
      %v371 = vsel %vm224, %v338, %v284
      %v372 = vsel %vm225, %v338, %v269
      %v373 = vsel %vm224, %v342, %v285
      %v374 = vsel %vm225, %v342, %v270
      %v375 = vsel %vm224, %v346, %v286
      %v376 = vsel %vm225, %v346, %v271
      %vm377 = vcmp.eq.s32.totalorder %v222, 15
      %vm378 = vcmp.eq.s32.totalorder %v223, 15
      %v379 = vrot.slane %v173, 1
      %v380 = vrot.slane %v171, 1
      %v381 = vrot.slane %v175, 1
      %v382 = vrot.slane %v177, 1
      %v383 = vrot.slane %v179, 1
      %v384 = vrot.slane %v181, 1
      %v385 = vrot.slane %v183, 1
      %v386 = vrot.slane %v185, 1
      %v387 = vrot.slane %v187, 1
      %v388 = vrot.slane %v189, 1
      %v389 = vrot.slane %v191, 1
      %v390 = vrot.slane %v193, 1
      %v391 = vrot.slane %v195, 1
      %v392 = vrot.slane %v197, 1
      %v393 = vrot.slane %v199, 1
      %v394 = vrot.slane %v174, 1
      %v395 = vrot.slane %v172, 1
      %v396 = vrot.slane %v176, 1
      %v397 = vrot.slane %v178, 1
      %v398 = vrot.slane %v180, 1
      %v399 = vrot.slane %v182, 1
      %v400 = vrot.slane %v184, 1
      %v401 = vrot.slane %v186, 1
      %v402 = vrot.slane %v188, 1
      %v403 = vrot.slane %v190, 1
      %v404 = vrot.slane %v192, 1
      %v405 = vrot.slane %v194, 1
      %v406 = vrot.slane %v196, 1
      %v407 = vrot.slane %v198, 1
      %v408 = vrot.slane %v200, 1
      %vm409 = vcmp.lt.s32.totalorder %v222, 7
      %v410 = vsel %vm409, %v379, %v394
      %v411 = vsel %vm409, %v380, %v395
      %v412 = vsel %vm409, %v381, %v396
      %v413 = vsel %vm409, %v382, %v397
      %v414 = vsel %vm409, %v383, %v398
      %v415 = vsel %vm409, %v384, %v399
      %v416 = vsel %vm409, %v385, %v400
      %v417 = vsel %vm409, %v386, %v401
      %v418 = vsel %vm409, %v387, %v402
      %v419 = vsel %vm409, %v388, %v403
      %v420 = vsel %vm409, %v389, %v404
      %v421 = vsel %vm409, %v390, %v405
      %v422 = vsel %vm409, %v391, %v406
      %v423 = vsel %vm409, %v392, %v407
      %v424 = vsel %vm409, %v393, %v408
      %v425 = vsel %vm409, %v394, %v379
      %v426 = vsel %vm409, %v395, %v380
      %v427 = vsel %vm409, %v396, %v381
      %v428 = vsel %vm409, %v397, %v382
      %v429 = vsel %vm409, %v398, %v383
      %v430 = vsel %vm409, %v399, %v384
      %v431 = vsel %vm409, %v400, %v385
      %v432 = vsel %vm409, %v401, %v386
      %v433 = vsel %vm409, %v402, %v387
      %v434 = vsel %vm409, %v403, %v388
      %v435 = vsel %vm409, %v404, %v389
      %v436 = vsel %vm409, %v405, %v390
      %v437 = vsel %vm409, %v406, %v391
      %v438 = vsel %vm409, %v407, %v392
      %v439 = vsel %vm409, %v408, %v393
      %v440 = vlaneseq
      %v441 = vshrl.u32 %v440, 7
      %v442 = vsub.s32 6, %v441
      %v443 = vrot.slane %v174, %v442
      %v444 = vlaneseq
      %v445 = vshrl.u32 %v444, 7
      %v446 = vsub.s32 6, %v445
      %v447 = vrot.slane %v172, %v446
      %v448 = vlaneseq
      %v449 = vshrl.u32 %v448, 7
      %v450 = vsub.s32 6, %v449
      %v451 = vrot.slane %v176, %v450
      %v452 = vlaneseq
      %v453 = vshrl.u32 %v452, 7
      %v454 = vsub.s32 6, %v453
      %v455 = vrot.slane %v178, %v454
      %v456 = vlaneseq
      %v457 = vshrl.u32 %v456, 7
      %v458 = vsub.s32 6, %v457
      %v459 = vrot.slane %v180, %v458
      %v460 = vlaneseq
      %v461 = vshrl.u32 %v460, 7
      %v462 = vsub.s32 6, %v461
      %v463 = vrot.slane %v182, %v462
      %v464 = vlaneseq
      %v465 = vshrl.u32 %v464, 7
      %v466 = vsub.s32 6, %v465
      %v467 = vrot.slane %v184, %v466
      %v468 = vlaneseq
      %v469 = vshrl.u32 %v468, 7
      %v470 = vsub.s32 6, %v469
      %v471 = vrot.slane %v186, %v470
      %v472 = vlaneseq
      %v473 = vshrl.u32 %v472, 7
      %v474 = vsub.s32 6, %v473
      %v475 = vrot.slane %v188, %v474
      %v476 = vlaneseq
      %v477 = vshrl.u32 %v476, 7
      %v478 = vsub.s32 6, %v477
      %v479 = vrot.slane %v190, %v478
      %v480 = vlaneseq
      %v481 = vshrl.u32 %v480, 7
      %v482 = vsub.s32 6, %v481
      %v483 = vrot.slane %v192, %v482
      %v484 = vlaneseq
      %v485 = vshrl.u32 %v484, 7
      %v486 = vsub.s32 6, %v485
      %v487 = vrot.slane %v194, %v486
      %v488 = vlaneseq
      %v489 = vshrl.u32 %v488, 7
      %v490 = vsub.s32 6, %v489
      %v491 = vrot.slane %v196, %v490
      %v492 = vlaneseq
      %v493 = vshrl.u32 %v492, 7
      %v494 = vsub.s32 6, %v493
      %v495 = vrot.slane %v198, %v494
      %v496 = vlaneseq
      %v497 = vshrl.u32 %v496, 7
      %v498 = vsub.s32 6, %v497
      %v499 = vrot.slane %v200, %v498
      %v500 = vsel %vm377, %v443, %v410
      %v501 = vsel %vm378, %v443, %v425
      %v502 = vsel %vm377, %v447, %v411
      %v503 = vsel %vm378, %v447, %v426
      %v504 = vsel %vm377, %v451, %v412
      %v505 = vsel %vm378, %v451, %v427
      %v506 = vsel %vm377, %v455, %v413
      %v507 = vsel %vm378, %v455, %v428
      %v508 = vsel %vm377, %v459, %v414
      %v509 = vsel %vm378, %v459, %v429
      %v510 = vsel %vm377, %v463, %v415
      %v511 = vsel %vm378, %v463, %v430
      %v512 = vsel %vm377, %v467, %v416
      %v513 = vsel %vm378, %v467, %v431
      %v514 = vsel %vm377, %v471, %v417
      %v515 = vsel %vm378, %v471, %v432
      %v516 = vsel %vm377, %v475, %v418
      %v517 = vsel %vm378, %v475, %v433
      %v518 = vsel %vm377, %v479, %v419
      %v519 = vsel %vm378, %v479, %v434
      %v520 = vsel %vm377, %v483, %v420
      %v521 = vsel %vm378, %v483, %v435
      %v522 = vsel %vm377, %v487, %v421
      %v523 = vsel %vm378, %v487, %v436
      %v524 = vsel %vm377, %v491, %v422
      %v525 = vsel %vm378, %v491, %v437
      %v526 = vsel %vm377, %v495, %v423
      %v527 = vsel %vm378, %v495, %v438
      %v528 = vsel %vm377, %v499, %v424
      %v529 = vsel %vm378, %v499, %v439
      %vm530 = vcmask 31744
      %v532 = vsel %vm530, %v173, 0
      %v535 = vsel %vm530, %v174, 0
      %v538 = vsel %vm530, %v171, 0
      %v541 = vsel %vm530, %v172, 0
      %v544 = vsel %vm530, %v175, 0
      %v547 = vsel %vm530, %v176, 0
      %v550 = vsel %vm530, %v177, 0
      %v553 = vsel %vm530, %v178, 0
      %v556 = vsel %vm530, %v179, 0
      %v559 = vsel %vm530, %v180, 0
      %v562 = vsel %vm530, %v181, 0
      %v565 = vsel %vm530, %v182, 0
      %v568 = vsel %vm530, %v183, 0
      %v571 = vsel %vm530, %v184, 0
      %v574 = vsel %vm530, %v185, 0
      %v577 = vsel %vm530, %v186, 0
      %v580 = vsel %vm530, %v187, 0
      %v583 = vsel %vm530, %v188, 0
      %v586 = vsel %vm530, %v189, 0
      %v589 = vsel %vm530, %v190, 0
      %v592 = vsel %vm530, %v191, 0
      %v595 = vsel %vm530, %v192, 0
      %v598 = vsel %vm530, %v193, 0
      %v601 = vsel %vm530, %v194, 0
      %v604 = vsel %vm530, %v195, 0
      %v607 = vsel %vm530, %v196, 0
      %v610 = vsel %vm530, %v197, 0
      %v613 = vsel %vm530, %v198, 0
      %v616 = vsel %vm530, %v199, 0
      %v619 = vsel %vm530, %v200, 0
      %vm621 = vcmask 1043456
      %v623 = vsel %vm621, %v204, 0
      %625 = vmatprep.subr.mxu0 0.0
      %626 = vmatpush1.msra.mxu0 %v623
      %627 = vmatprep.subr.mxu0 0.0
      %628 = vmatpush1.msra.mxu0 0.0
      %629 = vmatprep.subr.mxu0 0.0
      %630 = vmatpush1.msra.mxu0 0.0
      %631 = vmatprep.subr.mxu0 0.0
      %632 = vmatpush1.msra.mxu0 0.0
      %633 = vmatprep.subr.mxu0 0.0
      %634 = vmatpush1.msra.mxu0 0.0
      %635 = vmatprep.subr.mxu0 0.0
      %636 = vmatpush1.msra.mxu0 0.0
      %637 = vmatprep.subr.mxu0 0.0
      %638 = vmatpush1.msra.mxu0 0.0
      %639 = vmatprep.subr.mxu0 0.0
      %640 = vmatpush1.msra.mxu0 0.0
      %641 = vmatprep.subr.mxu0 0.0
      %642 = vmatpush1.msra.mxu0 0.0
      %643 = vmatprep.subr.mxu0 0.0
      %644 = vmatpush1.msra.mxu0 0.0
      %645 = vmatprep.subr.mxu0 0.0
      %646 = vmatpush1.msra.mxu0 0.0
      %647 = vmatprep.subr.mxu0 0.0
      %648 = vmatpush1.msra.mxu0 0.0
      %649 = vmatprep.subr.mxu0 0.0
      %650 = vmatpush1.msra.mxu0 0.0
      %651 = vmatprep.subr.mxu0 0.0
      %652 = vmatpush1.msra.mxu0 0.0
      %653 = vmatprep.subr.mxu0 0.0
      %654 = vmatpush1.msra.mxu0 0.0
      %655 = vmatprep.subr.mxu0 0.0
      %656 = vmatpush1.msra.mxu0 0.0
      %657 = vmatprep.subr.mxu0 0.0
      %658 = vmatpush1.msra.mxu0 0.0
      %659 = vmatprep.subr.mxu0 0.0
      %660 = vmatpush1.msra.mxu0 0.0
      %661 = vmatprep.subr.mxu0 0.0
      %662 = vmatpush1.msra.mxu0 0.0
      %663 = vmatprep.subr.mxu0 0.0
      %664 = vmatpush1.msra.mxu0 0.0
      %665 = vmatprep.subr.mxu0 0.0
      %666 = vmatpush1.msra.mxu0 0.0
      %667 = vmatprep.subr.mxu0 0.0
      %668 = vmatpush1.msra.mxu0 0.0
      %669 = vmatprep.subr.mxu0 0.0
      %670 = vmatpush1.msra.mxu0 0.0
      %671 = vmatprep.subr.mxu0 0.0
      %672 = vmatpush1.msra.mxu0 0.0
      %673 = vmatprep.subr.mxu0 0.0
      %674 = vmatpush1.msra.mxu0 0.0
      %675 = vmatprep.subr.mxu0 0.0
      %676 = vmatpush1.msra.mxu0 0.0
      %677 = vmatprep.subr.mxu0 0.0
      %678 = vmatpush1.msra.mxu0 0.0
      %679 = vmatprep.subr.mxu0 0.0
      %680 = vmatpush1.msra.mxu0 0.0
      %681 = vmatprep.subr.mxu0 0.0
      %682 = vmatpush1.msra.mxu0 0.0
      %683 = vmatprep.subr.mxu0 0.0
      %684 = vmatpush1.msra.mxu0 0.0
      %685 = vmatprep.subr.mxu0 0.0
      %686 = vmatpush1.msra.mxu0 0.0
      %687 = vmatprep.subr.mxu0 0.0
      %688 = vmatpush1.msra.mxu0 0.0
      %689 = vmatprep.mubr.f32.mxu0 0.0
      %690 = vmatmul.mubr.f32.gmra.mrb[0].mxu0 %v532
      %v691 = vpop.f32.mrb[0].mxu0
      %v692 = vadd.f32 0.0, %v691
      %v693 = vpop.f32.mrb[0].mxu0
      %694 = vmatprep.mubr.f32.mxu0 0.0
      %695 = vmatmul.mubr.f32.gmra.mrb[0].mxu0 %v535
      %v696 = vpop.f32.mrb[0].mxu0
      %v697 = vadd.f32 0.0, %v696
      %v698 = vpop.f32.mrb[0].mxu0
      %699 = vmatprep.mubr.f32.mxu0 0.0
      %700 = vmatmul.mubr.f32.gmra.mrb[0].mxu0 %v538
      %v701 = vpop.f32.mrb[0].mxu0
      %v702 = vadd.f32 0.0, %v701
      %v703 = vpop.f32.mrb[0].mxu0
      %704 = vmatprep.mubr.f32.mxu0 0.0
      %705 = vmatmul.mubr.f32.gmra.mrb[0].mxu0 %v541
      %v706 = vpop.f32.mrb[0].mxu0
      %v707 = vadd.f32 0.0, %v706
      %v708 = vpop.f32.mrb[0].mxu0
      %709 = vmatprep.mubr.f32.mxu0 0.0
      %710 = vmatmul.mubr.f32.gmra.mrb[0].mxu0 %v532
      %v711 = vpop.f32.mrb[0].mxu0
      %v712 = vadd.f32 0.0, %v711
      %v713 = vpop.f32.mrb[0].mxu0
      %714 = vmatprep.mubr.f32.mxu0 0.0
      %715 = vmatmul.mubr.f32.gmra.mrb[0].mxu0 %v535
      %v716 = vpop.f32.mrb[0].mxu0
      %v717 = vadd.f32 0.0, %v716
      %v718 = vpop.f32.mrb[0].mxu0
      %719 = vmatprep.mubr.f32.mxu0 0.0
      %720 = vmatmul.mubr.f32.gmra.mrb[0].mxu0 %v544
      %v721 = vpop.f32.mrb[0].mxu0
      %v722 = vadd.f32 0.0, %v721
      %v723 = vpop.f32.mrb[0].mxu0
      %724 = vmatprep.mubr.f32.mxu0 0.0
      %725 = vmatmul.mubr.f32.gmra.mrb[0].mxu0 %v547
      %v726 = vpop.f32.mrb[0].mxu0
      %v727 = vadd.f32 0.0, %v726
      %v728 = vpop.f32.mrb[0].mxu0
      %729 = vmatprep.mubr.f32.mxu0 0.0
      %730 = vmatmul.mubr.f32.gmra.mrb[0].mxu0 %v550
      %v731 = vpop.f32.mrb[0].mxu0
      %v732 = vadd.f32 0.0, %v731
      %v733 = vpop.f32.mrb[0].mxu0
      %734 = vmatprep.mubr.f32.mxu0 0.0
      %735 = vmatmul.mubr.f32.gmra.mrb[0].mxu0 %v553
      %v736 = vpop.f32.mrb[0].mxu0
      %v737 = vadd.f32 0.0, %v736
      %v738 = vpop.f32.mrb[0].mxu0
      %739 = vmatprep.mubr.f32.mxu0 0.0
      %740 = vmatmul.mubr.f32.gmra.mrb[0].mxu0 %v556
      %v741 = vpop.f32.mrb[0].mxu0
      %v742 = vadd.f32 0.0, %v741
      %v743 = vpop.f32.mrb[0].mxu0
      %744 = vmatprep.mubr.f32.mxu0 0.0
      %745 = vmatmul.mubr.f32.gmra.mrb[0].mxu0 %v559
      %v746 = vpop.f32.mrb[0].mxu0
      %v747 = vadd.f32 0.0, %v746
      %v748 = vpop.f32.mrb[0].mxu0
      %749 = vmatprep.mubr.f32.mxu0 0.0
      %750 = vmatmul.mubr.f32.gmra.mrb[0].mxu0 %v562
      %v751 = vpop.f32.mrb[0].mxu0
      %v752 = vadd.f32 0.0, %v751
      %v753 = vpop.f32.mrb[0].mxu0
      %754 = vmatprep.mubr.f32.mxu0 0.0
      %755 = vmatmul.mubr.f32.gmra.mrb[0].mxu0 %v565
      %v756 = vpop.f32.mrb[0].mxu0
      %v757 = vadd.f32 0.0, %v756
      %v758 = vpop.f32.mrb[0].mxu0
      %759 = vmatprep.mubr.f32.mxu0 0.0
      %760 = vmatmul.mubr.f32.gmra.mrb[0].mxu0 %v568
      %v761 = vpop.f32.mrb[0].mxu0
      %v762 = vadd.f32 0.0, %v761
      %v763 = vpop.f32.mrb[0].mxu0
      %764 = vmatprep.mubr.f32.mxu0 0.0
      %765 = vmatmul.mubr.f32.gmra.mrb[0].mxu0 %v571
      %v766 = vpop.f32.mrb[0].mxu0
      %v767 = vadd.f32 0.0, %v766
      %v768 = vpop.f32.mrb[0].mxu0
      %769 = vmatprep.mubr.f32.mxu0 0.0
      %770 = vmatmul.mubr.f32.gmra.mrb[0].mxu0 %v574
      %v771 = vpop.f32.mrb[0].mxu0
      %v772 = vadd.f32 0.0, %v771
      %v773 = vpop.f32.mrb[0].mxu0
      %774 = vmatprep.mubr.f32.mxu0 0.0
      %775 = vmatmul.mubr.f32.gmra.mrb[0].mxu0 %v577
      %v776 = vpop.f32.mrb[0].mxu0
      %v777 = vadd.f32 0.0, %v776
      %v778 = vpop.f32.mrb[0].mxu0
      %779 = vmatprep.mubr.f32.mxu0 0.0
      %780 = vmatmul.mubr.f32.gmra.mrb[0].mxu0 %v580
      %v781 = vpop.f32.mrb[0].mxu0
      %v782 = vadd.f32 0.0, %v781
      %v783 = vpop.f32.mrb[0].mxu0
      %784 = vmatprep.mubr.f32.mxu0 0.0
      %785 = vmatmul.mubr.f32.gmra.mrb[0].mxu0 %v583
      %v786 = vpop.f32.mrb[0].mxu0
      %v787 = vadd.f32 0.0, %v786
      %v788 = vpop.f32.mrb[0].mxu0
      %789 = vmatprep.mubr.f32.mxu0 0.0
      %790 = vmatmul.mubr.f32.gmra.mrb[0].mxu0 %v586
      %v791 = vpop.f32.mrb[0].mxu0
      %v792 = vadd.f32 0.0, %v791
      %v793 = vpop.f32.mrb[0].mxu0
      %794 = vmatprep.mubr.f32.mxu0 0.0
      %795 = vmatmul.mubr.f32.gmra.mrb[0].mxu0 %v589
      %v796 = vpop.f32.mrb[0].mxu0
      %v797 = vadd.f32 0.0, %v796
      %v798 = vpop.f32.mrb[0].mxu0
      %799 = vmatprep.mubr.f32.mxu0 0.0
      %800 = vmatmul.mubr.f32.gmra.mrb[0].mxu0 %v592
      %v801 = vpop.f32.mrb[0].mxu0
      %v802 = vadd.f32 0.0, %v801
      %v803 = vpop.f32.mrb[0].mxu0
      %804 = vmatprep.mubr.f32.mxu0 0.0
      %805 = vmatmul.mubr.f32.gmra.mrb[0].mxu0 %v595
      %v806 = vpop.f32.mrb[0].mxu0
      %v807 = vadd.f32 0.0, %v806
      %v808 = vpop.f32.mrb[0].mxu0
      %809 = vmatprep.mubr.f32.mxu0 0.0
      %810 = vmatmul.mubr.f32.gmra.mrb[0].mxu0 %v598
      %v811 = vpop.f32.mrb[0].mxu0
      %v812 = vadd.f32 0.0, %v811
      %v813 = vpop.f32.mrb[0].mxu0
      %814 = vmatprep.mubr.f32.mxu0 0.0
      %815 = vmatmul.mubr.f32.gmra.mrb[0].mxu0 %v601
      %v816 = vpop.f32.mrb[0].mxu0
      %v817 = vadd.f32 0.0, %v816
      %v818 = vpop.f32.mrb[0].mxu0
      %819 = vmatprep.mubr.f32.mxu0 0.0
      %820 = vmatmul.mubr.f32.gmra.mrb[0].mxu0 %v604
      %v821 = vpop.f32.mrb[0].mxu0
      %v822 = vadd.f32 0.0, %v821
      %v823 = vpop.f32.mrb[0].mxu0
      %824 = vmatprep.mubr.f32.mxu0 0.0
      %825 = vmatmul.mubr.f32.gmra.mrb[0].mxu0 %v607
      %v826 = vpop.f32.mrb[0].mxu0
      %v827 = vadd.f32 0.0, %v826
      %v828 = vpop.f32.mrb[0].mxu0
      %829 = vmatprep.mubr.f32.mxu0 0.0
      %830 = vmatmul.mubr.f32.gmra.mrb[0].mxu0 %v610
      %v831 = vpop.f32.mrb[0].mxu0
      %v832 = vadd.f32 0.0, %v831
      %v833 = vpop.f32.mrb[0].mxu0
      %834 = vmatprep.mubr.f32.mxu0 0.0
      %835 = vmatmul.mubr.f32.gmra.mrb[0].mxu0 %v613
      %v836 = vpop.f32.mrb[0].mxu0
      %v837 = vadd.f32 0.0, %v836
      %v838 = vpop.f32.mrb[0].mxu0
      %839 = vmatprep.mubr.f32.mxu0 0.0
      %840 = vmatmul.mubr.f32.gmra.mrb[0].mxu0 %v616
      %v841 = vpop.f32.mrb[0].mxu0
      %v842 = vadd.f32 0.0, %v841
      %v843 = vpop.f32.mrb[0].mxu0
      %844 = vmatprep.mubr.f32.mxu0 0.0
      %845 = vmatmul.mubr.f32.gmra.mrb[0].mxu0 %v619
      %v846 = vpop.f32.mrb[0].mxu0
      %v847 = vadd.f32 0.0, %v846
      %v848 = vpop.f32.mrb[0].mxu0
      %849 = vdwg.mxu0
      %v851 = vsel %vm530, %v347, 0
      %v854 = vsel %vm530, %v348, 0
      %v857 = vsel %vm530, %v349, 0
      %v860 = vsel %vm530, %v350, 0
      %v863 = vsel %vm530, %v351, 0
      %v866 = vsel %vm530, %v352, 0
      %v869 = vsel %vm530, %v353, 0
      %v872 = vsel %vm530, %v354, 0
      %v875 = vsel %vm530, %v355, 0
      %v878 = vsel %vm530, %v356, 0
      %v881 = vsel %vm530, %v357, 0
      %v884 = vsel %vm530, %v358, 0
      %v887 = vsel %vm530, %v359, 0
      %v890 = vsel %vm530, %v360, 0
      %v893 = vsel %vm530, %v361, 0
      %v896 = vsel %vm530, %v362, 0
      %v899 = vsel %vm530, %v363, 0
      %v902 = vsel %vm530, %v364, 0
      %v905 = vsel %vm530, %v365, 0
      %v908 = vsel %vm530, %v366, 0
      %v911 = vsel %vm530, %v367, 0
      %v914 = vsel %vm530, %v368, 0
      %v917 = vsel %vm530, %v369, 0
      %v920 = vsel %vm530, %v370, 0
      %v923 = vsel %vm530, %v371, 0
      %v926 = vsel %vm530, %v372, 0
      %v929 = vsel %vm530, %v373, 0
      %v932 = vsel %vm530, %v374, 0
      %v935 = vsel %vm530, %v375, 0
      %v938 = vsel %vm530, %v376, 0
      %v941 = vsel %vm621, %v203, 0
      %943 = vmatprep.subr.mxu0 0.0
      %944 = vmatpush1.msra.mxu0 %v941
      %945 = vmatprep.subr.mxu0 0.0
      %946 = vmatpush1.msra.mxu0 0.0
      %947 = vmatprep.subr.mxu0 0.0
      %948 = vmatpush1.msra.mxu0 0.0
      %949 = vmatprep.subr.mxu0 0.0
      %950 = vmatpush1.msra.mxu0 0.0
      %951 = vmatprep.subr.mxu0 0.0
      %952 = vmatpush1.msra.mxu0 0.0
      %953 = vmatprep.subr.mxu0 0.0
      %954 = vmatpush1.msra.mxu0 0.0
      %955 = vmatprep.subr.mxu0 0.0
      %956 = vmatpush1.msra.mxu0 0.0
      %957 = vmatprep.subr.mxu0 0.0
      %958 = vmatpush1.msra.mxu0 0.0
      %959 = vmatprep.subr.mxu0 0.0
      %960 = vmatpush1.msra.mxu0 0.0
      %961 = vmatprep.subr.mxu0 0.0
      %962 = vmatpush1.msra.mxu0 0.0
      %963 = vmatprep.subr.mxu0 0.0
      %964 = vmatpush1.msra.mxu0 0.0
      %965 = vmatprep.subr.mxu0 0.0
      %966 = vmatpush1.msra.mxu0 0.0
      %967 = vmatprep.subr.mxu0 0.0
      %968 = vmatpush1.msra.mxu0 0.0
      %969 = vmatprep.subr.mxu0 0.0
      %970 = vmatpush1.msra.mxu0 0.0
      %971 = vmatprep.subr.mxu0 0.0
      %972 = vmatpush1.msra.mxu0 0.0
      %973 = vmatprep.subr.mxu0 0.0
      %974 = vmatpush1.msra.mxu0 0.0
      %975 = vmatprep.subr.mxu0 0.0
      %976 = vmatpush1.msra.mxu0 0.0
      %977 = vmatprep.subr.mxu0 0.0
      %978 = vmatpush1.msra.mxu0 0.0
      %979 = vmatprep.subr.mxu0 0.0
      %980 = vmatpush1.msra.mxu0 0.0
      %981 = vmatprep.subr.mxu0 0.0
      %982 = vmatpush1.msra.mxu0 0.0
      %983 = vmatprep.subr.mxu0 0.0
      %984 = vmatpush1.msra.mxu0 0.0
      %985 = vmatprep.subr.mxu0 0.0
      %986 = vmatpush1.msra.mxu0 0.0
      %987 = vmatprep.subr.mxu0 0.0
      %988 = vmatpush1.msra.mxu0 0.0
      %989 = vmatprep.subr.mxu0 0.0
      %990 = vmatpush1.msra.mxu0 0.0
      %991 = vmatprep.subr.mxu0 0.0
      %992 = vmatpush1.msra.mxu0 0.0
      %993 = vmatprep.subr.mxu0 0.0
      %994 = vmatpush1.msra.mxu0 0.0
      %995 = vmatprep.subr.mxu0 0.0
      %996 = vmatpush1.msra.mxu0 0.0
      %997 = vmatprep.subr.mxu0 0.0
      %998 = vmatpush1.msra.mxu0 0.0
      %999 = vmatprep.subr.mxu0 0.0
      %1000 = vmatpush1.msra.mxu0 0.0
      %1001 = vmatprep.subr.mxu0 0.0
      %1002 = vmatpush1.msra.mxu0 0.0
      %1003 = vmatprep.subr.mxu0 0.0
      %1004 = vmatpush1.msra.mxu0 0.0
      %1005 = vmatprep.subr.mxu0 0.0
      %1006 = vmatpush1.msra.mxu0 0.0
      %1007 = vmatprep.mubr.f32.mxu0 0.0
      %1008 = vmatmul.mubr.f32.gmra.mrb[0].mxu0 %v851
      %v1009 = vpop.f32.mrb[0].mxu0
      %v1010 = vadd.f32 %v692, %v1009
      %v1011 = vpop.f32.mrb[0].mxu0
      %1012 = vmatprep.mubr.f32.mxu0 0.0
      %1013 = vmatmul.mubr.f32.gmra.mrb[0].mxu0 %v854
      %v1014 = vpop.f32.mrb[0].mxu0
      %v1015 = vadd.f32 %v697, %v1014
      %v1016 = vpop.f32.mrb[0].mxu0
      %1017 = vmatprep.mubr.f32.mxu0 0.0
      %1018 = vmatmul.mubr.f32.gmra.mrb[0].mxu0 %v857
      %v1019 = vpop.f32.mrb[0].mxu0
      %v1020 = vadd.f32 %v702, %v1019
      %v1021 = vpop.f32.mrb[0].mxu0
      %1022 = vmatprep.mubr.f32.mxu0 0.0
      %1023 = vmatmul.mubr.f32.gmra.mrb[0].mxu0 %v860
      %v1024 = vpop.f32.mrb[0].mxu0
      %v1025 = vadd.f32 %v707, %v1024
      %v1026 = vpop.f32.mrb[0].mxu0
      %1027 = vmatprep.mubr.f32.mxu0 0.0
      %1028 = vmatmul.mubr.f32.gmra.mrb[0].mxu0 %v851
      %v1029 = vpop.f32.mrb[0].mxu0
      %v1030 = vadd.f32 %v712, %v1029
      %v1031 = vpop.f32.mrb[0].mxu0
      %1032 = vmatprep.mubr.f32.mxu0 0.0
      %1033 = vmatmul.mubr.f32.gmra.mrb[0].mxu0 %v854
      %v1034 = vpop.f32.mrb[0].mxu0
      %v1035 = vadd.f32 %v717, %v1034
      %v1036 = vpop.f32.mrb[0].mxu0
      %1037 = vmatprep.mubr.f32.mxu0 0.0
      %1038 = vmatmul.mubr.f32.gmra.mrb[0].mxu0 %v863
      %v1039 = vpop.f32.mrb[0].mxu0
      %v1040 = vadd.f32 %v722, %v1039
      %v1041 = vpop.f32.mrb[0].mxu0
      %1042 = vmatprep.mubr.f32.mxu0 0.0
      %1043 = vmatmul.mubr.f32.gmra.mrb[0].mxu0 %v866
      %v1044 = vpop.f32.mrb[0].mxu0
      %v1045 = vadd.f32 %v727, %v1044
      %v1046 = vpop.f32.mrb[0].mxu0
      %1047 = vmatprep.mubr.f32.mxu0 0.0
      %1048 = vmatmul.mubr.f32.gmra.mrb[0].mxu0 %v869
      %v1049 = vpop.f32.mrb[0].mxu0
      %v1050 = vadd.f32 %v732, %v1049
      %v1051 = vpop.f32.mrb[0].mxu0
      %1052 = vmatprep.mubr.f32.mxu0 0.0
      %1053 = vmatmul.mubr.f32.gmra.mrb[0].mxu0 %v872
      %v1054 = vpop.f32.mrb[0].mxu0
      %v1055 = vadd.f32 %v737, %v1054
      %v1056 = vpop.f32.mrb[0].mxu0
      %1057 = vmatprep.mubr.f32.mxu0 0.0
      %1058 = vmatmul.mubr.f32.gmra.mrb[0].mxu0 %v875
      %v1059 = vpop.f32.mrb[0].mxu0
      %v1060 = vadd.f32 %v742, %v1059
      %v1061 = vpop.f32.mrb[0].mxu0
      %1062 = vmatprep.mubr.f32.mxu0 0.0
      %1063 = vmatmul.mubr.f32.gmra.mrb[0].mxu0 %v878
      %v1064 = vpop.f32.mrb[0].mxu0
      %v1065 = vadd.f32 %v747, %v1064
      %v1066 = vpop.f32.mrb[0].mxu0
      %1067 = vmatprep.mubr.f32.mxu0 0.0
      %1068 = vmatmul.mubr.f32.gmra.mrb[0].mxu0 %v881
      %v1069 = vpop.f32.mrb[0].mxu0
      %v1070 = vadd.f32 %v752, %v1069
      %v1071 = vpop.f32.mrb[0].mxu0
      %1072 = vmatprep.mubr.f32.mxu0 0.0
      %1073 = vmatmul.mubr.f32.gmra.mrb[0].mxu0 %v884
      %v1074 = vpop.f32.mrb[0].mxu0
      %v1075 = vadd.f32 %v757, %v1074
      %v1076 = vpop.f32.mrb[0].mxu0
      %1077 = vmatprep.mubr.f32.mxu0 0.0
      %1078 = vmatmul.mubr.f32.gmra.mrb[0].mxu0 %v887
      %v1079 = vpop.f32.mrb[0].mxu0
      %v1080 = vadd.f32 %v762, %v1079
      %v1081 = vpop.f32.mrb[0].mxu0
      %1082 = vmatprep.mubr.f32.mxu0 0.0
      %1083 = vmatmul.mubr.f32.gmra.mrb[0].mxu0 %v890
      %v1084 = vpop.f32.mrb[0].mxu0
      %v1085 = vadd.f32 %v767, %v1084
      %v1086 = vpop.f32.mrb[0].mxu0
      %1087 = vmatprep.mubr.f32.mxu0 0.0
      %1088 = vmatmul.mubr.f32.gmra.mrb[0].mxu0 %v893
      %v1089 = vpop.f32.mrb[0].mxu0
      %v1090 = vadd.f32 %v772, %v1089
      %v1091 = vpop.f32.mrb[0].mxu0
      %1092 = vmatprep.mubr.f32.mxu0 0.0
      %1093 = vmatmul.mubr.f32.gmra.mrb[0].mxu0 %v896
      %v1094 = vpop.f32.mrb[0].mxu0
      %v1095 = vadd.f32 %v777, %v1094
      %v1096 = vpop.f32.mrb[0].mxu0
      %1097 = vmatprep.mubr.f32.mxu0 0.0
      %1098 = vmatmul.mubr.f32.gmra.mrb[0].mxu0 %v899
      %v1099 = vpop.f32.mrb[0].mxu0
      %v1100 = vadd.f32 %v782, %v1099
      %v1101 = vpop.f32.mrb[0].mxu0
      %1102 = vmatprep.mubr.f32.mxu0 0.0
      %1103 = vmatmul.mubr.f32.gmra.mrb[0].mxu0 %v902
      %v1104 = vpop.f32.mrb[0].mxu0
      %v1105 = vadd.f32 %v787, %v1104
      %v1106 = vpop.f32.mrb[0].mxu0
      %1107 = vmatprep.mubr.f32.mxu0 0.0
      %1108 = vmatmul.mubr.f32.gmra.mrb[0].mxu0 %v905
      %v1109 = vpop.f32.mrb[0].mxu0
      %v1110 = vadd.f32 %v792, %v1109
      %v1111 = vpop.f32.mrb[0].mxu0
      %1112 = vmatprep.mubr.f32.mxu0 0.0
      %1113 = vmatmul.mubr.f32.gmra.mrb[0].mxu0 %v908
      %v1114 = vpop.f32.mrb[0].mxu0
      %v1115 = vadd.f32 %v797, %v1114
      %v1116 = vpop.f32.mrb[0].mxu0
      %1117 = vmatprep.mubr.f32.mxu0 0.0
      %1118 = vmatmul.mubr.f32.gmra.mrb[0].mxu0 %v911
      %v1119 = vpop.f32.mrb[0].mxu0
      %v1120 = vadd.f32 %v802, %v1119
      %v1121 = vpop.f32.mrb[0].mxu0
      %1122 = vmatprep.mubr.f32.mxu0 0.0
      %1123 = vmatmul.mubr.f32.gmra.mrb[0].mxu0 %v914
      %v1124 = vpop.f32.mrb[0].mxu0
      %v1125 = vadd.f32 %v807, %v1124
      %v1126 = vpop.f32.mrb[0].mxu0
      %1127 = vmatprep.mubr.f32.mxu0 0.0
      %1128 = vmatmul.mubr.f32.gmra.mrb[0].mxu0 %v917
      %v1129 = vpop.f32.mrb[0].mxu0
      %v1130 = vadd.f32 %v812, %v1129
      %v1131 = vpop.f32.mrb[0].mxu0
      %1132 = vmatprep.mubr.f32.mxu0 0.0
      %1133 = vmatmul.mubr.f32.gmra.mrb[0].mxu0 %v920
      %v1134 = vpop.f32.mrb[0].mxu0
      %v1135 = vadd.f32 %v817, %v1134
      %v1136 = vpop.f32.mrb[0].mxu0
      %1137 = vmatprep.mubr.f32.mxu0 0.0
      %1138 = vmatmul.mubr.f32.gmra.mrb[0].mxu0 %v923
      %v1139 = vpop.f32.mrb[0].mxu0
      %v1140 = vadd.f32 %v822, %v1139
      %v1141 = vpop.f32.mrb[0].mxu0
      %1142 = vmatprep.mubr.f32.mxu0 0.0
      %1143 = vmatmul.mubr.f32.gmra.mrb[0].mxu0 %v926
      %v1144 = vpop.f32.mrb[0].mxu0
      %v1145 = vadd.f32 %v827, %v1144
      %v1146 = vpop.f32.mrb[0].mxu0
      %1147 = vmatprep.mubr.f32.mxu0 0.0
      %1148 = vmatmul.mubr.f32.gmra.mrb[0].mxu0 %v929
      %v1149 = vpop.f32.mrb[0].mxu0
      %v1150 = vadd.f32 %v832, %v1149
      %v1151 = vpop.f32.mrb[0].mxu0
      %1152 = vmatprep.mubr.f32.mxu0 0.0
      %1153 = vmatmul.mubr.f32.gmra.mrb[0].mxu0 %v932
      %v1154 = vpop.f32.mrb[0].mxu0
      %v1155 = vadd.f32 %v837, %v1154
      %v1156 = vpop.f32.mrb[0].mxu0
      %1157 = vmatprep.mubr.f32.mxu0 0.0
      %1158 = vmatmul.mubr.f32.gmra.mrb[0].mxu0 %v935
      %v1159 = vpop.f32.mrb[0].mxu0
      %v1160 = vadd.f32 %v842, %v1159
      %v1161 = vpop.f32.mrb[0].mxu0
      %1162 = vmatprep.mubr.f32.mxu0 0.0
      %1163 = vmatmul.mubr.f32.gmra.mrb[0].mxu0 %v938
      %v1164 = vpop.f32.mrb[0].mxu0
      %v1165 = vadd.f32 %v847, %v1164
      %v1166 = vpop.f32.mrb[0].mxu0
      %1167 = vdwg.mxu0
      %v1169 = vsel %vm530, %v500, 0
      %v1172 = vsel %vm530, %v501, 0
      %v1175 = vsel %vm530, %v502, 0
      %v1178 = vsel %vm530, %v503, 0
      %v1181 = vsel %vm530, %v504, 0
      %v1184 = vsel %vm530, %v505, 0
      %v1187 = vsel %vm530, %v506, 0
      %v1190 = vsel %vm530, %v507, 0
      %v1193 = vsel %vm530, %v508, 0
      %v1196 = vsel %vm530, %v509, 0
      %v1199 = vsel %vm530, %v510, 0
      %v1202 = vsel %vm530, %v511, 0
      %v1205 = vsel %vm530, %v512, 0
      %v1208 = vsel %vm530, %v513, 0
      %v1211 = vsel %vm530, %v514, 0
      %v1214 = vsel %vm530, %v515, 0
      %v1217 = vsel %vm530, %v516, 0
      %v1220 = vsel %vm530, %v517, 0
      %v1223 = vsel %vm530, %v518, 0
      %v1226 = vsel %vm530, %v519, 0
      %v1229 = vsel %vm530, %v520, 0
      %v1232 = vsel %vm530, %v521, 0
      %v1235 = vsel %vm530, %v522, 0
      %v1238 = vsel %vm530, %v523, 0
      %v1241 = vsel %vm530, %v524, 0
      %v1244 = vsel %vm530, %v525, 0
      %v1247 = vsel %vm530, %v526, 0
      %v1250 = vsel %vm530, %v527, 0
      %v1253 = vsel %vm530, %v528, 0
      %v1256 = vsel %vm530, %v529, 0
      %v1259 = vsel %vm621, %v205, 0
      %1261 = vmatprep.subr.mxu0 0.0
      %1262 = vmatpush1.msra.mxu0 %v1259
      %1263 = vmatprep.subr.mxu0 0.0
      %1264 = vmatpush1.msra.mxu0 0.0
      %1265 = vmatprep.subr.mxu0 0.0
      %1266 = vmatpush1.msra.mxu0 0.0
      %1267 = vmatprep.subr.mxu0 0.0
      %1268 = vmatpush1.msra.mxu0 0.0
      %1269 = vmatprep.subr.mxu0 0.0
      %1270 = vmatpush1.msra.mxu0 0.0
      %1271 = vmatprep.subr.mxu0 0.0
      %1272 = vmatpush1.msra.mxu0 0.0
      %1273 = vmatprep.subr.mxu0 0.0
      %1274 = vmatpush1.msra.mxu0 0.0
      %1275 = vmatprep.subr.mxu0 0.0
      %1276 = vmatpush1.msra.mxu0 0.0
      %1277 = vmatprep.subr.mxu0 0.0
      %1278 = vmatpush1.msra.mxu0 0.0
      %1279 = vmatprep.subr.mxu0 0.0
      %1280 = vmatpush1.msra.mxu0 0.0
      %1281 = vmatprep.subr.mxu0 0.0
      %1282 = vmatpush1.msra.mxu0 0.0
      %1283 = vmatprep.subr.mxu0 0.0
      %1284 = vmatpush1.msra.mxu0 0.0
      %1285 = vmatprep.subr.mxu0 0.0
      %1286 = vmatpush1.msra.mxu0 0.0
      %1287 = vmatprep.subr.mxu0 0.0
      %1288 = vmatpush1.msra.mxu0 0.0
      %1289 = vmatprep.subr.mxu0 0.0
      %1290 = vmatpush1.msra.mxu0 0.0
      %1291 = vmatprep.subr.mxu0 0.0
      %1292 = vmatpush1.msra.mxu0 0.0
      %1293 = vmatprep.subr.mxu0 0.0
      %1294 = vmatpush1.msra.mxu0 0.0
      %1295 = vmatprep.subr.mxu0 0.0
      %1296 = vmatpush1.msra.mxu0 0.0
      %1297 = vmatprep.subr.mxu0 0.0
      %1298 = vmatpush1.msra.mxu0 0.0
      %1299 = vmatprep.subr.mxu0 0.0
      %1300 = vmatpush1.msra.mxu0 0.0
      %1301 = vmatprep.subr.mxu0 0.0
      %1302 = vmatpush1.msra.mxu0 0.0
      %1303 = vmatprep.subr.mxu0 0.0
      %1304 = vmatpush1.msra.mxu0 0.0
      %1305 = vmatprep.subr.mxu0 0.0
      %1306 = vmatpush1.msra.mxu0 0.0
      %1307 = vmatprep.subr.mxu0 0.0
      %1308 = vmatpush1.msra.mxu0 0.0
      %1309 = vmatprep.subr.mxu0 0.0
      %1310 = vmatpush1.msra.mxu0 0.0
      %1311 = vmatprep.subr.mxu0 0.0
      %1312 = vmatpush1.msra.mxu0 0.0
      %1313 = vmatprep.subr.mxu0 0.0
      %1314 = vmatpush1.msra.mxu0 0.0
      %1315 = vmatprep.subr.mxu0 0.0
      %1316 = vmatpush1.msra.mxu0 0.0
      %1317 = vmatprep.subr.mxu0 0.0
      %1318 = vmatpush1.msra.mxu0 0.0
      %1319 = vmatprep.subr.mxu0 0.0
      %1320 = vmatpush1.msra.mxu0 0.0
      %1321 = vmatprep.subr.mxu0 0.0
      %1322 = vmatpush1.msra.mxu0 0.0
      %1323 = vmatprep.subr.mxu0 0.0
      %1324 = vmatpush1.msra.mxu0 0.0
      %1325 = vmatprep.mubr.f32.mxu0 0.0
      %1326 = vmatmul.mubr.f32.gmra.mrb[0].mxu0 %v1169
      %v1327 = vpop.f32.mrb[0].mxu0
      %v1328 = vadd.f32 0.0, %v1327
      %v1329 = vpop.f32.mrb[0].mxu0
      %1330 = vmatprep.mubr.f32.mxu0 0.0
      %1331 = vmatmul.mubr.f32.gmra.mrb[0].mxu0 %v1172
      %v1332 = vpop.f32.mrb[0].mxu0
      %v1333 = vadd.f32 0.0, %v1332
      %v1334 = vpop.f32.mrb[0].mxu0
      %1335 = vmatprep.mubr.f32.mxu0 0.0
      %1336 = vmatmul.mubr.f32.gmra.mrb[0].mxu0 %v1175
      %v1337 = vpop.f32.mrb[0].mxu0
      %v1338 = vadd.f32 0.0, %v1337
      %v1339 = vpop.f32.mrb[0].mxu0
      %1340 = vmatprep.mubr.f32.mxu0 0.0
      %1341 = vmatmul.mubr.f32.gmra.mrb[0].mxu0 %v1178
      %v1342 = vpop.f32.mrb[0].mxu0
      %v1343 = vadd.f32 0.0, %v1342
      %v1344 = vpop.f32.mrb[0].mxu0
      %1345 = vmatprep.mubr.f32.mxu0 0.0
      %1346 = vmatmul.mubr.f32.gmra.mrb[0].mxu0 %v1169
      %v1347 = vpop.f32.mrb[0].mxu0
      %v1348 = vadd.f32 0.0, %v1347
      %v1349 = vpop.f32.mrb[0].mxu0
      %1350 = vmatprep.mubr.f32.mxu0 0.0
      %1351 = vmatmul.mubr.f32.gmra.mrb[0].mxu0 %v1172
      %v1352 = vpop.f32.mrb[0].mxu0
      %v1353 = vadd.f32 0.0, %v1352
      %v1354 = vpop.f32.mrb[0].mxu0
      %1355 = vmatprep.mubr.f32.mxu0 0.0
      %1356 = vmatmul.mubr.f32.gmra.mrb[0].mxu0 %v1181
      %v1357 = vpop.f32.mrb[0].mxu0
      %v1358 = vadd.f32 0.0, %v1357
      %v1359 = vpop.f32.mrb[0].mxu0
      %1360 = vmatprep.mubr.f32.mxu0 0.0
      %1361 = vmatmul.mubr.f32.gmra.mrb[0].mxu0 %v1184
      %v1362 = vpop.f32.mrb[0].mxu0
      %v1363 = vadd.f32 0.0, %v1362
      %v1364 = vpop.f32.mrb[0].mxu0
      %1365 = vmatprep.mubr.f32.mxu0 0.0
      %1366 = vmatmul.mubr.f32.gmra.mrb[0].mxu0 %v1187
      %v1367 = vpop.f32.mrb[0].mxu0
      %v1368 = vadd.f32 0.0, %v1367
      %v1369 = vpop.f32.mrb[0].mxu0
      %1370 = vmatprep.mubr.f32.mxu0 0.0
      %1371 = vmatmul.mubr.f32.gmra.mrb[0].mxu0 %v1190
      %v1372 = vpop.f32.mrb[0].mxu0
      %v1373 = vadd.f32 0.0, %v1372
      %v1374 = vpop.f32.mrb[0].mxu0
      %1375 = vmatprep.mubr.f32.mxu0 0.0
      %1376 = vmatmul.mubr.f32.gmra.mrb[0].mxu0 %v1193
      %v1377 = vpop.f32.mrb[0].mxu0
      %v1378 = vadd.f32 0.0, %v1377
      %v1379 = vpop.f32.mrb[0].mxu0
      %1380 = vmatprep.mubr.f32.mxu0 0.0
      %1381 = vmatmul.mubr.f32.gmra.mrb[0].mxu0 %v1196
      %v1382 = vpop.f32.mrb[0].mxu0
      %v1383 = vadd.f32 0.0, %v1382
      %v1384 = vpop.f32.mrb[0].mxu0
      %1385 = vmatprep.mubr.f32.mxu0 0.0
      %1386 = vmatmul.mubr.f32.gmra.mrb[0].mxu0 %v1199
      %v1387 = vpop.f32.mrb[0].mxu0
      %v1388 = vadd.f32 0.0, %v1387
      %v1389 = vpop.f32.mrb[0].mxu0
      %1390 = vmatprep.mubr.f32.mxu0 0.0
      %1391 = vmatmul.mubr.f32.gmra.mrb[0].mxu0 %v1202
      %v1392 = vpop.f32.mrb[0].mxu0
      %v1393 = vadd.f32 0.0, %v1392
      %v1394 = vpop.f32.mrb[0].mxu0
      %1395 = vmatprep.mubr.f32.mxu0 0.0
      %1396 = vmatmul.mubr.f32.gmra.mrb[0].mxu0 %v1205
      %v1397 = vpop.f32.mrb[0].mxu0
      %v1398 = vadd.f32 0.0, %v1397
      %v1399 = vpop.f32.mrb[0].mxu0
      %1400 = vmatprep.mubr.f32.mxu0 0.0
      %1401 = vmatmul.mubr.f32.gmra.mrb[0].mxu0 %v1208
      %v1402 = vpop.f32.mrb[0].mxu0
      %v1403 = vadd.f32 0.0, %v1402
      %v1404 = vpop.f32.mrb[0].mxu0
      %1405 = vmatprep.mubr.f32.mxu0 0.0
      %1406 = vmatmul.mubr.f32.gmra.mrb[0].mxu0 %v1211
      %v1407 = vpop.f32.mrb[0].mxu0
      %v1408 = vadd.f32 0.0, %v1407
      %v1409 = vpop.f32.mrb[0].mxu0
      %1410 = vmatprep.mubr.f32.mxu0 0.0
      %1411 = vmatmul.mubr.f32.gmra.mrb[0].mxu0 %v1214
      %v1412 = vpop.f32.mrb[0].mxu0
      %v1413 = vadd.f32 0.0, %v1412
      %v1414 = vpop.f32.mrb[0].mxu0
      %1415 = vmatprep.mubr.f32.mxu0 0.0
      %1416 = vmatmul.mubr.f32.gmra.mrb[0].mxu0 %v1217
      %v1417 = vpop.f32.mrb[0].mxu0
      %v1418 = vadd.f32 0.0, %v1417
      %v1419 = vpop.f32.mrb[0].mxu0
      %1420 = vmatprep.mubr.f32.mxu0 0.0
      %1421 = vmatmul.mubr.f32.gmra.mrb[0].mxu0 %v1220
      %v1422 = vpop.f32.mrb[0].mxu0
      %v1423 = vadd.f32 0.0, %v1422
      %v1424 = vpop.f32.mrb[0].mxu0
      %1425 = vmatprep.mubr.f32.mxu0 0.0
      %1426 = vmatmul.mubr.f32.gmra.mrb[0].mxu0 %v1223
      %v1427 = vpop.f32.mrb[0].mxu0
      %v1428 = vadd.f32 0.0, %v1427
      %v1429 = vpop.f32.mrb[0].mxu0
      %1430 = vmatprep.mubr.f32.mxu0 0.0
      %1431 = vmatmul.mubr.f32.gmra.mrb[0].mxu0 %v1226
      %v1432 = vpop.f32.mrb[0].mxu0
      %v1433 = vadd.f32 0.0, %v1432
      %v1434 = vpop.f32.mrb[0].mxu0
      %1435 = vmatprep.mubr.f32.mxu0 0.0
      %1436 = vmatmul.mubr.f32.gmra.mrb[0].mxu0 %v1229
      %v1437 = vpop.f32.mrb[0].mxu0
      %v1438 = vadd.f32 0.0, %v1437
      %v1439 = vpop.f32.mrb[0].mxu0
      %1440 = vmatprep.mubr.f32.mxu0 0.0
      %1441 = vmatmul.mubr.f32.gmra.mrb[0].mxu0 %v1232
      %v1442 = vpop.f32.mrb[0].mxu0
      %v1443 = vadd.f32 0.0, %v1442
      %v1444 = vpop.f32.mrb[0].mxu0
      %1445 = vmatprep.mubr.f32.mxu0 0.0
      %1446 = vmatmul.mubr.f32.gmra.mrb[0].mxu0 %v1235
      %v1447 = vpop.f32.mrb[0].mxu0
      %v1448 = vadd.f32 0.0, %v1447
      %v1449 = vpop.f32.mrb[0].mxu0
      %1450 = vmatprep.mubr.f32.mxu0 0.0
      %1451 = vmatmul.mubr.f32.gmra.mrb[0].mxu0 %v1238
      %v1452 = vpop.f32.mrb[0].mxu0
      %v1453 = vadd.f32 0.0, %v1452
      %v1454 = vpop.f32.mrb[0].mxu0
      %1455 = vmatprep.mubr.f32.mxu0 0.0
      %1456 = vmatmul.mubr.f32.gmra.mrb[0].mxu0 %v1241
      %v1457 = vpop.f32.mrb[0].mxu0
      %v1458 = vadd.f32 0.0, %v1457
      %v1459 = vpop.f32.mrb[0].mxu0
      %1460 = vmatprep.mubr.f32.mxu0 0.0
      %1461 = vmatmul.mubr.f32.gmra.mrb[0].mxu0 %v1244
      %v1462 = vpop.f32.mrb[0].mxu0
      %v1463 = vadd.f32 0.0, %v1462
      %v1464 = vpop.f32.mrb[0].mxu0
      %1465 = vmatprep.mubr.f32.mxu0 0.0
      %1466 = vmatmul.mubr.f32.gmra.mrb[0].mxu0 %v1247
      %v1467 = vpop.f32.mrb[0].mxu0
      %v1468 = vadd.f32 0.0, %v1467
      %v1469 = vpop.f32.mrb[0].mxu0
      %1470 = vmatprep.mubr.f32.mxu0 0.0
      %1471 = vmatmul.mubr.f32.gmra.mrb[0].mxu0 %v1250
      %v1472 = vpop.f32.mrb[0].mxu0
      %v1473 = vadd.f32 0.0, %v1472
      %v1474 = vpop.f32.mrb[0].mxu0
      %1475 = vmatprep.mubr.f32.mxu0 0.0
      %1476 = vmatmul.mubr.f32.gmra.mrb[0].mxu0 %v1253
      %v1477 = vpop.f32.mrb[0].mxu0
      %v1478 = vadd.f32 0.0, %v1477
      %v1479 = vpop.f32.mrb[0].mxu0
      %1480 = vmatprep.mubr.f32.mxu0 0.0
      %1481 = vmatmul.mubr.f32.gmra.mrb[0].mxu0 %v1256
      %v1482 = vpop.f32.mrb[0].mxu0
      %v1483 = vadd.f32 0.0, %v1482
      %v1484 = vpop.f32.mrb[0].mxu0
      %1485 = vdwg.mxu0
      %v1486 = vadd.f32 %v1010, %v1328
      %v1487 = vadd.f32 %v1015, %v1333
      %v1488 = vadd.f32 %v1020, %v1338
      %v1489 = vadd.f32 %v1025, %v1343
      %v1490 = vadd.f32 %v1030, %v1348
      %v1491 = vadd.f32 %v1035, %v1353
      %v1492 = vadd.f32 %v1040, %v1358
      %v1493 = vadd.f32 %v1045, %v1363
      %v1494 = vadd.f32 %v1050, %v1368
      %v1495 = vadd.f32 %v1055, %v1373
      %v1496 = vadd.f32 %v1060, %v1378
      %v1497 = vadd.f32 %v1065, %v1383
      %v1498 = vadd.f32 %v1070, %v1388
      %v1499 = vadd.f32 %v1075, %v1393
      %v1500 = vadd.f32 %v1080, %v1398
      %v1501 = vadd.f32 %v1085, %v1403
      %v1502 = vadd.f32 %v1090, %v1408
      %v1503 = vadd.f32 %v1095, %v1413
      %v1504 = vadd.f32 %v1100, %v1418
      %v1505 = vadd.f32 %v1105, %v1423
      %v1506 = vadd.f32 %v1110, %v1428
      %v1507 = vadd.f32 %v1115, %v1433
      %v1508 = vadd.f32 %v1120, %v1438
      %v1509 = vadd.f32 %v1125, %v1443
      %v1510 = vadd.f32 %v1130, %v1448
      %v1511 = vadd.f32 %v1135, %v1453
      %v1512 = vadd.f32 %v1140, %v1458
      %v1513 = vadd.f32 %v1145, %v1463
      %v1514 = vadd.f32 %v1150, %v1468
      %v1515 = vadd.f32 %v1155, %v1473
      %v1516 = vadd.f32 %v1160, %v1478
      %v1517 = vadd.f32 %v1165, %v1483
      %v1518 = vrot.slane %v201, 7
      %v1519 = vrot.slane %v202, 7
      %v1520 = vsel %vm256, %v1518, %v1519
      %v1521 = vsel %vm256, %v1519, %v1518
      %v1522 = vlaneseq
      %v1523 = vshrl.u32 %v1522, 7
      %v1524 = vsub.s32 1, %v1523
      %v1525 = vrot.slane %v201, %v1524
      %v1526 = vsel %vm224, %v1525, %v1521
      %v1527 = vsel %vm225, %v1525, %v1520
      %v1528 = vrot.slane %v201, 1
      %v1529 = vrot.slane %v202, 1
      %v1530 = vsel %vm409, %v1528, %v1529
      %v1531 = vsel %vm409, %v1529, %v1528
      %v1532 = vlaneseq
      %v1533 = vshrl.u32 %v1532, 7
      %v1534 = vsub.s32 6, %v1533
      %v1535 = vrot.slane %v202, %v1534
      %v1536 = vsel %vm377, %v1535, %v1530
      %v1537 = vsel %vm378, %v1535, %v1531
      %v1539 = vsel %vm530, %v1526, 0
      %v1542 = vsel %vm530, %v1527, 0
      %v1545 = vsel %vm621, %v206, 0
      %1547 = vmatprep.subr.mxu0 0.0
      %1548 = vmatpush1.msra.mxu0 %v1545
      %1549 = vmatprep.subr.mxu0 0.0
      %1550 = vmatpush1.msra.mxu0 0.0
      %1551 = vmatprep.subr.mxu0 0.0
      %1552 = vmatpush1.msra.mxu0 0.0
      %1553 = vmatprep.subr.mxu0 0.0
      %1554 = vmatpush1.msra.mxu0 0.0
      %1555 = vmatprep.subr.mxu0 0.0
      %1556 = vmatpush1.msra.mxu0 0.0
      %1557 = vmatprep.subr.mxu0 0.0
      %1558 = vmatpush1.msra.mxu0 0.0
      %1559 = vmatprep.subr.mxu0 0.0
      %1560 = vmatpush1.msra.mxu0 0.0
      %1561 = vmatprep.subr.mxu0 0.0
      %1562 = vmatpush1.msra.mxu0 0.0
      %1563 = vmatprep.subr.mxu0 0.0
      %1564 = vmatpush1.msra.mxu0 0.0
      %1565 = vmatprep.subr.mxu0 0.0
      %1566 = vmatpush1.msra.mxu0 0.0
      %1567 = vmatprep.subr.mxu0 0.0
      %1568 = vmatpush1.msra.mxu0 0.0
      %1569 = vmatprep.subr.mxu0 0.0
      %1570 = vmatpush1.msra.mxu0 0.0
      %1571 = vmatprep.subr.mxu0 0.0
      %1572 = vmatpush1.msra.mxu0 0.0
      %1573 = vmatprep.subr.mxu0 0.0
      %1574 = vmatpush1.msra.mxu0 0.0
      %1575 = vmatprep.subr.mxu0 0.0
      %1576 = vmatpush1.msra.mxu0 0.0
      %1577 = vmatprep.subr.mxu0 0.0
      %1578 = vmatpush1.msra.mxu0 0.0
      %1579 = vmatprep.subr.mxu0 0.0
      %1580 = vmatpush1.msra.mxu0 0.0
      %1581 = vmatprep.subr.mxu0 0.0
      %1582 = vmatpush1.msra.mxu0 0.0
      %1583 = vmatprep.subr.mxu0 0.0
      %1584 = vmatpush1.msra.mxu0 0.0
      %1585 = vmatprep.subr.mxu0 0.0
      %1586 = vmatpush1.msra.mxu0 0.0
      %1587 = vmatprep.subr.mxu0 0.0
      %1588 = vmatpush1.msra.mxu0 0.0
      %1589 = vmatprep.subr.mxu0 0.0
      %1590 = vmatpush1.msra.mxu0 0.0
      %1591 = vmatprep.subr.mxu0 0.0
      %1592 = vmatpush1.msra.mxu0 0.0
      %1593 = vmatprep.subr.mxu0 0.0
      %1594 = vmatpush1.msra.mxu0 0.0
      %1595 = vmatprep.subr.mxu0 0.0
      %1596 = vmatpush1.msra.mxu0 0.0
      %1597 = vmatprep.subr.mxu0 0.0
      %1598 = vmatpush1.msra.mxu0 0.0
      %1599 = vmatprep.subr.mxu0 0.0
      %1600 = vmatpush1.msra.mxu0 0.0
      %1601 = vmatprep.subr.mxu0 0.0
      %1602 = vmatpush1.msra.mxu0 0.0
      %1603 = vmatprep.subr.mxu0 0.0
      %1604 = vmatpush1.msra.mxu0 0.0
      %1605 = vmatprep.subr.mxu0 0.0
      %1606 = vmatpush1.msra.mxu0 0.0
      %1607 = vmatprep.subr.mxu0 0.0
      %1608 = vmatpush1.msra.mxu0 0.0
      %1609 = vmatprep.subr.mxu0 0.0
      %1610 = vmatpush1.msra.mxu0 0.0
      %1611 = vmatprep.mubr.f32.mxu0 0.0
      %1612 = vmatmul.mubr.f32.gmra.mrb[0].mxu0 %v857
      %v1613 = vpop.f32.mrb[0].mxu0
      %v1614 = vadd.f32 0.0, %v1613
      %v1615 = vpop.f32.mrb[0].mxu0
      %1616 = vmatprep.mubr.f32.mxu0 0.0
      %1617 = vmatmul.mubr.f32.gmra.mrb[0].mxu0 %v860
      %v1618 = vpop.f32.mrb[0].mxu0
      %v1619 = vadd.f32 0.0, %v1618
      %v1620 = vpop.f32.mrb[0].mxu0
      %1621 = vmatprep.mubr.f32.mxu0 0.0
      %1622 = vmatmul.mubr.f32.gmra.mrb[0].mxu0 %v851
      %v1623 = vpop.f32.mrb[0].mxu0
      %v1624 = vadd.f32 0.0, %v1623
      %v1625 = vpop.f32.mrb[0].mxu0
      %1626 = vmatprep.mubr.f32.mxu0 0.0
      %1627 = vmatmul.mubr.f32.gmra.mrb[0].mxu0 %v854
      %v1628 = vpop.f32.mrb[0].mxu0
      %v1629 = vadd.f32 0.0, %v1628
      %v1630 = vpop.f32.mrb[0].mxu0
      %1631 = vmatprep.mubr.f32.mxu0 0.0
      %1632 = vmatmul.mubr.f32.gmra.mrb[0].mxu0 %v863
      %v1633 = vpop.f32.mrb[0].mxu0
      %v1634 = vadd.f32 0.0, %v1633
      %v1635 = vpop.f32.mrb[0].mxu0
      %1636 = vmatprep.mubr.f32.mxu0 0.0
      %1637 = vmatmul.mubr.f32.gmra.mrb[0].mxu0 %v866
      %v1638 = vpop.f32.mrb[0].mxu0
      %v1639 = vadd.f32 0.0, %v1638
      %v1640 = vpop.f32.mrb[0].mxu0
      %1641 = vmatprep.mubr.f32.mxu0 0.0
      %1642 = vmatmul.mubr.f32.gmra.mrb[0].mxu0 %v869
      %v1643 = vpop.f32.mrb[0].mxu0
      %v1644 = vadd.f32 0.0, %v1643
      %v1645 = vpop.f32.mrb[0].mxu0
      %1646 = vmatprep.mubr.f32.mxu0 0.0
      %1647 = vmatmul.mubr.f32.gmra.mrb[0].mxu0 %v872
      %v1648 = vpop.f32.mrb[0].mxu0
      %v1649 = vadd.f32 0.0, %v1648
      %v1650 = vpop.f32.mrb[0].mxu0
      %1651 = vmatprep.mubr.f32.mxu0 0.0
      %1652 = vmatmul.mubr.f32.gmra.mrb[0].mxu0 %v875
      %v1653 = vpop.f32.mrb[0].mxu0
      %v1654 = vadd.f32 0.0, %v1653
      %v1655 = vpop.f32.mrb[0].mxu0
      %1656 = vmatprep.mubr.f32.mxu0 0.0
      %1657 = vmatmul.mubr.f32.gmra.mrb[0].mxu0 %v878
      %v1658 = vpop.f32.mrb[0].mxu0
      %v1659 = vadd.f32 0.0, %v1658
      %v1660 = vpop.f32.mrb[0].mxu0
      %1661 = vmatprep.mubr.f32.mxu0 0.0
      %1662 = vmatmul.mubr.f32.gmra.mrb[0].mxu0 %v881
      %v1663 = vpop.f32.mrb[0].mxu0
      %v1664 = vadd.f32 0.0, %v1663
      %v1665 = vpop.f32.mrb[0].mxu0
      %1666 = vmatprep.mubr.f32.mxu0 0.0
      %1667 = vmatmul.mubr.f32.gmra.mrb[0].mxu0 %v884
      %v1668 = vpop.f32.mrb[0].mxu0
      %v1669 = vadd.f32 0.0, %v1668
      %v1670 = vpop.f32.mrb[0].mxu0
      %1671 = vmatprep.mubr.f32.mxu0 0.0
      %1672 = vmatmul.mubr.f32.gmra.mrb[0].mxu0 %v887
      %v1673 = vpop.f32.mrb[0].mxu0
      %v1674 = vadd.f32 0.0, %v1673
      %v1675 = vpop.f32.mrb[0].mxu0
      %1676 = vmatprep.mubr.f32.mxu0 0.0
      %1677 = vmatmul.mubr.f32.gmra.mrb[0].mxu0 %v890
      %v1678 = vpop.f32.mrb[0].mxu0
      %v1679 = vadd.f32 0.0, %v1678
      %v1680 = vpop.f32.mrb[0].mxu0
      %1681 = vmatprep.mubr.f32.mxu0 0.0
      %1682 = vmatmul.mubr.f32.gmra.mrb[0].mxu0 %v893
      %v1683 = vpop.f32.mrb[0].mxu0
      %v1684 = vadd.f32 0.0, %v1683
      %v1685 = vpop.f32.mrb[0].mxu0
      %1686 = vmatprep.mubr.f32.mxu0 0.0
      %1687 = vmatmul.mubr.f32.gmra.mrb[0].mxu0 %v896
      %v1688 = vpop.f32.mrb[0].mxu0
      %v1689 = vadd.f32 0.0, %v1688
      %v1690 = vpop.f32.mrb[0].mxu0
      %1691 = vmatprep.mubr.f32.mxu0 0.0
      %1692 = vmatmul.mubr.f32.gmra.mrb[0].mxu0 %v899
      %v1693 = vpop.f32.mrb[0].mxu0
      %v1694 = vadd.f32 0.0, %v1693
      %v1695 = vpop.f32.mrb[0].mxu0
      %1696 = vmatprep.mubr.f32.mxu0 0.0
      %1697 = vmatmul.mubr.f32.gmra.mrb[0].mxu0 %v902
      %v1698 = vpop.f32.mrb[0].mxu0
      %v1699 = vadd.f32 0.0, %v1698
      %v1700 = vpop.f32.mrb[0].mxu0
      %1701 = vmatprep.mubr.f32.mxu0 0.0
      %1702 = vmatmul.mubr.f32.gmra.mrb[0].mxu0 %v905
      %v1703 = vpop.f32.mrb[0].mxu0
      %v1704 = vadd.f32 0.0, %v1703
      %v1705 = vpop.f32.mrb[0].mxu0
      %1706 = vmatprep.mubr.f32.mxu0 0.0
      %1707 = vmatmul.mubr.f32.gmra.mrb[0].mxu0 %v908
      %v1708 = vpop.f32.mrb[0].mxu0
      %v1709 = vadd.f32 0.0, %v1708
      %v1710 = vpop.f32.mrb[0].mxu0
      %1711 = vmatprep.mubr.f32.mxu0 0.0
      %1712 = vmatmul.mubr.f32.gmra.mrb[0].mxu0 %v911
      %v1713 = vpop.f32.mrb[0].mxu0
      %v1714 = vadd.f32 0.0, %v1713
      %v1715 = vpop.f32.mrb[0].mxu0
      %1716 = vmatprep.mubr.f32.mxu0 0.0
      %1717 = vmatmul.mubr.f32.gmra.mrb[0].mxu0 %v914
      %v1718 = vpop.f32.mrb[0].mxu0
      %v1719 = vadd.f32 0.0, %v1718
      %v1720 = vpop.f32.mrb[0].mxu0
      %1721 = vmatprep.mubr.f32.mxu0 0.0
      %1722 = vmatmul.mubr.f32.gmra.mrb[0].mxu0 %v917
      %v1723 = vpop.f32.mrb[0].mxu0
      %v1724 = vadd.f32 0.0, %v1723
      %v1725 = vpop.f32.mrb[0].mxu0
      %1726 = vmatprep.mubr.f32.mxu0 0.0
      %1727 = vmatmul.mubr.f32.gmra.mrb[0].mxu0 %v920
      %v1728 = vpop.f32.mrb[0].mxu0
      %v1729 = vadd.f32 0.0, %v1728
      %v1730 = vpop.f32.mrb[0].mxu0
      %1731 = vmatprep.mubr.f32.mxu0 0.0
      %1732 = vmatmul.mubr.f32.gmra.mrb[0].mxu0 %v923
      %v1733 = vpop.f32.mrb[0].mxu0
      %v1734 = vadd.f32 0.0, %v1733
      %v1735 = vpop.f32.mrb[0].mxu0
      %1736 = vmatprep.mubr.f32.mxu0 0.0
      %1737 = vmatmul.mubr.f32.gmra.mrb[0].mxu0 %v926
      %v1738 = vpop.f32.mrb[0].mxu0
      %v1739 = vadd.f32 0.0, %v1738
      %v1740 = vpop.f32.mrb[0].mxu0
      %1741 = vmatprep.mubr.f32.mxu0 0.0
      %1742 = vmatmul.mubr.f32.gmra.mrb[0].mxu0 %v929
      %v1743 = vpop.f32.mrb[0].mxu0
      %v1744 = vadd.f32 0.0, %v1743
      %v1745 = vpop.f32.mrb[0].mxu0
      %1746 = vmatprep.mubr.f32.mxu0 0.0
      %1747 = vmatmul.mubr.f32.gmra.mrb[0].mxu0 %v932
      %v1748 = vpop.f32.mrb[0].mxu0
      %v1749 = vadd.f32 0.0, %v1748
      %v1750 = vpop.f32.mrb[0].mxu0
      %1751 = vmatprep.mubr.f32.mxu0 0.0
      %1752 = vmatmul.mubr.f32.gmra.mrb[0].mxu0 %v935
      %v1753 = vpop.f32.mrb[0].mxu0
      %v1754 = vadd.f32 0.0, %v1753
      %v1755 = vpop.f32.mrb[0].mxu0
      %1756 = vmatprep.mubr.f32.mxu0 0.0
      %1757 = vmatmul.mubr.f32.gmra.mrb[0].mxu0 %v938
      %v1758 = vpop.f32.mrb[0].mxu0
      %v1759 = vadd.f32 0.0, %v1758
      %v1760 = vpop.f32.mrb[0].mxu0
      %1761 = vmatprep.mubr.f32.mxu0 0.0
      %1762 = vmatmul.mubr.f32.gmra.mrb[0].mxu0 %v1539
      %v1763 = vpop.f32.mrb[0].mxu0
      %v1764 = vadd.f32 0.0, %v1763
      %v1765 = vpop.f32.mrb[0].mxu0
      %1766 = vmatprep.mubr.f32.mxu0 0.0
      %1767 = vmatmul.mubr.f32.gmra.mrb[0].mxu0 %v1542
      %v1768 = vpop.f32.mrb[0].mxu0
      %v1769 = vadd.f32 0.0, %v1768
      %v1770 = vpop.f32.mrb[0].mxu0
      %1771 = vdwg.mxu0
      %v1772 = vadd.f32 %v1486, %v1614
      %v1773 = vadd.f32 %v1487, %v1619
      %v1774 = vadd.f32 %v1488, %v1624
      %v1775 = vadd.f32 %v1489, %v1629
      %v1776 = vadd.f32 %v1490, %v1634
      %v1777 = vadd.f32 %v1491, %v1639
      %v1778 = vadd.f32 %v1492, %v1644
      %v1779 = vadd.f32 %v1493, %v1649
      %v1780 = vadd.f32 %v1494, %v1654
      %v1781 = vadd.f32 %v1495, %v1659
      %v1782 = vadd.f32 %v1496, %v1664
      %v1783 = vadd.f32 %v1497, %v1669
      %v1784 = vadd.f32 %v1498, %v1674
      %v1785 = vadd.f32 %v1499, %v1679
      %v1786 = vadd.f32 %v1500, %v1684
      %v1787 = vadd.f32 %v1501, %v1689
      %v1788 = vadd.f32 %v1502, %v1694
      %v1789 = vadd.f32 %v1503, %v1699
      %v1790 = vadd.f32 %v1504, %v1704
      %v1791 = vadd.f32 %v1505, %v1709
      %v1792 = vadd.f32 %v1506, %v1714
      %v1793 = vadd.f32 %v1507, %v1719
      %v1794 = vadd.f32 %v1508, %v1724
      %v1795 = vadd.f32 %v1509, %v1729
      %v1796 = vadd.f32 %v1510, %v1734
      %v1797 = vadd.f32 %v1511, %v1739
      %v1798 = vadd.f32 %v1512, %v1744
      %v1799 = vadd.f32 %v1513, %v1749
      %v1800 = vadd.f32 %v1514, %v1754
      %v1801 = vadd.f32 %v1515, %v1759
      %v1802 = vadd.f32 %v1516, %v1764
      %v1803 = vadd.f32 %v1517, %v1769
      %v1805 = vsel %vm530, %v201, 0
      %v1808 = vsel %vm530, %v202, 0
      %v1811 = vsel %vm621, %v207, 0
      %1813 = vmatprep.subr.mxu0 0.0
      %1814 = vmatpush1.msra.mxu0 %v1811
      %1815 = vmatprep.subr.mxu0 0.0
      %1816 = vmatpush1.msra.mxu0 0.0
      %1817 = vmatprep.subr.mxu0 0.0
      %1818 = vmatpush1.msra.mxu0 0.0
      %1819 = vmatprep.subr.mxu0 0.0
      %1820 = vmatpush1.msra.mxu0 0.0
      %1821 = vmatprep.subr.mxu0 0.0
      %1822 = vmatpush1.msra.mxu0 0.0
      %1823 = vmatprep.subr.mxu0 0.0
      %1824 = vmatpush1.msra.mxu0 0.0
      %1825 = vmatprep.subr.mxu0 0.0
      %1826 = vmatpush1.msra.mxu0 0.0
      %1827 = vmatprep.subr.mxu0 0.0
      %1828 = vmatpush1.msra.mxu0 0.0
      %1829 = vmatprep.subr.mxu0 0.0
      %1830 = vmatpush1.msra.mxu0 0.0
      %1831 = vmatprep.subr.mxu0 0.0
      %1832 = vmatpush1.msra.mxu0 0.0
      %1833 = vmatprep.subr.mxu0 0.0
      %1834 = vmatpush1.msra.mxu0 0.0
      %1835 = vmatprep.subr.mxu0 0.0
      %1836 = vmatpush1.msra.mxu0 0.0
      %1837 = vmatprep.subr.mxu0 0.0
      %1838 = vmatpush1.msra.mxu0 0.0
      %1839 = vmatprep.subr.mxu0 0.0
      %1840 = vmatpush1.msra.mxu0 0.0
      %1841 = vmatprep.subr.mxu0 0.0
      %1842 = vmatpush1.msra.mxu0 0.0
      %1843 = vmatprep.subr.mxu0 0.0
      %1844 = vmatpush1.msra.mxu0 0.0
      %1845 = vmatprep.subr.mxu0 0.0
      %1846 = vmatpush1.msra.mxu0 0.0
      %1847 = vmatprep.subr.mxu0 0.0
      %1848 = vmatpush1.msra.mxu0 0.0
      %1849 = vmatprep.subr.mxu0 0.0
      %1850 = vmatpush1.msra.mxu0 0.0
      %1851 = vmatprep.subr.mxu0 0.0
      %1852 = vmatpush1.msra.mxu0 0.0
      %1853 = vmatprep.subr.mxu0 0.0
      %1854 = vmatpush1.msra.mxu0 0.0
      %1855 = vmatprep.subr.mxu0 0.0
      %1856 = vmatpush1.msra.mxu0 0.0
      %1857 = vmatprep.subr.mxu0 0.0
      %1858 = vmatpush1.msra.mxu0 0.0
      %1859 = vmatprep.subr.mxu0 0.0
      %1860 = vmatpush1.msra.mxu0 0.0
      %1861 = vmatprep.subr.mxu0 0.0
      %1862 = vmatpush1.msra.mxu0 0.0
      %1863 = vmatprep.subr.mxu0 0.0
      %1864 = vmatpush1.msra.mxu0 0.0
      %1865 = vmatprep.subr.mxu0 0.0
      %1866 = vmatpush1.msra.mxu0 0.0
      %1867 = vmatprep.subr.mxu0 0.0
      %1868 = vmatpush1.msra.mxu0 0.0
      %1869 = vmatprep.subr.mxu0 0.0
      %1870 = vmatpush1.msra.mxu0 0.0
      %1871 = vmatprep.subr.mxu0 0.0
      %1872 = vmatpush1.msra.mxu0 0.0
      %1873 = vmatprep.subr.mxu0 0.0
      %1874 = vmatpush1.msra.mxu0 0.0
      %1875 = vmatprep.subr.mxu0 0.0
      %1876 = vmatpush1.msra.mxu0 0.0
      %1877 = vmatprep.mubr.f32.mxu0 0.0
      %1878 = vmatmul.mubr.f32.gmra.mrb[0].mxu0 %v538
      %v1879 = vpop.f32.mrb[0].mxu0
      %v1880 = vadd.f32 0.0, %v1879
      %v1881 = vpop.f32.mrb[0].mxu0
      %1882 = vmatprep.mubr.f32.mxu0 0.0
      %1883 = vmatmul.mubr.f32.gmra.mrb[0].mxu0 %v541
      %v1884 = vpop.f32.mrb[0].mxu0
      %v1885 = vadd.f32 0.0, %v1884
      %v1886 = vpop.f32.mrb[0].mxu0
      %1887 = vmatprep.mubr.f32.mxu0 0.0
      %1888 = vmatmul.mubr.f32.gmra.mrb[0].mxu0 %v532
      %v1889 = vpop.f32.mrb[0].mxu0
      %v1890 = vadd.f32 0.0, %v1889
      %v1891 = vpop.f32.mrb[0].mxu0
      %1892 = vmatprep.mubr.f32.mxu0 0.0
      %1893 = vmatmul.mubr.f32.gmra.mrb[0].mxu0 %v535
      %v1894 = vpop.f32.mrb[0].mxu0
      %v1895 = vadd.f32 0.0, %v1894
      %v1896 = vpop.f32.mrb[0].mxu0
      %1897 = vmatprep.mubr.f32.mxu0 0.0
      %1898 = vmatmul.mubr.f32.gmra.mrb[0].mxu0 %v544
      %v1899 = vpop.f32.mrb[0].mxu0
      %v1900 = vadd.f32 0.0, %v1899
      %v1901 = vpop.f32.mrb[0].mxu0
      %1902 = vmatprep.mubr.f32.mxu0 0.0
      %1903 = vmatmul.mubr.f32.gmra.mrb[0].mxu0 %v547
      %v1904 = vpop.f32.mrb[0].mxu0
      %v1905 = vadd.f32 0.0, %v1904
      %v1906 = vpop.f32.mrb[0].mxu0
      %1907 = vmatprep.mubr.f32.mxu0 0.0
      %1908 = vmatmul.mubr.f32.gmra.mrb[0].mxu0 %v550
      %v1909 = vpop.f32.mrb[0].mxu0
      %v1910 = vadd.f32 0.0, %v1909
      %v1911 = vpop.f32.mrb[0].mxu0
      %1912 = vmatprep.mubr.f32.mxu0 0.0
      %1913 = vmatmul.mubr.f32.gmra.mrb[0].mxu0 %v553
      %v1914 = vpop.f32.mrb[0].mxu0
      %v1915 = vadd.f32 0.0, %v1914
      %v1916 = vpop.f32.mrb[0].mxu0
      %1917 = vmatprep.mubr.f32.mxu0 0.0
      %1918 = vmatmul.mubr.f32.gmra.mrb[0].mxu0 %v556
      %v1919 = vpop.f32.mrb[0].mxu0
      %v1920 = vadd.f32 0.0, %v1919
      %v1921 = vpop.f32.mrb[0].mxu0
      %1922 = vmatprep.mubr.f32.mxu0 0.0
      %1923 = vmatmul.mubr.f32.gmra.mrb[0].mxu0 %v559
      %v1924 = vpop.f32.mrb[0].mxu0
      %v1925 = vadd.f32 0.0, %v1924
      %v1926 = vpop.f32.mrb[0].mxu0
      %1927 = vmatprep.mubr.f32.mxu0 0.0
      %1928 = vmatmul.mubr.f32.gmra.mrb[0].mxu0 %v562
      %v1929 = vpop.f32.mrb[0].mxu0
      %v1930 = vadd.f32 0.0, %v1929
      %v1931 = vpop.f32.mrb[0].mxu0
      %1932 = vmatprep.mubr.f32.mxu0 0.0
      %1933 = vmatmul.mubr.f32.gmra.mrb[0].mxu0 %v565
      %v1934 = vpop.f32.mrb[0].mxu0
      %v1935 = vadd.f32 0.0, %v1934
      %v1936 = vpop.f32.mrb[0].mxu0
      %1937 = vmatprep.mubr.f32.mxu0 0.0
      %1938 = vmatmul.mubr.f32.gmra.mrb[0].mxu0 %v568
      %v1939 = vpop.f32.mrb[0].mxu0
      %v1940 = vadd.f32 0.0, %v1939
      %v1941 = vpop.f32.mrb[0].mxu0
      %1942 = vmatprep.mubr.f32.mxu0 0.0
      %1943 = vmatmul.mubr.f32.gmra.mrb[0].mxu0 %v571
      %v1944 = vpop.f32.mrb[0].mxu0
      %v1945 = vadd.f32 0.0, %v1944
      %v1946 = vpop.f32.mrb[0].mxu0
      %1947 = vmatprep.mubr.f32.mxu0 0.0
      %1948 = vmatmul.mubr.f32.gmra.mrb[0].mxu0 %v574
      %v1949 = vpop.f32.mrb[0].mxu0
      %v1950 = vadd.f32 0.0, %v1949
      %v1951 = vpop.f32.mrb[0].mxu0
      %1952 = vmatprep.mubr.f32.mxu0 0.0
      %1953 = vmatmul.mubr.f32.gmra.mrb[0].mxu0 %v577
      %v1954 = vpop.f32.mrb[0].mxu0
      %v1955 = vadd.f32 0.0, %v1954
      %v1956 = vpop.f32.mrb[0].mxu0
      %1957 = vmatprep.mubr.f32.mxu0 0.0
      %1958 = vmatmul.mubr.f32.gmra.mrb[0].mxu0 %v580
      %v1959 = vpop.f32.mrb[0].mxu0
      %v1960 = vadd.f32 0.0, %v1959
      %v1961 = vpop.f32.mrb[0].mxu0
      %1962 = vmatprep.mubr.f32.mxu0 0.0
      %1963 = vmatmul.mubr.f32.gmra.mrb[0].mxu0 %v583
      %v1964 = vpop.f32.mrb[0].mxu0
      %v1965 = vadd.f32 0.0, %v1964
      %v1966 = vpop.f32.mrb[0].mxu0
      %1967 = vmatprep.mubr.f32.mxu0 0.0
      %1968 = vmatmul.mubr.f32.gmra.mrb[0].mxu0 %v586
      %v1969 = vpop.f32.mrb[0].mxu0
      %v1970 = vadd.f32 0.0, %v1969
      %v1971 = vpop.f32.mrb[0].mxu0
      %1972 = vmatprep.mubr.f32.mxu0 0.0
      %1973 = vmatmul.mubr.f32.gmra.mrb[0].mxu0 %v589
      %v1974 = vpop.f32.mrb[0].mxu0
      %v1975 = vadd.f32 0.0, %v1974
      %v1976 = vpop.f32.mrb[0].mxu0
      %1977 = vmatprep.mubr.f32.mxu0 0.0
      %1978 = vmatmul.mubr.f32.gmra.mrb[0].mxu0 %v592
      %v1979 = vpop.f32.mrb[0].mxu0
      %v1980 = vadd.f32 0.0, %v1979
      %v1981 = vpop.f32.mrb[0].mxu0
      %1982 = vmatprep.mubr.f32.mxu0 0.0
      %1983 = vmatmul.mubr.f32.gmra.mrb[0].mxu0 %v595
      %v1984 = vpop.f32.mrb[0].mxu0
      %v1985 = vadd.f32 0.0, %v1984
      %v1986 = vpop.f32.mrb[0].mxu0
      %1987 = vmatprep.mubr.f32.mxu0 0.0
      %1988 = vmatmul.mubr.f32.gmra.mrb[0].mxu0 %v598
      %v1989 = vpop.f32.mrb[0].mxu0
      %v1990 = vadd.f32 0.0, %v1989
      %v1991 = vpop.f32.mrb[0].mxu0
      %1992 = vmatprep.mubr.f32.mxu0 0.0
      %1993 = vmatmul.mubr.f32.gmra.mrb[0].mxu0 %v601
      %v1994 = vpop.f32.mrb[0].mxu0
      %v1995 = vadd.f32 0.0, %v1994
      %v1996 = vpop.f32.mrb[0].mxu0
      %1997 = vmatprep.mubr.f32.mxu0 0.0
      %1998 = vmatmul.mubr.f32.gmra.mrb[0].mxu0 %v604
      %v1999 = vpop.f32.mrb[0].mxu0
      %v2000 = vadd.f32 0.0, %v1999
      %v2001 = vpop.f32.mrb[0].mxu0
      %2002 = vmatprep.mubr.f32.mxu0 0.0
      %2003 = vmatmul.mubr.f32.gmra.mrb[0].mxu0 %v607
      %v2004 = vpop.f32.mrb[0].mxu0
      %v2005 = vadd.f32 0.0, %v2004
      %v2006 = vpop.f32.mrb[0].mxu0
      %2007 = vmatprep.mubr.f32.mxu0 0.0
      %2008 = vmatmul.mubr.f32.gmra.mrb[0].mxu0 %v610
      %v2009 = vpop.f32.mrb[0].mxu0
      %v2010 = vadd.f32 0.0, %v2009
      %v2011 = vpop.f32.mrb[0].mxu0
      %2012 = vmatprep.mubr.f32.mxu0 0.0
      %2013 = vmatmul.mubr.f32.gmra.mrb[0].mxu0 %v613
      %v2014 = vpop.f32.mrb[0].mxu0
      %v2015 = vadd.f32 0.0, %v2014
      %v2016 = vpop.f32.mrb[0].mxu0
      %2017 = vmatprep.mubr.f32.mxu0 0.0
      %2018 = vmatmul.mubr.f32.gmra.mrb[0].mxu0 %v616
      %v2019 = vpop.f32.mrb[0].mxu0
      %v2020 = vadd.f32 0.0, %v2019
      %v2021 = vpop.f32.mrb[0].mxu0
      %2022 = vmatprep.mubr.f32.mxu0 0.0
      %2023 = vmatmul.mubr.f32.gmra.mrb[0].mxu0 %v619
      %v2024 = vpop.f32.mrb[0].mxu0
      %v2025 = vadd.f32 0.0, %v2024
      %v2026 = vpop.f32.mrb[0].mxu0
      %2027 = vmatprep.mubr.f32.mxu0 0.0
      %2028 = vmatmul.mubr.f32.gmra.mrb[0].mxu0 %v1805
      %v2029 = vpop.f32.mrb[0].mxu0
      %v2030 = vadd.f32 0.0, %v2029
      %v2031 = vpop.f32.mrb[0].mxu0
      %2032 = vmatprep.mubr.f32.mxu0 0.0
      %2033 = vmatmul.mubr.f32.gmra.mrb[0].mxu0 %v1808
      %v2034 = vpop.f32.mrb[0].mxu0
      %v2035 = vadd.f32 0.0, %v2034
      %v2036 = vpop.f32.mrb[0].mxu0
      %2037 = vdwg.mxu0
      %v2038 = vadd.f32 %v1772, %v1880
      %v2039 = vadd.f32 %v1773, %v1885
      %v2040 = vadd.f32 %v1774, %v1890
      %v2041 = vadd.f32 %v1775, %v1895
      %v2042 = vadd.f32 %v1776, %v1900
      %v2043 = vadd.f32 %v1777, %v1905
      %v2044 = vadd.f32 %v1778, %v1910
      %v2045 = vadd.f32 %v1779, %v1915
      %v2046 = vadd.f32 %v1780, %v1920
      %v2047 = vadd.f32 %v1781, %v1925
      %v2048 = vadd.f32 %v1782, %v1930
      %v2049 = vadd.f32 %v1783, %v1935
      %v2050 = vadd.f32 %v1784, %v1940
      %v2051 = vadd.f32 %v1785, %v1945
      %v2052 = vadd.f32 %v1786, %v1950
      %v2053 = vadd.f32 %v1787, %v1955
      %v2054 = vadd.f32 %v1788, %v1960
      %v2055 = vadd.f32 %v1789, %v1965
      %v2056 = vadd.f32 %v1790, %v1970
      %v2057 = vadd.f32 %v1791, %v1975
      %v2058 = vadd.f32 %v1792, %v1980
      %v2059 = vadd.f32 %v1793, %v1985
      %v2060 = vadd.f32 %v1794, %v1990
      %v2061 = vadd.f32 %v1795, %v1995
      %v2062 = vadd.f32 %v1796, %v2000
      %v2063 = vadd.f32 %v1797, %v2005
      %v2064 = vadd.f32 %v1798, %v2010
      %v2065 = vadd.f32 %v1799, %v2015
      %v2066 = vadd.f32 %v1800, %v2020
      %v2067 = vadd.f32 %v1801, %v2025
      %v2068 = vadd.f32 %v1802, %v2030
      %v2069 = vadd.f32 %v1803, %v2035
      %v2071 = vsel %vm530, %v1536, 0
      %v2074 = vsel %vm530, %v1537, 0
      %v2077 = vsel %vm621, %v208, 0
      %2079 = vmatprep.subr.mxu0 0.0
      %2080 = vmatpush1.msra.mxu0 %v2077
      %2081 = vmatprep.subr.mxu0 0.0
      %2082 = vmatpush1.msra.mxu0 0.0
      %2083 = vmatprep.subr.mxu0 0.0
      %2084 = vmatpush1.msra.mxu0 0.0
      %2085 = vmatprep.subr.mxu0 0.0
      %2086 = vmatpush1.msra.mxu0 0.0
      %2087 = vmatprep.subr.mxu0 0.0
      %2088 = vmatpush1.msra.mxu0 0.0
      %2089 = vmatprep.subr.mxu0 0.0
      %2090 = vmatpush1.msra.mxu0 0.0
      %2091 = vmatprep.subr.mxu0 0.0
      %2092 = vmatpush1.msra.mxu0 0.0
      %2093 = vmatprep.subr.mxu0 0.0
      %2094 = vmatpush1.msra.mxu0 0.0
      %2095 = vmatprep.subr.mxu0 0.0
      %2096 = vmatpush1.msra.mxu0 0.0
      %2097 = vmatprep.subr.mxu0 0.0
      %2098 = vmatpush1.msra.mxu0 0.0
      %2099 = vmatprep.subr.mxu0 0.0
      %2100 = vmatpush1.msra.mxu0 0.0
      %2101 = vmatprep.subr.mxu0 0.0
      %2102 = vmatpush1.msra.mxu0 0.0
      %2103 = vmatprep.subr.mxu0 0.0
      %2104 = vmatpush1.msra.mxu0 0.0
      %2105 = vmatprep.subr.mxu0 0.0
      %2106 = vmatpush1.msra.mxu0 0.0
      %2107 = vmatprep.subr.mxu0 0.0
      %2108 = vmatpush1.msra.mxu0 0.0
      %2109 = vmatprep.subr.mxu0 0.0
      %2110 = vmatpush1.msra.mxu0 0.0
      %2111 = vmatprep.subr.mxu0 0.0
      %2112 = vmatpush1.msra.mxu0 0.0
      %2113 = vmatprep.subr.mxu0 0.0
      %2114 = vmatpush1.msra.mxu0 0.0
      %2115 = vmatprep.subr.mxu0 0.0
      %2116 = vmatpush1.msra.mxu0 0.0
      %2117 = vmatprep.subr.mxu0 0.0
      %2118 = vmatpush1.msra.mxu0 0.0
      %2119 = vmatprep.subr.mxu0 0.0
      %2120 = vmatpush1.msra.mxu0 0.0
      %2121 = vmatprep.subr.mxu0 0.0
      %2122 = vmatpush1.msra.mxu0 0.0
      %2123 = vmatprep.subr.mxu0 0.0
      %2124 = vmatpush1.msra.mxu0 0.0
      %2125 = vmatprep.subr.mxu0 0.0
      %2126 = vmatpush1.msra.mxu0 0.0
      %2127 = vmatprep.subr.mxu0 0.0
      %2128 = vmatpush1.msra.mxu0 0.0
      %2129 = vmatprep.subr.mxu0 0.0
      %2130 = vmatpush1.msra.mxu0 0.0
      %2131 = vmatprep.subr.mxu0 0.0
      %2132 = vmatpush1.msra.mxu0 0.0
      %2133 = vmatprep.subr.mxu0 0.0
      %2134 = vmatpush1.msra.mxu0 0.0
      %2135 = vmatprep.subr.mxu0 0.0
      %2136 = vmatpush1.msra.mxu0 0.0
      %2137 = vmatprep.subr.mxu0 0.0
      %2138 = vmatpush1.msra.mxu0 0.0
      %2139 = vmatprep.subr.mxu0 0.0
      %2140 = vmatpush1.msra.mxu0 0.0
      %2141 = vmatprep.subr.mxu0 0.0
      %2142 = vmatpush1.msra.mxu0 0.0
      %2143 = vmatprep.mubr.f32.mxu0 0.0
      %2144 = vmatmul.mubr.f32.gmra.mrb[0].mxu0 %v1175
      %v2145 = vpop.f32.mrb[0].mxu0
      %v2146 = vadd.f32 0.0, %v2145
      %v2147 = vpop.f32.mrb[0].mxu0
      %2148 = vmatprep.mubr.f32.mxu0 0.0
      %2149 = vmatmul.mubr.f32.gmra.mrb[0].mxu0 %v1178
      %v2150 = vpop.f32.mrb[0].mxu0
      %v2151 = vadd.f32 0.0, %v2150
      %v2152 = vpop.f32.mrb[0].mxu0
      %2153 = vmatprep.mubr.f32.mxu0 0.0
      %2154 = vmatmul.mubr.f32.gmra.mrb[0].mxu0 %v1169
      %v2155 = vpop.f32.mrb[0].mxu0
      %v2156 = vadd.f32 0.0, %v2155
      %v2157 = vpop.f32.mrb[0].mxu0
      %2158 = vmatprep.mubr.f32.mxu0 0.0
      %2159 = vmatmul.mubr.f32.gmra.mrb[0].mxu0 %v1172
      %v2160 = vpop.f32.mrb[0].mxu0
      %v2161 = vadd.f32 0.0, %v2160
      %v2162 = vpop.f32.mrb[0].mxu0
      %2163 = vmatprep.mubr.f32.mxu0 0.0
      %2164 = vmatmul.mubr.f32.gmra.mrb[0].mxu0 %v1181
      %v2165 = vpop.f32.mrb[0].mxu0
      %v2166 = vadd.f32 0.0, %v2165
      %v2167 = vpop.f32.mrb[0].mxu0
      %2168 = vmatprep.mubr.f32.mxu0 0.0
      %2169 = vmatmul.mubr.f32.gmra.mrb[0].mxu0 %v1184
      %v2170 = vpop.f32.mrb[0].mxu0
      %v2171 = vadd.f32 0.0, %v2170
      %v2172 = vpop.f32.mrb[0].mxu0
      %2173 = vmatprep.mubr.f32.mxu0 0.0
      %2174 = vmatmul.mubr.f32.gmra.mrb[0].mxu0 %v1187
      %v2175 = vpop.f32.mrb[0].mxu0
      %v2176 = vadd.f32 0.0, %v2175
      %v2177 = vpop.f32.mrb[0].mxu0
      %2178 = vmatprep.mubr.f32.mxu0 0.0
      %2179 = vmatmul.mubr.f32.gmra.mrb[0].mxu0 %v1190
      %v2180 = vpop.f32.mrb[0].mxu0
      %v2181 = vadd.f32 0.0, %v2180
      %v2182 = vpop.f32.mrb[0].mxu0
      %2183 = vmatprep.mubr.f32.mxu0 0.0
      %2184 = vmatmul.mubr.f32.gmra.mrb[0].mxu0 %v1193
      %v2185 = vpop.f32.mrb[0].mxu0
      %v2186 = vadd.f32 0.0, %v2185
      %v2187 = vpop.f32.mrb[0].mxu0
      %2188 = vmatprep.mubr.f32.mxu0 0.0
      %2189 = vmatmul.mubr.f32.gmra.mrb[0].mxu0 %v1196
      %v2190 = vpop.f32.mrb[0].mxu0
      %v2191 = vadd.f32 0.0, %v2190
      %v2192 = vpop.f32.mrb[0].mxu0
      %2193 = vmatprep.mubr.f32.mxu0 0.0
      %2194 = vmatmul.mubr.f32.gmra.mrb[0].mxu0 %v1199
      %v2195 = vpop.f32.mrb[0].mxu0
      %v2196 = vadd.f32 0.0, %v2195
      %v2197 = vpop.f32.mrb[0].mxu0
      %2198 = vmatprep.mubr.f32.mxu0 0.0
      %2199 = vmatmul.mubr.f32.gmra.mrb[0].mxu0 %v1202
      %v2200 = vpop.f32.mrb[0].mxu0
      %v2201 = vadd.f32 0.0, %v2200
      %v2202 = vpop.f32.mrb[0].mxu0
      %2203 = vmatprep.mubr.f32.mxu0 0.0
      %2204 = vmatmul.mubr.f32.gmra.mrb[0].mxu0 %v1205
      %v2205 = vpop.f32.mrb[0].mxu0
      %v2206 = vadd.f32 0.0, %v2205
      %v2207 = vpop.f32.mrb[0].mxu0
      %2208 = vmatprep.mubr.f32.mxu0 0.0
      %2209 = vmatmul.mubr.f32.gmra.mrb[0].mxu0 %v1208
      %v2210 = vpop.f32.mrb[0].mxu0
      %v2211 = vadd.f32 0.0, %v2210
      %v2212 = vpop.f32.mrb[0].mxu0
      %2213 = vmatprep.mubr.f32.mxu0 0.0
      %2214 = vmatmul.mubr.f32.gmra.mrb[0].mxu0 %v1211
      %v2215 = vpop.f32.mrb[0].mxu0
      %v2216 = vadd.f32 0.0, %v2215
      %v2217 = vpop.f32.mrb[0].mxu0
      %2218 = vmatprep.mubr.f32.mxu0 0.0
      %2219 = vmatmul.mubr.f32.gmra.mrb[0].mxu0 %v1214
      %v2220 = vpop.f32.mrb[0].mxu0
      %v2221 = vadd.f32 0.0, %v2220
      %v2222 = vpop.f32.mrb[0].mxu0
      %2223 = vmatprep.mubr.f32.mxu0 0.0
      %2224 = vmatmul.mubr.f32.gmra.mrb[0].mxu0 %v1217
      %v2225 = vpop.f32.mrb[0].mxu0
      %v2226 = vadd.f32 0.0, %v2225
      %v2227 = vpop.f32.mrb[0].mxu0
      %2228 = vmatprep.mubr.f32.mxu0 0.0
      %2229 = vmatmul.mubr.f32.gmra.mrb[0].mxu0 %v1220
      %v2230 = vpop.f32.mrb[0].mxu0
      %v2231 = vadd.f32 0.0, %v2230
      %v2232 = vpop.f32.mrb[0].mxu0
      %2233 = vmatprep.mubr.f32.mxu0 0.0
      %2234 = vmatmul.mubr.f32.gmra.mrb[0].mxu0 %v1223
      %v2235 = vpop.f32.mrb[0].mxu0
      %v2236 = vadd.f32 0.0, %v2235
      %v2237 = vpop.f32.mrb[0].mxu0
      %2238 = vmatprep.mubr.f32.mxu0 0.0
      %2239 = vmatmul.mubr.f32.gmra.mrb[0].mxu0 %v1226
      %v2240 = vpop.f32.mrb[0].mxu0
      %v2241 = vadd.f32 0.0, %v2240
      %v2242 = vpop.f32.mrb[0].mxu0
      %2243 = vmatprep.mubr.f32.mxu0 0.0
      %2244 = vmatmul.mubr.f32.gmra.mrb[0].mxu0 %v1229
      %v2245 = vpop.f32.mrb[0].mxu0
      %v2246 = vadd.f32 0.0, %v2245
      %v2247 = vpop.f32.mrb[0].mxu0
      %2248 = vmatprep.mubr.f32.mxu0 0.0
      %2249 = vmatmul.mubr.f32.gmra.mrb[0].mxu0 %v1232
      %v2250 = vpop.f32.mrb[0].mxu0
      %v2251 = vadd.f32 0.0, %v2250
      %v2252 = vpop.f32.mrb[0].mxu0
      %2253 = vmatprep.mubr.f32.mxu0 0.0
      %2254 = vmatmul.mubr.f32.gmra.mrb[0].mxu0 %v1235
      %v2255 = vpop.f32.mrb[0].mxu0
      %v2256 = vadd.f32 0.0, %v2255
      %v2257 = vpop.f32.mrb[0].mxu0
      %2258 = vmatprep.mubr.f32.mxu0 0.0
      %2259 = vmatmul.mubr.f32.gmra.mrb[0].mxu0 %v1238
      %v2260 = vpop.f32.mrb[0].mxu0
      %v2261 = vadd.f32 0.0, %v2260
      %v2262 = vpop.f32.mrb[0].mxu0
      %2263 = vmatprep.mubr.f32.mxu0 0.0
      %2264 = vmatmul.mubr.f32.gmra.mrb[0].mxu0 %v1241
      %v2265 = vpop.f32.mrb[0].mxu0
      %v2266 = vadd.f32 0.0, %v2265
      %v2267 = vpop.f32.mrb[0].mxu0
      %2268 = vmatprep.mubr.f32.mxu0 0.0
      %2269 = vmatmul.mubr.f32.gmra.mrb[0].mxu0 %v1244
      %v2270 = vpop.f32.mrb[0].mxu0
      %v2271 = vadd.f32 0.0, %v2270
      %v2272 = vpop.f32.mrb[0].mxu0
      %2273 = vmatprep.mubr.f32.mxu0 0.0
      %2274 = vmatmul.mubr.f32.gmra.mrb[0].mxu0 %v1247
      %v2275 = vpop.f32.mrb[0].mxu0
      %v2276 = vadd.f32 0.0, %v2275
      %v2277 = vpop.f32.mrb[0].mxu0
      %2278 = vmatprep.mubr.f32.mxu0 0.0
      %2279 = vmatmul.mubr.f32.gmra.mrb[0].mxu0 %v1250
      %v2280 = vpop.f32.mrb[0].mxu0
      %v2281 = vadd.f32 0.0, %v2280
      %v2282 = vpop.f32.mrb[0].mxu0
      %2283 = vmatprep.mubr.f32.mxu0 0.0
      %2284 = vmatmul.mubr.f32.gmra.mrb[0].mxu0 %v1253
      %v2285 = vpop.f32.mrb[0].mxu0
      %v2286 = vadd.f32 0.0, %v2285
      %v2287 = vpop.f32.mrb[0].mxu0
      %2288 = vmatprep.mubr.f32.mxu0 0.0
      %2289 = vmatmul.mubr.f32.gmra.mrb[0].mxu0 %v1256
      %v2290 = vpop.f32.mrb[0].mxu0
      %v2291 = vadd.f32 0.0, %v2290
      %v2292 = vpop.f32.mrb[0].mxu0
      %2293 = vmatprep.mubr.f32.mxu0 0.0
      %2294 = vmatmul.mubr.f32.gmra.mrb[0].mxu0 %v2071
      %v2295 = vpop.f32.mrb[0].mxu0
      %v2296 = vadd.f32 0.0, %v2295
      %v2297 = vpop.f32.mrb[0].mxu0
      %2298 = vmatprep.mubr.f32.mxu0 0.0
      %2299 = vmatmul.mubr.f32.gmra.mrb[0].mxu0 %v2074
      %v2300 = vpop.f32.mrb[0].mxu0
      %v2301 = vadd.f32 0.0, %v2300
      %v2302 = vpop.f32.mrb[0].mxu0
      %2303 = vdwg.mxu0
      %v2304 = vadd.f32 %v2038, %v2146
      %v2305 = vadd.f32 %v2039, %v2151
      %v2306 = vadd.f32 %v2040, %v2156
      %v2307 = vadd.f32 %v2041, %v2161
      %v2308 = vadd.f32 %v2042, %v2166
      %v2309 = vadd.f32 %v2043, %v2171
      %v2310 = vadd.f32 %v2044, %v2176
      %v2311 = vadd.f32 %v2045, %v2181
      %v2312 = vadd.f32 %v2046, %v2186
      %v2313 = vadd.f32 %v2047, %v2191
      %v2314 = vadd.f32 %v2048, %v2196
      %v2315 = vadd.f32 %v2049, %v2201
      %v2316 = vadd.f32 %v2050, %v2206
      %v2317 = vadd.f32 %v2051, %v2211
      %v2318 = vadd.f32 %v2052, %v2216
      %v2319 = vadd.f32 %v2053, %v2221
      %v2320 = vadd.f32 %v2054, %v2226
      %v2321 = vadd.f32 %v2055, %v2231
      %v2322 = vadd.f32 %v2056, %v2236
      %v2323 = vadd.f32 %v2057, %v2241
      %v2324 = vadd.f32 %v2058, %v2246
      %v2325 = vadd.f32 %v2059, %v2251
      %v2326 = vadd.f32 %v2060, %v2256
      %v2327 = vadd.f32 %v2061, %v2261
      %v2328 = vadd.f32 %v2062, %v2266
      %v2329 = vadd.f32 %v2063, %v2271
      %v2330 = vadd.f32 %v2064, %v2276
      %v2331 = vadd.f32 %v2065, %v2281
      %v2332 = vadd.f32 %v2066, %v2286
      %v2333 = vadd.f32 %v2067, %v2291
      %v2334 = vadd.f32 %v2068, %v2296
      %v2335 = vadd.f32 %v2069, %v2301
      %v2337 = vsel %vm621, %v209, 0
      %2339 = vmatprep.subr.mxu0 0.0
      %2340 = vmatpush1.msra.mxu0 %v2337
      %2341 = vmatprep.subr.mxu0 0.0
      %2342 = vmatpush1.msra.mxu0 0.0
      %2343 = vmatprep.subr.mxu0 0.0
      %2344 = vmatpush1.msra.mxu0 0.0
      %2345 = vmatprep.subr.mxu0 0.0
      %2346 = vmatpush1.msra.mxu0 0.0
      %2347 = vmatprep.subr.mxu0 0.0
      %2348 = vmatpush1.msra.mxu0 0.0
      %2349 = vmatprep.subr.mxu0 0.0
      %2350 = vmatpush1.msra.mxu0 0.0
      %2351 = vmatprep.subr.mxu0 0.0
      %2352 = vmatpush1.msra.mxu0 0.0
      %2353 = vmatprep.subr.mxu0 0.0
      %2354 = vmatpush1.msra.mxu0 0.0
      %2355 = vmatprep.subr.mxu0 0.0
      %2356 = vmatpush1.msra.mxu0 0.0
      %2357 = vmatprep.subr.mxu0 0.0
      %2358 = vmatpush1.msra.mxu0 0.0
      %2359 = vmatprep.subr.mxu0 0.0
      %2360 = vmatpush1.msra.mxu0 0.0
      %2361 = vmatprep.subr.mxu0 0.0
      %2362 = vmatpush1.msra.mxu0 0.0
      %2363 = vmatprep.subr.mxu0 0.0
      %2364 = vmatpush1.msra.mxu0 0.0
      %2365 = vmatprep.subr.mxu0 0.0
      %2366 = vmatpush1.msra.mxu0 0.0
      %2367 = vmatprep.subr.mxu0 0.0
      %2368 = vmatpush1.msra.mxu0 0.0
      %2369 = vmatprep.subr.mxu0 0.0
      %2370 = vmatpush1.msra.mxu0 0.0
      %2371 = vmatprep.subr.mxu0 0.0
      %2372 = vmatpush1.msra.mxu0 0.0
      %2373 = vmatprep.subr.mxu0 0.0
      %2374 = vmatpush1.msra.mxu0 0.0
      %2375 = vmatprep.subr.mxu0 0.0
      %2376 = vmatpush1.msra.mxu0 0.0
      %2377 = vmatprep.subr.mxu0 0.0
      %2378 = vmatpush1.msra.mxu0 0.0
      %2379 = vmatprep.subr.mxu0 0.0
      %2380 = vmatpush1.msra.mxu0 0.0
      %2381 = vmatprep.subr.mxu0 0.0
      %2382 = vmatpush1.msra.mxu0 0.0
      %2383 = vmatprep.subr.mxu0 0.0
      %2384 = vmatpush1.msra.mxu0 0.0
      %2385 = vmatprep.subr.mxu0 0.0
      %2386 = vmatpush1.msra.mxu0 0.0
      %2387 = vmatprep.subr.mxu0 0.0
      %2388 = vmatpush1.msra.mxu0 0.0
      %2389 = vmatprep.subr.mxu0 0.0
      %2390 = vmatpush1.msra.mxu0 0.0
      %2391 = vmatprep.subr.mxu0 0.0
      %2392 = vmatpush1.msra.mxu0 0.0
      %2393 = vmatprep.subr.mxu0 0.0
      %2394 = vmatpush1.msra.mxu0 0.0
      %2395 = vmatprep.subr.mxu0 0.0
      %2396 = vmatpush1.msra.mxu0 0.0
      %2397 = vmatprep.subr.mxu0 0.0
      %2398 = vmatpush1.msra.mxu0 0.0
      %2399 = vmatprep.subr.mxu0 0.0
      %2400 = vmatpush1.msra.mxu0 0.0
      %2401 = vmatprep.subr.mxu0 0.0
      %2402 = vmatpush1.msra.mxu0 0.0
      %2403 = vmatprep.mubr.f32.mxu0 0.0
      %2404 = vmatmul.mubr.f32.gmra.mrb[0].mxu0 %v851
      %v2405 = vpop.f32.mrb[0].mxu0
      %v2406 = vadd.f32 0.0, %v2405
      %v2407 = vpop.f32.mrb[0].mxu0
      %2408 = vmatprep.mubr.f32.mxu0 0.0
      %2409 = vmatmul.mubr.f32.gmra.mrb[0].mxu0 %v854
      %v2410 = vpop.f32.mrb[0].mxu0
      %v2411 = vadd.f32 0.0, %v2410
      %v2412 = vpop.f32.mrb[0].mxu0
      %2413 = vmatprep.mubr.f32.mxu0 0.0
      %2414 = vmatmul.mubr.f32.gmra.mrb[0].mxu0 %v863
      %v2415 = vpop.f32.mrb[0].mxu0
      %v2416 = vadd.f32 0.0, %v2415
      %v2417 = vpop.f32.mrb[0].mxu0
      %2418 = vmatprep.mubr.f32.mxu0 0.0
      %2419 = vmatmul.mubr.f32.gmra.mrb[0].mxu0 %v866
      %v2420 = vpop.f32.mrb[0].mxu0
      %v2421 = vadd.f32 0.0, %v2420
      %v2422 = vpop.f32.mrb[0].mxu0
      %2423 = vmatprep.mubr.f32.mxu0 0.0
      %2424 = vmatmul.mubr.f32.gmra.mrb[0].mxu0 %v869
      %v2425 = vpop.f32.mrb[0].mxu0
      %v2426 = vadd.f32 0.0, %v2425
      %v2427 = vpop.f32.mrb[0].mxu0
      %2428 = vmatprep.mubr.f32.mxu0 0.0
      %2429 = vmatmul.mubr.f32.gmra.mrb[0].mxu0 %v872
      %v2430 = vpop.f32.mrb[0].mxu0
      %v2431 = vadd.f32 0.0, %v2430
      %v2432 = vpop.f32.mrb[0].mxu0
      %2433 = vmatprep.mubr.f32.mxu0 0.0
      %2434 = vmatmul.mubr.f32.gmra.mrb[0].mxu0 %v875
      %v2435 = vpop.f32.mrb[0].mxu0
      %v2436 = vadd.f32 0.0, %v2435
      %v2437 = vpop.f32.mrb[0].mxu0
      %2438 = vmatprep.mubr.f32.mxu0 0.0
      %2439 = vmatmul.mubr.f32.gmra.mrb[0].mxu0 %v878
      %v2440 = vpop.f32.mrb[0].mxu0
      %v2441 = vadd.f32 0.0, %v2440
      %v2442 = vpop.f32.mrb[0].mxu0
      %2443 = vmatprep.mubr.f32.mxu0 0.0
      %2444 = vmatmul.mubr.f32.gmra.mrb[0].mxu0 %v881
      %v2445 = vpop.f32.mrb[0].mxu0
      %v2446 = vadd.f32 0.0, %v2445
      %v2447 = vpop.f32.mrb[0].mxu0
      %2448 = vmatprep.mubr.f32.mxu0 0.0
      %2449 = vmatmul.mubr.f32.gmra.mrb[0].mxu0 %v884
      %v2450 = vpop.f32.mrb[0].mxu0
      %v2451 = vadd.f32 0.0, %v2450
      %v2452 = vpop.f32.mrb[0].mxu0
      %2453 = vmatprep.mubr.f32.mxu0 0.0
      %2454 = vmatmul.mubr.f32.gmra.mrb[0].mxu0 %v887
      %v2455 = vpop.f32.mrb[0].mxu0
      %v2456 = vadd.f32 0.0, %v2455
      %v2457 = vpop.f32.mrb[0].mxu0
      %2458 = vmatprep.mubr.f32.mxu0 0.0
      %2459 = vmatmul.mubr.f32.gmra.mrb[0].mxu0 %v890
      %v2460 = vpop.f32.mrb[0].mxu0
      %v2461 = vadd.f32 0.0, %v2460
      %v2462 = vpop.f32.mrb[0].mxu0
      %2463 = vmatprep.mubr.f32.mxu0 0.0
      %2464 = vmatmul.mubr.f32.gmra.mrb[0].mxu0 %v893
      %v2465 = vpop.f32.mrb[0].mxu0
      %v2466 = vadd.f32 0.0, %v2465
      %v2467 = vpop.f32.mrb[0].mxu0
      %2468 = vmatprep.mubr.f32.mxu0 0.0
      %2469 = vmatmul.mubr.f32.gmra.mrb[0].mxu0 %v896
      %v2470 = vpop.f32.mrb[0].mxu0
      %v2471 = vadd.f32 0.0, %v2470
      %v2472 = vpop.f32.mrb[0].mxu0
      %2473 = vmatprep.mubr.f32.mxu0 0.0
      %2474 = vmatmul.mubr.f32.gmra.mrb[0].mxu0 %v899
      %v2475 = vpop.f32.mrb[0].mxu0
      %v2476 = vadd.f32 0.0, %v2475
      %v2477 = vpop.f32.mrb[0].mxu0
      %2478 = vmatprep.mubr.f32.mxu0 0.0
      %2479 = vmatmul.mubr.f32.gmra.mrb[0].mxu0 %v902
      %v2480 = vpop.f32.mrb[0].mxu0
      %v2481 = vadd.f32 0.0, %v2480
      %v2482 = vpop.f32.mrb[0].mxu0
      %2483 = vmatprep.mubr.f32.mxu0 0.0
      %2484 = vmatmul.mubr.f32.gmra.mrb[0].mxu0 %v905
      %v2485 = vpop.f32.mrb[0].mxu0
      %v2486 = vadd.f32 0.0, %v2485
      %v2487 = vpop.f32.mrb[0].mxu0
      %2488 = vmatprep.mubr.f32.mxu0 0.0
      %2489 = vmatmul.mubr.f32.gmra.mrb[0].mxu0 %v908
      %v2490 = vpop.f32.mrb[0].mxu0
      %v2491 = vadd.f32 0.0, %v2490
      %v2492 = vpop.f32.mrb[0].mxu0
      %2493 = vmatprep.mubr.f32.mxu0 0.0
      %2494 = vmatmul.mubr.f32.gmra.mrb[0].mxu0 %v911
      %v2495 = vpop.f32.mrb[0].mxu0
      %v2496 = vadd.f32 0.0, %v2495
      %v2497 = vpop.f32.mrb[0].mxu0
      %2498 = vmatprep.mubr.f32.mxu0 0.0
      %2499 = vmatmul.mubr.f32.gmra.mrb[0].mxu0 %v914
      %v2500 = vpop.f32.mrb[0].mxu0
      %v2501 = vadd.f32 0.0, %v2500
      %v2502 = vpop.f32.mrb[0].mxu0
      %2503 = vmatprep.mubr.f32.mxu0 0.0
      %2504 = vmatmul.mubr.f32.gmra.mrb[0].mxu0 %v917
      %v2505 = vpop.f32.mrb[0].mxu0
      %v2506 = vadd.f32 0.0, %v2505
      %v2507 = vpop.f32.mrb[0].mxu0
      %2508 = vmatprep.mubr.f32.mxu0 0.0
      %2509 = vmatmul.mubr.f32.gmra.mrb[0].mxu0 %v920
      %v2510 = vpop.f32.mrb[0].mxu0
      %v2511 = vadd.f32 0.0, %v2510
      %v2512 = vpop.f32.mrb[0].mxu0
      %2513 = vmatprep.mubr.f32.mxu0 0.0
      %2514 = vmatmul.mubr.f32.gmra.mrb[0].mxu0 %v923
      %v2515 = vpop.f32.mrb[0].mxu0
      %v2516 = vadd.f32 0.0, %v2515
      %v2517 = vpop.f32.mrb[0].mxu0
      %2518 = vmatprep.mubr.f32.mxu0 0.0
      %2519 = vmatmul.mubr.f32.gmra.mrb[0].mxu0 %v926
      %v2520 = vpop.f32.mrb[0].mxu0
      %v2521 = vadd.f32 0.0, %v2520
      %v2522 = vpop.f32.mrb[0].mxu0
      %2523 = vmatprep.mubr.f32.mxu0 0.0
      %2524 = vmatmul.mubr.f32.gmra.mrb[0].mxu0 %v929
      %v2525 = vpop.f32.mrb[0].mxu0
      %v2526 = vadd.f32 0.0, %v2525
      %v2527 = vpop.f32.mrb[0].mxu0
      %2528 = vmatprep.mubr.f32.mxu0 0.0
      %2529 = vmatmul.mubr.f32.gmra.mrb[0].mxu0 %v932
      %v2530 = vpop.f32.mrb[0].mxu0
      %v2531 = vadd.f32 0.0, %v2530
      %v2532 = vpop.f32.mrb[0].mxu0
      %2533 = vmatprep.mubr.f32.mxu0 0.0
      %2534 = vmatmul.mubr.f32.gmra.mrb[0].mxu0 %v935
      %v2535 = vpop.f32.mrb[0].mxu0
      %v2536 = vadd.f32 0.0, %v2535
      %v2537 = vpop.f32.mrb[0].mxu0
      %2538 = vmatprep.mubr.f32.mxu0 0.0
      %2539 = vmatmul.mubr.f32.gmra.mrb[0].mxu0 %v938
      %v2540 = vpop.f32.mrb[0].mxu0
      %v2541 = vadd.f32 0.0, %v2540
      %v2542 = vpop.f32.mrb[0].mxu0
      %2543 = vmatprep.mubr.f32.mxu0 0.0
      %2544 = vmatmul.mubr.f32.gmra.mrb[0].mxu0 %v1539
      %v2545 = vpop.f32.mrb[0].mxu0
      %v2546 = vadd.f32 0.0, %v2545
      %v2547 = vpop.f32.mrb[0].mxu0
      %2548 = vmatprep.mubr.f32.mxu0 0.0
      %2549 = vmatmul.mubr.f32.gmra.mrb[0].mxu0 %v1542
      %v2550 = vpop.f32.mrb[0].mxu0
      %v2551 = vadd.f32 0.0, %v2550
      %v2552 = vpop.f32.mrb[0].mxu0
      %2553 = vmatprep.mubr.f32.mxu0 0.0
      %2554 = vmatmul.mubr.f32.gmra.mrb[0].mxu0 %v935
      %v2555 = vpop.f32.mrb[0].mxu0
      %v2556 = vadd.f32 0.0, %v2555
      %v2557 = vpop.f32.mrb[0].mxu0
      %2558 = vmatprep.mubr.f32.mxu0 0.0
      %2559 = vmatmul.mubr.f32.gmra.mrb[0].mxu0 %v938
      %v2560 = vpop.f32.mrb[0].mxu0
      %v2561 = vadd.f32 0.0, %v2560
      %v2562 = vpop.f32.mrb[0].mxu0
      %2563 = vdwg.mxu0
      %v2564 = vadd.f32 %v2304, %v2406
      %v2565 = vadd.f32 %v2305, %v2411
      %v2566 = vadd.f32 %v2306, %v2416
      %v2567 = vadd.f32 %v2307, %v2421
      %v2568 = vadd.f32 %v2308, %v2426
      %v2569 = vadd.f32 %v2309, %v2431
      %v2570 = vadd.f32 %v2310, %v2436
      %v2571 = vadd.f32 %v2311, %v2441
      %v2572 = vadd.f32 %v2312, %v2446
      %v2573 = vadd.f32 %v2313, %v2451
      %v2574 = vadd.f32 %v2314, %v2456
      %v2575 = vadd.f32 %v2315, %v2461
      %v2576 = vadd.f32 %v2316, %v2466
      %v2577 = vadd.f32 %v2317, %v2471
      %v2578 = vadd.f32 %v2318, %v2476
      %v2579 = vadd.f32 %v2319, %v2481
      %v2580 = vadd.f32 %v2320, %v2486
      %v2581 = vadd.f32 %v2321, %v2491
      %v2582 = vadd.f32 %v2322, %v2496
      %v2583 = vadd.f32 %v2323, %v2501
      %v2584 = vadd.f32 %v2324, %v2506
      %v2585 = vadd.f32 %v2325, %v2511
      %v2586 = vadd.f32 %v2326, %v2516
      %v2587 = vadd.f32 %v2327, %v2521
      %v2588 = vadd.f32 %v2328, %v2526
      %v2589 = vadd.f32 %v2329, %v2531
      %v2590 = vadd.f32 %v2330, %v2536
      %v2591 = vadd.f32 %v2331, %v2541
      %v2592 = vadd.f32 %v2332, %v2546
      %v2593 = vadd.f32 %v2333, %v2551
      %v2594 = vadd.f32 %v2334, %v2556
      %v2595 = vadd.f32 %v2335, %v2561
      %v2597 = vsel %vm621, %v210, 0
      %2599 = vmatprep.subr.mxu0 0.0
      %2600 = vmatpush1.msra.mxu0 %v2597
      %2601 = vmatprep.subr.mxu0 0.0
      %2602 = vmatpush1.msra.mxu0 0.0
      %2603 = vmatprep.subr.mxu0 0.0
      %2604 = vmatpush1.msra.mxu0 0.0
      %2605 = vmatprep.subr.mxu0 0.0
      %2606 = vmatpush1.msra.mxu0 0.0
      %2607 = vmatprep.subr.mxu0 0.0
      %2608 = vmatpush1.msra.mxu0 0.0
      %2609 = vmatprep.subr.mxu0 0.0
      %2610 = vmatpush1.msra.mxu0 0.0
      %2611 = vmatprep.subr.mxu0 0.0
      %2612 = vmatpush1.msra.mxu0 0.0
      %2613 = vmatprep.subr.mxu0 0.0
      %2614 = vmatpush1.msra.mxu0 0.0
      %2615 = vmatprep.subr.mxu0 0.0
      %2616 = vmatpush1.msra.mxu0 0.0
      %2617 = vmatprep.subr.mxu0 0.0
      %2618 = vmatpush1.msra.mxu0 0.0
      %2619 = vmatprep.subr.mxu0 0.0
      %2620 = vmatpush1.msra.mxu0 0.0
      %2621 = vmatprep.subr.mxu0 0.0
      %2622 = vmatpush1.msra.mxu0 0.0
      %2623 = vmatprep.subr.mxu0 0.0
      %2624 = vmatpush1.msra.mxu0 0.0
      %2625 = vmatprep.subr.mxu0 0.0
      %2626 = vmatpush1.msra.mxu0 0.0
      %2627 = vmatprep.subr.mxu0 0.0
      %2628 = vmatpush1.msra.mxu0 0.0
      %2629 = vmatprep.subr.mxu0 0.0
      %2630 = vmatpush1.msra.mxu0 0.0
      %2631 = vmatprep.subr.mxu0 0.0
      %2632 = vmatpush1.msra.mxu0 0.0
      %2633 = vmatprep.subr.mxu0 0.0
      %2634 = vmatpush1.msra.mxu0 0.0
      %2635 = vmatprep.subr.mxu0 0.0
      %2636 = vmatpush1.msra.mxu0 0.0
      %2637 = vmatprep.subr.mxu0 0.0
      %2638 = vmatpush1.msra.mxu0 0.0
      %2639 = vmatprep.subr.mxu0 0.0
      %2640 = vmatpush1.msra.mxu0 0.0
      %2641 = vmatprep.subr.mxu0 0.0
      %2642 = vmatpush1.msra.mxu0 0.0
      %2643 = vmatprep.subr.mxu0 0.0
      %2644 = vmatpush1.msra.mxu0 0.0
      %2645 = vmatprep.subr.mxu0 0.0
      %2646 = vmatpush1.msra.mxu0 0.0
      %2647 = vmatprep.subr.mxu0 0.0
      %2648 = vmatpush1.msra.mxu0 0.0
      %2649 = vmatprep.subr.mxu0 0.0
      %2650 = vmatpush1.msra.mxu0 0.0
      %2651 = vmatprep.subr.mxu0 0.0
      %2652 = vmatpush1.msra.mxu0 0.0
      %2653 = vmatprep.subr.mxu0 0.0
      %2654 = vmatpush1.msra.mxu0 0.0
      %2655 = vmatprep.subr.mxu0 0.0
      %2656 = vmatpush1.msra.mxu0 0.0
      %2657 = vmatprep.subr.mxu0 0.0
      %2658 = vmatpush1.msra.mxu0 0.0
      %2659 = vmatprep.subr.mxu0 0.0
      %2660 = vmatpush1.msra.mxu0 0.0
      %2661 = vmatprep.subr.mxu0 0.0
      %2662 = vmatpush1.msra.mxu0 0.0
      %2663 = vmatprep.mubr.f32.mxu0 0.0
      %2664 = vmatmul.mubr.f32.gmra.mrb[0].mxu0 %v532
      %v2665 = vpop.f32.mrb[0].mxu0
      %v2666 = vadd.f32 0.0, %v2665
      %v2667 = vpop.f32.mrb[0].mxu0
      %2668 = vmatprep.mubr.f32.mxu0 0.0
      %2669 = vmatmul.mubr.f32.gmra.mrb[0].mxu0 %v535
      %v2670 = vpop.f32.mrb[0].mxu0
      %v2671 = vadd.f32 0.0, %v2670
      %v2672 = vpop.f32.mrb[0].mxu0
      %2673 = vmatprep.mubr.f32.mxu0 0.0
      %2674 = vmatmul.mubr.f32.gmra.mrb[0].mxu0 %v544
      %v2675 = vpop.f32.mrb[0].mxu0
      %v2676 = vadd.f32 0.0, %v2675
      %v2677 = vpop.f32.mrb[0].mxu0
      %2678 = vmatprep.mubr.f32.mxu0 0.0
      %2679 = vmatmul.mubr.f32.gmra.mrb[0].mxu0 %v547
      %v2680 = vpop.f32.mrb[0].mxu0
      %v2681 = vadd.f32 0.0, %v2680
      %v2682 = vpop.f32.mrb[0].mxu0
      %2683 = vmatprep.mubr.f32.mxu0 0.0
      %2684 = vmatmul.mubr.f32.gmra.mrb[0].mxu0 %v550
      %v2685 = vpop.f32.mrb[0].mxu0
      %v2686 = vadd.f32 0.0, %v2685
      %v2687 = vpop.f32.mrb[0].mxu0
      %2688 = vmatprep.mubr.f32.mxu0 0.0
      %2689 = vmatmul.mubr.f32.gmra.mrb[0].mxu0 %v553
      %v2690 = vpop.f32.mrb[0].mxu0
      %v2691 = vadd.f32 0.0, %v2690
      %v2692 = vpop.f32.mrb[0].mxu0
      %2693 = vmatprep.mubr.f32.mxu0 0.0
      %2694 = vmatmul.mubr.f32.gmra.mrb[0].mxu0 %v556
      %v2695 = vpop.f32.mrb[0].mxu0
      %v2696 = vadd.f32 0.0, %v2695
      %v2697 = vpop.f32.mrb[0].mxu0
      %2698 = vmatprep.mubr.f32.mxu0 0.0
      %2699 = vmatmul.mubr.f32.gmra.mrb[0].mxu0 %v559
      %v2700 = vpop.f32.mrb[0].mxu0
      %v2701 = vadd.f32 0.0, %v2700
      %v2702 = vpop.f32.mrb[0].mxu0
      %2703 = vmatprep.mubr.f32.mxu0 0.0
      %2704 = vmatmul.mubr.f32.gmra.mrb[0].mxu0 %v562
      %v2705 = vpop.f32.mrb[0].mxu0
      %v2706 = vadd.f32 0.0, %v2705
      %v2707 = vpop.f32.mrb[0].mxu0
      %2708 = vmatprep.mubr.f32.mxu0 0.0
      %2709 = vmatmul.mubr.f32.gmra.mrb[0].mxu0 %v565
      %v2710 = vpop.f32.mrb[0].mxu0
      %v2711 = vadd.f32 0.0, %v2710
      %v2712 = vpop.f32.mrb[0].mxu0
      %2713 = vmatprep.mubr.f32.mxu0 0.0
      %2714 = vmatmul.mubr.f32.gmra.mrb[0].mxu0 %v568
      %v2715 = vpop.f32.mrb[0].mxu0
      %v2716 = vadd.f32 0.0, %v2715
      %v2717 = vpop.f32.mrb[0].mxu0
      %2718 = vmatprep.mubr.f32.mxu0 0.0
      %2719 = vmatmul.mubr.f32.gmra.mrb[0].mxu0 %v571
      %v2720 = vpop.f32.mrb[0].mxu0
      %v2721 = vadd.f32 0.0, %v2720
      %v2722 = vpop.f32.mrb[0].mxu0
      %2723 = vmatprep.mubr.f32.mxu0 0.0
      %2724 = vmatmul.mubr.f32.gmra.mrb[0].mxu0 %v574
      %v2725 = vpop.f32.mrb[0].mxu0
      %v2726 = vadd.f32 0.0, %v2725
      %v2727 = vpop.f32.mrb[0].mxu0
      %2728 = vmatprep.mubr.f32.mxu0 0.0
      %2729 = vmatmul.mubr.f32.gmra.mrb[0].mxu0 %v577
      %v2730 = vpop.f32.mrb[0].mxu0
      %v2731 = vadd.f32 0.0, %v2730
      %v2732 = vpop.f32.mrb[0].mxu0
      %2733 = vmatprep.mubr.f32.mxu0 0.0
      %2734 = vmatmul.mubr.f32.gmra.mrb[0].mxu0 %v580
      %v2735 = vpop.f32.mrb[0].mxu0
      %v2736 = vadd.f32 0.0, %v2735
      %v2737 = vpop.f32.mrb[0].mxu0
      %2738 = vmatprep.mubr.f32.mxu0 0.0
      %2739 = vmatmul.mubr.f32.gmra.mrb[0].mxu0 %v583
      %v2740 = vpop.f32.mrb[0].mxu0
      %v2741 = vadd.f32 0.0, %v2740
      %v2742 = vpop.f32.mrb[0].mxu0
      %2743 = vmatprep.mubr.f32.mxu0 0.0
      %2744 = vmatmul.mubr.f32.gmra.mrb[0].mxu0 %v586
      %v2745 = vpop.f32.mrb[0].mxu0
      %v2746 = vadd.f32 0.0, %v2745
      %v2747 = vpop.f32.mrb[0].mxu0
      %2748 = vmatprep.mubr.f32.mxu0 0.0
      %2749 = vmatmul.mubr.f32.gmra.mrb[0].mxu0 %v589
      %v2750 = vpop.f32.mrb[0].mxu0
      %v2751 = vadd.f32 0.0, %v2750
      %v2752 = vpop.f32.mrb[0].mxu0
      %2753 = vmatprep.mubr.f32.mxu0 0.0
      %2754 = vmatmul.mubr.f32.gmra.mrb[0].mxu0 %v592
      %v2755 = vpop.f32.mrb[0].mxu0
      %v2756 = vadd.f32 0.0, %v2755
      %v2757 = vpop.f32.mrb[0].mxu0
      %2758 = vmatprep.mubr.f32.mxu0 0.0
      %2759 = vmatmul.mubr.f32.gmra.mrb[0].mxu0 %v595
      %v2760 = vpop.f32.mrb[0].mxu0
      %v2761 = vadd.f32 0.0, %v2760
      %v2762 = vpop.f32.mrb[0].mxu0
      %2763 = vmatprep.mubr.f32.mxu0 0.0
      %2764 = vmatmul.mubr.f32.gmra.mrb[0].mxu0 %v598
      %v2765 = vpop.f32.mrb[0].mxu0
      %v2766 = vadd.f32 0.0, %v2765
      %v2767 = vpop.f32.mrb[0].mxu0
      %2768 = vmatprep.mubr.f32.mxu0 0.0
      %2769 = vmatmul.mubr.f32.gmra.mrb[0].mxu0 %v601
      %v2770 = vpop.f32.mrb[0].mxu0
      %v2771 = vadd.f32 0.0, %v2770
      %v2772 = vpop.f32.mrb[0].mxu0
      %2773 = vmatprep.mubr.f32.mxu0 0.0
      %2774 = vmatmul.mubr.f32.gmra.mrb[0].mxu0 %v604
      %v2775 = vpop.f32.mrb[0].mxu0
      %v2776 = vadd.f32 0.0, %v2775
      %v2777 = vpop.f32.mrb[0].mxu0
      %2778 = vmatprep.mubr.f32.mxu0 0.0
      %2779 = vmatmul.mubr.f32.gmra.mrb[0].mxu0 %v607
      %v2780 = vpop.f32.mrb[0].mxu0
      %v2781 = vadd.f32 0.0, %v2780
      %v2782 = vpop.f32.mrb[0].mxu0
      %2783 = vmatprep.mubr.f32.mxu0 0.0
      %2784 = vmatmul.mubr.f32.gmra.mrb[0].mxu0 %v610
      %v2785 = vpop.f32.mrb[0].mxu0
      %v2786 = vadd.f32 0.0, %v2785
      %v2787 = vpop.f32.mrb[0].mxu0
      %2788 = vmatprep.mubr.f32.mxu0 0.0
      %2789 = vmatmul.mubr.f32.gmra.mrb[0].mxu0 %v613
      %v2790 = vpop.f32.mrb[0].mxu0
      %v2791 = vadd.f32 0.0, %v2790
      %v2792 = vpop.f32.mrb[0].mxu0
      %2793 = vmatprep.mubr.f32.mxu0 0.0
      %2794 = vmatmul.mubr.f32.gmra.mrb[0].mxu0 %v616
      %v2795 = vpop.f32.mrb[0].mxu0
      %v2796 = vadd.f32 0.0, %v2795
      %v2797 = vpop.f32.mrb[0].mxu0
      %2798 = vmatprep.mubr.f32.mxu0 0.0
      %2799 = vmatmul.mubr.f32.gmra.mrb[0].mxu0 %v619
      %v2800 = vpop.f32.mrb[0].mxu0
      %v2801 = vadd.f32 0.0, %v2800
      %v2802 = vpop.f32.mrb[0].mxu0
      %2803 = vmatprep.mubr.f32.mxu0 0.0
      %2804 = vmatmul.mubr.f32.gmra.mrb[0].mxu0 %v1805
      %v2805 = vpop.f32.mrb[0].mxu0
      %v2806 = vadd.f32 0.0, %v2805
      %v2807 = vpop.f32.mrb[0].mxu0
      %2808 = vmatprep.mubr.f32.mxu0 0.0
      %2809 = vmatmul.mubr.f32.gmra.mrb[0].mxu0 %v1808
      %v2810 = vpop.f32.mrb[0].mxu0
      %v2811 = vadd.f32 0.0, %v2810
      %v2812 = vpop.f32.mrb[0].mxu0
      %2813 = vmatprep.mubr.f32.mxu0 0.0
      %2814 = vmatmul.mubr.f32.gmra.mrb[0].mxu0 %v616
      %v2815 = vpop.f32.mrb[0].mxu0
      %v2816 = vadd.f32 0.0, %v2815
      %v2817 = vpop.f32.mrb[0].mxu0
      %2818 = vmatprep.mubr.f32.mxu0 0.0
      %2819 = vmatmul.mubr.f32.gmra.mrb[0].mxu0 %v619
      %v2820 = vpop.f32.mrb[0].mxu0
      %v2821 = vadd.f32 0.0, %v2820
      %v2822 = vpop.f32.mrb[0].mxu0
      %2823 = vdwg.mxu0
      %v2824 = vadd.f32 %v2564, %v2666
      %v2825 = vadd.f32 %v2565, %v2671
      %v2826 = vadd.f32 %v2566, %v2676
      %v2827 = vadd.f32 %v2567, %v2681
      %v2828 = vadd.f32 %v2568, %v2686
      %v2829 = vadd.f32 %v2569, %v2691
      %v2830 = vadd.f32 %v2570, %v2696
      %v2831 = vadd.f32 %v2571, %v2701
      %v2832 = vadd.f32 %v2572, %v2706
      %v2833 = vadd.f32 %v2573, %v2711
      %v2834 = vadd.f32 %v2574, %v2716
      %v2835 = vadd.f32 %v2575, %v2721
      %v2836 = vadd.f32 %v2576, %v2726
      %v2837 = vadd.f32 %v2577, %v2731
      %v2838 = vadd.f32 %v2578, %v2736
      %v2839 = vadd.f32 %v2579, %v2741
      %v2840 = vadd.f32 %v2580, %v2746
      %v2841 = vadd.f32 %v2581, %v2751
      %v2842 = vadd.f32 %v2582, %v2756
      %v2843 = vadd.f32 %v2583, %v2761
      %v2844 = vadd.f32 %v2584, %v2766
      %v2845 = vadd.f32 %v2585, %v2771
      %v2846 = vadd.f32 %v2586, %v2776
      %v2847 = vadd.f32 %v2587, %v2781
      %v2848 = vadd.f32 %v2588, %v2786
      %v2849 = vadd.f32 %v2589, %v2791
      %v2850 = vadd.f32 %v2590, %v2796
      %v2851 = vadd.f32 %v2591, %v2801
      %v2852 = vadd.f32 %v2592, %v2806
      %v2853 = vadd.f32 %v2593, %v2811
      %v2854 = vadd.f32 %v2594, %v2816
      %v2855 = vadd.f32 %v2595, %v2821
      %v2857 = vsel %vm621, %v211, 0
      %2859 = vmatprep.subr.mxu0 0.0
      %2860 = vmatpush1.msra.mxu0 %v2857
      %2861 = vmatprep.subr.mxu0 0.0
      %2862 = vmatpush1.msra.mxu0 0.0
      %2863 = vmatprep.subr.mxu0 0.0
      %2864 = vmatpush1.msra.mxu0 0.0
      %2865 = vmatprep.subr.mxu0 0.0
      %2866 = vmatpush1.msra.mxu0 0.0
      %2867 = vmatprep.subr.mxu0 0.0
      %2868 = vmatpush1.msra.mxu0 0.0
      %2869 = vmatprep.subr.mxu0 0.0
      %2870 = vmatpush1.msra.mxu0 0.0
      %2871 = vmatprep.subr.mxu0 0.0
      %2872 = vmatpush1.msra.mxu0 0.0
      %2873 = vmatprep.subr.mxu0 0.0
      %2874 = vmatpush1.msra.mxu0 0.0
      %2875 = vmatprep.subr.mxu0 0.0
      %2876 = vmatpush1.msra.mxu0 0.0
      %2877 = vmatprep.subr.mxu0 0.0
      %2878 = vmatpush1.msra.mxu0 0.0
      %2879 = vmatprep.subr.mxu0 0.0
      %2880 = vmatpush1.msra.mxu0 0.0
      %2881 = vmatprep.subr.mxu0 0.0
      %2882 = vmatpush1.msra.mxu0 0.0
      %2883 = vmatprep.subr.mxu0 0.0
      %2884 = vmatpush1.msra.mxu0 0.0
      %2885 = vmatprep.subr.mxu0 0.0
      %2886 = vmatpush1.msra.mxu0 0.0
      %2887 = vmatprep.subr.mxu0 0.0
      %2888 = vmatpush1.msra.mxu0 0.0
      %2889 = vmatprep.subr.mxu0 0.0
      %2890 = vmatpush1.msra.mxu0 0.0
      %2891 = vmatprep.subr.mxu0 0.0
      %2892 = vmatpush1.msra.mxu0 0.0
      %2893 = vmatprep.subr.mxu0 0.0
      %2894 = vmatpush1.msra.mxu0 0.0
      %2895 = vmatprep.subr.mxu0 0.0
      %2896 = vmatpush1.msra.mxu0 0.0
      %2897 = vmatprep.subr.mxu0 0.0
      %2898 = vmatpush1.msra.mxu0 0.0
      %2899 = vmatprep.subr.mxu0 0.0
      %2900 = vmatpush1.msra.mxu0 0.0
      %2901 = vmatprep.subr.mxu0 0.0
      %2902 = vmatpush1.msra.mxu0 0.0
      %2903 = vmatprep.subr.mxu0 0.0
      %2904 = vmatpush1.msra.mxu0 0.0
      %2905 = vmatprep.subr.mxu0 0.0
      %2906 = vmatpush1.msra.mxu0 0.0
      %2907 = vmatprep.subr.mxu0 0.0
      %2908 = vmatpush1.msra.mxu0 0.0
      %2909 = vmatprep.subr.mxu0 0.0
      %2910 = vmatpush1.msra.mxu0 0.0
      %2911 = vmatprep.subr.mxu0 0.0
      %2912 = vmatpush1.msra.mxu0 0.0
      %2913 = vmatprep.subr.mxu0 0.0
      %2914 = vmatpush1.msra.mxu0 0.0
      %2915 = vmatprep.subr.mxu0 0.0
      %2916 = vmatpush1.msra.mxu0 0.0
      %2917 = vmatprep.subr.mxu0 0.0
      %2918 = vmatpush1.msra.mxu0 0.0
      %2919 = vmatprep.subr.mxu0 0.0
      %2920 = vmatpush1.msra.mxu0 0.0
      %2921 = vmatprep.subr.mxu0 0.0
      %2922 = vmatpush1.msra.mxu0 0.0
      %2923 = vmatprep.mubr.f32.mxu0 0.0
      %2924 = vmatmul.mubr.f32.gmra.mrb[0].mxu0 %v1169
      %v2925 = vpop.f32.mrb[0].mxu0
      %v2926 = vadd.f32 0.0, %v2925
      %v2927 = vpop.f32.mrb[0].mxu0
      %2928 = vmatprep.mubr.f32.mxu0 0.0
      %2929 = vmatmul.mubr.f32.gmra.mrb[0].mxu0 %v1172
      %v2930 = vpop.f32.mrb[0].mxu0
      %v2931 = vadd.f32 0.0, %v2930
      %v2932 = vpop.f32.mrb[0].mxu0
      %2933 = vmatprep.mubr.f32.mxu0 0.0
      %2934 = vmatmul.mubr.f32.gmra.mrb[0].mxu0 %v1181
      %v2935 = vpop.f32.mrb[0].mxu0
      %v2936 = vadd.f32 0.0, %v2935
      %v2937 = vpop.f32.mrb[0].mxu0
      %2938 = vmatprep.mubr.f32.mxu0 0.0
      %2939 = vmatmul.mubr.f32.gmra.mrb[0].mxu0 %v1184
      %v2940 = vpop.f32.mrb[0].mxu0
      %v2941 = vadd.f32 0.0, %v2940
      %v2942 = vpop.f32.mrb[0].mxu0
      %2943 = vmatprep.mubr.f32.mxu0 0.0
      %2944 = vmatmul.mubr.f32.gmra.mrb[0].mxu0 %v1187
      %v2945 = vpop.f32.mrb[0].mxu0
      %v2946 = vadd.f32 0.0, %v2945
      %v2947 = vpop.f32.mrb[0].mxu0
      %2948 = vmatprep.mubr.f32.mxu0 0.0
      %2949 = vmatmul.mubr.f32.gmra.mrb[0].mxu0 %v1190
      %v2950 = vpop.f32.mrb[0].mxu0
      %v2951 = vadd.f32 0.0, %v2950
      %v2952 = vpop.f32.mrb[0].mxu0
      %2953 = vmatprep.mubr.f32.mxu0 0.0
      %2954 = vmatmul.mubr.f32.gmra.mrb[0].mxu0 %v1193
      %v2955 = vpop.f32.mrb[0].mxu0
      %v2956 = vadd.f32 0.0, %v2955
      %v2957 = vpop.f32.mrb[0].mxu0
      %2958 = vmatprep.mubr.f32.mxu0 0.0
      %2959 = vmatmul.mubr.f32.gmra.mrb[0].mxu0 %v1196
      %v2960 = vpop.f32.mrb[0].mxu0
      %v2961 = vadd.f32 0.0, %v2960
      %v2962 = vpop.f32.mrb[0].mxu0
      %2963 = vmatprep.mubr.f32.mxu0 0.0
      %2964 = vmatmul.mubr.f32.gmra.mrb[0].mxu0 %v1199
      %v2965 = vpop.f32.mrb[0].mxu0
      %v2966 = vadd.f32 0.0, %v2965
      %v2967 = vpop.f32.mrb[0].mxu0
      %2968 = vmatprep.mubr.f32.mxu0 0.0
      %2969 = vmatmul.mubr.f32.gmra.mrb[0].mxu0 %v1202
      %v2970 = vpop.f32.mrb[0].mxu0
      %v2971 = vadd.f32 0.0, %v2970
      %v2972 = vpop.f32.mrb[0].mxu0
      %2973 = vmatprep.mubr.f32.mxu0 0.0
      %2974 = vmatmul.mubr.f32.gmra.mrb[0].mxu0 %v1205
      %v2975 = vpop.f32.mrb[0].mxu0
      %v2976 = vadd.f32 0.0, %v2975
      %v2977 = vpop.f32.mrb[0].mxu0
      %2978 = vmatprep.mubr.f32.mxu0 0.0
      %2979 = vmatmul.mubr.f32.gmra.mrb[0].mxu0 %v1208
      %v2980 = vpop.f32.mrb[0].mxu0
      %v2981 = vadd.f32 0.0, %v2980
      %v2982 = vpop.f32.mrb[0].mxu0
      %2983 = vmatprep.mubr.f32.mxu0 0.0
      %2984 = vmatmul.mubr.f32.gmra.mrb[0].mxu0 %v1211
      %v2985 = vpop.f32.mrb[0].mxu0
      %v2986 = vadd.f32 0.0, %v2985
      %v2987 = vpop.f32.mrb[0].mxu0
      %2988 = vmatprep.mubr.f32.mxu0 0.0
      %2989 = vmatmul.mubr.f32.gmra.mrb[0].mxu0 %v1214
      %v2990 = vpop.f32.mrb[0].mxu0
      %v2991 = vadd.f32 0.0, %v2990
      %v2992 = vpop.f32.mrb[0].mxu0
      %2993 = vmatprep.mubr.f32.mxu0 0.0
      %2994 = vmatmul.mubr.f32.gmra.mrb[0].mxu0 %v1217
      %v2995 = vpop.f32.mrb[0].mxu0
      %v2996 = vadd.f32 0.0, %v2995
      %v2997 = vpop.f32.mrb[0].mxu0
      %2998 = vmatprep.mubr.f32.mxu0 0.0
      %2999 = vmatmul.mubr.f32.gmra.mrb[0].mxu0 %v1220
      %v3000 = vpop.f32.mrb[0].mxu0
      %v3001 = vadd.f32 0.0, %v3000
      %v3002 = vpop.f32.mrb[0].mxu0
      %3003 = vmatprep.mubr.f32.mxu0 0.0
      %3004 = vmatmul.mubr.f32.gmra.mrb[0].mxu0 %v1223
      %v3005 = vpop.f32.mrb[0].mxu0
      %v3006 = vadd.f32 0.0, %v3005
      %v3007 = vpop.f32.mrb[0].mxu0
      %3008 = vmatprep.mubr.f32.mxu0 0.0
      %3009 = vmatmul.mubr.f32.gmra.mrb[0].mxu0 %v1226
      %v3010 = vpop.f32.mrb[0].mxu0
      %v3011 = vadd.f32 0.0, %v3010
      %v3012 = vpop.f32.mrb[0].mxu0
      %3013 = vmatprep.mubr.f32.mxu0 0.0
      %3014 = vmatmul.mubr.f32.gmra.mrb[0].mxu0 %v1229
      %v3015 = vpop.f32.mrb[0].mxu0
      %v3016 = vadd.f32 0.0, %v3015
      %v3017 = vpop.f32.mrb[0].mxu0
      %3018 = vmatprep.mubr.f32.mxu0 0.0
      %3019 = vmatmul.mubr.f32.gmra.mrb[0].mxu0 %v1232
      %v3020 = vpop.f32.mrb[0].mxu0
      %v3021 = vadd.f32 0.0, %v3020
      %v3022 = vpop.f32.mrb[0].mxu0
      %3023 = vmatprep.mubr.f32.mxu0 0.0
      %3024 = vmatmul.mubr.f32.gmra.mrb[0].mxu0 %v1235
      %v3025 = vpop.f32.mrb[0].mxu0
      %v3026 = vadd.f32 0.0, %v3025
      %v3027 = vpop.f32.mrb[0].mxu0
      %3028 = vmatprep.mubr.f32.mxu0 0.0
      %3029 = vmatmul.mubr.f32.gmra.mrb[0].mxu0 %v1238
      %v3030 = vpop.f32.mrb[0].mxu0
      %v3031 = vadd.f32 0.0, %v3030
      %v3032 = vpop.f32.mrb[0].mxu0
      %3033 = vmatprep.mubr.f32.mxu0 0.0
      %3034 = vmatmul.mubr.f32.gmra.mrb[0].mxu0 %v1241
      %v3035 = vpop.f32.mrb[0].mxu0
      %v3036 = vadd.f32 0.0, %v3035
      %v3037 = vpop.f32.mrb[0].mxu0
      %3038 = vmatprep.mubr.f32.mxu0 0.0
      %3039 = vmatmul.mubr.f32.gmra.mrb[0].mxu0 %v1244
      %v3040 = vpop.f32.mrb[0].mxu0
      %v3041 = vadd.f32 0.0, %v3040
      %v3042 = vpop.f32.mrb[0].mxu0
      %3043 = vmatprep.mubr.f32.mxu0 0.0
      %3044 = vmatmul.mubr.f32.gmra.mrb[0].mxu0 %v1247
      %v3045 = vpop.f32.mrb[0].mxu0
      %v3046 = vadd.f32 0.0, %v3045
      %v3047 = vpop.f32.mrb[0].mxu0
      %3048 = vmatprep.mubr.f32.mxu0 0.0
      %3049 = vmatmul.mubr.f32.gmra.mrb[0].mxu0 %v1250
      %v3050 = vpop.f32.mrb[0].mxu0
      %v3051 = vadd.f32 0.0, %v3050
      %v3052 = vpop.f32.mrb[0].mxu0
      %3053 = vmatprep.mubr.f32.mxu0 0.0
      %3054 = vmatmul.mubr.f32.gmra.mrb[0].mxu0 %v1253
      %v3055 = vpop.f32.mrb[0].mxu0
      %v3056 = vadd.f32 0.0, %v3055
      %v3057 = vpop.f32.mrb[0].mxu0
      %3058 = vmatprep.mubr.f32.mxu0 0.0
      %3059 = vmatmul.mubr.f32.gmra.mrb[0].mxu0 %v1256
      %v3060 = vpop.f32.mrb[0].mxu0
      %v3061 = vadd.f32 0.0, %v3060
      %v3062 = vpop.f32.mrb[0].mxu0
      %3063 = vmatprep.mubr.f32.mxu0 0.0
      %3064 = vmatmul.mubr.f32.gmra.mrb[0].mxu0 %v2071
      %v3065 = vpop.f32.mrb[0].mxu0
      %v3066 = vadd.f32 0.0, %v3065
      %v3067 = vpop.f32.mrb[0].mxu0
      %3068 = vmatprep.mubr.f32.mxu0 0.0
      %3069 = vmatmul.mubr.f32.gmra.mrb[0].mxu0 %v2074
      %v3070 = vpop.f32.mrb[0].mxu0
      %v3071 = vadd.f32 0.0, %v3070
      %v3072 = vpop.f32.mrb[0].mxu0
      %3073 = vmatprep.mubr.f32.mxu0 0.0
      %3074 = vmatmul.mubr.f32.gmra.mrb[0].mxu0 %v1253
      %v3075 = vpop.f32.mrb[0].mxu0
      %v3076 = vadd.f32 0.0, %v3075
      %v3077 = vpop.f32.mrb[0].mxu0
      %3078 = vmatprep.mubr.f32.mxu0 0.0
      %3079 = vmatmul.mubr.f32.gmra.mrb[0].mxu0 %v1256
      %v3080 = vpop.f32.mrb[0].mxu0
      %v3081 = vadd.f32 0.0, %v3080
      %v3082 = vpop.f32.mrb[0].mxu0
      %3083 = vdwg.mxu0
      %v3084 = vadd.f32 %v2824, %v2926
      %v3085 = vadd.f32 %v2825, %v2931
      %v3086 = vadd.f32 %v2826, %v2936
      %v3087 = vadd.f32 %v2827, %v2941
      %v3088 = vadd.f32 %v2828, %v2946
      %v3089 = vadd.f32 %v2829, %v2951
      %v3090 = vadd.f32 %v2830, %v2956
      %v3091 = vadd.f32 %v2831, %v2961
      %v3092 = vadd.f32 %v2832, %v2966
      %v3093 = vadd.f32 %v2833, %v2971
      %v3094 = vadd.f32 %v2834, %v2976
      %v3095 = vadd.f32 %v2835, %v2981
      %v3096 = vadd.f32 %v2836, %v2986
      %v3097 = vadd.f32 %v2837, %v2991
      %v3098 = vadd.f32 %v2838, %v2996
      %v3099 = vadd.f32 %v2839, %v3001
      %v3100 = vadd.f32 %v2840, %v3006
      %v3101 = vadd.f32 %v2841, %v3011
      %v3102 = vadd.f32 %v2842, %v3016
      %v3103 = vadd.f32 %v2843, %v3021
      %v3104 = vadd.f32 %v2844, %v3026
      %v3105 = vadd.f32 %v2845, %v3031
      %v3106 = vadd.f32 %v2846, %v3036
      %v3107 = vadd.f32 %v2847, %v3041
      %v3108 = vadd.f32 %v2848, %v3046
      %v3109 = vadd.f32 %v2849, %v3051
      %v3110 = vadd.f32 %v2850, %v3056
      %v3111 = vadd.f32 %v2851, %v3061
      %v3112 = vadd.f32 %v2852, %v3066
      %v3113 = vadd.f32 %v2853, %v3071
      %v3114 = vadd.f32 %v2854, %v3076
      %v3115 = vadd.f32 %v2855, %v3081
      %v3116 = vsel %vm530, %v3084, 0.0
      %v3117 = vsel %vm530, %v3085, 0.0
      %v3118 = vadd.f32 %v3116, %v3117
      %v3119 = vsel %vm530, %v3086, 0.0
      %v3120 = vadd.f32 %v3118, %v3119
      %v3121 = vsel %vm530, %v3087, 0.0
      %v3122 = vadd.f32 %v3120, %v3121
      %v3123 = vsel %vm530, %v3088, 0.0
      %v3124 = vadd.f32 %v3122, %v3123
      %v3125 = vsel %vm530, %v3089, 0.0
      %v3126 = vadd.f32 %v3124, %v3125
      %v3127 = vsel %vm530, %v3090, 0.0
      %v3128 = vadd.f32 %v3126, %v3127
      %v3129 = vsel %vm530, %v3091, 0.0
      %v3130 = vadd.f32 %v3128, %v3129
      %v3131 = vsel %vm530, %v3092, 0.0
      %v3132 = vadd.f32 %v3130, %v3131
      %v3133 = vsel %vm530, %v3093, 0.0
      %v3134 = vadd.f32 %v3132, %v3133
      %v3135 = vsel %vm530, %v3094, 0.0
      %v3136 = vadd.f32 %v3134, %v3135
      %v3137 = vsel %vm530, %v3095, 0.0
      %v3138 = vadd.f32 %v3136, %v3137
      %v3139 = vsel %vm530, %v3096, 0.0
      %v3140 = vadd.f32 %v3138, %v3139
      %v3141 = vsel %vm530, %v3097, 0.0
      %v3142 = vadd.f32 %v3140, %v3141
      %v3143 = vsel %vm530, %v3098, 0.0
      %v3144 = vadd.f32 %v3142, %v3143
      %v3145 = vsel %vm530, %v3099, 0.0
      %v3146 = vadd.f32 %v3144, %v3145
      %v3147 = vsel %vm530, %v3100, 0.0
      %v3148 = vadd.f32 %v3146, %v3147
      %v3149 = vsel %vm530, %v3101, 0.0
      %v3150 = vadd.f32 %v3148, %v3149
      %v3151 = vsel %vm530, %v3102, 0.0
      %v3152 = vadd.f32 %v3150, %v3151
      %v3153 = vsel %vm530, %v3103, 0.0
      %v3154 = vadd.f32 %v3152, %v3153
      %v3155 = vsel %vm530, %v3104, 0.0
      %v3156 = vadd.f32 %v3154, %v3155
      %v3157 = vsel %vm530, %v3105, 0.0
      %v3158 = vadd.f32 %v3156, %v3157
      %v3159 = vsel %vm530, %v3106, 0.0
      %v3160 = vadd.f32 %v3158, %v3159
      %v3161 = vsel %vm530, %v3107, 0.0
      %v3162 = vadd.f32 %v3160, %v3161
      %v3163 = vsel %vm530, %v3108, 0.0
      %v3164 = vadd.f32 %v3162, %v3163
      %v3165 = vsel %vm530, %v3109, 0.0
      %v3166 = vadd.f32 %v3164, %v3165
      %v3167 = vsel %vm530, %v3110, 0.0
      %v3168 = vadd.f32 %v3166, %v3167
      %v3169 = vsel %vm530, %v3111, 0.0
      %v3170 = vadd.f32 %v3168, %v3169
      %v3171 = vsel %vm530, %v3112, 0.0
      %v3172 = vadd.f32 %v3170, %v3171
      %v3173 = vsel %vm530, %v3113, 0.0
      %v3174 = vadd.f32 %v3172, %v3173
      %v3175 = vsel %vm530, %v3114, 0.0
      %v3176 = vadd.f32 %v3174, %v3175
      %v3177 = vsel %vm530, %v3115, 0.0
      %v3178 = vadd.f32 %v3176, %v3177
      %v3179 = vrot.slane %v3178, 4
      %v3180 = vadd.f32 %v3178, %v3179
      %v3181 = vrot.slane %v3180, 2
      %v3182 = vadd.f32 %v3180, %v3181
      %v3183 = vrot.slane %v3182, 1
      %v3184 = vadd.f32 %v3182, %v3183
      %v3185 = vrcp.pop 256.0
      %v3186 = vmul.f32 %v3184, %v3185
      %v3187 = vsub.f32 %v3084, %v3186
      %v3188 = vsub.f32 %v3085, %v3186
      %v3189 = vsub.f32 %v3086, %v3186
      %v3190 = vsub.f32 %v3087, %v3186
      %v3191 = vsub.f32 %v3088, %v3186
      %v3192 = vsub.f32 %v3089, %v3186
      %v3193 = vsub.f32 %v3090, %v3186
      %v3194 = vsub.f32 %v3091, %v3186
      %v3195 = vsub.f32 %v3092, %v3186
      %v3196 = vsub.f32 %v3093, %v3186
      %v3197 = vsub.f32 %v3094, %v3186
      %v3198 = vsub.f32 %v3095, %v3186
      %v3199 = vsub.f32 %v3096, %v3186
      %v3200 = vsub.f32 %v3097, %v3186
      %v3201 = vsub.f32 %v3098, %v3186
      %v3202 = vsub.f32 %v3099, %v3186
      %v3203 = vsub.f32 %v3100, %v3186
      %v3204 = vsub.f32 %v3101, %v3186
      %v3205 = vsub.f32 %v3102, %v3186
      %v3206 = vsub.f32 %v3103, %v3186
      %v3207 = vsub.f32 %v3104, %v3186
      %v3208 = vsub.f32 %v3105, %v3186
      %v3209 = vsub.f32 %v3106, %v3186
      %v3210 = vsub.f32 %v3107, %v3186
      %v3211 = vsub.f32 %v3108, %v3186
      %v3212 = vsub.f32 %v3109, %v3186
      %v3213 = vsub.f32 %v3110, %v3186
      %v3214 = vsub.f32 %v3111, %v3186
      %v3215 = vsub.f32 %v3112, %v3186
      %v3216 = vsub.f32 %v3113, %v3186
      %v3217 = vsub.f32 %v3114, %v3186
      %v3218 = vsub.f32 %v3115, %v3186
      %v3219 = vmul.f32 %v3187, %v3187
      %v3220 = vmul.f32 %v3188, %v3188
      %v3221 = vmul.f32 %v3189, %v3189
      %v3222 = vmul.f32 %v3190, %v3190
      %v3223 = vmul.f32 %v3191, %v3191
      %v3224 = vmul.f32 %v3192, %v3192
      %v3225 = vmul.f32 %v3193, %v3193
      %v3226 = vmul.f32 %v3194, %v3194
      %v3227 = vmul.f32 %v3195, %v3195
      %v3228 = vmul.f32 %v3196, %v3196
      %v3229 = vmul.f32 %v3197, %v3197
      %v3230 = vmul.f32 %v3198, %v3198
      %v3231 = vmul.f32 %v3199, %v3199
      %v3232 = vmul.f32 %v3200, %v3200
      %v3233 = vmul.f32 %v3201, %v3201
      %v3234 = vmul.f32 %v3202, %v3202
      %v3235 = vmul.f32 %v3203, %v3203
      %v3236 = vmul.f32 %v3204, %v3204
      %v3237 = vmul.f32 %v3205, %v3205
      %v3238 = vmul.f32 %v3206, %v3206
      %v3239 = vmul.f32 %v3207, %v3207
      %v3240 = vmul.f32 %v3208, %v3208
      %v3241 = vmul.f32 %v3209, %v3209
      %v3242 = vmul.f32 %v3210, %v3210
      %v3243 = vmul.f32 %v3211, %v3211
      %v3244 = vmul.f32 %v3212, %v3212
      %v3245 = vmul.f32 %v3213, %v3213
      %v3246 = vmul.f32 %v3214, %v3214
      %v3247 = vmul.f32 %v3215, %v3215
      %v3248 = vmul.f32 %v3216, %v3216
      %v3249 = vmul.f32 %v3217, %v3217
      %v3250 = vmul.f32 %v3218, %v3218
      %v3251 = vsel %vm530, %v3219, 0.0
      %v3252 = vsel %vm530, %v3220, 0.0
      %v3253 = vadd.f32 %v3251, %v3252
      %v3254 = vsel %vm530, %v3221, 0.0
      %v3255 = vadd.f32 %v3253, %v3254
      %v3256 = vsel %vm530, %v3222, 0.0
      %v3257 = vadd.f32 %v3255, %v3256
      %v3258 = vsel %vm530, %v3223, 0.0
      %v3259 = vadd.f32 %v3257, %v3258
      %v3260 = vsel %vm530, %v3224, 0.0
      %v3261 = vadd.f32 %v3259, %v3260
      %v3262 = vsel %vm530, %v3225, 0.0
      %v3263 = vadd.f32 %v3261, %v3262
      %v3264 = vsel %vm530, %v3226, 0.0
      %v3265 = vadd.f32 %v3263, %v3264
      %v3266 = vsel %vm530, %v3227, 0.0
      %v3267 = vadd.f32 %v3265, %v3266
      %v3268 = vsel %vm530, %v3228, 0.0
      %v3269 = vadd.f32 %v3267, %v3268
      %v3270 = vsel %vm530, %v3229, 0.0
      %v3271 = vadd.f32 %v3269, %v3270
      %v3272 = vsel %vm530, %v3230, 0.0
      %v3273 = vadd.f32 %v3271, %v3272
      %v3274 = vsel %vm530, %v3231, 0.0
      %v3275 = vadd.f32 %v3273, %v3274
      %v3276 = vsel %vm530, %v3232, 0.0
      %v3277 = vadd.f32 %v3275, %v3276
      %v3278 = vsel %vm530, %v3233, 0.0
      %v3279 = vadd.f32 %v3277, %v3278
      %v3280 = vsel %vm530, %v3234, 0.0
      %v3281 = vadd.f32 %v3279, %v3280
      %v3282 = vsel %vm530, %v3235, 0.0
      %v3283 = vadd.f32 %v3281, %v3282
      %v3284 = vsel %vm530, %v3236, 0.0
      %v3285 = vadd.f32 %v3283, %v3284
      %v3286 = vsel %vm530, %v3237, 0.0
      %v3287 = vadd.f32 %v3285, %v3286
      %v3288 = vsel %vm530, %v3238, 0.0
      %v3289 = vadd.f32 %v3287, %v3288
      %v3290 = vsel %vm530, %v3239, 0.0
      %v3291 = vadd.f32 %v3289, %v3290
      %v3292 = vsel %vm530, %v3240, 0.0
      %v3293 = vadd.f32 %v3291, %v3292
      %v3294 = vsel %vm530, %v3241, 0.0
      %v3295 = vadd.f32 %v3293, %v3294
      %v3296 = vsel %vm530, %v3242, 0.0
      %v3297 = vadd.f32 %v3295, %v3296
      %v3298 = vsel %vm530, %v3243, 0.0
      %v3299 = vadd.f32 %v3297, %v3298
      %v3300 = vsel %vm530, %v3244, 0.0
      %v3301 = vadd.f32 %v3299, %v3300
      %v3302 = vsel %vm530, %v3245, 0.0
      %v3303 = vadd.f32 %v3301, %v3302
      %v3304 = vsel %vm530, %v3246, 0.0
      %v3305 = vadd.f32 %v3303, %v3304
      %v3306 = vsel %vm530, %v3247, 0.0
      %v3307 = vadd.f32 %v3305, %v3306
      %v3308 = vsel %vm530, %v3248, 0.0
      %v3309 = vadd.f32 %v3307, %v3308
      %v3310 = vsel %vm530, %v3249, 0.0
      %v3311 = vadd.f32 %v3309, %v3310
      %v3312 = vsel %vm530, %v3250, 0.0
      %v3313 = vadd.f32 %v3311, %v3312
      %v3314 = vrot.slane %v3313, 4
      %v3315 = vadd.f32 %v3313, %v3314
      %v3316 = vrot.slane %v3315, 2
      %v3317 = vadd.f32 %v3315, %v3316
      %v3318 = vrot.slane %v3317, 1
      %v3319 = vadd.f32 %v3317, %v3318
      %v3320 = vmul.f32 %v3319, %v3185
      %v3321 = vadd.f32 %v3320, 1e-05
      %v3322 = vrsqrt.pop %v3321
      %v3323 = vmul.f32 %v3187, %v3322
      %v3324 = vmul.f32 %v3188, %v3322
      %v3325 = vmul.f32 %v3189, %v3322
      %v3326 = vmul.f32 %v3190, %v3322
      %v3327 = vmul.f32 %v3191, %v3322
      %v3328 = vmul.f32 %v3192, %v3322
      %v3329 = vmul.f32 %v3193, %v3322
      %v3330 = vmul.f32 %v3194, %v3322
      %v3331 = vmul.f32 %v3195, %v3322
      %v3332 = vmul.f32 %v3196, %v3322
      %v3333 = vmul.f32 %v3197, %v3322
      %v3334 = vmul.f32 %v3198, %v3322
      %v3335 = vmul.f32 %v3199, %v3322
      %v3336 = vmul.f32 %v3200, %v3322
      %v3337 = vmul.f32 %v3201, %v3322
      %v3338 = vmul.f32 %v3202, %v3322
      %v3339 = vmul.f32 %v3203, %v3322
      %v3340 = vmul.f32 %v3204, %v3322
      %v3341 = vmul.f32 %v3205, %v3322
      %v3342 = vmul.f32 %v3206, %v3322
      %v3343 = vmul.f32 %v3207, %v3322
      %v3344 = vmul.f32 %v3208, %v3322
      %v3345 = vmul.f32 %v3209, %v3322
      %v3346 = vmul.f32 %v3210, %v3322
      %v3347 = vmul.f32 %v3211, %v3322
      %v3348 = vmul.f32 %v3212, %v3322
      %v3349 = vmul.f32 %v3213, %v3322
      %v3350 = vmul.f32 %v3214, %v3322
      %v3351 = vmul.f32 %v3215, %v3322
      %v3352 = vmul.f32 %v3216, %v3322
      %v3353 = vmul.f32 %v3217, %v3322
      %v3354 = vmul.f32 %v3218, %v3322
      %v3355 = vmax.f32 %v3323, 0.0
      %v3356 = vmax.f32 %v3324, 0.0
      %v3357 = vmax.f32 %v3325, 0.0
      %v3358 = vmax.f32 %v3326, 0.0
      %v3359 = vmax.f32 %v3327, 0.0
      %v3360 = vmax.f32 %v3328, 0.0
      %v3361 = vmax.f32 %v3329, 0.0
      %v3362 = vmax.f32 %v3330, 0.0
      %v3363 = vmax.f32 %v3331, 0.0
      %v3364 = vmax.f32 %v3332, 0.0
      %v3365 = vmax.f32 %v3333, 0.0
      %v3366 = vmax.f32 %v3334, 0.0
      %v3367 = vmax.f32 %v3335, 0.0
      %v3368 = vmax.f32 %v3336, 0.0
      %v3369 = vmax.f32 %v3337, 0.0
      %v3370 = vmax.f32 %v3338, 0.0
      %v3371 = vmax.f32 %v3339, 0.0
      %v3372 = vmax.f32 %v3340, 0.0
      %v3373 = vmax.f32 %v3341, 0.0
      %v3374 = vmax.f32 %v3342, 0.0
      %v3375 = vmax.f32 %v3343, 0.0
      %v3376 = vmax.f32 %v3344, 0.0
      %v3377 = vmax.f32 %v3345, 0.0
      %v3378 = vmax.f32 %v3346, 0.0
      %v3379 = vmax.f32 %v3347, 0.0
      %v3380 = vmax.f32 %v3348, 0.0
      %v3381 = vmax.f32 %v3349, 0.0
      %v3382 = vmax.f32 %v3350, 0.0
      %v3383 = vmax.f32 %v3351, 0.0
      %v3384 = vmax.f32 %v3352, 0.0
      %v3385 = vmax.f32 %v3353, 0.0
      %v3386 = vmax.f32 %v3354, 0.0
      %v3387 = vrot.slane %v3357, 7
      %v3388 = vrot.slane %v3355, 7
      %v3389 = vrot.slane %v3359, 7
      %v3390 = vrot.slane %v3361, 7
      %v3391 = vrot.slane %v3363, 7
      %v3392 = vrot.slane %v3365, 7
      %v3393 = vrot.slane %v3367, 7
      %v3394 = vrot.slane %v3369, 7
      %v3395 = vrot.slane %v3371, 7
      %v3396 = vrot.slane %v3373, 7
      %v3397 = vrot.slane %v3375, 7
      %v3398 = vrot.slane %v3377, 7
      %v3399 = vrot.slane %v3379, 7
      %v3400 = vrot.slane %v3381, 7
      %v3401 = vrot.slane %v3383, 7
      %v3402 = vrot.slane %v3358, 7
      %v3403 = vrot.slane %v3356, 7
      %v3404 = vrot.slane %v3360, 7
      %v3405 = vrot.slane %v3362, 7
      %v3406 = vrot.slane %v3364, 7
      %v3407 = vrot.slane %v3366, 7
      %v3408 = vrot.slane %v3368, 7
      %v3409 = vrot.slane %v3370, 7
      %v3410 = vrot.slane %v3372, 7
      %v3411 = vrot.slane %v3374, 7
      %v3412 = vrot.slane %v3376, 7
      %v3413 = vrot.slane %v3378, 7
      %v3414 = vrot.slane %v3380, 7
      %v3415 = vrot.slane %v3382, 7
      %v3416 = vrot.slane %v3384, 7
      %v3417 = vsel %vm256, %v3387, %v3402
      %v3418 = vsel %vm256, %v3388, %v3403
      %v3419 = vsel %vm256, %v3389, %v3404
      %v3420 = vsel %vm256, %v3390, %v3405
      %v3421 = vsel %vm256, %v3391, %v3406
      %v3422 = vsel %vm256, %v3392, %v3407
      %v3423 = vsel %vm256, %v3393, %v3408
      %v3424 = vsel %vm256, %v3394, %v3409
      %v3425 = vsel %vm256, %v3395, %v3410
      %v3426 = vsel %vm256, %v3396, %v3411
      %v3427 = vsel %vm256, %v3397, %v3412
      %v3428 = vsel %vm256, %v3398, %v3413
      %v3429 = vsel %vm256, %v3399, %v3414
      %v3430 = vsel %vm256, %v3400, %v3415
      %v3431 = vsel %vm256, %v3401, %v3416
      %v3432 = vsel %vm256, %v3402, %v3387
      %v3433 = vsel %vm256, %v3403, %v3388
      %v3434 = vsel %vm256, %v3404, %v3389
      %v3435 = vsel %vm256, %v3405, %v3390
      %v3436 = vsel %vm256, %v3406, %v3391
      %v3437 = vsel %vm256, %v3407, %v3392
      %v3438 = vsel %vm256, %v3408, %v3393
      %v3439 = vsel %vm256, %v3409, %v3394
      %v3440 = vsel %vm256, %v3410, %v3395
      %v3441 = vsel %vm256, %v3411, %v3396
      %v3442 = vsel %vm256, %v3412, %v3397
      %v3443 = vsel %vm256, %v3413, %v3398
      %v3444 = vsel %vm256, %v3414, %v3399
      %v3445 = vsel %vm256, %v3415, %v3400
      %v3446 = vsel %vm256, %v3416, %v3401
      %v3447 = vlaneseq
      %v3448 = vshrl.u32 %v3447, 7
      %v3449 = vsub.s32 1, %v3448
      %v3450 = vrot.slane %v3357, %v3449
      %v3451 = vlaneseq
      %v3452 = vshrl.u32 %v3451, 7
      %v3453 = vsub.s32 1, %v3452
      %v3454 = vrot.slane %v3355, %v3453
      %v3455 = vlaneseq
      %v3456 = vshrl.u32 %v3455, 7
      %v3457 = vsub.s32 1, %v3456
      %v3458 = vrot.slane %v3359, %v3457
      %v3459 = vlaneseq
      %v3460 = vshrl.u32 %v3459, 7
      %v3461 = vsub.s32 1, %v3460
      %v3462 = vrot.slane %v3361, %v3461
      %v3463 = vlaneseq
      %v3464 = vshrl.u32 %v3463, 7
      %v3465 = vsub.s32 1, %v3464
      %v3466 = vrot.slane %v3363, %v3465
      %v3467 = vlaneseq
      %v3468 = vshrl.u32 %v3467, 7
      %v3469 = vsub.s32 1, %v3468
      %v3470 = vrot.slane %v3365, %v3469
      %v3471 = vlaneseq
      %v3472 = vshrl.u32 %v3471, 7
      %v3473 = vsub.s32 1, %v3472
      %v3474 = vrot.slane %v3367, %v3473
      %v3475 = vlaneseq
      %v3476 = vshrl.u32 %v3475, 7
      %v3477 = vsub.s32 1, %v3476
      %v3478 = vrot.slane %v3369, %v3477
      %v3479 = vlaneseq
      %v3480 = vshrl.u32 %v3479, 7
      %v3481 = vsub.s32 1, %v3480
      %v3482 = vrot.slane %v3371, %v3481
      %v3483 = vlaneseq
      %v3484 = vshrl.u32 %v3483, 7
      %v3485 = vsub.s32 1, %v3484
      %v3486 = vrot.slane %v3373, %v3485
      %v3487 = vlaneseq
      %v3488 = vshrl.u32 %v3487, 7
      %v3489 = vsub.s32 1, %v3488
      %v3490 = vrot.slane %v3375, %v3489
      %v3491 = vlaneseq
      %v3492 = vshrl.u32 %v3491, 7
      %v3493 = vsub.s32 1, %v3492
      %v3494 = vrot.slane %v3377, %v3493
      %v3495 = vlaneseq
      %v3496 = vshrl.u32 %v3495, 7
      %v3497 = vsub.s32 1, %v3496
      %v3498 = vrot.slane %v3379, %v3497
      %v3499 = vlaneseq
      %v3500 = vshrl.u32 %v3499, 7
      %v3501 = vsub.s32 1, %v3500
      %v3502 = vrot.slane %v3381, %v3501
      %v3503 = vlaneseq
      %v3504 = vshrl.u32 %v3503, 7
      %v3505 = vsub.s32 1, %v3504
      %v3506 = vrot.slane %v3383, %v3505
      %v3507 = vsel %vm224, %v3450, %v3432
      %v3508 = vsel %vm225, %v3450, %v3417
      %v3509 = vsel %vm224, %v3454, %v3433
      %v3510 = vsel %vm225, %v3454, %v3418
      %v3511 = vsel %vm224, %v3458, %v3434
      %v3512 = vsel %vm225, %v3458, %v3419
      %v3513 = vsel %vm224, %v3462, %v3435
      %v3514 = vsel %vm225, %v3462, %v3420
      %v3515 = vsel %vm224, %v3466, %v3436
      %v3516 = vsel %vm225, %v3466, %v3421
      %v3517 = vsel %vm224, %v3470, %v3437
      %v3518 = vsel %vm225, %v3470, %v3422
      %v3519 = vsel %vm224, %v3474, %v3438
      %v3520 = vsel %vm225, %v3474, %v3423
      %v3521 = vsel %vm224, %v3478, %v3439
      %v3522 = vsel %vm225, %v3478, %v3424
      %v3523 = vsel %vm224, %v3482, %v3440
      %v3524 = vsel %vm225, %v3482, %v3425
      %v3525 = vsel %vm224, %v3486, %v3441
      %v3526 = vsel %vm225, %v3486, %v3426
      %v3527 = vsel %vm224, %v3490, %v3442
      %v3528 = vsel %vm225, %v3490, %v3427
      %v3529 = vsel %vm224, %v3494, %v3443
      %v3530 = vsel %vm225, %v3494, %v3428
      %v3531 = vsel %vm224, %v3498, %v3444
      %v3532 = vsel %vm225, %v3498, %v3429
      %v3533 = vsel %vm224, %v3502, %v3445
      %v3534 = vsel %vm225, %v3502, %v3430
      %v3535 = vsel %vm224, %v3506, %v3446
      %v3536 = vsel %vm225, %v3506, %v3431
      %v3537 = vrot.slane %v3357, 1
      %v3538 = vrot.slane %v3355, 1
      %v3539 = vrot.slane %v3359, 1
      %v3540 = vrot.slane %v3361, 1
      %v3541 = vrot.slane %v3363, 1
      %v3542 = vrot.slane %v3365, 1
      %v3543 = vrot.slane %v3367, 1
      %v3544 = vrot.slane %v3369, 1
      %v3545 = vrot.slane %v3371, 1
      %v3546 = vrot.slane %v3373, 1
      %v3547 = vrot.slane %v3375, 1
      %v3548 = vrot.slane %v3377, 1
      %v3549 = vrot.slane %v3379, 1
      %v3550 = vrot.slane %v3381, 1
      %v3551 = vrot.slane %v3383, 1
      %v3552 = vrot.slane %v3358, 1
      %v3553 = vrot.slane %v3356, 1
      %v3554 = vrot.slane %v3360, 1
      %v3555 = vrot.slane %v3362, 1
      %v3556 = vrot.slane %v3364, 1
      %v3557 = vrot.slane %v3366, 1
      %v3558 = vrot.slane %v3368, 1
      %v3559 = vrot.slane %v3370, 1
      %v3560 = vrot.slane %v3372, 1
      %v3561 = vrot.slane %v3374, 1
      %v3562 = vrot.slane %v3376, 1
      %v3563 = vrot.slane %v3378, 1
      %v3564 = vrot.slane %v3380, 1
      %v3565 = vrot.slane %v3382, 1
      %v3566 = vrot.slane %v3384, 1
      %v3567 = vsel %vm409, %v3537, %v3552
      %v3568 = vsel %vm409, %v3538, %v3553
      %v3569 = vsel %vm409, %v3539, %v3554
      %v3570 = vsel %vm409, %v3540, %v3555
      %v3571 = vsel %vm409, %v3541, %v3556
      %v3572 = vsel %vm409, %v3542, %v3557
      %v3573 = vsel %vm409, %v3543, %v3558
      %v3574 = vsel %vm409, %v3544, %v3559
      %v3575 = vsel %vm409, %v3545, %v3560
      %v3576 = vsel %vm409, %v3546, %v3561
      %v3577 = vsel %vm409, %v3547, %v3562
      %v3578 = vsel %vm409, %v3548, %v3563
      %v3579 = vsel %vm409, %v3549, %v3564
      %v3580 = vsel %vm409, %v3550, %v3565
      %v3581 = vsel %vm409, %v3551, %v3566
      %v3582 = vsel %vm409, %v3552, %v3537
      %v3583 = vsel %vm409, %v3553, %v3538
      %v3584 = vsel %vm409, %v3554, %v3539
      %v3585 = vsel %vm409, %v3555, %v3540
      %v3586 = vsel %vm409, %v3556, %v3541
      %v3587 = vsel %vm409, %v3557, %v3542
      %v3588 = vsel %vm409, %v3558, %v3543
      %v3589 = vsel %vm409, %v3559, %v3544
      %v3590 = vsel %vm409, %v3560, %v3545
      %v3591 = vsel %vm409, %v3561, %v3546
      %v3592 = vsel %vm409, %v3562, %v3547
      %v3593 = vsel %vm409, %v3563, %v3548
      %v3594 = vsel %vm409, %v3564, %v3549
      %v3595 = vsel %vm409, %v3565, %v3550
      %v3596 = vsel %vm409, %v3566, %v3551
      %v3597 = vlaneseq
      %v3598 = vshrl.u32 %v3597, 7
      %v3599 = vsub.s32 6, %v3598
      %v3600 = vrot.slane %v3358, %v3599
      %v3601 = vlaneseq
      %v3602 = vshrl.u32 %v3601, 7
      %v3603 = vsub.s32 6, %v3602
      %v3604 = vrot.slane %v3356, %v3603
      %v3605 = vlaneseq
      %v3606 = vshrl.u32 %v3605, 7
      %v3607 = vsub.s32 6, %v3606
      %v3608 = vrot.slane %v3360, %v3607
      %v3609 = vlaneseq
      %v3610 = vshrl.u32 %v3609, 7
      %v3611 = vsub.s32 6, %v3610
      %v3612 = vrot.slane %v3362, %v3611
      %v3613 = vlaneseq
      %v3614 = vshrl.u32 %v3613, 7
      %v3615 = vsub.s32 6, %v3614
      %v3616 = vrot.slane %v3364, %v3615
      %v3617 = vlaneseq
      %v3618 = vshrl.u32 %v3617, 7
      %v3619 = vsub.s32 6, %v3618
      %v3620 = vrot.slane %v3366, %v3619
      %v3621 = vlaneseq
      %v3622 = vshrl.u32 %v3621, 7
      %v3623 = vsub.s32 6, %v3622
      %v3624 = vrot.slane %v3368, %v3623
      %v3625 = vlaneseq
      %v3626 = vshrl.u32 %v3625, 7
      %v3627 = vsub.s32 6, %v3626
      %v3628 = vrot.slane %v3370, %v3627
      %v3629 = vlaneseq
      %v3630 = vshrl.u32 %v3629, 7
      %v3631 = vsub.s32 6, %v3630
      %v3632 = vrot.slane %v3372, %v3631
      %v3633 = vlaneseq
      %v3634 = vshrl.u32 %v3633, 7
      %v3635 = vsub.s32 6, %v3634
      %v3636 = vrot.slane %v3374, %v3635
      %v3637 = vlaneseq
      %v3638 = vshrl.u32 %v3637, 7
      %v3639 = vsub.s32 6, %v3638
      %v3640 = vrot.slane %v3376, %v3639
      %v3641 = vlaneseq
      %v3642 = vshrl.u32 %v3641, 7
      %v3643 = vsub.s32 6, %v3642
      %v3644 = vrot.slane %v3378, %v3643
      %v3645 = vlaneseq
      %v3646 = vshrl.u32 %v3645, 7
      %v3647 = vsub.s32 6, %v3646
      %v3648 = vrot.slane %v3380, %v3647
      %v3649 = vlaneseq
      %v3650 = vshrl.u32 %v3649, 7
      %v3651 = vsub.s32 6, %v3650
      %v3652 = vrot.slane %v3382, %v3651
      %v3653 = vlaneseq
      %v3654 = vshrl.u32 %v3653, 7
      %v3655 = vsub.s32 6, %v3654
      %v3656 = vrot.slane %v3384, %v3655
      %v3657 = vsel %vm377, %v3600, %v3567
      %v3658 = vsel %vm378, %v3600, %v3582
      %v3659 = vsel %vm377, %v3604, %v3568
      %v3660 = vsel %vm378, %v3604, %v3583
      %v3661 = vsel %vm377, %v3608, %v3569
      %v3662 = vsel %vm378, %v3608, %v3584
      %v3663 = vsel %vm377, %v3612, %v3570
      %v3664 = vsel %vm378, %v3612, %v3585
      %v3665 = vsel %vm377, %v3616, %v3571
      %v3666 = vsel %vm378, %v3616, %v3586
      %v3667 = vsel %vm377, %v3620, %v3572
      %v3668 = vsel %vm378, %v3620, %v3587
      %v3669 = vsel %vm377, %v3624, %v3573
      %v3670 = vsel %vm378, %v3624, %v3588
      %v3671 = vsel %vm377, %v3628, %v3574
      %v3672 = vsel %vm378, %v3628, %v3589
      %v3673 = vsel %vm377, %v3632, %v3575
      %v3674 = vsel %vm378, %v3632, %v3590
      %v3675 = vsel %vm377, %v3636, %v3576
      %v3676 = vsel %vm378, %v3636, %v3591
      %v3677 = vsel %vm377, %v3640, %v3577
      %v3678 = vsel %vm378, %v3640, %v3592
      %v3679 = vsel %vm377, %v3644, %v3578
      %v3680 = vsel %vm378, %v3644, %v3593
      %v3681 = vsel %vm377, %v3648, %v3579
      %v3682 = vsel %vm378, %v3648, %v3594
      %v3683 = vsel %vm377, %v3652, %v3580
      %v3684 = vsel %vm378, %v3652, %v3595
      %v3685 = vsel %vm377, %v3656, %v3581
      %v3686 = vsel %vm378, %v3656, %v3596
      %v3688 = vsel %vm530, %v3357, 0
      %v3691 = vsel %vm530, %v3358, 0
      %v3694 = vsel %vm530, %v3355, 0
      %v3697 = vsel %vm530, %v3356, 0
      %v3700 = vsel %vm530, %v3359, 0
      %v3703 = vsel %vm530, %v3360, 0
      %v3706 = vsel %vm530, %v3361, 0
      %v3709 = vsel %vm530, %v3362, 0
      %v3712 = vsel %vm530, %v3363, 0
      %v3715 = vsel %vm530, %v3364, 0
      %v3718 = vsel %vm530, %v3365, 0
      %v3721 = vsel %vm530, %v3366, 0
      %v3724 = vsel %vm530, %v3367, 0
      %v3727 = vsel %vm530, %v3368, 0
      %v3730 = vsel %vm530, %v3369, 0
      %v3733 = vsel %vm530, %v3370, 0
      %v3736 = vsel %vm530, %v3371, 0
      %v3739 = vsel %vm530, %v3372, 0
      %v3742 = vsel %vm530, %v3373, 0
      %v3745 = vsel %vm530, %v3374, 0
      %v3748 = vsel %vm530, %v3375, 0
      %v3751 = vsel %vm530, %v3376, 0
      %v3754 = vsel %vm530, %v3377, 0
      %v3757 = vsel %vm530, %v3378, 0
      %v3760 = vsel %vm530, %v3379, 0
      %v3763 = vsel %vm530, %v3380, 0
      %v3766 = vsel %vm530, %v3381, 0
      %v3769 = vsel %vm530, %v3382, 0
      %v3772 = vsel %vm530, %v3383, 0
      %v3775 = vsel %vm530, %v3384, 0
      %v3778 = vsel %vm621, %v213, 0
      %3780 = vmatprep.subr.mxu0 0.0
      %3781 = vmatpush1.msra.mxu0 %v3778
      %3782 = vmatprep.subr.mxu0 0.0
      %3783 = vmatpush1.msra.mxu0 0.0
      %3784 = vmatprep.subr.mxu0 0.0
      %3785 = vmatpush1.msra.mxu0 0.0
      %3786 = vmatprep.subr.mxu0 0.0
      %3787 = vmatpush1.msra.mxu0 0.0
      %3788 = vmatprep.subr.mxu0 0.0
      %3789 = vmatpush1.msra.mxu0 0.0
      %3790 = vmatprep.subr.mxu0 0.0
      %3791 = vmatpush1.msra.mxu0 0.0
      %3792 = vmatprep.subr.mxu0 0.0
      %3793 = vmatpush1.msra.mxu0 0.0
      %3794 = vmatprep.subr.mxu0 0.0
      %3795 = vmatpush1.msra.mxu0 0.0
      %3796 = vmatprep.subr.mxu0 0.0
      %3797 = vmatpush1.msra.mxu0 0.0
      %3798 = vmatprep.subr.mxu0 0.0
      %3799 = vmatpush1.msra.mxu0 0.0
      %3800 = vmatprep.subr.mxu0 0.0
      %3801 = vmatpush1.msra.mxu0 0.0
      %3802 = vmatprep.subr.mxu0 0.0
      %3803 = vmatpush1.msra.mxu0 0.0
      %3804 = vmatprep.subr.mxu0 0.0
      %3805 = vmatpush1.msra.mxu0 0.0
      %3806 = vmatprep.subr.mxu0 0.0
      %3807 = vmatpush1.msra.mxu0 0.0
      %3808 = vmatprep.subr.mxu0 0.0
      %3809 = vmatpush1.msra.mxu0 0.0
      %3810 = vmatprep.subr.mxu0 0.0
      %3811 = vmatpush1.msra.mxu0 0.0
      %3812 = vmatprep.subr.mxu0 0.0
      %3813 = vmatpush1.msra.mxu0 0.0
      %3814 = vmatprep.subr.mxu0 0.0
      %3815 = vmatpush1.msra.mxu0 0.0
      %3816 = vmatprep.subr.mxu0 0.0
      %3817 = vmatpush1.msra.mxu0 0.0
      %3818 = vmatprep.subr.mxu0 0.0
      %3819 = vmatpush1.msra.mxu0 0.0
      %3820 = vmatprep.subr.mxu0 0.0
      %3821 = vmatpush1.msra.mxu0 0.0
      %3822 = vmatprep.subr.mxu0 0.0
      %3823 = vmatpush1.msra.mxu0 0.0
      %3824 = vmatprep.subr.mxu0 0.0
      %3825 = vmatpush1.msra.mxu0 0.0
      %3826 = vmatprep.subr.mxu0 0.0
      %3827 = vmatpush1.msra.mxu0 0.0
      %3828 = vmatprep.subr.mxu0 0.0
      %3829 = vmatpush1.msra.mxu0 0.0
      %3830 = vmatprep.subr.mxu0 0.0
      %3831 = vmatpush1.msra.mxu0 0.0
      %3832 = vmatprep.subr.mxu0 0.0
      %3833 = vmatpush1.msra.mxu0 0.0
      %3834 = vmatprep.subr.mxu0 0.0
      %3835 = vmatpush1.msra.mxu0 0.0
      %3836 = vmatprep.subr.mxu0 0.0
      %3837 = vmatpush1.msra.mxu0 0.0
      %3838 = vmatprep.subr.mxu0 0.0
      %3839 = vmatpush1.msra.mxu0 0.0
      %3840 = vmatprep.subr.mxu0 0.0
      %3841 = vmatpush1.msra.mxu0 0.0
      %3842 = vmatprep.subr.mxu0 0.0
      %3843 = vmatpush1.msra.mxu0 0.0
      %3844 = vmatprep.mubr.f32.mxu0 0.0
      %3845 = vmatmul.mubr.f32.gmra.mrb[0].mxu0 %v3688
      %v3846 = vpop.f32.mrb[0].mxu0
      %v3847 = vadd.f32 0.0, %v3846
      %v3848 = vpop.f32.mrb[0].mxu0
      %3849 = vmatprep.mubr.f32.mxu0 0.0
      %3850 = vmatmul.mubr.f32.gmra.mrb[0].mxu0 %v3691
      %v3851 = vpop.f32.mrb[0].mxu0
      %v3852 = vadd.f32 0.0, %v3851
      %v3853 = vpop.f32.mrb[0].mxu0
      %3854 = vmatprep.mubr.f32.mxu0 0.0
      %3855 = vmatmul.mubr.f32.gmra.mrb[0].mxu0 %v3694
      %v3856 = vpop.f32.mrb[0].mxu0
      %v3857 = vadd.f32 0.0, %v3856
      %v3858 = vpop.f32.mrb[0].mxu0
      %3859 = vmatprep.mubr.f32.mxu0 0.0
      %3860 = vmatmul.mubr.f32.gmra.mrb[0].mxu0 %v3697
      %v3861 = vpop.f32.mrb[0].mxu0
      %v3862 = vadd.f32 0.0, %v3861
      %v3863 = vpop.f32.mrb[0].mxu0
      %3864 = vmatprep.mubr.f32.mxu0 0.0
      %3865 = vmatmul.mubr.f32.gmra.mrb[0].mxu0 %v3688
      %v3866 = vpop.f32.mrb[0].mxu0
      %v3867 = vadd.f32 0.0, %v3866
      %v3868 = vpop.f32.mrb[0].mxu0
      %3869 = vmatprep.mubr.f32.mxu0 0.0
      %3870 = vmatmul.mubr.f32.gmra.mrb[0].mxu0 %v3691
      %v3871 = vpop.f32.mrb[0].mxu0
      %v3872 = vadd.f32 0.0, %v3871
      %v3873 = vpop.f32.mrb[0].mxu0
      %3874 = vmatprep.mubr.f32.mxu0 0.0
      %3875 = vmatmul.mubr.f32.gmra.mrb[0].mxu0 %v3700
      %v3876 = vpop.f32.mrb[0].mxu0
      %v3877 = vadd.f32 0.0, %v3876
      %v3878 = vpop.f32.mrb[0].mxu0
      %3879 = vmatprep.mubr.f32.mxu0 0.0
      %3880 = vmatmul.mubr.f32.gmra.mrb[0].mxu0 %v3703
      %v3881 = vpop.f32.mrb[0].mxu0
      %v3882 = vadd.f32 0.0, %v3881
      %v3883 = vpop.f32.mrb[0].mxu0
      %3884 = vmatprep.mubr.f32.mxu0 0.0
      %3885 = vmatmul.mubr.f32.gmra.mrb[0].mxu0 %v3706
      %v3886 = vpop.f32.mrb[0].mxu0
      %v3887 = vadd.f32 0.0, %v3886
      %v3888 = vpop.f32.mrb[0].mxu0
      %3889 = vmatprep.mubr.f32.mxu0 0.0
      %3890 = vmatmul.mubr.f32.gmra.mrb[0].mxu0 %v3709
      %v3891 = vpop.f32.mrb[0].mxu0
      %v3892 = vadd.f32 0.0, %v3891
      %v3893 = vpop.f32.mrb[0].mxu0
      %3894 = vmatprep.mubr.f32.mxu0 0.0
      %3895 = vmatmul.mubr.f32.gmra.mrb[0].mxu0 %v3712
      %v3896 = vpop.f32.mrb[0].mxu0
      %v3897 = vadd.f32 0.0, %v3896
      %v3898 = vpop.f32.mrb[0].mxu0
      %3899 = vmatprep.mubr.f32.mxu0 0.0
      %3900 = vmatmul.mubr.f32.gmra.mrb[0].mxu0 %v3715
      %v3901 = vpop.f32.mrb[0].mxu0
      %v3902 = vadd.f32 0.0, %v3901
      %v3903 = vpop.f32.mrb[0].mxu0
      %3904 = vmatprep.mubr.f32.mxu0 0.0
      %3905 = vmatmul.mubr.f32.gmra.mrb[0].mxu0 %v3718
      %v3906 = vpop.f32.mrb[0].mxu0
      %v3907 = vadd.f32 0.0, %v3906
      %v3908 = vpop.f32.mrb[0].mxu0
      %3909 = vmatprep.mubr.f32.mxu0 0.0
      %3910 = vmatmul.mubr.f32.gmra.mrb[0].mxu0 %v3721
      %v3911 = vpop.f32.mrb[0].mxu0
      %v3912 = vadd.f32 0.0, %v3911
      %v3913 = vpop.f32.mrb[0].mxu0
      %3914 = vmatprep.mubr.f32.mxu0 0.0
      %3915 = vmatmul.mubr.f32.gmra.mrb[0].mxu0 %v3724
      %v3916 = vpop.f32.mrb[0].mxu0
      %v3917 = vadd.f32 0.0, %v3916
      %v3918 = vpop.f32.mrb[0].mxu0
      %3919 = vmatprep.mubr.f32.mxu0 0.0
      %3920 = vmatmul.mubr.f32.gmra.mrb[0].mxu0 %v3727
      %v3921 = vpop.f32.mrb[0].mxu0
      %v3922 = vadd.f32 0.0, %v3921
      %v3923 = vpop.f32.mrb[0].mxu0
      %3924 = vmatprep.mubr.f32.mxu0 0.0
      %3925 = vmatmul.mubr.f32.gmra.mrb[0].mxu0 %v3730
      %v3926 = vpop.f32.mrb[0].mxu0
      %v3927 = vadd.f32 0.0, %v3926
      %v3928 = vpop.f32.mrb[0].mxu0
      %3929 = vmatprep.mubr.f32.mxu0 0.0
      %3930 = vmatmul.mubr.f32.gmra.mrb[0].mxu0 %v3733
      %v3931 = vpop.f32.mrb[0].mxu0
      %v3932 = vadd.f32 0.0, %v3931
      %v3933 = vpop.f32.mrb[0].mxu0
      %3934 = vmatprep.mubr.f32.mxu0 0.0
      %3935 = vmatmul.mubr.f32.gmra.mrb[0].mxu0 %v3736
      %v3936 = vpop.f32.mrb[0].mxu0
      %v3937 = vadd.f32 0.0, %v3936
      %v3938 = vpop.f32.mrb[0].mxu0
      %3939 = vmatprep.mubr.f32.mxu0 0.0
      %3940 = vmatmul.mubr.f32.gmra.mrb[0].mxu0 %v3739
      %v3941 = vpop.f32.mrb[0].mxu0
      %v3942 = vadd.f32 0.0, %v3941
      %v3943 = vpop.f32.mrb[0].mxu0
      %3944 = vmatprep.mubr.f32.mxu0 0.0
      %3945 = vmatmul.mubr.f32.gmra.mrb[0].mxu0 %v3742
      %v3946 = vpop.f32.mrb[0].mxu0
      %v3947 = vadd.f32 0.0, %v3946
      %v3948 = vpop.f32.mrb[0].mxu0
      %3949 = vmatprep.mubr.f32.mxu0 0.0
      %3950 = vmatmul.mubr.f32.gmra.mrb[0].mxu0 %v3745
      %v3951 = vpop.f32.mrb[0].mxu0
      %v3952 = vadd.f32 0.0, %v3951
      %v3953 = vpop.f32.mrb[0].mxu0
      %3954 = vmatprep.mubr.f32.mxu0 0.0
      %3955 = vmatmul.mubr.f32.gmra.mrb[0].mxu0 %v3748
      %v3956 = vpop.f32.mrb[0].mxu0
      %v3957 = vadd.f32 0.0, %v3956
      %v3958 = vpop.f32.mrb[0].mxu0
      %3959 = vmatprep.mubr.f32.mxu0 0.0
      %3960 = vmatmul.mubr.f32.gmra.mrb[0].mxu0 %v3751
      %v3961 = vpop.f32.mrb[0].mxu0
      %v3962 = vadd.f32 0.0, %v3961
      %v3963 = vpop.f32.mrb[0].mxu0
      %3964 = vmatprep.mubr.f32.mxu0 0.0
      %3965 = vmatmul.mubr.f32.gmra.mrb[0].mxu0 %v3754
      %v3966 = vpop.f32.mrb[0].mxu0
      %v3967 = vadd.f32 0.0, %v3966
      %v3968 = vpop.f32.mrb[0].mxu0
      %3969 = vmatprep.mubr.f32.mxu0 0.0
      %3970 = vmatmul.mubr.f32.gmra.mrb[0].mxu0 %v3757
      %v3971 = vpop.f32.mrb[0].mxu0
      %v3972 = vadd.f32 0.0, %v3971
      %v3973 = vpop.f32.mrb[0].mxu0
      %3974 = vmatprep.mubr.f32.mxu0 0.0
      %3975 = vmatmul.mubr.f32.gmra.mrb[0].mxu0 %v3760
      %v3976 = vpop.f32.mrb[0].mxu0
      %v3977 = vadd.f32 0.0, %v3976
      %v3978 = vpop.f32.mrb[0].mxu0
      %3979 = vmatprep.mubr.f32.mxu0 0.0
      %3980 = vmatmul.mubr.f32.gmra.mrb[0].mxu0 %v3763
      %v3981 = vpop.f32.mrb[0].mxu0
      %v3982 = vadd.f32 0.0, %v3981
      %v3983 = vpop.f32.mrb[0].mxu0
      %3984 = vmatprep.mubr.f32.mxu0 0.0
      %3985 = vmatmul.mubr.f32.gmra.mrb[0].mxu0 %v3766
      %v3986 = vpop.f32.mrb[0].mxu0
      %v3987 = vadd.f32 0.0, %v3986
      %v3988 = vpop.f32.mrb[0].mxu0
      %3989 = vmatprep.mubr.f32.mxu0 0.0
      %3990 = vmatmul.mubr.f32.gmra.mrb[0].mxu0 %v3769
      %v3991 = vpop.f32.mrb[0].mxu0
      %v3992 = vadd.f32 0.0, %v3991
      %v3993 = vpop.f32.mrb[0].mxu0
      %3994 = vmatprep.mubr.f32.mxu0 0.0
      %3995 = vmatmul.mubr.f32.gmra.mrb[0].mxu0 %v3772
      %v3996 = vpop.f32.mrb[0].mxu0
      %v3997 = vadd.f32 0.0, %v3996
      %v3998 = vpop.f32.mrb[0].mxu0
      %3999 = vmatprep.mubr.f32.mxu0 0.0
      %4000 = vmatmul.mubr.f32.gmra.mrb[0].mxu0 %v3775
      %v4001 = vpop.f32.mrb[0].mxu0
      %v4002 = vadd.f32 0.0, %v4001
      %v4003 = vpop.f32.mrb[0].mxu0
      %4004 = vdwg.mxu0
      %v4006 = vsel %vm530, %v3507, 0
      %v4009 = vsel %vm530, %v3508, 0
      %v4012 = vsel %vm530, %v3509, 0
      %v4015 = vsel %vm530, %v3510, 0
      %v4018 = vsel %vm530, %v3511, 0
      %v4021 = vsel %vm530, %v3512, 0
      %v4024 = vsel %vm530, %v3513, 0
      %v4027 = vsel %vm530, %v3514, 0
      %v4030 = vsel %vm530, %v3515, 0
      %v4033 = vsel %vm530, %v3516, 0
      %v4036 = vsel %vm530, %v3517, 0
      %v4039 = vsel %vm530, %v3518, 0
      %v4042 = vsel %vm530, %v3519, 0
      %v4045 = vsel %vm530, %v3520, 0
      %v4048 = vsel %vm530, %v3521, 0
      %v4051 = vsel %vm530, %v3522, 0
      %v4054 = vsel %vm530, %v3523, 0
      %v4057 = vsel %vm530, %v3524, 0
      %v4060 = vsel %vm530, %v3525, 0
      %v4063 = vsel %vm530, %v3526, 0
      %v4066 = vsel %vm530, %v3527, 0
      %v4069 = vsel %vm530, %v3528, 0
      %v4072 = vsel %vm530, %v3529, 0
      %v4075 = vsel %vm530, %v3530, 0
      %v4078 = vsel %vm530, %v3531, 0
      %v4081 = vsel %vm530, %v3532, 0
      %v4084 = vsel %vm530, %v3533, 0
      %v4087 = vsel %vm530, %v3534, 0
      %v4090 = vsel %vm530, %v3535, 0
      %v4093 = vsel %vm530, %v3536, 0
      %v4096 = vsel %vm621, %v212, 0
      %4098 = vmatprep.subr.mxu0 0.0
      %4099 = vmatpush1.msra.mxu0 %v4096
      %4100 = vmatprep.subr.mxu0 0.0
      %4101 = vmatpush1.msra.mxu0 0.0
      %4102 = vmatprep.subr.mxu0 0.0
      %4103 = vmatpush1.msra.mxu0 0.0
      %4104 = vmatprep.subr.mxu0 0.0
      %4105 = vmatpush1.msra.mxu0 0.0
      %4106 = vmatprep.subr.mxu0 0.0
      %4107 = vmatpush1.msra.mxu0 0.0
      %4108 = vmatprep.subr.mxu0 0.0
      %4109 = vmatpush1.msra.mxu0 0.0
      %4110 = vmatprep.subr.mxu0 0.0
      %4111 = vmatpush1.msra.mxu0 0.0
      %4112 = vmatprep.subr.mxu0 0.0
      %4113 = vmatpush1.msra.mxu0 0.0
      %4114 = vmatprep.subr.mxu0 0.0
      %4115 = vmatpush1.msra.mxu0 0.0
      %4116 = vmatprep.subr.mxu0 0.0
      %4117 = vmatpush1.msra.mxu0 0.0
      %4118 = vmatprep.subr.mxu0 0.0
      %4119 = vmatpush1.msra.mxu0 0.0
      %4120 = vmatprep.subr.mxu0 0.0
      %4121 = vmatpush1.msra.mxu0 0.0
      %4122 = vmatprep.subr.mxu0 0.0
      %4123 = vmatpush1.msra.mxu0 0.0
      %4124 = vmatprep.subr.mxu0 0.0
      %4125 = vmatpush1.msra.mxu0 0.0
      %4126 = vmatprep.subr.mxu0 0.0
      %4127 = vmatpush1.msra.mxu0 0.0
      %4128 = vmatprep.subr.mxu0 0.0
      %4129 = vmatpush1.msra.mxu0 0.0
      %4130 = vmatprep.subr.mxu0 0.0
      %4131 = vmatpush1.msra.mxu0 0.0
      %4132 = vmatprep.subr.mxu0 0.0
      %4133 = vmatpush1.msra.mxu0 0.0
      %4134 = vmatprep.subr.mxu0 0.0
      %4135 = vmatpush1.msra.mxu0 0.0
      %4136 = vmatprep.subr.mxu0 0.0
      %4137 = vmatpush1.msra.mxu0 0.0
      %4138 = vmatprep.subr.mxu0 0.0
      %4139 = vmatpush1.msra.mxu0 0.0
      %4140 = vmatprep.subr.mxu0 0.0
      %4141 = vmatpush1.msra.mxu0 0.0
      %4142 = vmatprep.subr.mxu0 0.0
      %4143 = vmatpush1.msra.mxu0 0.0
      %4144 = vmatprep.subr.mxu0 0.0
      %4145 = vmatpush1.msra.mxu0 0.0
      %4146 = vmatprep.subr.mxu0 0.0
      %4147 = vmatpush1.msra.mxu0 0.0
      %4148 = vmatprep.subr.mxu0 0.0
      %4149 = vmatpush1.msra.mxu0 0.0
      %4150 = vmatprep.subr.mxu0 0.0
      %4151 = vmatpush1.msra.mxu0 0.0
      %4152 = vmatprep.subr.mxu0 0.0
      %4153 = vmatpush1.msra.mxu0 0.0
      %4154 = vmatprep.subr.mxu0 0.0
      %4155 = vmatpush1.msra.mxu0 0.0
      %4156 = vmatprep.subr.mxu0 0.0
      %4157 = vmatpush1.msra.mxu0 0.0
      %4158 = vmatprep.subr.mxu0 0.0
      %4159 = vmatpush1.msra.mxu0 0.0
      %4160 = vmatprep.subr.mxu0 0.0
      %4161 = vmatpush1.msra.mxu0 0.0
      %4162 = vmatprep.mubr.f32.mxu0 0.0
      %4163 = vmatmul.mubr.f32.gmra.mrb[0].mxu0 %v4006
      %v4164 = vpop.f32.mrb[0].mxu0
      %v4165 = vadd.f32 %v3847, %v4164
      %v4166 = vpop.f32.mrb[0].mxu0
      %4167 = vmatprep.mubr.f32.mxu0 0.0
      %4168 = vmatmul.mubr.f32.gmra.mrb[0].mxu0 %v4009
      %v4169 = vpop.f32.mrb[0].mxu0
      %v4170 = vadd.f32 %v3852, %v4169
      %v4171 = vpop.f32.mrb[0].mxu0
      %4172 = vmatprep.mubr.f32.mxu0 0.0
      %4173 = vmatmul.mubr.f32.gmra.mrb[0].mxu0 %v4012
      %v4174 = vpop.f32.mrb[0].mxu0
      %v4175 = vadd.f32 %v3857, %v4174
      %v4176 = vpop.f32.mrb[0].mxu0
      %4177 = vmatprep.mubr.f32.mxu0 0.0
      %4178 = vmatmul.mubr.f32.gmra.mrb[0].mxu0 %v4015
      %v4179 = vpop.f32.mrb[0].mxu0
      %v4180 = vadd.f32 %v3862, %v4179
      %v4181 = vpop.f32.mrb[0].mxu0
      %4182 = vmatprep.mubr.f32.mxu0 0.0
      %4183 = vmatmul.mubr.f32.gmra.mrb[0].mxu0 %v4006
      %v4184 = vpop.f32.mrb[0].mxu0
      %v4185 = vadd.f32 %v3867, %v4184
      %v4186 = vpop.f32.mrb[0].mxu0
      %4187 = vmatprep.mubr.f32.mxu0 0.0
      %4188 = vmatmul.mubr.f32.gmra.mrb[0].mxu0 %v4009
      %v4189 = vpop.f32.mrb[0].mxu0
      %v4190 = vadd.f32 %v3872, %v4189
      %v4191 = vpop.f32.mrb[0].mxu0
      %4192 = vmatprep.mubr.f32.mxu0 0.0
      %4193 = vmatmul.mubr.f32.gmra.mrb[0].mxu0 %v4018
      %v4194 = vpop.f32.mrb[0].mxu0
      %v4195 = vadd.f32 %v3877, %v4194
      %v4196 = vpop.f32.mrb[0].mxu0
      %4197 = vmatprep.mubr.f32.mxu0 0.0
      %4198 = vmatmul.mubr.f32.gmra.mrb[0].mxu0 %v4021
      %v4199 = vpop.f32.mrb[0].mxu0
      %v4200 = vadd.f32 %v3882, %v4199
      %v4201 = vpop.f32.mrb[0].mxu0
      %4202 = vmatprep.mubr.f32.mxu0 0.0
      %4203 = vmatmul.mubr.f32.gmra.mrb[0].mxu0 %v4024
      %v4204 = vpop.f32.mrb[0].mxu0
      %v4205 = vadd.f32 %v3887, %v4204
      %v4206 = vpop.f32.mrb[0].mxu0
      %4207 = vmatprep.mubr.f32.mxu0 0.0
      %4208 = vmatmul.mubr.f32.gmra.mrb[0].mxu0 %v4027
      %v4209 = vpop.f32.mrb[0].mxu0
      %v4210 = vadd.f32 %v3892, %v4209
      %v4211 = vpop.f32.mrb[0].mxu0
      %4212 = vmatprep.mubr.f32.mxu0 0.0
      %4213 = vmatmul.mubr.f32.gmra.mrb[0].mxu0 %v4030
      %v4214 = vpop.f32.mrb[0].mxu0
      %v4215 = vadd.f32 %v3897, %v4214
      %v4216 = vpop.f32.mrb[0].mxu0
      %4217 = vmatprep.mubr.f32.mxu0 0.0
      %4218 = vmatmul.mubr.f32.gmra.mrb[0].mxu0 %v4033
      %v4219 = vpop.f32.mrb[0].mxu0
      %v4220 = vadd.f32 %v3902, %v4219
      %v4221 = vpop.f32.mrb[0].mxu0
      %4222 = vmatprep.mubr.f32.mxu0 0.0
      %4223 = vmatmul.mubr.f32.gmra.mrb[0].mxu0 %v4036
      %v4224 = vpop.f32.mrb[0].mxu0
      %v4225 = vadd.f32 %v3907, %v4224
      %v4226 = vpop.f32.mrb[0].mxu0
      %4227 = vmatprep.mubr.f32.mxu0 0.0
      %4228 = vmatmul.mubr.f32.gmra.mrb[0].mxu0 %v4039
      %v4229 = vpop.f32.mrb[0].mxu0
      %v4230 = vadd.f32 %v3912, %v4229
      %v4231 = vpop.f32.mrb[0].mxu0
      %4232 = vmatprep.mubr.f32.mxu0 0.0
      %4233 = vmatmul.mubr.f32.gmra.mrb[0].mxu0 %v4042
      %v4234 = vpop.f32.mrb[0].mxu0
      %v4235 = vadd.f32 %v3917, %v4234
      %v4236 = vpop.f32.mrb[0].mxu0
      %4237 = vmatprep.mubr.f32.mxu0 0.0
      %4238 = vmatmul.mubr.f32.gmra.mrb[0].mxu0 %v4045
      %v4239 = vpop.f32.mrb[0].mxu0
      %v4240 = vadd.f32 %v3922, %v4239
      %v4241 = vpop.f32.mrb[0].mxu0
      %4242 = vmatprep.mubr.f32.mxu0 0.0
      %4243 = vmatmul.mubr.f32.gmra.mrb[0].mxu0 %v4048
      %v4244 = vpop.f32.mrb[0].mxu0
      %v4245 = vadd.f32 %v3927, %v4244
      %v4246 = vpop.f32.mrb[0].mxu0
      %4247 = vmatprep.mubr.f32.mxu0 0.0
      %4248 = vmatmul.mubr.f32.gmra.mrb[0].mxu0 %v4051
      %v4249 = vpop.f32.mrb[0].mxu0
      %v4250 = vadd.f32 %v3932, %v4249
      %v4251 = vpop.f32.mrb[0].mxu0
      %4252 = vmatprep.mubr.f32.mxu0 0.0
      %4253 = vmatmul.mubr.f32.gmra.mrb[0].mxu0 %v4054
      %v4254 = vpop.f32.mrb[0].mxu0
      %v4255 = vadd.f32 %v3937, %v4254
      %v4256 = vpop.f32.mrb[0].mxu0
      %4257 = vmatprep.mubr.f32.mxu0 0.0
      %4258 = vmatmul.mubr.f32.gmra.mrb[0].mxu0 %v4057
      %v4259 = vpop.f32.mrb[0].mxu0
      %v4260 = vadd.f32 %v3942, %v4259
      %v4261 = vpop.f32.mrb[0].mxu0
      %4262 = vmatprep.mubr.f32.mxu0 0.0
      %4263 = vmatmul.mubr.f32.gmra.mrb[0].mxu0 %v4060
      %v4264 = vpop.f32.mrb[0].mxu0
      %v4265 = vadd.f32 %v3947, %v4264
      %v4266 = vpop.f32.mrb[0].mxu0
      %4267 = vmatprep.mubr.f32.mxu0 0.0
      %4268 = vmatmul.mubr.f32.gmra.mrb[0].mxu0 %v4063
      %v4269 = vpop.f32.mrb[0].mxu0
      %v4270 = vadd.f32 %v3952, %v4269
      %v4271 = vpop.f32.mrb[0].mxu0
      %4272 = vmatprep.mubr.f32.mxu0 0.0
      %4273 = vmatmul.mubr.f32.gmra.mrb[0].mxu0 %v4066
      %v4274 = vpop.f32.mrb[0].mxu0
      %v4275 = vadd.f32 %v3957, %v4274
      %v4276 = vpop.f32.mrb[0].mxu0
      %4277 = vmatprep.mubr.f32.mxu0 0.0
      %4278 = vmatmul.mubr.f32.gmra.mrb[0].mxu0 %v4069
      %v4279 = vpop.f32.mrb[0].mxu0
      %v4280 = vadd.f32 %v3962, %v4279
      %v4281 = vpop.f32.mrb[0].mxu0
      %4282 = vmatprep.mubr.f32.mxu0 0.0
      %4283 = vmatmul.mubr.f32.gmra.mrb[0].mxu0 %v4072
      %v4284 = vpop.f32.mrb[0].mxu0
      %v4285 = vadd.f32 %v3967, %v4284
      %v4286 = vpop.f32.mrb[0].mxu0
      %4287 = vmatprep.mubr.f32.mxu0 0.0
      %4288 = vmatmul.mubr.f32.gmra.mrb[0].mxu0 %v4075
      %v4289 = vpop.f32.mrb[0].mxu0
      %v4290 = vadd.f32 %v3972, %v4289
      %v4291 = vpop.f32.mrb[0].mxu0
      %4292 = vmatprep.mubr.f32.mxu0 0.0
      %4293 = vmatmul.mubr.f32.gmra.mrb[0].mxu0 %v4078
      %v4294 = vpop.f32.mrb[0].mxu0
      %v4295 = vadd.f32 %v3977, %v4294
      %v4296 = vpop.f32.mrb[0].mxu0
      %4297 = vmatprep.mubr.f32.mxu0 0.0
      %4298 = vmatmul.mubr.f32.gmra.mrb[0].mxu0 %v4081
      %v4299 = vpop.f32.mrb[0].mxu0
      %v4300 = vadd.f32 %v3982, %v4299
      %v4301 = vpop.f32.mrb[0].mxu0
      %4302 = vmatprep.mubr.f32.mxu0 0.0
      %4303 = vmatmul.mubr.f32.gmra.mrb[0].mxu0 %v4084
      %v4304 = vpop.f32.mrb[0].mxu0
      %v4305 = vadd.f32 %v3987, %v4304
      %v4306 = vpop.f32.mrb[0].mxu0
      %4307 = vmatprep.mubr.f32.mxu0 0.0
      %4308 = vmatmul.mubr.f32.gmra.mrb[0].mxu0 %v4087
      %v4309 = vpop.f32.mrb[0].mxu0
      %v4310 = vadd.f32 %v3992, %v4309
      %v4311 = vpop.f32.mrb[0].mxu0
      %4312 = vmatprep.mubr.f32.mxu0 0.0
      %4313 = vmatmul.mubr.f32.gmra.mrb[0].mxu0 %v4090
      %v4314 = vpop.f32.mrb[0].mxu0
      %v4315 = vadd.f32 %v3997, %v4314
      %v4316 = vpop.f32.mrb[0].mxu0
      %4317 = vmatprep.mubr.f32.mxu0 0.0
      %4318 = vmatmul.mubr.f32.gmra.mrb[0].mxu0 %v4093
      %v4319 = vpop.f32.mrb[0].mxu0
      %v4320 = vadd.f32 %v4002, %v4319
      %v4321 = vpop.f32.mrb[0].mxu0
      %4322 = vdwg.mxu0
      %v4324 = vsel %vm530, %v3657, 0
      %v4327 = vsel %vm530, %v3658, 0
      %v4330 = vsel %vm530, %v3659, 0
      %v4333 = vsel %vm530, %v3660, 0
      %v4336 = vsel %vm530, %v3661, 0
      %v4339 = vsel %vm530, %v3662, 0
      %v4342 = vsel %vm530, %v3663, 0
      %v4345 = vsel %vm530, %v3664, 0
      %v4348 = vsel %vm530, %v3665, 0
      %v4351 = vsel %vm530, %v3666, 0
      %v4354 = vsel %vm530, %v3667, 0
      %v4357 = vsel %vm530, %v3668, 0
      %v4360 = vsel %vm530, %v3669, 0
      %v4363 = vsel %vm530, %v3670, 0
      %v4366 = vsel %vm530, %v3671, 0
      %v4369 = vsel %vm530, %v3672, 0
      %v4372 = vsel %vm530, %v3673, 0
      %v4375 = vsel %vm530, %v3674, 0
      %v4378 = vsel %vm530, %v3675, 0
      %v4381 = vsel %vm530, %v3676, 0
      %v4384 = vsel %vm530, %v3677, 0
      %v4387 = vsel %vm530, %v3678, 0
      %v4390 = vsel %vm530, %v3679, 0
      %v4393 = vsel %vm530, %v3680, 0
      %v4396 = vsel %vm530, %v3681, 0
      %v4399 = vsel %vm530, %v3682, 0
      %v4402 = vsel %vm530, %v3683, 0
      %v4405 = vsel %vm530, %v3684, 0
      %v4408 = vsel %vm530, %v3685, 0
      %v4411 = vsel %vm530, %v3686, 0
      %v4414 = vsel %vm621, %v214, 0
      %4416 = vmatprep.subr.mxu0 0.0
      %4417 = vmatpush1.msra.mxu0 %v4414
      %4418 = vmatprep.subr.mxu0 0.0
      %4419 = vmatpush1.msra.mxu0 0.0
      %4420 = vmatprep.subr.mxu0 0.0
      %4421 = vmatpush1.msra.mxu0 0.0
      %4422 = vmatprep.subr.mxu0 0.0
      %4423 = vmatpush1.msra.mxu0 0.0
      %4424 = vmatprep.subr.mxu0 0.0
      %4425 = vmatpush1.msra.mxu0 0.0
      %4426 = vmatprep.subr.mxu0 0.0
      %4427 = vmatpush1.msra.mxu0 0.0
      %4428 = vmatprep.subr.mxu0 0.0
      %4429 = vmatpush1.msra.mxu0 0.0
      %4430 = vmatprep.subr.mxu0 0.0
      %4431 = vmatpush1.msra.mxu0 0.0
      %4432 = vmatprep.subr.mxu0 0.0
      %4433 = vmatpush1.msra.mxu0 0.0
      %4434 = vmatprep.subr.mxu0 0.0
      %4435 = vmatpush1.msra.mxu0 0.0
      %4436 = vmatprep.subr.mxu0 0.0
      %4437 = vmatpush1.msra.mxu0 0.0
      %4438 = vmatprep.subr.mxu0 0.0
      %4439 = vmatpush1.msra.mxu0 0.0
      %4440 = vmatprep.subr.mxu0 0.0
      %4441 = vmatpush1.msra.mxu0 0.0
      %4442 = vmatprep.subr.mxu0 0.0
      %4443 = vmatpush1.msra.mxu0 0.0
      %4444 = vmatprep.subr.mxu0 0.0
      %4445 = vmatpush1.msra.mxu0 0.0
      %4446 = vmatprep.subr.mxu0 0.0
      %4447 = vmatpush1.msra.mxu0 0.0
      %4448 = vmatprep.subr.mxu0 0.0
      %4449 = vmatpush1.msra.mxu0 0.0
      %4450 = vmatprep.subr.mxu0 0.0
      %4451 = vmatpush1.msra.mxu0 0.0
      %4452 = vmatprep.subr.mxu0 0.0
      %4453 = vmatpush1.msra.mxu0 0.0
      %4454 = vmatprep.subr.mxu0 0.0
      %4455 = vmatpush1.msra.mxu0 0.0
      %4456 = vmatprep.subr.mxu0 0.0
      %4457 = vmatpush1.msra.mxu0 0.0
      %4458 = vmatprep.subr.mxu0 0.0
      %4459 = vmatpush1.msra.mxu0 0.0
      %4460 = vmatprep.subr.mxu0 0.0
      %4461 = vmatpush1.msra.mxu0 0.0
      %4462 = vmatprep.subr.mxu0 0.0
      %4463 = vmatpush1.msra.mxu0 0.0
      %4464 = vmatprep.subr.mxu0 0.0
      %4465 = vmatpush1.msra.mxu0 0.0
      %4466 = vmatprep.subr.mxu0 0.0
      %4467 = vmatpush1.msra.mxu0 0.0
      %4468 = vmatprep.subr.mxu0 0.0
      %4469 = vmatpush1.msra.mxu0 0.0
      %4470 = vmatprep.subr.mxu0 0.0
      %4471 = vmatpush1.msra.mxu0 0.0
      %4472 = vmatprep.subr.mxu0 0.0
      %4473 = vmatpush1.msra.mxu0 0.0
      %4474 = vmatprep.subr.mxu0 0.0
      %4475 = vmatpush1.msra.mxu0 0.0
      %4476 = vmatprep.subr.mxu0 0.0
      %4477 = vmatpush1.msra.mxu0 0.0
      %4478 = vmatprep.subr.mxu0 0.0
      %4479 = vmatpush1.msra.mxu0 0.0
      %4480 = vmatprep.mubr.f32.mxu0 0.0
      %4481 = vmatmul.mubr.f32.gmra.mrb[0].mxu0 %v4324
      %v4482 = vpop.f32.mrb[0].mxu0
      %v4483 = vadd.f32 0.0, %v4482
      %v4484 = vpop.f32.mrb[0].mxu0
      %4485 = vmatprep.mubr.f32.mxu0 0.0
      %4486 = vmatmul.mubr.f32.gmra.mrb[0].mxu0 %v4327
      %v4487 = vpop.f32.mrb[0].mxu0
      %v4488 = vadd.f32 0.0, %v4487
      %v4489 = vpop.f32.mrb[0].mxu0
      %4490 = vmatprep.mubr.f32.mxu0 0.0
      %4491 = vmatmul.mubr.f32.gmra.mrb[0].mxu0 %v4330
      %v4492 = vpop.f32.mrb[0].mxu0
      %v4493 = vadd.f32 0.0, %v4492
      %v4494 = vpop.f32.mrb[0].mxu0
      %4495 = vmatprep.mubr.f32.mxu0 0.0
      %4496 = vmatmul.mubr.f32.gmra.mrb[0].mxu0 %v4333
      %v4497 = vpop.f32.mrb[0].mxu0
      %v4498 = vadd.f32 0.0, %v4497
      %v4499 = vpop.f32.mrb[0].mxu0
      %4500 = vmatprep.mubr.f32.mxu0 0.0
      %4501 = vmatmul.mubr.f32.gmra.mrb[0].mxu0 %v4324
      %v4502 = vpop.f32.mrb[0].mxu0
      %v4503 = vadd.f32 0.0, %v4502
      %v4504 = vpop.f32.mrb[0].mxu0
      %4505 = vmatprep.mubr.f32.mxu0 0.0
      %4506 = vmatmul.mubr.f32.gmra.mrb[0].mxu0 %v4327
      %v4507 = vpop.f32.mrb[0].mxu0
      %v4508 = vadd.f32 0.0, %v4507
      %v4509 = vpop.f32.mrb[0].mxu0
      %4510 = vmatprep.mubr.f32.mxu0 0.0
      %4511 = vmatmul.mubr.f32.gmra.mrb[0].mxu0 %v4336
      %v4512 = vpop.f32.mrb[0].mxu0
      %v4513 = vadd.f32 0.0, %v4512
      %v4514 = vpop.f32.mrb[0].mxu0
      %4515 = vmatprep.mubr.f32.mxu0 0.0
      %4516 = vmatmul.mubr.f32.gmra.mrb[0].mxu0 %v4339
      %v4517 = vpop.f32.mrb[0].mxu0
      %v4518 = vadd.f32 0.0, %v4517
      %v4519 = vpop.f32.mrb[0].mxu0
      %4520 = vmatprep.mubr.f32.mxu0 0.0
      %4521 = vmatmul.mubr.f32.gmra.mrb[0].mxu0 %v4342
      %v4522 = vpop.f32.mrb[0].mxu0
      %v4523 = vadd.f32 0.0, %v4522
      %v4524 = vpop.f32.mrb[0].mxu0
      %4525 = vmatprep.mubr.f32.mxu0 0.0
      %4526 = vmatmul.mubr.f32.gmra.mrb[0].mxu0 %v4345
      %v4527 = vpop.f32.mrb[0].mxu0
      %v4528 = vadd.f32 0.0, %v4527
      %v4529 = vpop.f32.mrb[0].mxu0
      %4530 = vmatprep.mubr.f32.mxu0 0.0
      %4531 = vmatmul.mubr.f32.gmra.mrb[0].mxu0 %v4348
      %v4532 = vpop.f32.mrb[0].mxu0
      %v4533 = vadd.f32 0.0, %v4532
      %v4534 = vpop.f32.mrb[0].mxu0
      %4535 = vmatprep.mubr.f32.mxu0 0.0
      %4536 = vmatmul.mubr.f32.gmra.mrb[0].mxu0 %v4351
      %v4537 = vpop.f32.mrb[0].mxu0
      %v4538 = vadd.f32 0.0, %v4537
      %v4539 = vpop.f32.mrb[0].mxu0
      %4540 = vmatprep.mubr.f32.mxu0 0.0
      %4541 = vmatmul.mubr.f32.gmra.mrb[0].mxu0 %v4354
      %v4542 = vpop.f32.mrb[0].mxu0
      %v4543 = vadd.f32 0.0, %v4542
      %v4544 = vpop.f32.mrb[0].mxu0
      %4545 = vmatprep.mubr.f32.mxu0 0.0
      %4546 = vmatmul.mubr.f32.gmra.mrb[0].mxu0 %v4357
      %v4547 = vpop.f32.mrb[0].mxu0
      %v4548 = vadd.f32 0.0, %v4547
      %v4549 = vpop.f32.mrb[0].mxu0
      %4550 = vmatprep.mubr.f32.mxu0 0.0
      %4551 = vmatmul.mubr.f32.gmra.mrb[0].mxu0 %v4360
      %v4552 = vpop.f32.mrb[0].mxu0
      %v4553 = vadd.f32 0.0, %v4552
      %v4554 = vpop.f32.mrb[0].mxu0
      %4555 = vmatprep.mubr.f32.mxu0 0.0
      %4556 = vmatmul.mubr.f32.gmra.mrb[0].mxu0 %v4363
      %v4557 = vpop.f32.mrb[0].mxu0
      %v4558 = vadd.f32 0.0, %v4557
      %v4559 = vpop.f32.mrb[0].mxu0
      %4560 = vmatprep.mubr.f32.mxu0 0.0
      %4561 = vmatmul.mubr.f32.gmra.mrb[0].mxu0 %v4366
      %v4562 = vpop.f32.mrb[0].mxu0
      %v4563 = vadd.f32 0.0, %v4562
      %v4564 = vpop.f32.mrb[0].mxu0
      %4565 = vmatprep.mubr.f32.mxu0 0.0
      %4566 = vmatmul.mubr.f32.gmra.mrb[0].mxu0 %v4369
      %v4567 = vpop.f32.mrb[0].mxu0
      %v4568 = vadd.f32 0.0, %v4567
      %v4569 = vpop.f32.mrb[0].mxu0
      %4570 = vmatprep.mubr.f32.mxu0 0.0
      %4571 = vmatmul.mubr.f32.gmra.mrb[0].mxu0 %v4372
      %v4572 = vpop.f32.mrb[0].mxu0
      %v4573 = vadd.f32 0.0, %v4572
      %v4574 = vpop.f32.mrb[0].mxu0
      %4575 = vmatprep.mubr.f32.mxu0 0.0
      %4576 = vmatmul.mubr.f32.gmra.mrb[0].mxu0 %v4375
      %v4577 = vpop.f32.mrb[0].mxu0
      %v4578 = vadd.f32 0.0, %v4577
      %v4579 = vpop.f32.mrb[0].mxu0
      %4580 = vmatprep.mubr.f32.mxu0 0.0
      %4581 = vmatmul.mubr.f32.gmra.mrb[0].mxu0 %v4378
      %v4582 = vpop.f32.mrb[0].mxu0
      %v4583 = vadd.f32 0.0, %v4582
      %v4584 = vpop.f32.mrb[0].mxu0
      %4585 = vmatprep.mubr.f32.mxu0 0.0
      %4586 = vmatmul.mubr.f32.gmra.mrb[0].mxu0 %v4381
      %v4587 = vpop.f32.mrb[0].mxu0
      %v4588 = vadd.f32 0.0, %v4587
      %v4589 = vpop.f32.mrb[0].mxu0
      %4590 = vmatprep.mubr.f32.mxu0 0.0
      %4591 = vmatmul.mubr.f32.gmra.mrb[0].mxu0 %v4384
      %v4592 = vpop.f32.mrb[0].mxu0
      %v4593 = vadd.f32 0.0, %v4592
      %v4594 = vpop.f32.mrb[0].mxu0
      %4595 = vmatprep.mubr.f32.mxu0 0.0
      %4596 = vmatmul.mubr.f32.gmra.mrb[0].mxu0 %v4387
      %v4597 = vpop.f32.mrb[0].mxu0
      %v4598 = vadd.f32 0.0, %v4597
      %v4599 = vpop.f32.mrb[0].mxu0
      %4600 = vmatprep.mubr.f32.mxu0 0.0
      %4601 = vmatmul.mubr.f32.gmra.mrb[0].mxu0 %v4390
      %v4602 = vpop.f32.mrb[0].mxu0
      %v4603 = vadd.f32 0.0, %v4602
      %v4604 = vpop.f32.mrb[0].mxu0
      %4605 = vmatprep.mubr.f32.mxu0 0.0
      %4606 = vmatmul.mubr.f32.gmra.mrb[0].mxu0 %v4393
      %v4607 = vpop.f32.mrb[0].mxu0
      %v4608 = vadd.f32 0.0, %v4607
      %v4609 = vpop.f32.mrb[0].mxu0
      %4610 = vmatprep.mubr.f32.mxu0 0.0
      %4611 = vmatmul.mubr.f32.gmra.mrb[0].mxu0 %v4396
      %v4612 = vpop.f32.mrb[0].mxu0
      %v4613 = vadd.f32 0.0, %v4612
      %v4614 = vpop.f32.mrb[0].mxu0
      %4615 = vmatprep.mubr.f32.mxu0 0.0
      %4616 = vmatmul.mubr.f32.gmra.mrb[0].mxu0 %v4399
      %v4617 = vpop.f32.mrb[0].mxu0
      %v4618 = vadd.f32 0.0, %v4617
      %v4619 = vpop.f32.mrb[0].mxu0
      %4620 = vmatprep.mubr.f32.mxu0 0.0
      %4621 = vmatmul.mubr.f32.gmra.mrb[0].mxu0 %v4402
      %v4622 = vpop.f32.mrb[0].mxu0
      %v4623 = vadd.f32 0.0, %v4622
      %v4624 = vpop.f32.mrb[0].mxu0
      %4625 = vmatprep.mubr.f32.mxu0 0.0
      %4626 = vmatmul.mubr.f32.gmra.mrb[0].mxu0 %v4405
      %v4627 = vpop.f32.mrb[0].mxu0
      %v4628 = vadd.f32 0.0, %v4627
      %v4629 = vpop.f32.mrb[0].mxu0
      %4630 = vmatprep.mubr.f32.mxu0 0.0
      %4631 = vmatmul.mubr.f32.gmra.mrb[0].mxu0 %v4408
      %v4632 = vpop.f32.mrb[0].mxu0
      %v4633 = vadd.f32 0.0, %v4632
      %v4634 = vpop.f32.mrb[0].mxu0
      %4635 = vmatprep.mubr.f32.mxu0 0.0
      %4636 = vmatmul.mubr.f32.gmra.mrb[0].mxu0 %v4411
      %v4637 = vpop.f32.mrb[0].mxu0
      %v4638 = vadd.f32 0.0, %v4637
      %v4639 = vpop.f32.mrb[0].mxu0
      %4640 = vdwg.mxu0
      %v4641 = vadd.f32 %v4165, %v4483
      %v4642 = vadd.f32 %v4170, %v4488
      %v4643 = vadd.f32 %v4175, %v4493
      %v4644 = vadd.f32 %v4180, %v4498
      %v4645 = vadd.f32 %v4185, %v4503
      %v4646 = vadd.f32 %v4190, %v4508
      %v4647 = vadd.f32 %v4195, %v4513
      %v4648 = vadd.f32 %v4200, %v4518
      %v4649 = vadd.f32 %v4205, %v4523
      %v4650 = vadd.f32 %v4210, %v4528
      %v4651 = vadd.f32 %v4215, %v4533
      %v4652 = vadd.f32 %v4220, %v4538
      %v4653 = vadd.f32 %v4225, %v4543
      %v4654 = vadd.f32 %v4230, %v4548
      %v4655 = vadd.f32 %v4235, %v4553
      %v4656 = vadd.f32 %v4240, %v4558
      %v4657 = vadd.f32 %v4245, %v4563
      %v4658 = vadd.f32 %v4250, %v4568
      %v4659 = vadd.f32 %v4255, %v4573
      %v4660 = vadd.f32 %v4260, %v4578
      %v4661 = vadd.f32 %v4265, %v4583
      %v4662 = vadd.f32 %v4270, %v4588
      %v4663 = vadd.f32 %v4275, %v4593
      %v4664 = vadd.f32 %v4280, %v4598
      %v4665 = vadd.f32 %v4285, %v4603
      %v4666 = vadd.f32 %v4290, %v4608
      %v4667 = vadd.f32 %v4295, %v4613
      %v4668 = vadd.f32 %v4300, %v4618
      %v4669 = vadd.f32 %v4305, %v4623
      %v4670 = vadd.f32 %v4310, %v4628
      %v4671 = vadd.f32 %v4315, %v4633
      %v4672 = vadd.f32 %v4320, %v4638
      %v4673 = vrot.slane %v3385, 7
      %v4674 = vrot.slane %v3386, 7
      %v4675 = vsel %vm256, %v4673, %v4674
      %v4676 = vsel %vm256, %v4674, %v4673
      %v4677 = vlaneseq
      %v4678 = vshrl.u32 %v4677, 7
      %v4679 = vsub.s32 1, %v4678
      %v4680 = vrot.slane %v3385, %v4679
      %v4681 = vsel %vm224, %v4680, %v4676
      %v4682 = vsel %vm225, %v4680, %v4675
      %v4683 = vrot.slane %v3385, 1
      %v4684 = vrot.slane %v3386, 1
      %v4685 = vsel %vm409, %v4683, %v4684
      %v4686 = vsel %vm409, %v4684, %v4683
      %v4687 = vlaneseq
      %v4688 = vshrl.u32 %v4687, 7
      %v4689 = vsub.s32 6, %v4688
      %v4690 = vrot.slane %v3386, %v4689
      %v4691 = vsel %vm377, %v4690, %v4685
      %v4692 = vsel %vm378, %v4690, %v4686
      %v4694 = vsel %vm530, %v4681, 0
      %v4697 = vsel %vm530, %v4682, 0
      %v4700 = vsel %vm621, %v215, 0
      %4702 = vmatprep.subr.mxu0 0.0
      %4703 = vmatpush1.msra.mxu0 %v4700
      %4704 = vmatprep.subr.mxu0 0.0
      %4705 = vmatpush1.msra.mxu0 0.0
      %4706 = vmatprep.subr.mxu0 0.0
      %4707 = vmatpush1.msra.mxu0 0.0
      %4708 = vmatprep.subr.mxu0 0.0
      %4709 = vmatpush1.msra.mxu0 0.0
      %4710 = vmatprep.subr.mxu0 0.0
      %4711 = vmatpush1.msra.mxu0 0.0
      %4712 = vmatprep.subr.mxu0 0.0
      %4713 = vmatpush1.msra.mxu0 0.0
      %4714 = vmatprep.subr.mxu0 0.0
      %4715 = vmatpush1.msra.mxu0 0.0
      %4716 = vmatprep.subr.mxu0 0.0
      %4717 = vmatpush1.msra.mxu0 0.0
      %4718 = vmatprep.subr.mxu0 0.0
      %4719 = vmatpush1.msra.mxu0 0.0
      %4720 = vmatprep.subr.mxu0 0.0
      %4721 = vmatpush1.msra.mxu0 0.0
      %4722 = vmatprep.subr.mxu0 0.0
      %4723 = vmatpush1.msra.mxu0 0.0
      %4724 = vmatprep.subr.mxu0 0.0
      %4725 = vmatpush1.msra.mxu0 0.0
      %4726 = vmatprep.subr.mxu0 0.0
      %4727 = vmatpush1.msra.mxu0 0.0
      %4728 = vmatprep.subr.mxu0 0.0
      %4729 = vmatpush1.msra.mxu0 0.0
      %4730 = vmatprep.subr.mxu0 0.0
      %4731 = vmatpush1.msra.mxu0 0.0
      %4732 = vmatprep.subr.mxu0 0.0
      %4733 = vmatpush1.msra.mxu0 0.0
      %4734 = vmatprep.subr.mxu0 0.0
      %4735 = vmatpush1.msra.mxu0 0.0
      %4736 = vmatprep.subr.mxu0 0.0
      %4737 = vmatpush1.msra.mxu0 0.0
      %4738 = vmatprep.subr.mxu0 0.0
      %4739 = vmatpush1.msra.mxu0 0.0
      %4740 = vmatprep.subr.mxu0 0.0
      %4741 = vmatpush1.msra.mxu0 0.0
      %4742 = vmatprep.subr.mxu0 0.0
      %4743 = vmatpush1.msra.mxu0 0.0
      %4744 = vmatprep.subr.mxu0 0.0
      %4745 = vmatpush1.msra.mxu0 0.0
      %4746 = vmatprep.subr.mxu0 0.0
      %4747 = vmatpush1.msra.mxu0 0.0
      %4748 = vmatprep.subr.mxu0 0.0
      %4749 = vmatpush1.msra.mxu0 0.0
      %4750 = vmatprep.subr.mxu0 0.0
      %4751 = vmatpush1.msra.mxu0 0.0
      %4752 = vmatprep.subr.mxu0 0.0
      %4753 = vmatpush1.msra.mxu0 0.0
      %4754 = vmatprep.subr.mxu0 0.0
      %4755 = vmatpush1.msra.mxu0 0.0
      %4756 = vmatprep.subr.mxu0 0.0
      %4757 = vmatpush1.msra.mxu0 0.0
      %4758 = vmatprep.subr.mxu0 0.0
      %4759 = vmatpush1.msra.mxu0 0.0
      %4760 = vmatprep.subr.mxu0 0.0
      %4761 = vmatpush1.msra.mxu0 0.0
      %4762 = vmatprep.subr.mxu0 0.0
      %4763 = vmatpush1.msra.mxu0 0.0
      %4764 = vmatprep.subr.mxu0 0.0
      %4765 = vmatpush1.msra.mxu0 0.0
      %4766 = vmatprep.mubr.f32.mxu0 0.0
      %4767 = vmatmul.mubr.f32.gmra.mrb[0].mxu0 %v4012
      %v4768 = vpop.f32.mrb[0].mxu0
      %v4769 = vadd.f32 0.0, %v4768
      %v4770 = vpop.f32.mrb[0].mxu0
      %4771 = vmatprep.mubr.f32.mxu0 0.0
      %4772 = vmatmul.mubr.f32.gmra.mrb[0].mxu0 %v4015
      %v4773 = vpop.f32.mrb[0].mxu0
      %v4774 = vadd.f32 0.0, %v4773
      %v4775 = vpop.f32.mrb[0].mxu0
      %4776 = vmatprep.mubr.f32.mxu0 0.0
      %4777 = vmatmul.mubr.f32.gmra.mrb[0].mxu0 %v4006
      %v4778 = vpop.f32.mrb[0].mxu0
      %v4779 = vadd.f32 0.0, %v4778
      %v4780 = vpop.f32.mrb[0].mxu0
      %4781 = vmatprep.mubr.f32.mxu0 0.0
      %4782 = vmatmul.mubr.f32.gmra.mrb[0].mxu0 %v4009
      %v4783 = vpop.f32.mrb[0].mxu0
      %v4784 = vadd.f32 0.0, %v4783
      %v4785 = vpop.f32.mrb[0].mxu0
      %4786 = vmatprep.mubr.f32.mxu0 0.0
      %4787 = vmatmul.mubr.f32.gmra.mrb[0].mxu0 %v4018
      %v4788 = vpop.f32.mrb[0].mxu0
      %v4789 = vadd.f32 0.0, %v4788
      %v4790 = vpop.f32.mrb[0].mxu0
      %4791 = vmatprep.mubr.f32.mxu0 0.0
      %4792 = vmatmul.mubr.f32.gmra.mrb[0].mxu0 %v4021
      %v4793 = vpop.f32.mrb[0].mxu0
      %v4794 = vadd.f32 0.0, %v4793
      %v4795 = vpop.f32.mrb[0].mxu0
      %4796 = vmatprep.mubr.f32.mxu0 0.0
      %4797 = vmatmul.mubr.f32.gmra.mrb[0].mxu0 %v4024
      %v4798 = vpop.f32.mrb[0].mxu0
      %v4799 = vadd.f32 0.0, %v4798
      %v4800 = vpop.f32.mrb[0].mxu0
      %4801 = vmatprep.mubr.f32.mxu0 0.0
      %4802 = vmatmul.mubr.f32.gmra.mrb[0].mxu0 %v4027
      %v4803 = vpop.f32.mrb[0].mxu0
      %v4804 = vadd.f32 0.0, %v4803
      %v4805 = vpop.f32.mrb[0].mxu0
      %4806 = vmatprep.mubr.f32.mxu0 0.0
      %4807 = vmatmul.mubr.f32.gmra.mrb[0].mxu0 %v4030
      %v4808 = vpop.f32.mrb[0].mxu0
      %v4809 = vadd.f32 0.0, %v4808
      %v4810 = vpop.f32.mrb[0].mxu0
      %4811 = vmatprep.mubr.f32.mxu0 0.0
      %4812 = vmatmul.mubr.f32.gmra.mrb[0].mxu0 %v4033
      %v4813 = vpop.f32.mrb[0].mxu0
      %v4814 = vadd.f32 0.0, %v4813
      %v4815 = vpop.f32.mrb[0].mxu0
      %4816 = vmatprep.mubr.f32.mxu0 0.0
      %4817 = vmatmul.mubr.f32.gmra.mrb[0].mxu0 %v4036
      %v4818 = vpop.f32.mrb[0].mxu0
      %v4819 = vadd.f32 0.0, %v4818
      %v4820 = vpop.f32.mrb[0].mxu0
      %4821 = vmatprep.mubr.f32.mxu0 0.0
      %4822 = vmatmul.mubr.f32.gmra.mrb[0].mxu0 %v4039
      %v4823 = vpop.f32.mrb[0].mxu0
      %v4824 = vadd.f32 0.0, %v4823
      %v4825 = vpop.f32.mrb[0].mxu0
      %4826 = vmatprep.mubr.f32.mxu0 0.0
      %4827 = vmatmul.mubr.f32.gmra.mrb[0].mxu0 %v4042
      %v4828 = vpop.f32.mrb[0].mxu0
      %v4829 = vadd.f32 0.0, %v4828
      %v4830 = vpop.f32.mrb[0].mxu0
      %4831 = vmatprep.mubr.f32.mxu0 0.0
      %4832 = vmatmul.mubr.f32.gmra.mrb[0].mxu0 %v4045
      %v4833 = vpop.f32.mrb[0].mxu0
      %v4834 = vadd.f32 0.0, %v4833
      %v4835 = vpop.f32.mrb[0].mxu0
      %4836 = vmatprep.mubr.f32.mxu0 0.0
      %4837 = vmatmul.mubr.f32.gmra.mrb[0].mxu0 %v4048
      %v4838 = vpop.f32.mrb[0].mxu0
      %v4839 = vadd.f32 0.0, %v4838
      %v4840 = vpop.f32.mrb[0].mxu0
      %4841 = vmatprep.mubr.f32.mxu0 0.0
      %4842 = vmatmul.mubr.f32.gmra.mrb[0].mxu0 %v4051
      %v4843 = vpop.f32.mrb[0].mxu0
      %v4844 = vadd.f32 0.0, %v4843
      %v4845 = vpop.f32.mrb[0].mxu0
      %4846 = vmatprep.mubr.f32.mxu0 0.0
      %4847 = vmatmul.mubr.f32.gmra.mrb[0].mxu0 %v4054
      %v4848 = vpop.f32.mrb[0].mxu0
      %v4849 = vadd.f32 0.0, %v4848
      %v4850 = vpop.f32.mrb[0].mxu0
      %4851 = vmatprep.mubr.f32.mxu0 0.0
      %4852 = vmatmul.mubr.f32.gmra.mrb[0].mxu0 %v4057
      %v4853 = vpop.f32.mrb[0].mxu0
      %v4854 = vadd.f32 0.0, %v4853
      %v4855 = vpop.f32.mrb[0].mxu0
      %4856 = vmatprep.mubr.f32.mxu0 0.0
      %4857 = vmatmul.mubr.f32.gmra.mrb[0].mxu0 %v4060
      %v4858 = vpop.f32.mrb[0].mxu0
      %v4859 = vadd.f32 0.0, %v4858
      %v4860 = vpop.f32.mrb[0].mxu0
      %4861 = vmatprep.mubr.f32.mxu0 0.0
      %4862 = vmatmul.mubr.f32.gmra.mrb[0].mxu0 %v4063
      %v4863 = vpop.f32.mrb[0].mxu0
      %v4864 = vadd.f32 0.0, %v4863
      %v4865 = vpop.f32.mrb[0].mxu0
      %4866 = vmatprep.mubr.f32.mxu0 0.0
      %4867 = vmatmul.mubr.f32.gmra.mrb[0].mxu0 %v4066
      %v4868 = vpop.f32.mrb[0].mxu0
      %v4869 = vadd.f32 0.0, %v4868
      %v4870 = vpop.f32.mrb[0].mxu0
      %4871 = vmatprep.mubr.f32.mxu0 0.0
      %4872 = vmatmul.mubr.f32.gmra.mrb[0].mxu0 %v4069
      %v4873 = vpop.f32.mrb[0].mxu0
      %v4874 = vadd.f32 0.0, %v4873
      %v4875 = vpop.f32.mrb[0].mxu0
      %4876 = vmatprep.mubr.f32.mxu0 0.0
      %4877 = vmatmul.mubr.f32.gmra.mrb[0].mxu0 %v4072
      %v4878 = vpop.f32.mrb[0].mxu0
      %v4879 = vadd.f32 0.0, %v4878
      %v4880 = vpop.f32.mrb[0].mxu0
      %4881 = vmatprep.mubr.f32.mxu0 0.0
      %4882 = vmatmul.mubr.f32.gmra.mrb[0].mxu0 %v4075
      %v4883 = vpop.f32.mrb[0].mxu0
      %v4884 = vadd.f32 0.0, %v4883
      %v4885 = vpop.f32.mrb[0].mxu0
      %4886 = vmatprep.mubr.f32.mxu0 0.0
      %4887 = vmatmul.mubr.f32.gmra.mrb[0].mxu0 %v4078
      %v4888 = vpop.f32.mrb[0].mxu0
      %v4889 = vadd.f32 0.0, %v4888
      %v4890 = vpop.f32.mrb[0].mxu0
      %4891 = vmatprep.mubr.f32.mxu0 0.0
      %4892 = vmatmul.mubr.f32.gmra.mrb[0].mxu0 %v4081
      %v4893 = vpop.f32.mrb[0].mxu0
      %v4894 = vadd.f32 0.0, %v4893
      %v4895 = vpop.f32.mrb[0].mxu0
      %4896 = vmatprep.mubr.f32.mxu0 0.0
      %4897 = vmatmul.mubr.f32.gmra.mrb[0].mxu0 %v4084
      %v4898 = vpop.f32.mrb[0].mxu0
      %v4899 = vadd.f32 0.0, %v4898
      %v4900 = vpop.f32.mrb[0].mxu0
      %4901 = vmatprep.mubr.f32.mxu0 0.0
      %4902 = vmatmul.mubr.f32.gmra.mrb[0].mxu0 %v4087
      %v4903 = vpop.f32.mrb[0].mxu0
      %v4904 = vadd.f32 0.0, %v4903
      %v4905 = vpop.f32.mrb[0].mxu0
      %4906 = vmatprep.mubr.f32.mxu0 0.0
      %4907 = vmatmul.mubr.f32.gmra.mrb[0].mxu0 %v4090
      %v4908 = vpop.f32.mrb[0].mxu0
      %v4909 = vadd.f32 0.0, %v4908
      %v4910 = vpop.f32.mrb[0].mxu0
      %4911 = vmatprep.mubr.f32.mxu0 0.0
      %4912 = vmatmul.mubr.f32.gmra.mrb[0].mxu0 %v4093
      %v4913 = vpop.f32.mrb[0].mxu0
      %v4914 = vadd.f32 0.0, %v4913
      %v4915 = vpop.f32.mrb[0].mxu0
      %4916 = vmatprep.mubr.f32.mxu0 0.0
      %4917 = vmatmul.mubr.f32.gmra.mrb[0].mxu0 %v4694
      %v4918 = vpop.f32.mrb[0].mxu0
      %v4919 = vadd.f32 0.0, %v4918
      %v4920 = vpop.f32.mrb[0].mxu0
      %4921 = vmatprep.mubr.f32.mxu0 0.0
      %4922 = vmatmul.mubr.f32.gmra.mrb[0].mxu0 %v4697
      %v4923 = vpop.f32.mrb[0].mxu0
      %v4924 = vadd.f32 0.0, %v4923
      %v4925 = vpop.f32.mrb[0].mxu0
      %4926 = vdwg.mxu0
      %v4927 = vadd.f32 %v4641, %v4769
      %v4928 = vadd.f32 %v4642, %v4774
      %v4929 = vadd.f32 %v4643, %v4779
      %v4930 = vadd.f32 %v4644, %v4784
      %v4931 = vadd.f32 %v4645, %v4789
      %v4932 = vadd.f32 %v4646, %v4794
      %v4933 = vadd.f32 %v4647, %v4799
      %v4934 = vadd.f32 %v4648, %v4804
      %v4935 = vadd.f32 %v4649, %v4809
      %v4936 = vadd.f32 %v4650, %v4814
      %v4937 = vadd.f32 %v4651, %v4819
      %v4938 = vadd.f32 %v4652, %v4824
      %v4939 = vadd.f32 %v4653, %v4829
      %v4940 = vadd.f32 %v4654, %v4834
      %v4941 = vadd.f32 %v4655, %v4839
      %v4942 = vadd.f32 %v4656, %v4844
      %v4943 = vadd.f32 %v4657, %v4849
      %v4944 = vadd.f32 %v4658, %v4854
      %v4945 = vadd.f32 %v4659, %v4859
      %v4946 = vadd.f32 %v4660, %v4864
      %v4947 = vadd.f32 %v4661, %v4869
      %v4948 = vadd.f32 %v4662, %v4874
      %v4949 = vadd.f32 %v4663, %v4879
      %v4950 = vadd.f32 %v4664, %v4884
      %v4951 = vadd.f32 %v4665, %v4889
      %v4952 = vadd.f32 %v4666, %v4894
      %v4953 = vadd.f32 %v4667, %v4899
      %v4954 = vadd.f32 %v4668, %v4904
      %v4955 = vadd.f32 %v4669, %v4909
      %v4956 = vadd.f32 %v4670, %v4914
      %v4957 = vadd.f32 %v4671, %v4919
      %v4958 = vadd.f32 %v4672, %v4924
      %v4960 = vsel %vm530, %v3385, 0
      %v4963 = vsel %vm530, %v3386, 0
      %v4966 = vsel %vm621, %v216, 0
      %4968 = vmatprep.subr.mxu0 0.0
      %4969 = vmatpush1.msra.mxu0 %v4966
      %4970 = vmatprep.subr.mxu0 0.0
      %4971 = vmatpush1.msra.mxu0 0.0
      %4972 = vmatprep.subr.mxu0 0.0
      %4973 = vmatpush1.msra.mxu0 0.0
      %4974 = vmatprep.subr.mxu0 0.0
      %4975 = vmatpush1.msra.mxu0 0.0
      %4976 = vmatprep.subr.mxu0 0.0
      %4977 = vmatpush1.msra.mxu0 0.0
      %4978 = vmatprep.subr.mxu0 0.0
      %4979 = vmatpush1.msra.mxu0 0.0
      %4980 = vmatprep.subr.mxu0 0.0
      %4981 = vmatpush1.msra.mxu0 0.0
      %4982 = vmatprep.subr.mxu0 0.0
      %4983 = vmatpush1.msra.mxu0 0.0
      %4984 = vmatprep.subr.mxu0 0.0
      %4985 = vmatpush1.msra.mxu0 0.0
      %4986 = vmatprep.subr.mxu0 0.0
      %4987 = vmatpush1.msra.mxu0 0.0
      %4988 = vmatprep.subr.mxu0 0.0
      %4989 = vmatpush1.msra.mxu0 0.0
      %4990 = vmatprep.subr.mxu0 0.0
      %4991 = vmatpush1.msra.mxu0 0.0
      %4992 = vmatprep.subr.mxu0 0.0
      %4993 = vmatpush1.msra.mxu0 0.0
      %4994 = vmatprep.subr.mxu0 0.0
      %4995 = vmatpush1.msra.mxu0 0.0
      %4996 = vmatprep.subr.mxu0 0.0
      %4997 = vmatpush1.msra.mxu0 0.0
      %4998 = vmatprep.subr.mxu0 0.0
      %4999 = vmatpush1.msra.mxu0 0.0
      %5000 = vmatprep.subr.mxu0 0.0
      %5001 = vmatpush1.msra.mxu0 0.0
      %5002 = vmatprep.subr.mxu0 0.0
      %5003 = vmatpush1.msra.mxu0 0.0
      %5004 = vmatprep.subr.mxu0 0.0
      %5005 = vmatpush1.msra.mxu0 0.0
      %5006 = vmatprep.subr.mxu0 0.0
      %5007 = vmatpush1.msra.mxu0 0.0
      %5008 = vmatprep.subr.mxu0 0.0
      %5009 = vmatpush1.msra.mxu0 0.0
      %5010 = vmatprep.subr.mxu0 0.0
      %5011 = vmatpush1.msra.mxu0 0.0
      %5012 = vmatprep.subr.mxu0 0.0
      %5013 = vmatpush1.msra.mxu0 0.0
      %5014 = vmatprep.subr.mxu0 0.0
      %5015 = vmatpush1.msra.mxu0 0.0
      %5016 = vmatprep.subr.mxu0 0.0
      %5017 = vmatpush1.msra.mxu0 0.0
      %5018 = vmatprep.subr.mxu0 0.0
      %5019 = vmatpush1.msra.mxu0 0.0
      %5020 = vmatprep.subr.mxu0 0.0
      %5021 = vmatpush1.msra.mxu0 0.0
      %5022 = vmatprep.subr.mxu0 0.0
      %5023 = vmatpush1.msra.mxu0 0.0
      %5024 = vmatprep.subr.mxu0 0.0
      %5025 = vmatpush1.msra.mxu0 0.0
      %5026 = vmatprep.subr.mxu0 0.0
      %5027 = vmatpush1.msra.mxu0 0.0
      %5028 = vmatprep.subr.mxu0 0.0
      %5029 = vmatpush1.msra.mxu0 0.0
      %5030 = vmatprep.subr.mxu0 0.0
      %5031 = vmatpush1.msra.mxu0 0.0
      %5032 = vmatprep.mubr.f32.mxu0 0.0
      %5033 = vmatmul.mubr.f32.gmra.mrb[0].mxu0 %v3694
      %v5034 = vpop.f32.mrb[0].mxu0
      %v5035 = vadd.f32 0.0, %v5034
      %v5036 = vpop.f32.mrb[0].mxu0
      %5037 = vmatprep.mubr.f32.mxu0 0.0
      %5038 = vmatmul.mubr.f32.gmra.mrb[0].mxu0 %v3697
      %v5039 = vpop.f32.mrb[0].mxu0
      %v5040 = vadd.f32 0.0, %v5039
      %v5041 = vpop.f32.mrb[0].mxu0
      %5042 = vmatprep.mubr.f32.mxu0 0.0
      %5043 = vmatmul.mubr.f32.gmra.mrb[0].mxu0 %v3688
      %v5044 = vpop.f32.mrb[0].mxu0
      %v5045 = vadd.f32 0.0, %v5044
      %v5046 = vpop.f32.mrb[0].mxu0
      %5047 = vmatprep.mubr.f32.mxu0 0.0
      %5048 = vmatmul.mubr.f32.gmra.mrb[0].mxu0 %v3691
      %v5049 = vpop.f32.mrb[0].mxu0
      %v5050 = vadd.f32 0.0, %v5049
      %v5051 = vpop.f32.mrb[0].mxu0
      %5052 = vmatprep.mubr.f32.mxu0 0.0
      %5053 = vmatmul.mubr.f32.gmra.mrb[0].mxu0 %v3700
      %v5054 = vpop.f32.mrb[0].mxu0
      %v5055 = vadd.f32 0.0, %v5054
      %v5056 = vpop.f32.mrb[0].mxu0
      %5057 = vmatprep.mubr.f32.mxu0 0.0
      %5058 = vmatmul.mubr.f32.gmra.mrb[0].mxu0 %v3703
      %v5059 = vpop.f32.mrb[0].mxu0
      %v5060 = vadd.f32 0.0, %v5059
      %v5061 = vpop.f32.mrb[0].mxu0
      %5062 = vmatprep.mubr.f32.mxu0 0.0
      %5063 = vmatmul.mubr.f32.gmra.mrb[0].mxu0 %v3706
      %v5064 = vpop.f32.mrb[0].mxu0
      %v5065 = vadd.f32 0.0, %v5064
      %v5066 = vpop.f32.mrb[0].mxu0
      %5067 = vmatprep.mubr.f32.mxu0 0.0
      %5068 = vmatmul.mubr.f32.gmra.mrb[0].mxu0 %v3709
      %v5069 = vpop.f32.mrb[0].mxu0
      %v5070 = vadd.f32 0.0, %v5069
      %v5071 = vpop.f32.mrb[0].mxu0
      %5072 = vmatprep.mubr.f32.mxu0 0.0
      %5073 = vmatmul.mubr.f32.gmra.mrb[0].mxu0 %v3712
      %v5074 = vpop.f32.mrb[0].mxu0
      %v5075 = vadd.f32 0.0, %v5074
      %v5076 = vpop.f32.mrb[0].mxu0
      %5077 = vmatprep.mubr.f32.mxu0 0.0
      %5078 = vmatmul.mubr.f32.gmra.mrb[0].mxu0 %v3715
      %v5079 = vpop.f32.mrb[0].mxu0
      %v5080 = vadd.f32 0.0, %v5079
      %v5081 = vpop.f32.mrb[0].mxu0
      %5082 = vmatprep.mubr.f32.mxu0 0.0
      %5083 = vmatmul.mubr.f32.gmra.mrb[0].mxu0 %v3718
      %v5084 = vpop.f32.mrb[0].mxu0
      %v5085 = vadd.f32 0.0, %v5084
      %v5086 = vpop.f32.mrb[0].mxu0
      %5087 = vmatprep.mubr.f32.mxu0 0.0
      %5088 = vmatmul.mubr.f32.gmra.mrb[0].mxu0 %v3721
      %v5089 = vpop.f32.mrb[0].mxu0
      %v5090 = vadd.f32 0.0, %v5089
      %v5091 = vpop.f32.mrb[0].mxu0
      %5092 = vmatprep.mubr.f32.mxu0 0.0
      %5093 = vmatmul.mubr.f32.gmra.mrb[0].mxu0 %v3724
      %v5094 = vpop.f32.mrb[0].mxu0
      %v5095 = vadd.f32 0.0, %v5094
      %v5096 = vpop.f32.mrb[0].mxu0
      %5097 = vmatprep.mubr.f32.mxu0 0.0
      %5098 = vmatmul.mubr.f32.gmra.mrb[0].mxu0 %v3727
      %v5099 = vpop.f32.mrb[0].mxu0
      %v5100 = vadd.f32 0.0, %v5099
      %v5101 = vpop.f32.mrb[0].mxu0
      %5102 = vmatprep.mubr.f32.mxu0 0.0
      %5103 = vmatmul.mubr.f32.gmra.mrb[0].mxu0 %v3730
      %v5104 = vpop.f32.mrb[0].mxu0
      %v5105 = vadd.f32 0.0, %v5104
      %v5106 = vpop.f32.mrb[0].mxu0
      %5107 = vmatprep.mubr.f32.mxu0 0.0
      %5108 = vmatmul.mubr.f32.gmra.mrb[0].mxu0 %v3733
      %v5109 = vpop.f32.mrb[0].mxu0
      %v5110 = vadd.f32 0.0, %v5109
      %v5111 = vpop.f32.mrb[0].mxu0
      %5112 = vmatprep.mubr.f32.mxu0 0.0
      %5113 = vmatmul.mubr.f32.gmra.mrb[0].mxu0 %v3736
      %v5114 = vpop.f32.mrb[0].mxu0
      %v5115 = vadd.f32 0.0, %v5114
      %v5116 = vpop.f32.mrb[0].mxu0
      %5117 = vmatprep.mubr.f32.mxu0 0.0
      %5118 = vmatmul.mubr.f32.gmra.mrb[0].mxu0 %v3739
      %v5119 = vpop.f32.mrb[0].mxu0
      %v5120 = vadd.f32 0.0, %v5119
      %v5121 = vpop.f32.mrb[0].mxu0
      %5122 = vmatprep.mubr.f32.mxu0 0.0
      %5123 = vmatmul.mubr.f32.gmra.mrb[0].mxu0 %v3742
      %v5124 = vpop.f32.mrb[0].mxu0
      %v5125 = vadd.f32 0.0, %v5124
      %v5126 = vpop.f32.mrb[0].mxu0
      %5127 = vmatprep.mubr.f32.mxu0 0.0
      %5128 = vmatmul.mubr.f32.gmra.mrb[0].mxu0 %v3745
      %v5129 = vpop.f32.mrb[0].mxu0
      %v5130 = vadd.f32 0.0, %v5129
      %v5131 = vpop.f32.mrb[0].mxu0
      %5132 = vmatprep.mubr.f32.mxu0 0.0
      %5133 = vmatmul.mubr.f32.gmra.mrb[0].mxu0 %v3748
      %v5134 = vpop.f32.mrb[0].mxu0
      %v5135 = vadd.f32 0.0, %v5134
      %v5136 = vpop.f32.mrb[0].mxu0
      %5137 = vmatprep.mubr.f32.mxu0 0.0
      %5138 = vmatmul.mubr.f32.gmra.mrb[0].mxu0 %v3751
      %v5139 = vpop.f32.mrb[0].mxu0
      %v5140 = vadd.f32 0.0, %v5139
      %v5141 = vpop.f32.mrb[0].mxu0
      %5142 = vmatprep.mubr.f32.mxu0 0.0
      %5143 = vmatmul.mubr.f32.gmra.mrb[0].mxu0 %v3754
      %v5144 = vpop.f32.mrb[0].mxu0
      %v5145 = vadd.f32 0.0, %v5144
      %v5146 = vpop.f32.mrb[0].mxu0
      %5147 = vmatprep.mubr.f32.mxu0 0.0
      %5148 = vmatmul.mubr.f32.gmra.mrb[0].mxu0 %v3757
      %v5149 = vpop.f32.mrb[0].mxu0
      %v5150 = vadd.f32 0.0, %v5149
      %v5151 = vpop.f32.mrb[0].mxu0
      %5152 = vmatprep.mubr.f32.mxu0 0.0
      %5153 = vmatmul.mubr.f32.gmra.mrb[0].mxu0 %v3760
      %v5154 = vpop.f32.mrb[0].mxu0
      %v5155 = vadd.f32 0.0, %v5154
      %v5156 = vpop.f32.mrb[0].mxu0
      %5157 = vmatprep.mubr.f32.mxu0 0.0
      %5158 = vmatmul.mubr.f32.gmra.mrb[0].mxu0 %v3763
      %v5159 = vpop.f32.mrb[0].mxu0
      %v5160 = vadd.f32 0.0, %v5159
      %v5161 = vpop.f32.mrb[0].mxu0
      %5162 = vmatprep.mubr.f32.mxu0 0.0
      %5163 = vmatmul.mubr.f32.gmra.mrb[0].mxu0 %v3766
      %v5164 = vpop.f32.mrb[0].mxu0
      %v5165 = vadd.f32 0.0, %v5164
      %v5166 = vpop.f32.mrb[0].mxu0
      %5167 = vmatprep.mubr.f32.mxu0 0.0
      %5168 = vmatmul.mubr.f32.gmra.mrb[0].mxu0 %v3769
      %v5169 = vpop.f32.mrb[0].mxu0
      %v5170 = vadd.f32 0.0, %v5169
      %v5171 = vpop.f32.mrb[0].mxu0
      %5172 = vmatprep.mubr.f32.mxu0 0.0
      %5173 = vmatmul.mubr.f32.gmra.mrb[0].mxu0 %v3772
      %v5174 = vpop.f32.mrb[0].mxu0
      %v5175 = vadd.f32 0.0, %v5174
      %v5176 = vpop.f32.mrb[0].mxu0
      %5177 = vmatprep.mubr.f32.mxu0 0.0
      %5178 = vmatmul.mubr.f32.gmra.mrb[0].mxu0 %v3775
      %v5179 = vpop.f32.mrb[0].mxu0
      %v5180 = vadd.f32 0.0, %v5179
      %v5181 = vpop.f32.mrb[0].mxu0
      %5182 = vmatprep.mubr.f32.mxu0 0.0
      %5183 = vmatmul.mubr.f32.gmra.mrb[0].mxu0 %v4960
      %v5184 = vpop.f32.mrb[0].mxu0
      %v5185 = vadd.f32 0.0, %v5184
      %v5186 = vpop.f32.mrb[0].mxu0
      %5187 = vmatprep.mubr.f32.mxu0 0.0
      %5188 = vmatmul.mubr.f32.gmra.mrb[0].mxu0 %v4963
      %v5189 = vpop.f32.mrb[0].mxu0
      %v5190 = vadd.f32 0.0, %v5189
      %v5191 = vpop.f32.mrb[0].mxu0
      %5192 = vdwg.mxu0
      %v5193 = vadd.f32 %v4927, %v5035
      %v5194 = vadd.f32 %v4928, %v5040
      %v5195 = vadd.f32 %v4929, %v5045
      %v5196 = vadd.f32 %v4930, %v5050
      %v5197 = vadd.f32 %v4931, %v5055
      %v5198 = vadd.f32 %v4932, %v5060
      %v5199 = vadd.f32 %v4933, %v5065
      %v5200 = vadd.f32 %v4934, %v5070
      %v5201 = vadd.f32 %v4935, %v5075
      %v5202 = vadd.f32 %v4936, %v5080
      %v5203 = vadd.f32 %v4937, %v5085
      %v5204 = vadd.f32 %v4938, %v5090
      %v5205 = vadd.f32 %v4939, %v5095
      %v5206 = vadd.f32 %v4940, %v5100
      %v5207 = vadd.f32 %v4941, %v5105
      %v5208 = vadd.f32 %v4942, %v5110
      %v5209 = vadd.f32 %v4943, %v5115
      %v5210 = vadd.f32 %v4944, %v5120
      %v5211 = vadd.f32 %v4945, %v5125
      %v5212 = vadd.f32 %v4946, %v5130
      %v5213 = vadd.f32 %v4947, %v5135
      %v5214 = vadd.f32 %v4948, %v5140
      %v5215 = vadd.f32 %v4949, %v5145
      %v5216 = vadd.f32 %v4950, %v5150
      %v5217 = vadd.f32 %v4951, %v5155
      %v5218 = vadd.f32 %v4952, %v5160
      %v5219 = vadd.f32 %v4953, %v5165
      %v5220 = vadd.f32 %v4954, %v5170
      %v5221 = vadd.f32 %v4955, %v5175
      %v5222 = vadd.f32 %v4956, %v5180
      %v5223 = vadd.f32 %v4957, %v5185
      %v5224 = vadd.f32 %v4958, %v5190
      %v5226 = vsel %vm530, %v4691, 0
      %v5229 = vsel %vm530, %v4692, 0
      %v5232 = vsel %vm621, %v217, 0
      %5234 = vmatprep.subr.mxu0 0.0
      %5235 = vmatpush1.msra.mxu0 %v5232
      %5236 = vmatprep.subr.mxu0 0.0
      %5237 = vmatpush1.msra.mxu0 0.0
      %5238 = vmatprep.subr.mxu0 0.0
      %5239 = vmatpush1.msra.mxu0 0.0
      %5240 = vmatprep.subr.mxu0 0.0
      %5241 = vmatpush1.msra.mxu0 0.0
      %5242 = vmatprep.subr.mxu0 0.0
      %5243 = vmatpush1.msra.mxu0 0.0
      %5244 = vmatprep.subr.mxu0 0.0
      %5245 = vmatpush1.msra.mxu0 0.0
      %5246 = vmatprep.subr.mxu0 0.0
      %5247 = vmatpush1.msra.mxu0 0.0
      %5248 = vmatprep.subr.mxu0 0.0
      %5249 = vmatpush1.msra.mxu0 0.0
      %5250 = vmatprep.subr.mxu0 0.0
      %5251 = vmatpush1.msra.mxu0 0.0
      %5252 = vmatprep.subr.mxu0 0.0
      %5253 = vmatpush1.msra.mxu0 0.0
      %5254 = vmatprep.subr.mxu0 0.0
      %5255 = vmatpush1.msra.mxu0 0.0
      %5256 = vmatprep.subr.mxu0 0.0
      %5257 = vmatpush1.msra.mxu0 0.0
      %5258 = vmatprep.subr.mxu0 0.0
      %5259 = vmatpush1.msra.mxu0 0.0
      %5260 = vmatprep.subr.mxu0 0.0
      %5261 = vmatpush1.msra.mxu0 0.0
      %5262 = vmatprep.subr.mxu0 0.0
      %5263 = vmatpush1.msra.mxu0 0.0
      %5264 = vmatprep.subr.mxu0 0.0
      %5265 = vmatpush1.msra.mxu0 0.0
      %5266 = vmatprep.subr.mxu0 0.0
      %5267 = vmatpush1.msra.mxu0 0.0
      %5268 = vmatprep.subr.mxu0 0.0
      %5269 = vmatpush1.msra.mxu0 0.0
      %5270 = vmatprep.subr.mxu0 0.0
      %5271 = vmatpush1.msra.mxu0 0.0
      %5272 = vmatprep.subr.mxu0 0.0
      %5273 = vmatpush1.msra.mxu0 0.0
      %5274 = vmatprep.subr.mxu0 0.0
      %5275 = vmatpush1.msra.mxu0 0.0
      %5276 = vmatprep.subr.mxu0 0.0
      %5277 = vmatpush1.msra.mxu0 0.0
      %5278 = vmatprep.subr.mxu0 0.0
      %5279 = vmatpush1.msra.mxu0 0.0
      %5280 = vmatprep.subr.mxu0 0.0
      %5281 = vmatpush1.msra.mxu0 0.0
      %5282 = vmatprep.subr.mxu0 0.0
      %5283 = vmatpush1.msra.mxu0 0.0
      %5284 = vmatprep.subr.mxu0 0.0
      %5285 = vmatpush1.msra.mxu0 0.0
      %5286 = vmatprep.subr.mxu0 0.0
      %5287 = vmatpush1.msra.mxu0 0.0
      %5288 = vmatprep.subr.mxu0 0.0
      %5289 = vmatpush1.msra.mxu0 0.0
      %5290 = vmatprep.subr.mxu0 0.0
      %5291 = vmatpush1.msra.mxu0 0.0
      %5292 = vmatprep.subr.mxu0 0.0
      %5293 = vmatpush1.msra.mxu0 0.0
      %5294 = vmatprep.subr.mxu0 0.0
      %5295 = vmatpush1.msra.mxu0 0.0
      %5296 = vmatprep.subr.mxu0 0.0
      %5297 = vmatpush1.msra.mxu0 0.0
      %5298 = vmatprep.mubr.f32.mxu0 0.0
      %5299 = vmatmul.mubr.f32.gmra.mrb[0].mxu0 %v4330
      %v5300 = vpop.f32.mrb[0].mxu0
      %v5301 = vadd.f32 0.0, %v5300
      %v5302 = vpop.f32.mrb[0].mxu0
      %5303 = vmatprep.mubr.f32.mxu0 0.0
      %5304 = vmatmul.mubr.f32.gmra.mrb[0].mxu0 %v4333
      %v5305 = vpop.f32.mrb[0].mxu0
      %v5306 = vadd.f32 0.0, %v5305
      %v5307 = vpop.f32.mrb[0].mxu0
      %5308 = vmatprep.mubr.f32.mxu0 0.0
      %5309 = vmatmul.mubr.f32.gmra.mrb[0].mxu0 %v4324
      %v5310 = vpop.f32.mrb[0].mxu0
      %v5311 = vadd.f32 0.0, %v5310
      %v5312 = vpop.f32.mrb[0].mxu0
      %5313 = vmatprep.mubr.f32.mxu0 0.0
      %5314 = vmatmul.mubr.f32.gmra.mrb[0].mxu0 %v4327
      %v5315 = vpop.f32.mrb[0].mxu0
      %v5316 = vadd.f32 0.0, %v5315
      %v5317 = vpop.f32.mrb[0].mxu0
      %5318 = vmatprep.mubr.f32.mxu0 0.0
      %5319 = vmatmul.mubr.f32.gmra.mrb[0].mxu0 %v4336
      %v5320 = vpop.f32.mrb[0].mxu0
      %v5321 = vadd.f32 0.0, %v5320
      %v5322 = vpop.f32.mrb[0].mxu0
      %5323 = vmatprep.mubr.f32.mxu0 0.0
      %5324 = vmatmul.mubr.f32.gmra.mrb[0].mxu0 %v4339
      %v5325 = vpop.f32.mrb[0].mxu0
      %v5326 = vadd.f32 0.0, %v5325
      %v5327 = vpop.f32.mrb[0].mxu0
      %5328 = vmatprep.mubr.f32.mxu0 0.0
      %5329 = vmatmul.mubr.f32.gmra.mrb[0].mxu0 %v4342
      %v5330 = vpop.f32.mrb[0].mxu0
      %v5331 = vadd.f32 0.0, %v5330
      %v5332 = vpop.f32.mrb[0].mxu0
      %5333 = vmatprep.mubr.f32.mxu0 0.0
      %5334 = vmatmul.mubr.f32.gmra.mrb[0].mxu0 %v4345
      %v5335 = vpop.f32.mrb[0].mxu0
      %v5336 = vadd.f32 0.0, %v5335
      %v5337 = vpop.f32.mrb[0].mxu0
      %5338 = vmatprep.mubr.f32.mxu0 0.0
      %5339 = vmatmul.mubr.f32.gmra.mrb[0].mxu0 %v4348
      %v5340 = vpop.f32.mrb[0].mxu0
      %v5341 = vadd.f32 0.0, %v5340
      %v5342 = vpop.f32.mrb[0].mxu0
      %5343 = vmatprep.mubr.f32.mxu0 0.0
      %5344 = vmatmul.mubr.f32.gmra.mrb[0].mxu0 %v4351
      %v5345 = vpop.f32.mrb[0].mxu0
      %v5346 = vadd.f32 0.0, %v5345
      %v5347 = vpop.f32.mrb[0].mxu0
      %5348 = vmatprep.mubr.f32.mxu0 0.0
      %5349 = vmatmul.mubr.f32.gmra.mrb[0].mxu0 %v4354
      %v5350 = vpop.f32.mrb[0].mxu0
      %v5351 = vadd.f32 0.0, %v5350
      %v5352 = vpop.f32.mrb[0].mxu0
      %5353 = vmatprep.mubr.f32.mxu0 0.0
      %5354 = vmatmul.mubr.f32.gmra.mrb[0].mxu0 %v4357
      %v5355 = vpop.f32.mrb[0].mxu0
      %v5356 = vadd.f32 0.0, %v5355
      %v5357 = vpop.f32.mrb[0].mxu0
      %5358 = vmatprep.mubr.f32.mxu0 0.0
      %5359 = vmatmul.mubr.f32.gmra.mrb[0].mxu0 %v4360
      %v5360 = vpop.f32.mrb[0].mxu0
      %v5361 = vadd.f32 0.0, %v5360
      %v5362 = vpop.f32.mrb[0].mxu0
      %5363 = vmatprep.mubr.f32.mxu0 0.0
      %5364 = vmatmul.mubr.f32.gmra.mrb[0].mxu0 %v4363
      %v5365 = vpop.f32.mrb[0].mxu0
      %v5366 = vadd.f32 0.0, %v5365
      %v5367 = vpop.f32.mrb[0].mxu0
      %5368 = vmatprep.mubr.f32.mxu0 0.0
      %5369 = vmatmul.mubr.f32.gmra.mrb[0].mxu0 %v4366
      %v5370 = vpop.f32.mrb[0].mxu0
      %v5371 = vadd.f32 0.0, %v5370
      %v5372 = vpop.f32.mrb[0].mxu0
      %5373 = vmatprep.mubr.f32.mxu0 0.0
      %5374 = vmatmul.mubr.f32.gmra.mrb[0].mxu0 %v4369
      %v5375 = vpop.f32.mrb[0].mxu0
      %v5376 = vadd.f32 0.0, %v5375
      %v5377 = vpop.f32.mrb[0].mxu0
      %5378 = vmatprep.mubr.f32.mxu0 0.0
      %5379 = vmatmul.mubr.f32.gmra.mrb[0].mxu0 %v4372
      %v5380 = vpop.f32.mrb[0].mxu0
      %v5381 = vadd.f32 0.0, %v5380
      %v5382 = vpop.f32.mrb[0].mxu0
      %5383 = vmatprep.mubr.f32.mxu0 0.0
      %5384 = vmatmul.mubr.f32.gmra.mrb[0].mxu0 %v4375
      %v5385 = vpop.f32.mrb[0].mxu0
      %v5386 = vadd.f32 0.0, %v5385
      %v5387 = vpop.f32.mrb[0].mxu0
      %5388 = vmatprep.mubr.f32.mxu0 0.0
      %5389 = vmatmul.mubr.f32.gmra.mrb[0].mxu0 %v4378
      %v5390 = vpop.f32.mrb[0].mxu0
      %v5391 = vadd.f32 0.0, %v5390
      %v5392 = vpop.f32.mrb[0].mxu0
      %5393 = vmatprep.mubr.f32.mxu0 0.0
      %5394 = vmatmul.mubr.f32.gmra.mrb[0].mxu0 %v4381
      %v5395 = vpop.f32.mrb[0].mxu0
      %v5396 = vadd.f32 0.0, %v5395
      %v5397 = vpop.f32.mrb[0].mxu0
      %5398 = vmatprep.mubr.f32.mxu0 0.0
      %5399 = vmatmul.mubr.f32.gmra.mrb[0].mxu0 %v4384
      %v5400 = vpop.f32.mrb[0].mxu0
      %v5401 = vadd.f32 0.0, %v5400
      %v5402 = vpop.f32.mrb[0].mxu0
      %5403 = vmatprep.mubr.f32.mxu0 0.0
      %5404 = vmatmul.mubr.f32.gmra.mrb[0].mxu0 %v4387
      %v5405 = vpop.f32.mrb[0].mxu0
      %v5406 = vadd.f32 0.0, %v5405
      %v5407 = vpop.f32.mrb[0].mxu0
      %5408 = vmatprep.mubr.f32.mxu0 0.0
      %5409 = vmatmul.mubr.f32.gmra.mrb[0].mxu0 %v4390
      %v5410 = vpop.f32.mrb[0].mxu0
      %v5411 = vadd.f32 0.0, %v5410
      %v5412 = vpop.f32.mrb[0].mxu0
      %5413 = vmatprep.mubr.f32.mxu0 0.0
      %5414 = vmatmul.mubr.f32.gmra.mrb[0].mxu0 %v4393
      %v5415 = vpop.f32.mrb[0].mxu0
      %v5416 = vadd.f32 0.0, %v5415
      %v5417 = vpop.f32.mrb[0].mxu0
      %5418 = vmatprep.mubr.f32.mxu0 0.0
      %5419 = vmatmul.mubr.f32.gmra.mrb[0].mxu0 %v4396
      %v5420 = vpop.f32.mrb[0].mxu0
      %v5421 = vadd.f32 0.0, %v5420
      %v5422 = vpop.f32.mrb[0].mxu0
      %5423 = vmatprep.mubr.f32.mxu0 0.0
      %5424 = vmatmul.mubr.f32.gmra.mrb[0].mxu0 %v4399
      %v5425 = vpop.f32.mrb[0].mxu0
      %v5426 = vadd.f32 0.0, %v5425
      %v5427 = vpop.f32.mrb[0].mxu0
      %5428 = vmatprep.mubr.f32.mxu0 0.0
      %5429 = vmatmul.mubr.f32.gmra.mrb[0].mxu0 %v4402
      %v5430 = vpop.f32.mrb[0].mxu0
      %v5431 = vadd.f32 0.0, %v5430
      %v5432 = vpop.f32.mrb[0].mxu0
      %5433 = vmatprep.mubr.f32.mxu0 0.0
      %5434 = vmatmul.mubr.f32.gmra.mrb[0].mxu0 %v4405
      %v5435 = vpop.f32.mrb[0].mxu0
      %v5436 = vadd.f32 0.0, %v5435
      %v5437 = vpop.f32.mrb[0].mxu0
      %5438 = vmatprep.mubr.f32.mxu0 0.0
      %5439 = vmatmul.mubr.f32.gmra.mrb[0].mxu0 %v4408
      %v5440 = vpop.f32.mrb[0].mxu0
      %v5441 = vadd.f32 0.0, %v5440
      %v5442 = vpop.f32.mrb[0].mxu0
      %5443 = vmatprep.mubr.f32.mxu0 0.0
      %5444 = vmatmul.mubr.f32.gmra.mrb[0].mxu0 %v4411
      %v5445 = vpop.f32.mrb[0].mxu0
      %v5446 = vadd.f32 0.0, %v5445
      %v5447 = vpop.f32.mrb[0].mxu0
      %5448 = vmatprep.mubr.f32.mxu0 0.0
      %5449 = vmatmul.mubr.f32.gmra.mrb[0].mxu0 %v5226
      %v5450 = vpop.f32.mrb[0].mxu0
      %v5451 = vadd.f32 0.0, %v5450
      %v5452 = vpop.f32.mrb[0].mxu0
      %5453 = vmatprep.mubr.f32.mxu0 0.0
      %5454 = vmatmul.mubr.f32.gmra.mrb[0].mxu0 %v5229
      %v5455 = vpop.f32.mrb[0].mxu0
      %v5456 = vadd.f32 0.0, %v5455
      %v5457 = vpop.f32.mrb[0].mxu0
      %5458 = vdwg.mxu0
      %v5459 = vadd.f32 %v5193, %v5301
      %v5460 = vadd.f32 %v5194, %v5306
      %v5461 = vadd.f32 %v5195, %v5311
      %v5462 = vadd.f32 %v5196, %v5316
      %v5463 = vadd.f32 %v5197, %v5321
      %v5464 = vadd.f32 %v5198, %v5326
      %v5465 = vadd.f32 %v5199, %v5331
      %v5466 = vadd.f32 %v5200, %v5336
      %v5467 = vadd.f32 %v5201, %v5341
      %v5468 = vadd.f32 %v5202, %v5346
      %v5469 = vadd.f32 %v5203, %v5351
      %v5470 = vadd.f32 %v5204, %v5356
      %v5471 = vadd.f32 %v5205, %v5361
      %v5472 = vadd.f32 %v5206, %v5366
      %v5473 = vadd.f32 %v5207, %v5371
      %v5474 = vadd.f32 %v5208, %v5376
      %v5475 = vadd.f32 %v5209, %v5381
      %v5476 = vadd.f32 %v5210, %v5386
      %v5477 = vadd.f32 %v5211, %v5391
      %v5478 = vadd.f32 %v5212, %v5396
      %v5479 = vadd.f32 %v5213, %v5401
      %v5480 = vadd.f32 %v5214, %v5406
      %v5481 = vadd.f32 %v5215, %v5411
      %v5482 = vadd.f32 %v5216, %v5416
      %v5483 = vadd.f32 %v5217, %v5421
      %v5484 = vadd.f32 %v5218, %v5426
      %v5485 = vadd.f32 %v5219, %v5431
      %v5486 = vadd.f32 %v5220, %v5436
      %v5487 = vadd.f32 %v5221, %v5441
      %v5488 = vadd.f32 %v5222, %v5446
      %v5489 = vadd.f32 %v5223, %v5451
      %v5490 = vadd.f32 %v5224, %v5456
      %v5492 = vsel %vm621, %v218, 0
      %5494 = vmatprep.subr.mxu0 0.0
      %5495 = vmatpush1.msra.mxu0 %v5492
      %5496 = vmatprep.subr.mxu0 0.0
      %5497 = vmatpush1.msra.mxu0 0.0
      %5498 = vmatprep.subr.mxu0 0.0
      %5499 = vmatpush1.msra.mxu0 0.0
      %5500 = vmatprep.subr.mxu0 0.0
      %5501 = vmatpush1.msra.mxu0 0.0
      %5502 = vmatprep.subr.mxu0 0.0
      %5503 = vmatpush1.msra.mxu0 0.0
      %5504 = vmatprep.subr.mxu0 0.0
      %5505 = vmatpush1.msra.mxu0 0.0
      %5506 = vmatprep.subr.mxu0 0.0
      %5507 = vmatpush1.msra.mxu0 0.0
      %5508 = vmatprep.subr.mxu0 0.0
      %5509 = vmatpush1.msra.mxu0 0.0
      %5510 = vmatprep.subr.mxu0 0.0
      %5511 = vmatpush1.msra.mxu0 0.0
      %5512 = vmatprep.subr.mxu0 0.0
      %5513 = vmatpush1.msra.mxu0 0.0
      %5514 = vmatprep.subr.mxu0 0.0
      %5515 = vmatpush1.msra.mxu0 0.0
      %5516 = vmatprep.subr.mxu0 0.0
      %5517 = vmatpush1.msra.mxu0 0.0
      %5518 = vmatprep.subr.mxu0 0.0
      %5519 = vmatpush1.msra.mxu0 0.0
      %5520 = vmatprep.subr.mxu0 0.0
      %5521 = vmatpush1.msra.mxu0 0.0
      %5522 = vmatprep.subr.mxu0 0.0
      %5523 = vmatpush1.msra.mxu0 0.0
      %5524 = vmatprep.subr.mxu0 0.0
      %5525 = vmatpush1.msra.mxu0 0.0
      %5526 = vmatprep.subr.mxu0 0.0
      %5527 = vmatpush1.msra.mxu0 0.0
      %5528 = vmatprep.subr.mxu0 0.0
      %5529 = vmatpush1.msra.mxu0 0.0
      %5530 = vmatprep.subr.mxu0 0.0
      %5531 = vmatpush1.msra.mxu0 0.0
      %5532 = vmatprep.subr.mxu0 0.0
      %5533 = vmatpush1.msra.mxu0 0.0
      %5534 = vmatprep.subr.mxu0 0.0
      %5535 = vmatpush1.msra.mxu0 0.0
      %5536 = vmatprep.subr.mxu0 0.0
      %5537 = vmatpush1.msra.mxu0 0.0
      %5538 = vmatprep.subr.mxu0 0.0
      %5539 = vmatpush1.msra.mxu0 0.0
      %5540 = vmatprep.subr.mxu0 0.0
      %5541 = vmatpush1.msra.mxu0 0.0
      %5542 = vmatprep.subr.mxu0 0.0
      %5543 = vmatpush1.msra.mxu0 0.0
      %5544 = vmatprep.subr.mxu0 0.0
      %5545 = vmatpush1.msra.mxu0 0.0
      %5546 = vmatprep.subr.mxu0 0.0
      %5547 = vmatpush1.msra.mxu0 0.0
      %5548 = vmatprep.subr.mxu0 0.0
      %5549 = vmatpush1.msra.mxu0 0.0
      %5550 = vmatprep.subr.mxu0 0.0
      %5551 = vmatpush1.msra.mxu0 0.0
      %5552 = vmatprep.subr.mxu0 0.0
      %5553 = vmatpush1.msra.mxu0 0.0
      %5554 = vmatprep.subr.mxu0 0.0
      %5555 = vmatpush1.msra.mxu0 0.0
      %5556 = vmatprep.subr.mxu0 0.0
      %5557 = vmatpush1.msra.mxu0 0.0
      %5558 = vmatprep.mubr.f32.mxu0 0.0
      %5559 = vmatmul.mubr.f32.gmra.mrb[0].mxu0 %v4006
      %v5560 = vpop.f32.mrb[0].mxu0
      %v5561 = vadd.f32 0.0, %v5560
      %v5562 = vpop.f32.mrb[0].mxu0
      %5563 = vmatprep.mubr.f32.mxu0 0.0
      %5564 = vmatmul.mubr.f32.gmra.mrb[0].mxu0 %v4009
      %v5565 = vpop.f32.mrb[0].mxu0
      %v5566 = vadd.f32 0.0, %v5565
      %v5567 = vpop.f32.mrb[0].mxu0
      %5568 = vmatprep.mubr.f32.mxu0 0.0
      %5569 = vmatmul.mubr.f32.gmra.mrb[0].mxu0 %v4018
      %v5570 = vpop.f32.mrb[0].mxu0
      %v5571 = vadd.f32 0.0, %v5570
      %v5572 = vpop.f32.mrb[0].mxu0
      %5573 = vmatprep.mubr.f32.mxu0 0.0
      %5574 = vmatmul.mubr.f32.gmra.mrb[0].mxu0 %v4021
      %v5575 = vpop.f32.mrb[0].mxu0
      %v5576 = vadd.f32 0.0, %v5575
      %v5577 = vpop.f32.mrb[0].mxu0
      %5578 = vmatprep.mubr.f32.mxu0 0.0
      %5579 = vmatmul.mubr.f32.gmra.mrb[0].mxu0 %v4024
      %v5580 = vpop.f32.mrb[0].mxu0
      %v5581 = vadd.f32 0.0, %v5580
      %v5582 = vpop.f32.mrb[0].mxu0
      %5583 = vmatprep.mubr.f32.mxu0 0.0
      %5584 = vmatmul.mubr.f32.gmra.mrb[0].mxu0 %v4027
      %v5585 = vpop.f32.mrb[0].mxu0
      %v5586 = vadd.f32 0.0, %v5585
      %v5587 = vpop.f32.mrb[0].mxu0
      %5588 = vmatprep.mubr.f32.mxu0 0.0
      %5589 = vmatmul.mubr.f32.gmra.mrb[0].mxu0 %v4030
      %v5590 = vpop.f32.mrb[0].mxu0
      %v5591 = vadd.f32 0.0, %v5590
      %v5592 = vpop.f32.mrb[0].mxu0
      %5593 = vmatprep.mubr.f32.mxu0 0.0
      %5594 = vmatmul.mubr.f32.gmra.mrb[0].mxu0 %v4033
      %v5595 = vpop.f32.mrb[0].mxu0
      %v5596 = vadd.f32 0.0, %v5595
      %v5597 = vpop.f32.mrb[0].mxu0
      %5598 = vmatprep.mubr.f32.mxu0 0.0
      %5599 = vmatmul.mubr.f32.gmra.mrb[0].mxu0 %v4036
      %v5600 = vpop.f32.mrb[0].mxu0
      %v5601 = vadd.f32 0.0, %v5600
      %v5602 = vpop.f32.mrb[0].mxu0
      %5603 = vmatprep.mubr.f32.mxu0 0.0
      %5604 = vmatmul.mubr.f32.gmra.mrb[0].mxu0 %v4039
      %v5605 = vpop.f32.mrb[0].mxu0
      %v5606 = vadd.f32 0.0, %v5605
      %v5607 = vpop.f32.mrb[0].mxu0
      %5608 = vmatprep.mubr.f32.mxu0 0.0
      %5609 = vmatmul.mubr.f32.gmra.mrb[0].mxu0 %v4042
      %v5610 = vpop.f32.mrb[0].mxu0
      %v5611 = vadd.f32 0.0, %v5610
      %v5612 = vpop.f32.mrb[0].mxu0
      %5613 = vmatprep.mubr.f32.mxu0 0.0
      %5614 = vmatmul.mubr.f32.gmra.mrb[0].mxu0 %v4045
      %v5615 = vpop.f32.mrb[0].mxu0
      %v5616 = vadd.f32 0.0, %v5615
      %v5617 = vpop.f32.mrb[0].mxu0
      %5618 = vmatprep.mubr.f32.mxu0 0.0
      %5619 = vmatmul.mubr.f32.gmra.mrb[0].mxu0 %v4048
      %v5620 = vpop.f32.mrb[0].mxu0
      %v5621 = vadd.f32 0.0, %v5620
      %v5622 = vpop.f32.mrb[0].mxu0
      %5623 = vmatprep.mubr.f32.mxu0 0.0
      %5624 = vmatmul.mubr.f32.gmra.mrb[0].mxu0 %v4051
      %v5625 = vpop.f32.mrb[0].mxu0
      %v5626 = vadd.f32 0.0, %v5625
      %v5627 = vpop.f32.mrb[0].mxu0
      %5628 = vmatprep.mubr.f32.mxu0 0.0
      %5629 = vmatmul.mubr.f32.gmra.mrb[0].mxu0 %v4054
      %v5630 = vpop.f32.mrb[0].mxu0
      %v5631 = vadd.f32 0.0, %v5630
      %v5632 = vpop.f32.mrb[0].mxu0
      %5633 = vmatprep.mubr.f32.mxu0 0.0
      %5634 = vmatmul.mubr.f32.gmra.mrb[0].mxu0 %v4057
      %v5635 = vpop.f32.mrb[0].mxu0
      %v5636 = vadd.f32 0.0, %v5635
      %v5637 = vpop.f32.mrb[0].mxu0
      %5638 = vmatprep.mubr.f32.mxu0 0.0
      %5639 = vmatmul.mubr.f32.gmra.mrb[0].mxu0 %v4060
      %v5640 = vpop.f32.mrb[0].mxu0
      %v5641 = vadd.f32 0.0, %v5640
      %v5642 = vpop.f32.mrb[0].mxu0
      %5643 = vmatprep.mubr.f32.mxu0 0.0
      %5644 = vmatmul.mubr.f32.gmra.mrb[0].mxu0 %v4063
      %v5645 = vpop.f32.mrb[0].mxu0
      %v5646 = vadd.f32 0.0, %v5645
      %v5647 = vpop.f32.mrb[0].mxu0
      %5648 = vmatprep.mubr.f32.mxu0 0.0
      %5649 = vmatmul.mubr.f32.gmra.mrb[0].mxu0 %v4066
      %v5650 = vpop.f32.mrb[0].mxu0
      %v5651 = vadd.f32 0.0, %v5650
      %v5652 = vpop.f32.mrb[0].mxu0
      %5653 = vmatprep.mubr.f32.mxu0 0.0
      %5654 = vmatmul.mubr.f32.gmra.mrb[0].mxu0 %v4069
      %v5655 = vpop.f32.mrb[0].mxu0
      %v5656 = vadd.f32 0.0, %v5655
      %v5657 = vpop.f32.mrb[0].mxu0
      %5658 = vmatprep.mubr.f32.mxu0 0.0
      %5659 = vmatmul.mubr.f32.gmra.mrb[0].mxu0 %v4072
      %v5660 = vpop.f32.mrb[0].mxu0
      %v5661 = vadd.f32 0.0, %v5660
      %v5662 = vpop.f32.mrb[0].mxu0
      %5663 = vmatprep.mubr.f32.mxu0 0.0
      %5664 = vmatmul.mubr.f32.gmra.mrb[0].mxu0 %v4075
      %v5665 = vpop.f32.mrb[0].mxu0
      %v5666 = vadd.f32 0.0, %v5665
      %v5667 = vpop.f32.mrb[0].mxu0
      %5668 = vmatprep.mubr.f32.mxu0 0.0
      %5669 = vmatmul.mubr.f32.gmra.mrb[0].mxu0 %v4078
      %v5670 = vpop.f32.mrb[0].mxu0
      %v5671 = vadd.f32 0.0, %v5670
      %v5672 = vpop.f32.mrb[0].mxu0
      %5673 = vmatprep.mubr.f32.mxu0 0.0
      %5674 = vmatmul.mubr.f32.gmra.mrb[0].mxu0 %v4081
      %v5675 = vpop.f32.mrb[0].mxu0
      %v5676 = vadd.f32 0.0, %v5675
      %v5677 = vpop.f32.mrb[0].mxu0
      %5678 = vmatprep.mubr.f32.mxu0 0.0
      %5679 = vmatmul.mubr.f32.gmra.mrb[0].mxu0 %v4084
      %v5680 = vpop.f32.mrb[0].mxu0
      %v5681 = vadd.f32 0.0, %v5680
      %v5682 = vpop.f32.mrb[0].mxu0
      %5683 = vmatprep.mubr.f32.mxu0 0.0
      %5684 = vmatmul.mubr.f32.gmra.mrb[0].mxu0 %v4087
      %v5685 = vpop.f32.mrb[0].mxu0
      %v5686 = vadd.f32 0.0, %v5685
      %v5687 = vpop.f32.mrb[0].mxu0
      %5688 = vmatprep.mubr.f32.mxu0 0.0
      %5689 = vmatmul.mubr.f32.gmra.mrb[0].mxu0 %v4090
      %v5690 = vpop.f32.mrb[0].mxu0
      %v5691 = vadd.f32 0.0, %v5690
      %v5692 = vpop.f32.mrb[0].mxu0
      %5693 = vmatprep.mubr.f32.mxu0 0.0
      %5694 = vmatmul.mubr.f32.gmra.mrb[0].mxu0 %v4093
      %v5695 = vpop.f32.mrb[0].mxu0
      %v5696 = vadd.f32 0.0, %v5695
      %v5697 = vpop.f32.mrb[0].mxu0
      %5698 = vmatprep.mubr.f32.mxu0 0.0
      %5699 = vmatmul.mubr.f32.gmra.mrb[0].mxu0 %v4694
      %v5700 = vpop.f32.mrb[0].mxu0
      %v5701 = vadd.f32 0.0, %v5700
      %v5702 = vpop.f32.mrb[0].mxu0
      %5703 = vmatprep.mubr.f32.mxu0 0.0
      %5704 = vmatmul.mubr.f32.gmra.mrb[0].mxu0 %v4697
      %v5705 = vpop.f32.mrb[0].mxu0
      %v5706 = vadd.f32 0.0, %v5705
      %v5707 = vpop.f32.mrb[0].mxu0
      %5708 = vmatprep.mubr.f32.mxu0 0.0
      %5709 = vmatmul.mubr.f32.gmra.mrb[0].mxu0 %v4090
      %v5710 = vpop.f32.mrb[0].mxu0
      %v5711 = vadd.f32 0.0, %v5710
      %v5712 = vpop.f32.mrb[0].mxu0
      %5713 = vmatprep.mubr.f32.mxu0 0.0
      %5714 = vmatmul.mubr.f32.gmra.mrb[0].mxu0 %v4093
      %v5715 = vpop.f32.mrb[0].mxu0
      %v5716 = vadd.f32 0.0, %v5715
      %v5717 = vpop.f32.mrb[0].mxu0
      %5718 = vdwg.mxu0
      %v5719 = vadd.f32 %v5459, %v5561
      %v5720 = vadd.f32 %v5460, %v5566
      %v5721 = vadd.f32 %v5461, %v5571
      %v5722 = vadd.f32 %v5462, %v5576
      %v5723 = vadd.f32 %v5463, %v5581
      %v5724 = vadd.f32 %v5464, %v5586
      %v5725 = vadd.f32 %v5465, %v5591
      %v5726 = vadd.f32 %v5466, %v5596
      %v5727 = vadd.f32 %v5467, %v5601
      %v5728 = vadd.f32 %v5468, %v5606
      %v5729 = vadd.f32 %v5469, %v5611
      %v5730 = vadd.f32 %v5470, %v5616
      %v5731 = vadd.f32 %v5471, %v5621
      %v5732 = vadd.f32 %v5472, %v5626
      %v5733 = vadd.f32 %v5473, %v5631
      %v5734 = vadd.f32 %v5474, %v5636
      %v5735 = vadd.f32 %v5475, %v5641
      %v5736 = vadd.f32 %v5476, %v5646
      %v5737 = vadd.f32 %v5477, %v5651
      %v5738 = vadd.f32 %v5478, %v5656
      %v5739 = vadd.f32 %v5479, %v5661
      %v5740 = vadd.f32 %v5480, %v5666
      %v5741 = vadd.f32 %v5481, %v5671
      %v5742 = vadd.f32 %v5482, %v5676
      %v5743 = vadd.f32 %v5483, %v5681
      %v5744 = vadd.f32 %v5484, %v5686
      %v5745 = vadd.f32 %v5485, %v5691
      %v5746 = vadd.f32 %v5486, %v5696
      %v5747 = vadd.f32 %v5487, %v5701
      %v5748 = vadd.f32 %v5488, %v5706
      %v5749 = vadd.f32 %v5489, %v5711
      %v5750 = vadd.f32 %v5490, %v5716
      %v5752 = vsel %vm621, %v219, 0
      %5754 = vmatprep.subr.mxu0 0.0
      %5755 = vmatpush1.msra.mxu0 %v5752
      %5756 = vmatprep.subr.mxu0 0.0
      %5757 = vmatpush1.msra.mxu0 0.0
      %5758 = vmatprep.subr.mxu0 0.0
      %5759 = vmatpush1.msra.mxu0 0.0
      %5760 = vmatprep.subr.mxu0 0.0
      %5761 = vmatpush1.msra.mxu0 0.0
      %5762 = vmatprep.subr.mxu0 0.0
      %5763 = vmatpush1.msra.mxu0 0.0
      %5764 = vmatprep.subr.mxu0 0.0
      %5765 = vmatpush1.msra.mxu0 0.0
      %5766 = vmatprep.subr.mxu0 0.0
      %5767 = vmatpush1.msra.mxu0 0.0
      %5768 = vmatprep.subr.mxu0 0.0
      %5769 = vmatpush1.msra.mxu0 0.0
      %5770 = vmatprep.subr.mxu0 0.0
      %5771 = vmatpush1.msra.mxu0 0.0
      %5772 = vmatprep.subr.mxu0 0.0
      %5773 = vmatpush1.msra.mxu0 0.0
      %5774 = vmatprep.subr.mxu0 0.0
      %5775 = vmatpush1.msra.mxu0 0.0
      %5776 = vmatprep.subr.mxu0 0.0
      %5777 = vmatpush1.msra.mxu0 0.0
      %5778 = vmatprep.subr.mxu0 0.0
      %5779 = vmatpush1.msra.mxu0 0.0
      %5780 = vmatprep.subr.mxu0 0.0
      %5781 = vmatpush1.msra.mxu0 0.0
      %5782 = vmatprep.subr.mxu0 0.0
      %5783 = vmatpush1.msra.mxu0 0.0
      %5784 = vmatprep.subr.mxu0 0.0
      %5785 = vmatpush1.msra.mxu0 0.0
      %5786 = vmatprep.subr.mxu0 0.0
      %5787 = vmatpush1.msra.mxu0 0.0
      %5788 = vmatprep.subr.mxu0 0.0
      %5789 = vmatpush1.msra.mxu0 0.0
      %5790 = vmatprep.subr.mxu0 0.0
      %5791 = vmatpush1.msra.mxu0 0.0
      %5792 = vmatprep.subr.mxu0 0.0
      %5793 = vmatpush1.msra.mxu0 0.0
      %5794 = vmatprep.subr.mxu0 0.0
      %5795 = vmatpush1.msra.mxu0 0.0
      %5796 = vmatprep.subr.mxu0 0.0
      %5797 = vmatpush1.msra.mxu0 0.0
      %5798 = vmatprep.subr.mxu0 0.0
      %5799 = vmatpush1.msra.mxu0 0.0
      %5800 = vmatprep.subr.mxu0 0.0
      %5801 = vmatpush1.msra.mxu0 0.0
      %5802 = vmatprep.subr.mxu0 0.0
      %5803 = vmatpush1.msra.mxu0 0.0
      %5804 = vmatprep.subr.mxu0 0.0
      %5805 = vmatpush1.msra.mxu0 0.0
      %5806 = vmatprep.subr.mxu0 0.0
      %5807 = vmatpush1.msra.mxu0 0.0
      %5808 = vmatprep.subr.mxu0 0.0
      %5809 = vmatpush1.msra.mxu0 0.0
      %5810 = vmatprep.subr.mxu0 0.0
      %5811 = vmatpush1.msra.mxu0 0.0
      %5812 = vmatprep.subr.mxu0 0.0
      %5813 = vmatpush1.msra.mxu0 0.0
      %5814 = vmatprep.subr.mxu0 0.0
      %5815 = vmatpush1.msra.mxu0 0.0
      %5816 = vmatprep.subr.mxu0 0.0
      %5817 = vmatpush1.msra.mxu0 0.0
      %5818 = vmatprep.mubr.f32.mxu0 0.0
      %5819 = vmatmul.mubr.f32.gmra.mrb[0].mxu0 %v3688
      %v5820 = vpop.f32.mrb[0].mxu0
      %v5821 = vadd.f32 0.0, %v5820
      %v5822 = vpop.f32.mrb[0].mxu0
      %5823 = vmatprep.mubr.f32.mxu0 0.0
      %5824 = vmatmul.mubr.f32.gmra.mrb[0].mxu0 %v3691
      %v5825 = vpop.f32.mrb[0].mxu0
      %v5826 = vadd.f32 0.0, %v5825
      %v5827 = vpop.f32.mrb[0].mxu0
      %5828 = vmatprep.mubr.f32.mxu0 0.0
      %5829 = vmatmul.mubr.f32.gmra.mrb[0].mxu0 %v3700
      %v5830 = vpop.f32.mrb[0].mxu0
      %v5831 = vadd.f32 0.0, %v5830
      %v5832 = vpop.f32.mrb[0].mxu0
      %5833 = vmatprep.mubr.f32.mxu0 0.0
      %5834 = vmatmul.mubr.f32.gmra.mrb[0].mxu0 %v3703
      %v5835 = vpop.f32.mrb[0].mxu0
      %v5836 = vadd.f32 0.0, %v5835
      %v5837 = vpop.f32.mrb[0].mxu0
      %5838 = vmatprep.mubr.f32.mxu0 0.0
      %5839 = vmatmul.mubr.f32.gmra.mrb[0].mxu0 %v3706
      %v5840 = vpop.f32.mrb[0].mxu0
      %v5841 = vadd.f32 0.0, %v5840
      %v5842 = vpop.f32.mrb[0].mxu0
      %5843 = vmatprep.mubr.f32.mxu0 0.0
      %5844 = vmatmul.mubr.f32.gmra.mrb[0].mxu0 %v3709
      %v5845 = vpop.f32.mrb[0].mxu0
      %v5846 = vadd.f32 0.0, %v5845
      %v5847 = vpop.f32.mrb[0].mxu0
      %5848 = vmatprep.mubr.f32.mxu0 0.0
      %5849 = vmatmul.mubr.f32.gmra.mrb[0].mxu0 %v3712
      %v5850 = vpop.f32.mrb[0].mxu0
      %v5851 = vadd.f32 0.0, %v5850
      %v5852 = vpop.f32.mrb[0].mxu0
      %5853 = vmatprep.mubr.f32.mxu0 0.0
      %5854 = vmatmul.mubr.f32.gmra.mrb[0].mxu0 %v3715
      %v5855 = vpop.f32.mrb[0].mxu0
      %v5856 = vadd.f32 0.0, %v5855
      %v5857 = vpop.f32.mrb[0].mxu0
      %5858 = vmatprep.mubr.f32.mxu0 0.0
      %5859 = vmatmul.mubr.f32.gmra.mrb[0].mxu0 %v3718
      %v5860 = vpop.f32.mrb[0].mxu0
      %v5861 = vadd.f32 0.0, %v5860
      %v5862 = vpop.f32.mrb[0].mxu0
      %5863 = vmatprep.mubr.f32.mxu0 0.0
      %5864 = vmatmul.mubr.f32.gmra.mrb[0].mxu0 %v3721
      %v5865 = vpop.f32.mrb[0].mxu0
      %v5866 = vadd.f32 0.0, %v5865
      %v5867 = vpop.f32.mrb[0].mxu0
      %5868 = vmatprep.mubr.f32.mxu0 0.0
      %5869 = vmatmul.mubr.f32.gmra.mrb[0].mxu0 %v3724
      %v5870 = vpop.f32.mrb[0].mxu0
      %v5871 = vadd.f32 0.0, %v5870
      %v5872 = vpop.f32.mrb[0].mxu0
      %5873 = vmatprep.mubr.f32.mxu0 0.0
      %5874 = vmatmul.mubr.f32.gmra.mrb[0].mxu0 %v3727
      %v5875 = vpop.f32.mrb[0].mxu0
      %v5876 = vadd.f32 0.0, %v5875
      %v5877 = vpop.f32.mrb[0].mxu0
      %5878 = vmatprep.mubr.f32.mxu0 0.0
      %5879 = vmatmul.mubr.f32.gmra.mrb[0].mxu0 %v3730
      %v5880 = vpop.f32.mrb[0].mxu0
      %v5881 = vadd.f32 0.0, %v5880
      %v5882 = vpop.f32.mrb[0].mxu0
      %5883 = vmatprep.mubr.f32.mxu0 0.0
      %5884 = vmatmul.mubr.f32.gmra.mrb[0].mxu0 %v3733
      %v5885 = vpop.f32.mrb[0].mxu0
      %v5886 = vadd.f32 0.0, %v5885
      %v5887 = vpop.f32.mrb[0].mxu0
      %5888 = vmatprep.mubr.f32.mxu0 0.0
      %5889 = vmatmul.mubr.f32.gmra.mrb[0].mxu0 %v3736
      %v5890 = vpop.f32.mrb[0].mxu0
      %v5891 = vadd.f32 0.0, %v5890
      %v5892 = vpop.f32.mrb[0].mxu0
      %5893 = vmatprep.mubr.f32.mxu0 0.0
      %5894 = vmatmul.mubr.f32.gmra.mrb[0].mxu0 %v3739
      %v5895 = vpop.f32.mrb[0].mxu0
      %v5896 = vadd.f32 0.0, %v5895
      %v5897 = vpop.f32.mrb[0].mxu0
      %5898 = vmatprep.mubr.f32.mxu0 0.0
      %5899 = vmatmul.mubr.f32.gmra.mrb[0].mxu0 %v3742
      %v5900 = vpop.f32.mrb[0].mxu0
      %v5901 = vadd.f32 0.0, %v5900
      %v5902 = vpop.f32.mrb[0].mxu0
      %5903 = vmatprep.mubr.f32.mxu0 0.0
      %5904 = vmatmul.mubr.f32.gmra.mrb[0].mxu0 %v3745
      %v5905 = vpop.f32.mrb[0].mxu0
      %v5906 = vadd.f32 0.0, %v5905
      %v5907 = vpop.f32.mrb[0].mxu0
      %5908 = vmatprep.mubr.f32.mxu0 0.0
      %5909 = vmatmul.mubr.f32.gmra.mrb[0].mxu0 %v3748
      %v5910 = vpop.f32.mrb[0].mxu0
      %v5911 = vadd.f32 0.0, %v5910
      %v5912 = vpop.f32.mrb[0].mxu0
      %5913 = vmatprep.mubr.f32.mxu0 0.0
      %5914 = vmatmul.mubr.f32.gmra.mrb[0].mxu0 %v3751
      %v5915 = vpop.f32.mrb[0].mxu0
      %v5916 = vadd.f32 0.0, %v5915
      %v5917 = vpop.f32.mrb[0].mxu0
      %5918 = vmatprep.mubr.f32.mxu0 0.0
      %5919 = vmatmul.mubr.f32.gmra.mrb[0].mxu0 %v3754
      %v5920 = vpop.f32.mrb[0].mxu0
      %v5921 = vadd.f32 0.0, %v5920
      %v5922 = vpop.f32.mrb[0].mxu0
      %5923 = vmatprep.mubr.f32.mxu0 0.0
      %5924 = vmatmul.mubr.f32.gmra.mrb[0].mxu0 %v3757
      %v5925 = vpop.f32.mrb[0].mxu0
      %v5926 = vadd.f32 0.0, %v5925
      %v5927 = vpop.f32.mrb[0].mxu0
      %5928 = vmatprep.mubr.f32.mxu0 0.0
      %5929 = vmatmul.mubr.f32.gmra.mrb[0].mxu0 %v3760
      %v5930 = vpop.f32.mrb[0].mxu0
      %v5931 = vadd.f32 0.0, %v5930
      %v5932 = vpop.f32.mrb[0].mxu0
      %5933 = vmatprep.mubr.f32.mxu0 0.0
      %5934 = vmatmul.mubr.f32.gmra.mrb[0].mxu0 %v3763
      %v5935 = vpop.f32.mrb[0].mxu0
      %v5936 = vadd.f32 0.0, %v5935
      %v5937 = vpop.f32.mrb[0].mxu0
      %5938 = vmatprep.mubr.f32.mxu0 0.0
      %5939 = vmatmul.mubr.f32.gmra.mrb[0].mxu0 %v3766
      %v5940 = vpop.f32.mrb[0].mxu0
      %v5941 = vadd.f32 0.0, %v5940
      %v5942 = vpop.f32.mrb[0].mxu0
      %5943 = vmatprep.mubr.f32.mxu0 0.0
      %5944 = vmatmul.mubr.f32.gmra.mrb[0].mxu0 %v3769
      %v5945 = vpop.f32.mrb[0].mxu0
      %v5946 = vadd.f32 0.0, %v5945
      %v5947 = vpop.f32.mrb[0].mxu0
      %5948 = vmatprep.mubr.f32.mxu0 0.0
      %5949 = vmatmul.mubr.f32.gmra.mrb[0].mxu0 %v3772
      %v5950 = vpop.f32.mrb[0].mxu0
      %v5951 = vadd.f32 0.0, %v5950
      %v5952 = vpop.f32.mrb[0].mxu0
      %5953 = vmatprep.mubr.f32.mxu0 0.0
      %5954 = vmatmul.mubr.f32.gmra.mrb[0].mxu0 %v3775
      %v5955 = vpop.f32.mrb[0].mxu0
      %v5956 = vadd.f32 0.0, %v5955
      %v5957 = vpop.f32.mrb[0].mxu0
      %5958 = vmatprep.mubr.f32.mxu0 0.0
      %5959 = vmatmul.mubr.f32.gmra.mrb[0].mxu0 %v4960
      %v5960 = vpop.f32.mrb[0].mxu0
      %v5961 = vadd.f32 0.0, %v5960
      %v5962 = vpop.f32.mrb[0].mxu0
      %5963 = vmatprep.mubr.f32.mxu0 0.0
      %5964 = vmatmul.mubr.f32.gmra.mrb[0].mxu0 %v4963
      %v5965 = vpop.f32.mrb[0].mxu0
      %v5966 = vadd.f32 0.0, %v5965
      %v5967 = vpop.f32.mrb[0].mxu0
      %5968 = vmatprep.mubr.f32.mxu0 0.0
      %5969 = vmatmul.mubr.f32.gmra.mrb[0].mxu0 %v3772
      %v5970 = vpop.f32.mrb[0].mxu0
      %v5971 = vadd.f32 0.0, %v5970
      %v5972 = vpop.f32.mrb[0].mxu0
      %5973 = vmatprep.mubr.f32.mxu0 0.0
      %5974 = vmatmul.mubr.f32.gmra.mrb[0].mxu0 %v3775
      %v5975 = vpop.f32.mrb[0].mxu0
      %v5976 = vadd.f32 0.0, %v5975
      %v5977 = vpop.f32.mrb[0].mxu0
      %5978 = vdwg.mxu0
      %v5979 = vadd.f32 %v5719, %v5821
      %v5980 = vadd.f32 %v5720, %v5826
      %v5981 = vadd.f32 %v5721, %v5831
      %v5982 = vadd.f32 %v5722, %v5836
      %v5983 = vadd.f32 %v5723, %v5841
      %v5984 = vadd.f32 %v5724, %v5846
      %v5985 = vadd.f32 %v5725, %v5851
      %v5986 = vadd.f32 %v5726, %v5856
      %v5987 = vadd.f32 %v5727, %v5861
      %v5988 = vadd.f32 %v5728, %v5866
      %v5989 = vadd.f32 %v5729, %v5871
      %v5990 = vadd.f32 %v5730, %v5876
      %v5991 = vadd.f32 %v5731, %v5881
      %v5992 = vadd.f32 %v5732, %v5886
      %v5993 = vadd.f32 %v5733, %v5891
      %v5994 = vadd.f32 %v5734, %v5896
      %v5995 = vadd.f32 %v5735, %v5901
      %v5996 = vadd.f32 %v5736, %v5906
      %v5997 = vadd.f32 %v5737, %v5911
      %v5998 = vadd.f32 %v5738, %v5916
      %v5999 = vadd.f32 %v5739, %v5921
      %v6000 = vadd.f32 %v5740, %v5926
      %v6001 = vadd.f32 %v5741, %v5931
      %v6002 = vadd.f32 %v5742, %v5936
      %v6003 = vadd.f32 %v5743, %v5941
      %v6004 = vadd.f32 %v5744, %v5946
      %v6005 = vadd.f32 %v5745, %v5951
      %v6006 = vadd.f32 %v5746, %v5956
      %v6007 = vadd.f32 %v5747, %v5961
      %v6008 = vadd.f32 %v5748, %v5966
      %v6009 = vadd.f32 %v5749, %v5971
      %v6010 = vadd.f32 %v5750, %v5976
      %v6012 = vsel %vm621, %v220, 0
      %6014 = vmatprep.subr.mxu0 0.0
      %6015 = vmatpush1.msra.mxu0 %v6012
      %6016 = vmatprep.subr.mxu0 0.0
      %6017 = vmatpush1.msra.mxu0 0.0
      %6018 = vmatprep.subr.mxu0 0.0
      %6019 = vmatpush1.msra.mxu0 0.0
      %6020 = vmatprep.subr.mxu0 0.0
      %6021 = vmatpush1.msra.mxu0 0.0
      %6022 = vmatprep.subr.mxu0 0.0
      %6023 = vmatpush1.msra.mxu0 0.0
      %6024 = vmatprep.subr.mxu0 0.0
      %6025 = vmatpush1.msra.mxu0 0.0
      %6026 = vmatprep.subr.mxu0 0.0
      %6027 = vmatpush1.msra.mxu0 0.0
      %6028 = vmatprep.subr.mxu0 0.0
      %6029 = vmatpush1.msra.mxu0 0.0
      %6030 = vmatprep.subr.mxu0 0.0
      %6031 = vmatpush1.msra.mxu0 0.0
      %6032 = vmatprep.subr.mxu0 0.0
      %6033 = vmatpush1.msra.mxu0 0.0
      %6034 = vmatprep.subr.mxu0 0.0
      %6035 = vmatpush1.msra.mxu0 0.0
      %6036 = vmatprep.subr.mxu0 0.0
      %6037 = vmatpush1.msra.mxu0 0.0
      %6038 = vmatprep.subr.mxu0 0.0
      %6039 = vmatpush1.msra.mxu0 0.0
      %6040 = vmatprep.subr.mxu0 0.0
      %6041 = vmatpush1.msra.mxu0 0.0
      %6042 = vmatprep.subr.mxu0 0.0
      %6043 = vmatpush1.msra.mxu0 0.0
      %6044 = vmatprep.subr.mxu0 0.0
      %6045 = vmatpush1.msra.mxu0 0.0
      %6046 = vmatprep.subr.mxu0 0.0
      %6047 = vmatpush1.msra.mxu0 0.0
      %6048 = vmatprep.subr.mxu0 0.0
      %6049 = vmatpush1.msra.mxu0 0.0
      %6050 = vmatprep.subr.mxu0 0.0
      %6051 = vmatpush1.msra.mxu0 0.0
      %6052 = vmatprep.subr.mxu0 0.0
      %6053 = vmatpush1.msra.mxu0 0.0
      %6054 = vmatprep.subr.mxu0 0.0
      %6055 = vmatpush1.msra.mxu0 0.0
      %6056 = vmatprep.subr.mxu0 0.0
      %6057 = vmatpush1.msra.mxu0 0.0
      %6058 = vmatprep.subr.mxu0 0.0
      %6059 = vmatpush1.msra.mxu0 0.0
      %6060 = vmatprep.subr.mxu0 0.0
      %6061 = vmatpush1.msra.mxu0 0.0
      %6062 = vmatprep.subr.mxu0 0.0
      %6063 = vmatpush1.msra.mxu0 0.0
      %6064 = vmatprep.subr.mxu0 0.0
      %6065 = vmatpush1.msra.mxu0 0.0
      %6066 = vmatprep.subr.mxu0 0.0
      %6067 = vmatpush1.msra.mxu0 0.0
      %6068 = vmatprep.subr.mxu0 0.0
      %6069 = vmatpush1.msra.mxu0 0.0
      %6070 = vmatprep.subr.mxu0 0.0
      %6071 = vmatpush1.msra.mxu0 0.0
      %6072 = vmatprep.subr.mxu0 0.0
      %6073 = vmatpush1.msra.mxu0 0.0
      %6074 = vmatprep.subr.mxu0 0.0
      %6075 = vmatpush1.msra.mxu0 0.0
      %6076 = vmatprep.subr.mxu0 0.0
      %6077 = vmatpush1.msra.mxu0 0.0
      %6078 = vmatprep.mubr.f32.mxu0 0.0
      %6079 = vmatmul.mubr.f32.gmra.mrb[0].mxu0 %v4324
      %v6080 = vpop.f32.mrb[0].mxu0
      %v6081 = vadd.f32 0.0, %v6080
      %v6082 = vpop.f32.mrb[0].mxu0
      %6083 = vmatprep.mubr.f32.mxu0 0.0
      %6084 = vmatmul.mubr.f32.gmra.mrb[0].mxu0 %v4327
      %v6085 = vpop.f32.mrb[0].mxu0
      %v6086 = vadd.f32 0.0, %v6085
      %v6087 = vpop.f32.mrb[0].mxu0
      %6088 = vmatprep.mubr.f32.mxu0 0.0
      %6089 = vmatmul.mubr.f32.gmra.mrb[0].mxu0 %v4336
      %v6090 = vpop.f32.mrb[0].mxu0
      %v6091 = vadd.f32 0.0, %v6090
      %v6092 = vpop.f32.mrb[0].mxu0
      %6093 = vmatprep.mubr.f32.mxu0 0.0
      %6094 = vmatmul.mubr.f32.gmra.mrb[0].mxu0 %v4339
      %v6095 = vpop.f32.mrb[0].mxu0
      %v6096 = vadd.f32 0.0, %v6095
      %v6097 = vpop.f32.mrb[0].mxu0
      %6098 = vmatprep.mubr.f32.mxu0 0.0
      %6099 = vmatmul.mubr.f32.gmra.mrb[0].mxu0 %v4342
      %v6100 = vpop.f32.mrb[0].mxu0
      %v6101 = vadd.f32 0.0, %v6100
      %v6102 = vpop.f32.mrb[0].mxu0
      %6103 = vmatprep.mubr.f32.mxu0 0.0
      %6104 = vmatmul.mubr.f32.gmra.mrb[0].mxu0 %v4345
      %v6105 = vpop.f32.mrb[0].mxu0
      %v6106 = vadd.f32 0.0, %v6105
      %v6107 = vpop.f32.mrb[0].mxu0
      %6108 = vmatprep.mubr.f32.mxu0 0.0
      %6109 = vmatmul.mubr.f32.gmra.mrb[0].mxu0 %v4348
      %v6110 = vpop.f32.mrb[0].mxu0
      %v6111 = vadd.f32 0.0, %v6110
      %v6112 = vpop.f32.mrb[0].mxu0
      %6113 = vmatprep.mubr.f32.mxu0 0.0
      %6114 = vmatmul.mubr.f32.gmra.mrb[0].mxu0 %v4351
      %v6115 = vpop.f32.mrb[0].mxu0
      %v6116 = vadd.f32 0.0, %v6115
      %v6117 = vpop.f32.mrb[0].mxu0
      %6118 = vmatprep.mubr.f32.mxu0 0.0
      %6119 = vmatmul.mubr.f32.gmra.mrb[0].mxu0 %v4354
      %v6120 = vpop.f32.mrb[0].mxu0
      %v6121 = vadd.f32 0.0, %v6120
      %v6122 = vpop.f32.mrb[0].mxu0
      %6123 = vmatprep.mubr.f32.mxu0 0.0
      %6124 = vmatmul.mubr.f32.gmra.mrb[0].mxu0 %v4357
      %v6125 = vpop.f32.mrb[0].mxu0
      %v6126 = vadd.f32 0.0, %v6125
      %v6127 = vpop.f32.mrb[0].mxu0
      %6128 = vmatprep.mubr.f32.mxu0 0.0
      %6129 = vmatmul.mubr.f32.gmra.mrb[0].mxu0 %v4360
      %v6130 = vpop.f32.mrb[0].mxu0
      %v6131 = vadd.f32 0.0, %v6130
      %v6132 = vpop.f32.mrb[0].mxu0
      %6133 = vmatprep.mubr.f32.mxu0 0.0
      %6134 = vmatmul.mubr.f32.gmra.mrb[0].mxu0 %v4363
      %v6135 = vpop.f32.mrb[0].mxu0
      %v6136 = vadd.f32 0.0, %v6135
      %v6137 = vpop.f32.mrb[0].mxu0
      %6138 = vmatprep.mubr.f32.mxu0 0.0
      %6139 = vmatmul.mubr.f32.gmra.mrb[0].mxu0 %v4366
      %v6140 = vpop.f32.mrb[0].mxu0
      %v6141 = vadd.f32 0.0, %v6140
      %v6142 = vpop.f32.mrb[0].mxu0
      %6143 = vmatprep.mubr.f32.mxu0 0.0
      %6144 = vmatmul.mubr.f32.gmra.mrb[0].mxu0 %v4369
      %v6145 = vpop.f32.mrb[0].mxu0
      %v6146 = vadd.f32 0.0, %v6145
      %v6147 = vpop.f32.mrb[0].mxu0
      %6148 = vmatprep.mubr.f32.mxu0 0.0
      %6149 = vmatmul.mubr.f32.gmra.mrb[0].mxu0 %v4372
      %v6150 = vpop.f32.mrb[0].mxu0
      %v6151 = vadd.f32 0.0, %v6150
      %v6152 = vpop.f32.mrb[0].mxu0
      %6153 = vmatprep.mubr.f32.mxu0 0.0
      %6154 = vmatmul.mubr.f32.gmra.mrb[0].mxu0 %v4375
      %v6155 = vpop.f32.mrb[0].mxu0
      %v6156 = vadd.f32 0.0, %v6155
      %v6157 = vpop.f32.mrb[0].mxu0
      %6158 = vmatprep.mubr.f32.mxu0 0.0
      %6159 = vmatmul.mubr.f32.gmra.mrb[0].mxu0 %v4378
      %v6160 = vpop.f32.mrb[0].mxu0
      %v6161 = vadd.f32 0.0, %v6160
      %v6162 = vpop.f32.mrb[0].mxu0
      %6163 = vmatprep.mubr.f32.mxu0 0.0
      %6164 = vmatmul.mubr.f32.gmra.mrb[0].mxu0 %v4381
      %v6165 = vpop.f32.mrb[0].mxu0
      %v6166 = vadd.f32 0.0, %v6165
      %v6167 = vpop.f32.mrb[0].mxu0
      %6168 = vmatprep.mubr.f32.mxu0 0.0
      %6169 = vmatmul.mubr.f32.gmra.mrb[0].mxu0 %v4384
      %v6170 = vpop.f32.mrb[0].mxu0
      %v6171 = vadd.f32 0.0, %v6170
      %v6172 = vpop.f32.mrb[0].mxu0
      %6173 = vmatprep.mubr.f32.mxu0 0.0
      %6174 = vmatmul.mubr.f32.gmra.mrb[0].mxu0 %v4387
      %v6175 = vpop.f32.mrb[0].mxu0
      %v6176 = vadd.f32 0.0, %v6175
      %v6177 = vpop.f32.mrb[0].mxu0
      %6178 = vmatprep.mubr.f32.mxu0 0.0
      %6179 = vmatmul.mubr.f32.gmra.mrb[0].mxu0 %v4390
      %v6180 = vpop.f32.mrb[0].mxu0
      %v6181 = vadd.f32 0.0, %v6180
      %v6182 = vpop.f32.mrb[0].mxu0
      %6183 = vmatprep.mubr.f32.mxu0 0.0
      %6184 = vmatmul.mubr.f32.gmra.mrb[0].mxu0 %v4393
      %v6185 = vpop.f32.mrb[0].mxu0
      %v6186 = vadd.f32 0.0, %v6185
      %v6187 = vpop.f32.mrb[0].mxu0
      %6188 = vmatprep.mubr.f32.mxu0 0.0
      %6189 = vmatmul.mubr.f32.gmra.mrb[0].mxu0 %v4396
      %v6190 = vpop.f32.mrb[0].mxu0
      %v6191 = vadd.f32 0.0, %v6190
      %v6192 = vpop.f32.mrb[0].mxu0
      %6193 = vmatprep.mubr.f32.mxu0 0.0
      %6194 = vmatmul.mubr.f32.gmra.mrb[0].mxu0 %v4399
      %v6195 = vpop.f32.mrb[0].mxu0
      %v6196 = vadd.f32 0.0, %v6195
      %v6197 = vpop.f32.mrb[0].mxu0
      %6198 = vmatprep.mubr.f32.mxu0 0.0
      %6199 = vmatmul.mubr.f32.gmra.mrb[0].mxu0 %v4402
      %v6200 = vpop.f32.mrb[0].mxu0
      %v6201 = vadd.f32 0.0, %v6200
      %v6202 = vpop.f32.mrb[0].mxu0
      %6203 = vmatprep.mubr.f32.mxu0 0.0
      %6204 = vmatmul.mubr.f32.gmra.mrb[0].mxu0 %v4405
      %v6205 = vpop.f32.mrb[0].mxu0
      %v6206 = vadd.f32 0.0, %v6205
      %v6207 = vpop.f32.mrb[0].mxu0
      %6208 = vmatprep.mubr.f32.mxu0 0.0
      %6209 = vmatmul.mubr.f32.gmra.mrb[0].mxu0 %v4408
      %v6210 = vpop.f32.mrb[0].mxu0
      %v6211 = vadd.f32 0.0, %v6210
      %v6212 = vpop.f32.mrb[0].mxu0
      %6213 = vmatprep.mubr.f32.mxu0 0.0
      %6214 = vmatmul.mubr.f32.gmra.mrb[0].mxu0 %v4411
      %v6215 = vpop.f32.mrb[0].mxu0
      %v6216 = vadd.f32 0.0, %v6215
      %v6217 = vpop.f32.mrb[0].mxu0
      %6218 = vmatprep.mubr.f32.mxu0 0.0
      %6219 = vmatmul.mubr.f32.gmra.mrb[0].mxu0 %v5226
      %v6220 = vpop.f32.mrb[0].mxu0
      %v6221 = vadd.f32 0.0, %v6220
      %v6222 = vpop.f32.mrb[0].mxu0
      %6223 = vmatprep.mubr.f32.mxu0 0.0
      %6224 = vmatmul.mubr.f32.gmra.mrb[0].mxu0 %v5229
      %v6225 = vpop.f32.mrb[0].mxu0
      %v6226 = vadd.f32 0.0, %v6225
      %v6227 = vpop.f32.mrb[0].mxu0
      %6228 = vmatprep.mubr.f32.mxu0 0.0
      %6229 = vmatmul.mubr.f32.gmra.mrb[0].mxu0 %v4408
      %v6230 = vpop.f32.mrb[0].mxu0
      %v6231 = vadd.f32 0.0, %v6230
      %v6232 = vpop.f32.mrb[0].mxu0
      %6233 = vmatprep.mubr.f32.mxu0 0.0
      %6234 = vmatmul.mubr.f32.gmra.mrb[0].mxu0 %v4411
      %v6235 = vpop.f32.mrb[0].mxu0
      %v6236 = vadd.f32 0.0, %v6235
      %v6237 = vpop.f32.mrb[0].mxu0
      %6238 = vdwg.mxu0
      %v6239 = vadd.f32 %v5979, %v6081
      %v6240 = vadd.f32 %v5980, %v6086
      %v6241 = vadd.f32 %v5981, %v6091
      %v6242 = vadd.f32 %v5982, %v6096
      %v6243 = vadd.f32 %v5983, %v6101
      %v6244 = vadd.f32 %v5984, %v6106
      %v6245 = vadd.f32 %v5985, %v6111
      %v6246 = vadd.f32 %v5986, %v6116
      %v6247 = vadd.f32 %v5987, %v6121
      %v6248 = vadd.f32 %v5988, %v6126
      %v6249 = vadd.f32 %v5989, %v6131
      %v6250 = vadd.f32 %v5990, %v6136
      %v6251 = vadd.f32 %v5991, %v6141
      %v6252 = vadd.f32 %v5992, %v6146
      %v6253 = vadd.f32 %v5993, %v6151
      %v6254 = vadd.f32 %v5994, %v6156
      %v6255 = vadd.f32 %v5995, %v6161
      %v6256 = vadd.f32 %v5996, %v6166
      %v6257 = vadd.f32 %v5997, %v6171
      %v6258 = vadd.f32 %v5998, %v6176
      %v6259 = vadd.f32 %v5999, %v6181
      %v6260 = vadd.f32 %v6000, %v6186
      %v6261 = vadd.f32 %v6001, %v6191
      %v6262 = vadd.f32 %v6002, %v6196
      %v6263 = vadd.f32 %v6003, %v6201
      %v6264 = vadd.f32 %v6004, %v6206
      %v6265 = vadd.f32 %v6005, %v6211
      %v6266 = vadd.f32 %v6006, %v6216
      %v6267 = vadd.f32 %v6007, %v6221
      %v6268 = vadd.f32 %v6008, %v6226
      %v6269 = vadd.f32 %v6009, %v6231
      %v6270 = vadd.f32 %v6010, %v6236
      %v6271 = vsel %vm530, %v6239, 0.0
      %v6272 = vsel %vm530, %v6240, 0.0
      %v6273 = vadd.f32 %v6271, %v6272
      %v6274 = vsel %vm530, %v6241, 0.0
      %v6275 = vadd.f32 %v6273, %v6274
      %v6276 = vsel %vm530, %v6242, 0.0
      %v6277 = vadd.f32 %v6275, %v6276
      %v6278 = vsel %vm530, %v6243, 0.0
      %v6279 = vadd.f32 %v6277, %v6278
      %v6280 = vsel %vm530, %v6244, 0.0
      %v6281 = vadd.f32 %v6279, %v6280
      %v6282 = vsel %vm530, %v6245, 0.0
      %v6283 = vadd.f32 %v6281, %v6282
      %v6284 = vsel %vm530, %v6246, 0.0
      %v6285 = vadd.f32 %v6283, %v6284
      %v6286 = vsel %vm530, %v6247, 0.0
      %v6287 = vadd.f32 %v6285, %v6286
      %v6288 = vsel %vm530, %v6248, 0.0
      %v6289 = vadd.f32 %v6287, %v6288
      %v6290 = vsel %vm530, %v6249, 0.0
      %v6291 = vadd.f32 %v6289, %v6290
      %v6292 = vsel %vm530, %v6250, 0.0
      %v6293 = vadd.f32 %v6291, %v6292
      %v6294 = vsel %vm530, %v6251, 0.0
      %v6295 = vadd.f32 %v6293, %v6294
      %v6296 = vsel %vm530, %v6252, 0.0
      %v6297 = vadd.f32 %v6295, %v6296
      %v6298 = vsel %vm530, %v6253, 0.0
      %v6299 = vadd.f32 %v6297, %v6298
      %v6300 = vsel %vm530, %v6254, 0.0
      %v6301 = vadd.f32 %v6299, %v6300
      %v6302 = vsel %vm530, %v6255, 0.0
      %v6303 = vadd.f32 %v6301, %v6302
      %v6304 = vsel %vm530, %v6256, 0.0
      %v6305 = vadd.f32 %v6303, %v6304
      %v6306 = vsel %vm530, %v6257, 0.0
      %v6307 = vadd.f32 %v6305, %v6306
      %v6308 = vsel %vm530, %v6258, 0.0
      %v6309 = vadd.f32 %v6307, %v6308
      %v6310 = vsel %vm530, %v6259, 0.0
      %v6311 = vadd.f32 %v6309, %v6310
      %v6312 = vsel %vm530, %v6260, 0.0
      %v6313 = vadd.f32 %v6311, %v6312
      %v6314 = vsel %vm530, %v6261, 0.0
      %v6315 = vadd.f32 %v6313, %v6314
      %v6316 = vsel %vm530, %v6262, 0.0
      %v6317 = vadd.f32 %v6315, %v6316
      %v6318 = vsel %vm530, %v6263, 0.0
      %v6319 = vadd.f32 %v6317, %v6318
      %v6320 = vsel %vm530, %v6264, 0.0
      %v6321 = vadd.f32 %v6319, %v6320
      %v6322 = vsel %vm530, %v6265, 0.0
      %v6323 = vadd.f32 %v6321, %v6322
      %v6324 = vsel %vm530, %v6266, 0.0
      %v6325 = vadd.f32 %v6323, %v6324
      %v6326 = vsel %vm530, %v6267, 0.0
      %v6327 = vadd.f32 %v6325, %v6326
      %v6328 = vsel %vm530, %v6268, 0.0
      %v6329 = vadd.f32 %v6327, %v6328
      %v6330 = vsel %vm530, %v6269, 0.0
      %v6331 = vadd.f32 %v6329, %v6330
      %v6332 = vsel %vm530, %v6270, 0.0
      %v6333 = vadd.f32 %v6331, %v6332
      %v6334 = vrot.slane %v6333, 4
      %v6335 = vadd.f32 %v6333, %v6334
      %v6336 = vrot.slane %v6335, 2
      %v6337 = vadd.f32 %v6335, %v6336
      %v6338 = vrot.slane %v6337, 1
      %v6339 = vadd.f32 %v6337, %v6338
      %v6340 = vmul.f32 %v6339, %v3185
      %v6341 = vsub.f32 %v6239, %v6340
      %v6342 = vsub.f32 %v6240, %v6340
      %v6343 = vsub.f32 %v6241, %v6340
      %v6344 = vsub.f32 %v6242, %v6340
      %v6345 = vsub.f32 %v6243, %v6340
      %v6346 = vsub.f32 %v6244, %v6340
      %v6347 = vsub.f32 %v6245, %v6340
      %v6348 = vsub.f32 %v6246, %v6340
      %v6349 = vsub.f32 %v6247, %v6340
      %v6350 = vsub.f32 %v6248, %v6340
      %v6351 = vsub.f32 %v6249, %v6340
      %v6352 = vsub.f32 %v6250, %v6340
      %v6353 = vsub.f32 %v6251, %v6340
      %v6354 = vsub.f32 %v6252, %v6340
      %v6355 = vsub.f32 %v6253, %v6340
      %v6356 = vsub.f32 %v6254, %v6340
      %v6357 = vsub.f32 %v6255, %v6340
      %v6358 = vsub.f32 %v6256, %v6340
      %v6359 = vsub.f32 %v6257, %v6340
      %v6360 = vsub.f32 %v6258, %v6340
      %v6361 = vsub.f32 %v6259, %v6340
      %v6362 = vsub.f32 %v6260, %v6340
      %v6363 = vsub.f32 %v6261, %v6340
      %v6364 = vsub.f32 %v6262, %v6340
      %v6365 = vsub.f32 %v6263, %v6340
      %v6366 = vsub.f32 %v6264, %v6340
      %v6367 = vsub.f32 %v6265, %v6340
      %v6368 = vsub.f32 %v6266, %v6340
      %v6369 = vsub.f32 %v6267, %v6340
      %v6370 = vsub.f32 %v6268, %v6340
      %v6371 = vsub.f32 %v6269, %v6340
      %v6372 = vsub.f32 %v6270, %v6340
      %v6373 = vmul.f32 %v6341, %v6341
      %v6374 = vmul.f32 %v6342, %v6342
      %v6375 = vmul.f32 %v6343, %v6343
      %v6376 = vmul.f32 %v6344, %v6344
      %v6377 = vmul.f32 %v6345, %v6345
      %v6378 = vmul.f32 %v6346, %v6346
      %v6379 = vmul.f32 %v6347, %v6347
      %v6380 = vmul.f32 %v6348, %v6348
      %v6381 = vmul.f32 %v6349, %v6349
      %v6382 = vmul.f32 %v6350, %v6350
      %v6383 = vmul.f32 %v6351, %v6351
      %v6384 = vmul.f32 %v6352, %v6352
      %v6385 = vmul.f32 %v6353, %v6353
      %v6386 = vmul.f32 %v6354, %v6354
      %v6387 = vmul.f32 %v6355, %v6355
      %v6388 = vmul.f32 %v6356, %v6356
      %v6389 = vmul.f32 %v6357, %v6357
      %v6390 = vmul.f32 %v6358, %v6358
      %v6391 = vmul.f32 %v6359, %v6359
      %v6392 = vmul.f32 %v6360, %v6360
      %v6393 = vmul.f32 %v6361, %v6361
      %v6394 = vmul.f32 %v6362, %v6362
      %v6395 = vmul.f32 %v6363, %v6363
      %v6396 = vmul.f32 %v6364, %v6364
      %v6397 = vmul.f32 %v6365, %v6365
      %v6398 = vmul.f32 %v6366, %v6366
      %v6399 = vmul.f32 %v6367, %v6367
      %v6400 = vmul.f32 %v6368, %v6368
      %v6401 = vmul.f32 %v6369, %v6369
      %v6402 = vmul.f32 %v6370, %v6370
      %v6403 = vmul.f32 %v6371, %v6371
      %v6404 = vmul.f32 %v6372, %v6372
      %v6405 = vsel %vm530, %v6373, 0.0
      %v6406 = vsel %vm530, %v6374, 0.0
      %v6407 = vadd.f32 %v6405, %v6406
      %v6408 = vsel %vm530, %v6375, 0.0
      %v6409 = vadd.f32 %v6407, %v6408
      %v6410 = vsel %vm530, %v6376, 0.0
      %v6411 = vadd.f32 %v6409, %v6410
      %v6412 = vsel %vm530, %v6377, 0.0
      %v6413 = vadd.f32 %v6411, %v6412
      %v6414 = vsel %vm530, %v6378, 0.0
      %v6415 = vadd.f32 %v6413, %v6414
      %v6416 = vsel %vm530, %v6379, 0.0
      %v6417 = vadd.f32 %v6415, %v6416
      %v6418 = vsel %vm530, %v6380, 0.0
      %v6419 = vadd.f32 %v6417, %v6418
      %v6420 = vsel %vm530, %v6381, 0.0
      %v6421 = vadd.f32 %v6419, %v6420
      %v6422 = vsel %vm530, %v6382, 0.0
      %v6423 = vadd.f32 %v6421, %v6422
      %v6424 = vsel %vm530, %v6383, 0.0
      %v6425 = vadd.f32 %v6423, %v6424
      %v6426 = vsel %vm530, %v6384, 0.0
      %v6427 = vadd.f32 %v6425, %v6426
      %v6428 = vsel %vm530, %v6385, 0.0
      %v6429 = vadd.f32 %v6427, %v6428
      %v6430 = vsel %vm530, %v6386, 0.0
      %v6431 = vadd.f32 %v6429, %v6430
      %v6432 = vsel %vm530, %v6387, 0.0
      %v6433 = vadd.f32 %v6431, %v6432
      %v6434 = vsel %vm530, %v6388, 0.0
      %v6435 = vadd.f32 %v6433, %v6434
      %v6436 = vsel %vm530, %v6389, 0.0
      %v6437 = vadd.f32 %v6435, %v6436
      %v6438 = vsel %vm530, %v6390, 0.0
      %v6439 = vadd.f32 %v6437, %v6438
      %v6440 = vsel %vm530, %v6391, 0.0
      %v6441 = vadd.f32 %v6439, %v6440
      %v6442 = vsel %vm530, %v6392, 0.0
      %v6443 = vadd.f32 %v6441, %v6442
      %v6444 = vsel %vm530, %v6393, 0.0
      %v6445 = vadd.f32 %v6443, %v6444
      %v6446 = vsel %vm530, %v6394, 0.0
      %v6447 = vadd.f32 %v6445, %v6446
      %v6448 = vsel %vm530, %v6395, 0.0
      %v6449 = vadd.f32 %v6447, %v6448
      %v6450 = vsel %vm530, %v6396, 0.0
      %v6451 = vadd.f32 %v6449, %v6450
      %v6452 = vsel %vm530, %v6397, 0.0
      %v6453 = vadd.f32 %v6451, %v6452
      %v6454 = vsel %vm530, %v6398, 0.0
      %v6455 = vadd.f32 %v6453, %v6454
      %v6456 = vsel %vm530, %v6399, 0.0
      %v6457 = vadd.f32 %v6455, %v6456
      %v6458 = vsel %vm530, %v6400, 0.0
      %v6459 = vadd.f32 %v6457, %v6458
      %v6460 = vsel %vm530, %v6401, 0.0
      %v6461 = vadd.f32 %v6459, %v6460
      %v6462 = vsel %vm530, %v6402, 0.0
      %v6463 = vadd.f32 %v6461, %v6462
      %v6464 = vsel %vm530, %v6403, 0.0
      %v6465 = vadd.f32 %v6463, %v6464
      %v6466 = vsel %vm530, %v6404, 0.0
      %v6467 = vadd.f32 %v6465, %v6466
      %v6468 = vrot.slane %v6467, 4
      %v6469 = vadd.f32 %v6467, %v6468
      %v6470 = vrot.slane %v6469, 2
      %v6471 = vadd.f32 %v6469, %v6470
      %v6472 = vrot.slane %v6471, 1
      %v6473 = vadd.f32 %v6471, %v6472
      %v6474 = vmul.f32 %v6473, %v3185
      %v6475 = vadd.f32 %v6474, 1e-05
      %v6476 = vrsqrt.pop %v6475
      %v6477 = vmul.f32 %v6341, %v6476
      %v6478 = vmul.f32 %v6342, %v6476
      %v6479 = vmul.f32 %v6343, %v6476
      %v6480 = vmul.f32 %v6344, %v6476
      %v6481 = vmul.f32 %v6345, %v6476
      %v6482 = vmul.f32 %v6346, %v6476
      %v6483 = vmul.f32 %v6347, %v6476
      %v6484 = vmul.f32 %v6348, %v6476
      %v6485 = vmul.f32 %v6349, %v6476
      %v6486 = vmul.f32 %v6350, %v6476
      %v6487 = vmul.f32 %v6351, %v6476
      %v6488 = vmul.f32 %v6352, %v6476
      %v6489 = vmul.f32 %v6353, %v6476
      %v6490 = vmul.f32 %v6354, %v6476
      %v6491 = vmul.f32 %v6355, %v6476
      %v6492 = vmul.f32 %v6356, %v6476
      %v6493 = vmul.f32 %v6357, %v6476
      %v6494 = vmul.f32 %v6358, %v6476
      %v6495 = vmul.f32 %v6359, %v6476
      %v6496 = vmul.f32 %v6360, %v6476
      %v6497 = vmul.f32 %v6361, %v6476
      %v6498 = vmul.f32 %v6362, %v6476
      %v6499 = vmul.f32 %v6363, %v6476
      %v6500 = vmul.f32 %v6364, %v6476
      %v6501 = vmul.f32 %v6365, %v6476
      %v6502 = vmul.f32 %v6366, %v6476
      %v6503 = vmul.f32 %v6367, %v6476
      %v6504 = vmul.f32 %v6368, %v6476
      %v6505 = vmul.f32 %v6369, %v6476
      %v6506 = vmul.f32 %v6370, %v6476
      %v6507 = vmul.f32 %v6371, %v6476
      %v6508 = vmul.f32 %v6372, %v6476
      %v6509 = vadd.f32 %v171, %v6477
      %v6510 = vadd.f32 %v172, %v6478
      %v6511 = vadd.f32 %v173, %v6479
      %v6512 = vadd.f32 %v174, %v6480
      %v6513 = vadd.f32 %v175, %v6481
      %v6514 = vadd.f32 %v176, %v6482
      %v6515 = vadd.f32 %v177, %v6483
      %v6516 = vadd.f32 %v178, %v6484
      %v6517 = vadd.f32 %v179, %v6485
      %v6518 = vadd.f32 %v180, %v6486
      %v6519 = vadd.f32 %v181, %v6487
      %v6520 = vadd.f32 %v182, %v6488
      %v6521 = vadd.f32 %v183, %v6489
      %v6522 = vadd.f32 %v184, %v6490
      %v6523 = vadd.f32 %v185, %v6491
      %v6524 = vadd.f32 %v186, %v6492
      %v6525 = vadd.f32 %v187, %v6493
      %v6526 = vadd.f32 %v188, %v6494
      %v6527 = vadd.f32 %v189, %v6495
      %v6528 = vadd.f32 %v190, %v6496
      %v6529 = vadd.f32 %v191, %v6497
      %v6530 = vadd.f32 %v192, %v6498
      %v6531 = vadd.f32 %v193, %v6499
      %v6532 = vadd.f32 %v194, %v6500
      %v6533 = vadd.f32 %v195, %v6501
      %v6534 = vadd.f32 %v196, %v6502
      %v6535 = vadd.f32 %v197, %v6503
      %v6536 = vadd.f32 %v198, %v6504
      %v6537 = vadd.f32 %v199, %v6505
      %v6538 = vadd.f32 %v200, %v6506
      %v6539 = vadd.f32 %v201, %v6507
      %v6540 = vadd.f32 %v202, %v6508
      %6541 = vst.msk [vmem:[%s170] sm:$0xff] %vm530, %v6509
      %6542 = vst.msk [vmem:[%s170 + $0x8] sm:$0xff] %vm530, %v6510
      %6543 = vst.msk [vmem:[%s170 + $0x10] sm:$0xff] %vm530, %v6511
      %6544 = vst.msk [vmem:[%s170 + $0x18] sm:$0xff] %vm530, %v6512
      %6545 = vst.msk [vmem:[%s170 + $0x20] sm:$0xff] %vm530, %v6513
      %6546 = vst.msk [vmem:[%s170 + $0x28] sm:$0xff] %vm530, %v6514
      %6547 = vst.msk [vmem:[%s170 + $0x30] sm:$0xff] %vm530, %v6515
      %6548 = vst.msk [vmem:[%s170 + $0x38] sm:$0xff] %vm530, %v6516
      %6549 = vst.msk [vmem:[%s170 + $0x40] sm:$0xff] %vm530, %v6517
      %6550 = vst.msk [vmem:[%s170 + $0x48] sm:$0xff] %vm530, %v6518
      %6551 = vst.msk [vmem:[%s170 + $0x50] sm:$0xff] %vm530, %v6519
      %6552 = vst.msk [vmem:[%s170 + $0x58] sm:$0xff] %vm530, %v6520
      %6553 = vst.msk [vmem:[%s170 + $0x60] sm:$0xff] %vm530, %v6521
      %6554 = vst.msk [vmem:[%s170 + $0x68] sm:$0xff] %vm530, %v6522
      %6555 = vst.msk [vmem:[%s170 + $0x70] sm:$0xff] %vm530, %v6523
      %6556 = vst.msk [vmem:[%s170 + $0x78] sm:$0xff] %vm530, %v6524
      %6557 = vst.msk [vmem:[%s170 + $0x80] sm:$0xff] %vm530, %v6525
      %6558 = vst.msk [vmem:[%s170 + $0x88] sm:$0xff] %vm530, %v6526
      %6559 = vst.msk [vmem:[%s170 + $0x90] sm:$0xff] %vm530, %v6527
      %6560 = vst.msk [vmem:[%s170 + $0x98] sm:$0xff] %vm530, %v6528
      %6561 = vst.msk [vmem:[%s170 + $0xa0] sm:$0xff] %vm530, %v6529
      %6562 = vst.msk [vmem:[%s170 + $0xa8] sm:$0xff] %vm530, %v6530
      %6563 = vst.msk [vmem:[%s170 + $0xb0] sm:$0xff] %vm530, %v6531
      %6564 = vst.msk [vmem:[%s170 + $0xb8] sm:$0xff] %vm530, %v6532
      %6565 = vst.msk [vmem:[%s170 + $0xc0] sm:$0xff] %vm530, %v6533
      %6566 = vst.msk [vmem:[%s170 + $0xc8] sm:$0xff] %vm530, %v6534
      %6567 = vst.msk [vmem:[%s170 + $0xd0] sm:$0xff] %vm530, %v6535
      %6568 = vst.msk [vmem:[%s170 + $0xd8] sm:$0xff] %vm530, %v6536
      %6569 = vst.msk [vmem:[%s170 + $0xe0] sm:$0xff] %vm530, %v6537
      %6570 = vst.msk [vmem:[%s170 + $0xe8] sm:$0xff] %vm530, %v6538
      %6571 = vst.msk [vmem:[%s170 + $0xf0] sm:$0xff] %vm530, %v6539
      %6572 = vst.msk [vmem:[%s170 + $0xf8] sm:$0xff] %vm530, %v6540
      %p6573 = scmp.lt.s32.totalorder %s14, 1
      %s6574 = scalar_select %p6573, %s14, 1
      %s6575 = smul.addr %s6574, 32
      %s6576 = smul.addr %s6575, 8
      %s6577 = scalar_lea.vmem %s3, %s6576
      // Predicated region
      $region33: #{resnet_block_forward.1} parent=31 // pred_check
        %p6578 = pneg %p100
      $region34: #{resnet_block_forward.1} parent=31 // pred_check_branch
        %6580 = sbr.rel (%p6578) target = $region36
      $region35: #{resnet_block_forward.1} parent=31 // pred_region
        _
      $region36: #{resnet_block_forward.1} parent=31 // pred_fallthru
        _
    $region32: #{resnet_block_forward.1} parent=5 // pred_fallthru
      _
    %p6581 = scmp.le.s32.totalorder 2, %s9
    // Predicated region
    $region37: #{resnet_block_forward.1} parent=5 // pred_check
      %p6582 = pneg %p6581
    $region38: #{resnet_block_forward.1} parent=5 // pred_check_branch
      %6584 = sbr.rel (%p6582) target = $region40
    $region39: #{resnet_block_forward.1} parent=5 // pred_region
      %s6585 = ssub.s32 %s9, 2
      // Predicated region
      $region41: #{resnet_block_forward.1} parent=39 // pred_check
        %p6586 = pneg %p106
      $region42: #{resnet_block_forward.1} parent=39 // pred_check_branch
        %6588 = sbr.rel (%p6586) target = $region44
      $region43: #{resnet_block_forward.1} parent=39 // pred_region
        %p6589 = scmp.lt.s32.totalorder %s15, 1
        %s6590 = scalar_select %p6589, %s15, 1
        %s6591 = smul.addr %s6590, 32
        %s6592 = smul.addr %s6591, 8
        %s6593 = scalar_lea.vmem %s3, %s6592
      $region44: #{resnet_block_forward.1} parent=39 // pred_fallthru
        _
    $region40: #{resnet_block_forward.1} parent=5 // pred_fallthru
      _
  $region6: #{resnet_block_forward.1} parent=0 // loop_footer
    %s13 = sadd.s32 1, %s9
  $region7: #{resnet_block_forward.1} parent=0 // loop_footer_branch
    %8 = sbr.rel target = $region3
  $region8: #{resnet_block_forward.1} parent=0 // loop_exit
    _

</llo_original>
